<compile_context>
chip_gen: v5e
topology: v5e:2x2
jax: 0.10.0
libtpu: 0.0.40
codegen_flags: <defaults>
</compile_context>

<pallas_src>
import functools

import jax
import jax.numpy as jnp
from jax.experimental import pallas as pl
from jax.experimental.pallas import tpu as pltpu

EPS = 1e-5                  # nn.BatchNorm2d default eps
LANES = 128                 # TPU vreg lane width
MXU_DTYPE = jnp.bfloat16    # MXU input dtype (bf16 is the fast path on v5e/v6e/v7x)


def _round_up(x, m):
    return (x + m - 1) // m * m


def _pad_last(a, target):
    pad = target - a.shape[-1]
    if pad == 0:
        return a
    return jnp.pad(a, [(0, 0)] * (a.ndim - 1) + [(0, pad)])


def _pack_weight(w, cin_p, cout_p, dtype):
    """HWIO (3,3,cin,cout) -> lane-padded, dx folded into K: (3, 3*cin_p, cout_p).

    K index = dx * cin_p + ci, matching the dx lane-slab layout of the kernel's
    activation scratch.  Pre-cast to the MXU dtype so weight DMA halves in bf16.
    """
    kh, kw, cin, cout = w.shape
    wp = jnp.pad(w, ((0, 0), (0, 0), (0, cin_p - cin), (0, cout_p - cout)))
    return wp.reshape(kh, kw * cin_p, cout_p).astype(dtype)


# ------------------------------ Pallas kernels ------------------------------

def _make_conv_kernel(with_prologue):
    """3x3 conv (pad=1) on one lane-padded NHWC image + per-channel statistics.

    Optional prologue applies relu(x*scale + bias) to the input tile — this is
    how the previous layer's BatchNorm+ReLU is fused into this conv.  The kernel
    also emits per-image per-channel sum and sum-of-squares of the (bias-less)
    conv output (from the f32 accumulator), so the following BatchNorm's batch
    statistics need no extra pass over the activation.  The Conv2d bias is
    folded away entirely — it cancels inside training-mode BatchNorm.
    """

    def kernel(*refs):
        if with_prologue:
            x_ref, s_ref, b_ref, w_ref, y_ref, sum_ref, ssq_ref, xs_ref, acc_ref = refs
        else:
            x_ref, w_ref, y_ref, sum_ref, ssq_ref, xs_ref, acc_ref = refs
            s_ref = b_ref = None

        H, W, cout_p = y_ref.shape[1], y_ref.shape[2], y_ref.shape[3]
        cin_p = x_ref.shape[3]
        HW = H * W
        K = 3 * cin_p

        # ---- fused prologue (previous BN+ReLU as per-channel affine), f32 ----
        xv = x_ref[0]                                      # (H, W, cin_p) f32
        if with_prologue:
            xv = jnp.maximum(xv * s_ref[0] + b_ref[0], 0.0)

        # ---- build dx-shifted lane slabs in the scratch -----------------------
        # xs[r, c, dx*cin_p:(dx+1)*cin_p] == x_zero_padded[r, c + dx, :]
        # Only rows 0 and H+1 are halo; they are rewritten (zeroed) every step —
        # cheap, and keeps the kernel free of cross-step scratch state (safe
        # under any grid sharding).  Rows 1..H are fully overwritten below.
        xs_ref[0] = jnp.zeros((W, K), xs_ref.dtype)
        xs_ref[H + 1] = jnp.zeros((W, K), xs_ref.dtype)

        col = jax.lax.broadcasted_iota(jnp.int32, (1, W, 1), 1)
        # dx=0 slab: left neighbour -> shift columns right by one, column 0 -> 0.
        xl = jnp.where(col == 0, 0.0, pltpu.roll(xv, shift=1, axis=1))
        # dx=2 slab: right neighbour -> shift columns left by one, column W-1 -> 0.
        xr = jnp.where(col == W - 1, 0.0, pltpu.roll(xv, shift=W - 1, axis=1))

        # Single cast to the MXU dtype at the (fully aligned) scratch stores.
        xs_ref[1:H + 1, :, 0 * cin_p:1 * cin_p] = xl.astype(xs_ref.dtype)
        xs_ref[1:H + 1, :, 1 * cin_p:2 * cin_p] = xv.astype(xs_ref.dtype)
        xs_ref[1:H + 1, :, 2 * cin_p:3 * cin_p] = xr.astype(xs_ref.dtype)

        # ---- 3 MXU matmuls (one per dy), K = 3*cin_p, f32 accumulation --------
        # xs_ref[dy:dy+H] is a leading-dim slice; its reshape to (HW, K) is
        # layout preserving (W is a multiple of the sublane tile), so the matmul
        # reads need no materializing copy.  Accumulate into a VMEM scratch ref.
        def tap(dy):
            return xs_ref[dy:dy + H].reshape(HW, K)

        acc_ref[...] = jnp.dot(tap(0), w_ref[0], preferred_element_type=jnp.float32)
        acc_ref[...] += jnp.dot(tap(1), w_ref[1], preferred_element_type=jnp.float32)
        acc_ref[...] += jnp.dot(tap(2), w_ref[2], preferred_element_type=jnp.float32)

        acc = acc_ref[...]
        y_ref[0] = acc.reshape(H, W, cout_p).astype(y_ref.dtype)
        # Per-image channel statistics for the following BatchNorm (f32).
        sum_ref[0] = jnp.sum(acc, axis=0, keepdims=True)
        ssq_ref[0] = jnp.sum(acc * acc, axis=0, keepdims=True)

    return kernel


def _affine_relu_kernel(x_ref, s_ref, b_ref, o_ref):
    # x_ref/o_ref: (rows_tile, C); s_ref/b_ref: (1, C).  Lane-dense elementwise.
    o_ref[...] = jnp.maximum(x_ref[...] * s_ref[0] + b_ref[0], 0.0)


# -------------------------------- wrappers ----------------------------------

def _conv3x3_stats(x, w_packed, prologue=None):
    """y = conv3x3(relu(x*scale+bias) if prologue else x); also channel stats."""
    N, H, W, cin_p = x.shape
    cout_p = w_packed.shape[-1]

    x_spec = pl.BlockSpec((1, H, W, cin_p), lambda n: (n, 0, 0, 0))
    w_spec = pl.BlockSpec(w_packed.shape, lambda n: (0, 0, 0))
    vec_spec = pl.BlockSpec((1, cin_p), lambda n: (0, 0))

    if prologue is None:
        in_specs, args = [x_spec, w_spec], (x, w_packed)
    else:
        scale, bias = prologue
        in_specs, args = [x_spec, vec_spec, vec_spec, w_spec], (x, scale, bias, w_packed)

    return pl.pallas_call(
        _make_conv_kernel(prologue is not None),
        out_shape=(
            jax.ShapeDtypeStruct((N, H, W, cout_p), jnp.float32),
            jax.ShapeDtypeStruct((N, 1, cout_p), jnp.float32),
            jax.ShapeDtypeStruct((N, 1, cout_p), jnp.float32),
        ),
        grid=(N,),
        in_specs=in_specs,
        out_specs=(
            pl.BlockSpec((1, H, W, cout_p), lambda n: (n, 0, 0, 0)),
            pl.BlockSpec((1, 1, cout_p), lambda n: (n, 0, 0)),
            pl.BlockSpec((1, 1, cout_p), lambda n: (n, 0, 0)),
        ),
        scratch_shapes=[
            pltpu.VMEM((H + 2, W, 3 * cin_p), w_packed.dtype),  # dx lane-slab scratch
            pltpu.VMEM((H * W, cout_p), jnp.float32),           # MXU accumulator
        ],
        compiler_params=pltpu.CompilerParams(dimension_semantics=("parallel",)),
    )(*args)


def _bn_affine(sums, ssqs, gamma, beta, count, c_pad):
    """Training-mode BatchNorm folded into per-channel scale/bias (tiny glue).

    Single-pass variance E[x^2] - E[x]^2 with f32 sums — fine at these
    magnitudes; switch to a shifted / two-pass form if tolerances tighten at
    production scale.
    """
    total = jnp.sum(sums, axis=(0, 1))
    total2 = jnp.sum(ssqs, axis=(0, 1))
    mean = total / count
    var = jnp.maximum(total2 / count - mean * mean, 0.0)
    g = _pad_last(gamma, c_pad)   # zero-padded lanes -> padded channels stay 0
    b = _pad_last(beta, c_pad)
    scale = g / jnp.sqrt(var + EPS)
    bias = b - mean * scale
    return scale.reshape(1, c_pad), bias.reshape(1, c_pad)


def _affine_relu(y, scale, bias):
    """Final BN affine + ReLU as one lane-dense elementwise pass."""
    N, H, W, c_p = y.shape
    rows = N * H * W
    # v5e/v6e could use ~8192-row tiles; keep <=4096 so blocks also sit well
    # under v7x's smaller scoped VMEM.
    tile = rows if rows <= 4096 else 4096
    out = pl.pallas_call(
        _affine_relu_kernel,
        out_shape=jax.ShapeDtypeStruct((rows, c_p), jnp.float32),
        grid=(pl.cdiv(rows, tile),),
        in_specs=[
            pl.BlockSpec((tile, c_p), lambda i: (i, 0)),
            pl.BlockSpec((1, c_p), lambda i: (0, 0)),
            pl.BlockSpec((1, c_p), lambda i: (0, 0)),
        ],
        out_specs=pl.BlockSpec((tile, c_p), lambda i: (i, 0)),
        compiler_params=pltpu.CompilerParams(dimension_semantics=("parallel",)),
    )(y.reshape(rows, c_p), scale, bias)
    return out.reshape(N, H, W, c_p)


def double_conv_forward(x_nchw, params, mxu_dtype=MXU_DTYPE):
    """PyTorch double_conv forward (train-mode BN).  NCHW in / NCHW out."""
    N, cin, H, W = x_nchw.shape
    cout = params["w1"].shape[-1]
    cin_p = max(LANES, _round_up(cin, LANES))
    cmid_p = max(LANES, _round_up(cout, LANES))
    count = N * H * W

    # NCHW -> NHWC, channels zero-padded to the lane width (one tiny pad of the
    # network input; all intermediates are produced lane-padded directly).
    x = _pad_last(jnp.transpose(x_nchw, (0, 2, 3, 1)), cin_p)
    w1 = _pack_weight(params["w1"], cin_p, cmid_p, mxu_dtype)
    w2 = _pack_weight(params["w2"], cmid_p, cmid_p, mxu_dtype)

    # Conv biases b1/b2 are folded away: a constant per-channel shift cancels
    # exactly inside training-mode BatchNorm, so the kernels never add them.
    y1, s1, q1 = _conv3x3_stats(x, w1)
    scale1, bias1 = _bn_affine(s1, q1, params["gamma1"], params["beta1"],
                               count, cmid_p)

    # relu(y1*scale1+bias1) is applied as a prologue inside the second conv.
    y2, s2, q2 = _conv3x3_stats(y1, w2, prologue=(scale1, bias1))
    scale2, bias2 = _bn_affine(s2, q2, params["gamma2"], params["beta2"],
                               count, cmid_p)

    # TODO(synk): if the downstream consumer accepts lane-padded NHWC, return it
    # directly and skip the channel slice + NCHW transpose (one extra HBM pass).
    out = _affine_relu(y2, scale2, bias2)[..., :cout]
    return jnp.transpose(out, (0, 3, 1, 2))


# ---------------------------- pure-JAX reference -----------------------------

def _conv3x3_ref(x_nhwc, w_hwio, bias):
    y = jax.lax.conv_general_dilated(
        x_nhwc, w_hwio, window_strides=(1, 1), padding=((1, 1), (1, 1)),
        dimension_numbers=("NHWC", "HWIO", "NHWC"))
    return y + bias


def double_conv_ref(x_nchw, params):
    x = jnp.transpose(x_nchw, (0, 2, 3, 1))
    x = _conv3x3_ref(x, params["w1"], params["b1"])
    m, v = jnp.mean(x, axis=(0, 1, 2)), jnp.var(x, axis=(0, 1, 2))
    x = jnp.maximum((x - m) / jnp.sqrt(v + EPS) * params["gamma1"]
                    + params["beta1"], 0.0)
    x = _conv3x3_ref(x, params["w2"], params["b2"])
    m, v = jnp.mean(x, axis=(0, 1, 2)), jnp.var(x, axis=(0, 1, 2))
    x = jnp.maximum((x - m) / jnp.sqrt(v + EPS) * params["gamma2"]
                    + params["beta2"], 0.0)
    return jnp.transpose(x, (0, 3, 1, 2))


# ----------------------------------- main ------------------------------------

if __name__ == "__main__":
    in_ch, out_ch = 4, 8
    N, H, W = 2, 16, 16

    key = jax.random.PRNGKey(0)
    kx, kw1, kb1, kg1, kt1, kw2, kb2, kg2, kt2 = jax.random.split(key, 9)

    x = jax.random.normal(kx, (N, in_ch, H, W), dtype=jnp.float32)
    params = {
        # conv weights in HWIO layout
        "w1": 0.1 * jax.random.normal(kw1, (3, 3, in_ch, out_ch), jnp.float32),
        "b1": 0.1 * jax.random.normal(kb1, (out_ch,), jnp.float32),
        "gamma1": 1.0 + 0.1 * jax.random.normal(kg1, (out_ch,), jnp.float32),
        "beta1": 0.1 * jax.random.normal(kt1, (out_ch,), jnp.float32),
        "w2": 0.1 * jax.random.normal(kw2, (3, 3, out_ch, out_ch), jnp.float32),
        "b2": 0.1 * jax.random.normal(kb2, (out_ch,), jnp.float32),
        "gamma2": 1.0 + 0.1 * jax.random.normal(kg2, (out_ch,), jnp.float32),
        "beta2": 0.1 * jax.random.normal(kt2, (out_ch,), jnp.float32),
    }

    ref = jax.block_until_ready(double_conv_ref(x, params))

    # Default fast path: bf16 MXU inputs, f32 accumulation / statistics.
    out_bf16 = jax.block_until_ready(
        jax.jit(functools.partial(double_conv_forward, mxu_dtype=jnp.bfloat16))(x, params))
    assert out_bf16.shape == (N, out_ch, H, W), out_bf16.shape
    assert jnp.allclose(out_bf16, ref, atol=5e-2, rtol=5e-2), \
        float(jnp.max(jnp.abs(out_bf16 - ref)))

    # f32-MXU path keeps the check bit-tight (same kernels, different MXU dtype).
    out_f32 = jax.block_until_ready(
        jax.jit(functools.partial(double_conv_forward, mxu_dtype=jnp.float32))(x, params))
    assert jnp.allclose(out_f32, ref, atol=1e-4, rtol=1e-4), \
        float(jnp.max(jnp.abs(out_f32 - ref)))

    print("KERNEL_OK")
</pallas_src>

<mosaic_0001>
module attributes {stable_mosaic.version = 11 : i64} {
  func.func @kernel(%arg0: i32, %arg1: memref<1x16x16x128xf32, #tpu.memory_space<vmem>>, %arg2: memref<3x384x128xbf16, #tpu.memory_space<vmem>>, %arg3: memref<1x16x16x128xf32, #tpu.memory_space<vmem>>, %arg4: memref<1x1x128xf32, #tpu.memory_space<vmem>>, %arg5: memref<1x1x128xf32, #tpu.memory_space<vmem>>, %arg6: memref<18x16x384xbf16, #tpu.memory_space<vmem>>, %arg7: memref<256x128xf32, #tpu.memory_space<vmem>>) attributes {dimension_semantics = [#tpu.dimension_semantics<parallel>], iteration_bounds = array<i64: 2>, scalar_prefetch = 0 : i64, scratch_operands = 2 : i64, tpu.core_type = #tpu.core_type<tc>, window_params = [{transform_indices = @transform_0, window_bounds = array<i64: 1, 16, 16, 128>}, {pipeline_mode = #tpu.pipeline_mode<synchronous>, transform_indices = @transform_1, window_bounds = array<i64: 3, 384, 128>}, {transform_indices = @transform_2, window_bounds = array<i64: 1, 16, 16, 128>}, {transform_indices = @transform_3, window_bounds = array<i64: 1, 1, 128>}, {transform_indices = @transform_4, window_bounds = array<i64: 1, 1, 128>}]} {
    %c0 = arith.constant 0 : index
    %c0_0 = arith.constant 0 : index
    %c0_1 = arith.constant 0 : index
    %c0_2 = arith.constant 0 : index
    %0 = vector.load %arg1[%c0, %c0_0, %c0_1, %c0_2] : memref<1x16x16x128xf32, #tpu.memory_space<vmem>>, vector<1x16x16x128xf32>
    %1 = vector.shape_cast %0 : vector<1x16x16x128xf32> to vector<16x16x128xf32>
    %cst = arith.constant 0.000000e+00 : bf16
    %2 = vector.broadcast %cst : bf16 to vector<16x384xbf16>
    %c0_3 = arith.constant 0 : index
    %c0_4 = arith.constant 0 : index
    %c0_5 = arith.constant 0 : index
    %3 = vector.load %arg6[%c0_3, %c0_4, %c0_5] : memref<18x16x384xbf16, #tpu.memory_space<vmem>>, vector<1x16x384xbf16>
    %4 = vector.shape_cast %3 : vector<1x16x384xbf16> to vector<16x384xbf16>
    %5 = vector.shape_cast %2 : vector<16x384xbf16> to vector<1x16x384xbf16>
    tpu.vector_store %arg6[%c0_3, %c0_4, %c0_5], %5 {strides = array<i32>} : memref<18x16x384xbf16, #tpu.memory_space<vmem>>, vector<1x16x384xbf16>,
    %cst_6 = arith.constant 0.000000e+00 : bf16
    %6 = vector.broadcast %cst_6 : bf16 to vector<16x384xbf16>
    %c17 = arith.constant 17 : index
    %c0_7 = arith.constant 0 : index
    %c0_8 = arith.constant 0 : index
    %7 = vector.load %arg6[%c17, %c0_7, %c0_8] : memref<18x16x384xbf16, #tpu.memory_space<vmem>>, vector<1x16x384xbf16>
    %8 = vector.shape_cast %7 : vector<1x16x384xbf16> to vector<16x384xbf16>
    %9 = vector.shape_cast %6 : vector<16x384xbf16> to vector<1x16x384xbf16>
    tpu.vector_store %arg6[%c17, %c0_7, %c0_8], %9 {strides = array<i32>} : memref<18x16x384xbf16, #tpu.memory_space<vmem>>, vector<1x16x384xbf16>,
    %10 = tpu.iota {dimensions = array<i32: 1>} : vector<1x16x1xi32>
    %c0_i32 = arith.constant 0 : i32
    %11 = vector.broadcast %c0_i32 : i32 to vector<1x16x1xi32>
    %12 = arith.cmpi eq, %10, %11 : vector<1x16x1xi32>
    %c1_i32 = arith.constant 1 : i32
    %13 = tpu.dynamic_rotate %1 by %c1_i32 dim 1 : vector<16x16x128xf32>, i32 -> vector<16x16x128xf32>
    %cst_9 = arith.constant 0.000000e+00 : f32
    %14 = vector.shape_cast %12 : vector<1x16x1xi1> to vector<1x16x1xi1>
    %15 = vector.broadcast %14 : vector<1x16x1xi1> to vector<16x16x128xi1>
    %16 = vector.broadcast %cst_9 : f32 to vector<16x16x128xf32>
    %17 = arith.select %15, %16, %13 : vector<16x16x128xi1>, vector<16x16x128xf32>
    %c15_i32 = arith.constant 15 : i32
    %18 = vector.broadcast %c15_i32 : i32 to vector<1x16x1xi32>
    %19 = arith.cmpi eq, %10, %18 : vector<1x16x1xi32>
    %c15_i32_10 = arith.constant 15 : i32
    %20 = tpu.dynamic_rotate %1 by %c15_i32_10 dim 1 : vector<16x16x128xf32>, i32 -> vector<16x16x128xf32>
    %cst_11 = arith.constant 0.000000e+00 : f32
    %21 = vector.shape_cast %19 : vector<1x16x1xi1> to vector<1x16x1xi1>
    %22 = vector.broadcast %21 : vector<1x16x1xi1> to vector<16x16x128xi1>
    %23 = vector.broadcast %cst_11 : f32 to vector<16x16x128xf32>
    %24 = arith.select %22, %23, %20 : vector<16x16x128xi1>, vector<16x16x128xf32>
    %25 = arith.truncf %17 : vector<16x16x128xf32> to vector<16x16x128xbf16>
    %c1 = arith.constant 1 : index
    %c0_12 = arith.constant 0 : index
    %c0_13 = arith.constant 0 : index
    %26 = vector.load %arg6[%c1, %c0_12, %c0_13] : memref<18x16x384xbf16, #tpu.memory_space<vmem>>, vector<16x16x128xbf16>
    tpu.vector_store %arg6[%c1, %c0_12, %c0_13], %25 {strides = array<i32>} : memref<18x16x384xbf16, #tpu.memory_space<vmem>>, vector<16x16x128xbf16>,
    %27 = arith.truncf %1 : vector<16x16x128xf32> to vector<16x16x128xbf16>
    %c1_14 = arith.constant 1 : index
    %c0_15 = arith.constant 0 : index
    %c128 = arith.constant 128 : index
    %28 = vector.load %arg6[%c1_14, %c0_15, %c128] : memref<18x16x384xbf16, #tpu.memory_space<vmem>>, vector<16x16x128xbf16>
    tpu.vector_store %arg6[%c1_14, %c0_15, %c128], %27 {strides = array<i32>} : memref<18x16x384xbf16, #tpu.memory_space<vmem>>, vector<16x16x128xbf16>,
    %29 = arith.truncf %24 : vector<16x16x128xf32> to vector<16x16x128xbf16>
    %c1_16 = arith.constant 1 : index
    %c0_17 = arith.constant 0 : index
    %c256 = arith.constant 256 : index
    %30 = vector.load %arg6[%c1_16, %c0_17, %c256] : memref<18x16x384xbf16, #tpu.memory_space<vmem>>, vector<16x16x128xbf16>
    tpu.vector_store %arg6[%c1_16, %c0_17, %c256], %29 {strides = array<i32>} : memref<18x16x384xbf16, #tpu.memory_space<vmem>>, vector<16x16x128xbf16>,
    %c0_18 = arith.constant 0 : index
    %c0_19 = arith.constant 0 : index
    %c0_20 = arith.constant 0 : index
    %31 = vector.load %arg6[%c0_18, %c0_19, %c0_20] : memref<18x16x384xbf16, #tpu.memory_space<vmem>>, vector<16x16x384xbf16>
    %32 = vector.shape_cast %31 : vector<16x16x384xbf16> to vector<256x384xbf16>
    %c0_21 = arith.constant 0 : index
    %c0_22 = arith.constant 0 : index
    %c0_23 = arith.constant 0 : index
    %33 = vector.load %arg2[%c0_21, %c0_22, %c0_23] : memref<3x384x128xbf16, #tpu.memory_space<vmem>>, vector<1x384x128xbf16>
    %34 = vector.shape_cast %33 : vector<1x384x128xbf16> to vector<384x128xbf16>
    %cst_24 = arith.constant dense<0.000000e+00> : vector<256x128xf32>
    %35 = tpu.matmul %32, %34, %cst_24 {dimension_numbers = #tpu.dot_dimension_numbers<[1], [0], [0], [1], [0, 0, 1, 1], [], []>} : vector<256x384xbf16>, vector<384x128xbf16>, vector<256x128xf32> -> vector<256x128xf32>
    %c0_25 = arith.constant 0 : index
    %c0_26 = arith.constant 0 : index
    %36 = vector.load %arg7[%c0_25, %c0_26] : memref<256x128xf32, #tpu.memory_space<vmem>>, vector<256x128xf32>
    tpu.vector_store %arg7[%c0_25, %c0_26], %35 {strides = array<i32>} : memref<256x128xf32, #tpu.memory_space<vmem>>, vector<256x128xf32>,
    %c0_27 = arith.constant 0 : index
    %c0_28 = arith.constant 0 : index
    %37 = vector.load %arg7[%c0_27, %c0_28] : memref<256x128xf32, #tpu.memory_space<vmem>>, vector<256x128xf32>
    %c1_29 = arith.constant 1 : index
    %c0_30 = arith.constant 0 : index
    %c0_31 = arith.constant 0 : index
    %38 = vector.load %arg6[%c1_29, %c0_30, %c0_31] : memref<18x16x384xbf16, #tpu.memory_space<vmem>>, vector<16x16x384xbf16>
    %39 = vector.shape_cast %38 : vector<16x16x384xbf16> to vector<256x384xbf16>
    %c1_32 = arith.constant 1 : index
    %c0_33 = arith.constant 0 : index
    %c0_34 = arith.constant 0 : index
    %40 = vector.load %arg2[%c1_32, %c0_33, %c0_34] : memref<3x384x128xbf16, #tpu.memory_space<vmem>>, vector<1x384x128xbf16>
    %41 = vector.shape_cast %40 : vector<1x384x128xbf16> to vector<384x128xbf16>
    %cst_35 = arith.constant dense<0.000000e+00> : vector<256x128xf32>
    %42 = tpu.matmul %39, %41, %cst_35 {dimension_numbers = #tpu.dot_dimension_numbers<[1], [0], [0], [1], [0, 0, 1, 1], [], []>} : vector<256x384xbf16>, vector<384x128xbf16>, vector<256x128xf32> -> vector<256x128xf32>
    %43 = arith.addf %37, %42 : vector<256x128xf32>
    %c0_36 = arith.constant 0 : index
    %c0_37 = arith.constant 0 : index
    %44 = vector.load %arg7[%c0_36, %c0_37] : memref<256x128xf32, #tpu.memory_space<vmem>>, vector<256x128xf32>
    tpu.vector_store %arg7[%c0_36, %c0_37], %43 {strides = array<i32>} : memref<256x128xf32, #tpu.memory_space<vmem>>, vector<256x128xf32>,
    %c0_38 = arith.constant 0 : index
    %c0_39 = arith.constant 0 : index
    %45 = vector.load %arg7[%c0_38, %c0_39] : memref<256x128xf32, #tpu.memory_space<vmem>>, vector<256x128xf32>
    %c2 = arith.constant 2 : index
    %c0_40 = arith.constant 0 : index
    %c0_41 = arith.constant 0 : index
    %46 = vector.load %arg6[%c2, %c0_40, %c0_41] : memref<18x16x384xbf16, #tpu.memory_space<vmem>>, vector<16x16x384xbf16>
    %47 = vector.shape_cast %46 : vector<16x16x384xbf16> to vector<256x384xbf16>
    %c2_42 = arith.constant 2 : index
    %c0_43 = arith.constant 0 : index
    %c0_44 = arith.constant 0 : index
    %48 = vector.load %arg2[%c2_42, %c0_43, %c0_44] : memref<3x384x128xbf16, #tpu.memory_space<vmem>>, vector<1x384x128xbf16>
    %49 = vector.shape_cast %48 : vector<1x384x128xbf16> to vector<384x128xbf16>
    %cst_45 = arith.constant dense<0.000000e+00> : vector<256x128xf32>
    %50 = tpu.matmul %47, %49, %cst_45 {dimension_numbers = #tpu.dot_dimension_numbers<[1], [0], [0], [1], [0, 0, 1, 1], [], []>} : vector<256x384xbf16>, vector<384x128xbf16>, vector<256x128xf32> -> vector<256x128xf32>
    %51 = arith.addf %45, %50 : vector<256x128xf32>
    %c0_46 = arith.constant 0 : index
    %c0_47 = arith.constant 0 : index
    %52 = vector.load %arg7[%c0_46, %c0_47] : memref<256x128xf32, #tpu.memory_space<vmem>>, vector<256x128xf32>
    tpu.vector_store %arg7[%c0_46, %c0_47], %51 {strides = array<i32>} : memref<256x128xf32, #tpu.memory_space<vmem>>, vector<256x128xf32>,
    %c0_48 = arith.constant 0 : index
    %c0_49 = arith.constant 0 : index
    %53 = vector.load %arg7[%c0_48, %c0_49] : memref<256x128xf32, #tpu.memory_space<vmem>>, vector<256x128xf32>
    %54 = vector.shape_cast %53 : vector<256x128xf32> to vector<16x16x128xf32>
    %c0_50 = arith.constant 0 : index
    %c0_51 = arith.constant 0 : index
    %c0_52 = arith.constant 0 : index
    %c0_53 = arith.constant 0 : index
    %55 = vector.load %arg3[%c0_50, %c0_51, %c0_52, %c0_53] : memref<1x16x16x128xf32, #tpu.memory_space<vmem>>, vector<1x16x16x128xf32>
    %56 = vector.shape_cast %55 : vector<1x16x16x128xf32> to vector<16x16x128xf32>
    %57 = vector.shape_cast %54 : vector<16x16x128xf32> to vector<1x16x16x128xf32>
    tpu.vector_store %arg3[%c0_50, %c0_51, %c0_52, %c0_53], %57 {strides = array<i32>} : memref<1x16x16x128xf32, #tpu.memory_space<vmem>>, vector<1x16x16x128xf32>,
    %cst_54 = arith.constant dense<0.000000e+00> : vector<128xf32>
    %58 = vector.multi_reduction <add>, %53, %cst_54 [0] : vector<256x128xf32> to vector<128xf32>
    %59 = vector.shape_cast %58 : vector<128xf32> to vector<1x128xf32>
    %c0_55 = arith.constant 0 : index
    %c0_56 = arith.constant 0 : index
    %c0_57 = arith.constant 0 : index
    %60 = vector.load %arg4[%c0_55, %c0_56, %c0_57] : memref<1x1x128xf32, #tpu.memory_space<vmem>>, vector<1x1x128xf32>
    %61 = vector.shape_cast %60 : vector<1x1x128xf32> to vector<1x128xf32>
    %62 = vector.shape_cast %59 : vector<1x128xf32> to vector<1x1x128xf32>
    tpu.vector_store %arg4[%c0_55, %c0_56, %c0_57], %62 {strides = array<i32>} : memref<1x1x128xf32, #tpu.memory_space<vmem>>, vector<1x1x128xf32>,
    %63 = arith.mulf %53, %53 : vector<256x128xf32>
    %cst_58 = arith.constant dense<0.000000e+00> : vector<128xf32>
    %64 = vector.multi_reduction <add>, %63, %cst_58 [0] : vector<256x128xf32> to vector<128xf32>
    %65 = vector.shape_cast %64 : vector<128xf32> to vector<1x128xf32>
    %c0_59 = arith.constant 0 : index
    %c0_60 = arith.constant 0 : index
    %c0_61 = arith.constant 0 : index
    %66 = vector.load %arg5[%c0_59, %c0_60, %c0_61] : memref<1x1x128xf32, #tpu.memory_space<vmem>>, vector<1x1x128xf32>
    %67 = vector.shape_cast %66 : vector<1x1x128xf32> to vector<1x128xf32>
    %68 = vector.shape_cast %65 : vector<1x128xf32> to vector<1x1x128xf32>
    tpu.vector_store %arg5[%c0_59, %c0_60, %c0_61], %68 {strides = array<i32>} : memref<1x1x128xf32, #tpu.memory_space<vmem>>, vector<1x1x128xf32>,
    return
  }
  func.func @transform_0(%arg0: i32) -> (i32, i32, i32, i32) {
    %c0_i32 = arith.constant 0 : i32
    %c0_i32_0 = arith.constant 0 : i32
    %c0_i32_1 = arith.constant 0 : i32
    %c0_i32_2 = arith.constant 0 : i32
    return %arg0, %c0_i32, %c0_i32_0, %c0_i32_1 : i32, i32, i32, i32
  }
  func.func @transform_1(%arg0: i32) -> (i32, i32, i32) {
    %c0_i32 = arith.constant 0 : i32
    %c0_i32_0 = arith.constant 0 : i32
    %c0_i32_1 = arith.constant 0 : i32
    %c0_i32_2 = arith.constant 0 : i32
    return %c0_i32, %c0_i32_0, %c0_i32_1 : i32, i32, i32
  }
  func.func @transform_2(%arg0: i32) -> (i32, i32, i32, i32) {
    %c0_i32 = arith.constant 0 : i32
    %c0_i32_0 = arith.constant 0 : i32
    %c0_i32_1 = arith.constant 0 : i32
    %c0_i32_2 = arith.constant 0 : i32
    return %arg0, %c0_i32, %c0_i32_0, %c0_i32_1 : i32, i32, i32, i32
  }
  func.func @transform_3(%arg0: i32) -> (i32, i32, i32) {
    %c0_i32 = arith.constant 0 : i32
    %c0_i32_0 = arith.constant 0 : i32
    %c0_i32_1 = arith.constant 0 : i32
    return %arg0, %c0_i32, %c0_i32_0 : i32, i32, i32
  }
  func.func @transform_4(%arg0: i32) -> (i32, i32, i32) {
    %c0_i32 = arith.constant 0 : i32
    %c0_i32_0 = arith.constant 0 : i32
    %c0_i32_1 = arith.constant 0 : i32
    return %arg0, %c0_i32, %c0_i32_0 : i32, i32, i32
  }
}

module attributes {stable_mosaic.version = 11 : i64} {
  func.func @_affine_relu_kernel(%arg0: i32, %arg1: memref<512x128xf32, #tpu.memory_space<vmem>>, %arg2: memref<1x128xf32, #tpu.memory_space<vmem>>, %arg3: memref<1x128xf32, #tpu.memory_space<vmem>>, %arg4: memref<512x128xf32, #tpu.memory_space<vmem>>) attributes {dimension_semantics = [#tpu.dimension_semantics<parallel>], iteration_bounds = array<i64: 1>, scalar_prefetch = 0 : i64, scratch_operands = 0 : i64, tpu.core_type = #tpu.core_type<tc>, window_params = [{transform_indices = @transform_0, window_bounds = array<i64: 512, 128>}, {pipeline_mode = #tpu.pipeline_mode<synchronous>, transform_indices = @transform_1, window_bounds = array<i64: 1, 128>}, {pipeline_mode = #tpu.pipeline_mode<synchronous>, transform_indices = @transform_2, window_bounds = array<i64: 1, 128>}, {transform_indices = @transform_3, window_bounds = array<i64: 512, 128>}]} {
    %c0 = arith.constant 0 : index
    %c0_0 = arith.constant 0 : index
    %0 = vector.load %arg1[%c0, %c0_0] : memref<512x128xf32, #tpu.memory_space<vmem>>, vector<512x128xf32>
    %c0_1 = arith.constant 0 : index
    %c0_2 = arith.constant 0 : index
    %1 = vector.load %arg2[%c0_1, %c0_2] : memref<1x128xf32, #tpu.memory_space<vmem>>, vector<1x128xf32>
    %2 = vector.shape_cast %1 : vector<1x128xf32> to vector<128xf32>
    %3 = vector.shape_cast %2 : vector<128xf32> to vector<1x128xf32>
    %4 = vector.broadcast %3 : vector<1x128xf32> to vector<512x128xf32>
    %5 = arith.mulf %0, %4 : vector<512x128xf32>
    %c0_3 = arith.constant 0 : index
    %c0_4 = arith.constant 0 : index
    %6 = vector.load %arg3[%c0_3, %c0_4] : memref<1x128xf32, #tpu.memory_space<vmem>>, vector<1x128xf32>
    %7 = vector.shape_cast %6 : vector<1x128xf32> to vector<128xf32>
    %8 = vector.shape_cast %7 : vector<128xf32> to vector<1x128xf32>
    %9 = vector.broadcast %8 : vector<1x128xf32> to vector<512x128xf32>
    %10 = arith.addf %5, %9 : vector<512x128xf32>
    %cst = arith.constant 0.000000e+00 : f32
    %11 = vector.broadcast %cst : f32 to vector<512x128xf32>
    %12 = arith.maximumf %10, %11 : vector<512x128xf32>
    %c0_5 = arith.constant 0 : index
    %c0_6 = arith.constant 0 : index
    %13 = vector.load %arg4[%c0_5, %c0_6] : memref<512x128xf32, #tpu.memory_space<vmem>>, vector<512x128xf32>
    tpu.vector_store %arg4[%c0_5, %c0_6], %12 {strides = array<i32>} : memref<512x128xf32, #tpu.memory_space<vmem>>, vector<512x128xf32>,
    return
  }
  func.func @transform_0(%arg0: i32) -> (i32, i32) {
    %c0_i32 = arith.constant 0 : i32
    %c0_i32_0 = arith.constant 0 : i32
    return %arg0, %c0_i32 : i32, i32
  }
  func.func @transform_1(%arg0: i32) -> (i32, i32) {
    %c0_i32 = arith.constant 0 : i32
    %c0_i32_0 = arith.constant 0 : i32
    %c0_i32_1 = arith.constant 0 : i32
    return %c0_i32, %c0_i32_0 : i32, i32
  }
  func.func @transform_2(%arg0: i32) -> (i32, i32) {
    %c0_i32 = arith.constant 0 : i32
    %c0_i32_0 = arith.constant 0 : i32
    %c0_i32_1 = arith.constant 0 : i32
    return %c0_i32, %c0_i32_0 : i32, i32
  }
  func.func @transform_3(%arg0: i32) -> (i32, i32) {
    %c0_i32 = arith.constant 0 : i32
    %c0_i32_0 = arith.constant 0 : i32
    return %arg0, %c0_i32 : i32, i32
  }
}

module attributes {stable_mosaic.version = 11 : i64} {
  func.func @kernel(%arg0: i32, %arg1: memref<1x16x16x128xf32, #tpu.memory_space<vmem>>, %arg2: memref<1x128xf32, #tpu.memory_space<vmem>>, %arg3: memref<1x128xf32, #tpu.memory_space<vmem>>, %arg4: memref<3x384x128xbf16, #tpu.memory_space<vmem>>, %arg5: memref<1x16x16x128xf32, #tpu.memory_space<vmem>>, %arg6: memref<1x1x128xf32, #tpu.memory_space<vmem>>, %arg7: memref<1x1x128xf32, #tpu.memory_space<vmem>>, %arg8: memref<18x16x384xbf16, #tpu.memory_space<vmem>>, %arg9: memref<256x128xf32, #tpu.memory_space<vmem>>) attributes {dimension_semantics = [#tpu.dimension_semantics<parallel>], iteration_bounds = array<i64: 2>, scalar_prefetch = 0 : i64, scratch_operands = 2 : i64, tpu.core_type = #tpu.core_type<tc>, window_params = [{transform_indices = @transform_0, window_bounds = array<i64: 1, 16, 16, 128>}, {pipeline_mode = #tpu.pipeline_mode<synchronous>, transform_indices = @transform_1, window_bounds = array<i64: 1, 128>}, {pipeline_mode = #tpu.pipeline_mode<synchronous>, transform_indices = @transform_2, window_bounds = array<i64: 1, 128>}, {pipeline_mode = #tpu.pipeline_mode<synchronous>, transform_indices = @transform_3, window_bounds = array<i64: 3, 384, 128>}, {transform_indices = @transform_4, window_bounds = array<i64: 1, 16, 16, 128>}, {transform_indices = @transform_5, window_bounds = array<i64: 1, 1, 128>}, {transform_indices = @transform_6, window_bounds = array<i64: 1, 1, 128>}]} {
    %c0 = arith.constant 0 : index
    %c0_0 = arith.constant 0 : index
    %c0_1 = arith.constant 0 : index
    %c0_2 = arith.constant 0 : index
    %0 = vector.load %arg1[%c0, %c0_0, %c0_1, %c0_2] : memref<1x16x16x128xf32, #tpu.memory_space<vmem>>, vector<1x16x16x128xf32>
    %1 = vector.shape_cast %0 : vector<1x16x16x128xf32> to vector<16x16x128xf32>
    %c0_3 = arith.constant 0 : index
    %c0_4 = arith.constant 0 : index
    %2 = vector.load %arg2[%c0_3, %c0_4] : memref<1x128xf32, #tpu.memory_space<vmem>>, vector<1x128xf32>
    %3 = vector.shape_cast %2 : vector<1x128xf32> to vector<128xf32>
    %4 = vector.shape_cast %3 : vector<128xf32> to vector<1x1x128xf32>
    %5 = vector.broadcast %4 : vector<1x1x128xf32> to vector<16x16x128xf32>
    %6 = arith.mulf %1, %5 : vector<16x16x128xf32>
    %c0_5 = arith.constant 0 : index
    %c0_6 = arith.constant 0 : index
    %7 = vector.load %arg3[%c0_5, %c0_6] : memref<1x128xf32, #tpu.memory_space<vmem>>, vector<1x128xf32>
    %8 = vector.shape_cast %7 : vector<1x128xf32> to vector<128xf32>
    %9 = vector.shape_cast %8 : vector<128xf32> to vector<1x1x128xf32>
    %10 = vector.broadcast %9 : vector<1x1x128xf32> to vector<16x16x128xf32>
    %11 = arith.addf %6, %10 : vector<16x16x128xf32>
    %cst = arith.constant 0.000000e+00 : f32
    %12 = vector.broadcast %cst : f32 to vector<16x16x128xf32>
    %13 = arith.maximumf %11, %12 : vector<16x16x128xf32>
    %cst_7 = arith.constant 0.000000e+00 : bf16
    %14 = vector.broadcast %cst_7 : bf16 to vector<16x384xbf16>
    %c0_8 = arith.constant 0 : index
    %c0_9 = arith.constant 0 : index
    %c0_10 = arith.constant 0 : index
    %15 = vector.load %arg8[%c0_8, %c0_9, %c0_10] : memref<18x16x384xbf16, #tpu.memory_space<vmem>>, vector<1x16x384xbf16>
    %16 = vector.shape_cast %15 : vector<1x16x384xbf16> to vector<16x384xbf16>
    %17 = vector.shape_cast %14 : vector<16x384xbf16> to vector<1x16x384xbf16>
    tpu.vector_store %arg8[%c0_8, %c0_9, %c0_10], %17 {strides = array<i32>} : memref<18x16x384xbf16, #tpu.memory_space<vmem>>, vector<1x16x384xbf16>,
    %cst_11 = arith.constant 0.000000e+00 : bf16
    %18 = vector.broadcast %cst_11 : bf16 to vector<16x384xbf16>
    %c17 = arith.constant 17 : index
    %c0_12 = arith.constant 0 : index
    %c0_13 = arith.constant 0 : index
    %19 = vector.load %arg8[%c17, %c0_12, %c0_13] : memref<18x16x384xbf16, #tpu.memory_space<vmem>>, vector<1x16x384xbf16>
    %20 = vector.shape_cast %19 : vector<1x16x384xbf16> to vector<16x384xbf16>
    %21 = vector.shape_cast %18 : vector<16x384xbf16> to vector<1x16x384xbf16>
    tpu.vector_store %arg8[%c17, %c0_12, %c0_13], %21 {strides = array<i32>} : memref<18x16x384xbf16, #tpu.memory_space<vmem>>, vector<1x16x384xbf16>,
    %22 = tpu.iota {dimensions = array<i32: 1>} : vector<1x16x1xi32>
    %c0_i32 = arith.constant 0 : i32
    %23 = vector.broadcast %c0_i32 : i32 to vector<1x16x1xi32>
    %24 = arith.cmpi eq, %22, %23 : vector<1x16x1xi32>
    %c1_i32 = arith.constant 1 : i32
    %25 = tpu.dynamic_rotate %13 by %c1_i32 dim 1 : vector<16x16x128xf32>, i32 -> vector<16x16x128xf32>
    %cst_14 = arith.constant 0.000000e+00 : f32
    %26 = vector.shape_cast %24 : vector<1x16x1xi1> to vector<1x16x1xi1>
    %27 = vector.broadcast %26 : vector<1x16x1xi1> to vector<16x16x128xi1>
    %28 = vector.broadcast %cst_14 : f32 to vector<16x16x128xf32>
    %29 = arith.select %27, %28, %25 : vector<16x16x128xi1>, vector<16x16x128xf32>
    %c15_i32 = arith.constant 15 : i32
    %30 = vector.broadcast %c15_i32 : i32 to vector<1x16x1xi32>
    %31 = arith.cmpi eq, %22, %30 : vector<1x16x1xi32>
    %c15_i32_15 = arith.constant 15 : i32
    %32 = tpu.dynamic_rotate %13 by %c15_i32_15 dim 1 : vector<16x16x128xf32>, i32 -> vector<16x16x128xf32>
    %cst_16 = arith.constant 0.000000e+00 : f32
    %33 = vector.shape_cast %31 : vector<1x16x1xi1> to vector<1x16x1xi1>
    %34 = vector.broadcast %33 : vector<1x16x1xi1> to vector<16x16x128xi1>
    %35 = vector.broadcast %cst_16 : f32 to vector<16x16x128xf32>
    %36 = arith.select %34, %35, %32 : vector<16x16x128xi1>, vector<16x16x128xf32>
    %37 = arith.truncf %29 : vector<16x16x128xf32> to vector<16x16x128xbf16>
    %c1 = arith.constant 1 : index
    %c0_17 = arith.constant 0 : index
    %c0_18 = arith.constant 0 : index
    %38 = vector.load %arg8[%c1, %c0_17, %c0_18] : memref<18x16x384xbf16, #tpu.memory_space<vmem>>, vector<16x16x128xbf16>
    tpu.vector_store %arg8[%c1, %c0_17, %c0_18], %37 {strides = array<i32>} : memref<18x16x384xbf16, #tpu.memory_space<vmem>>, vector<16x16x128xbf16>,
    %39 = arith.truncf %13 : vector<16x16x128xf32> to vector<16x16x128xbf16>
    %c1_19 = arith.constant 1 : index
    %c0_20 = arith.constant 0 : index
    %c128 = arith.constant 128 : index
    %40 = vector.load %arg8[%c1_19, %c0_20, %c128] : memref<18x16x384xbf16, #tpu.memory_space<vmem>>, vector<16x16x128xbf16>
    tpu.vector_store %arg8[%c1_19, %c0_20, %c128], %39 {strides = array<i32>} : memref<18x16x384xbf16, #tpu.memory_space<vmem>>, vector<16x16x128xbf16>,
    %41 = arith.truncf %36 : vector<16x16x128xf32> to vector<16x16x128xbf16>
    %c1_21 = arith.constant 1 : index
    %c0_22 = arith.constant 0 : index
    %c256 = arith.constant 256 : index
    %42 = vector.load %arg8[%c1_21, %c0_22, %c256] : memref<18x16x384xbf16, #tpu.memory_space<vmem>>, vector<16x16x128xbf16>
    tpu.vector_store %arg8[%c1_21, %c0_22, %c256], %41 {strides = array<i32>} : memref<18x16x384xbf16, #tpu.memory_space<vmem>>, vector<16x16x128xbf16>,
    %c0_23 = arith.constant 0 : index
    %c0_24 = arith.constant 0 : index
    %c0_25 = arith.constant 0 : index
    %43 = vector.load %arg8[%c0_23, %c0_24, %c0_25] : memref<18x16x384xbf16, #tpu.memory_space<vmem>>, vector<16x16x384xbf16>
    %44 = vector.shape_cast %43 : vector<16x16x384xbf16> to vector<256x384xbf16>
    %c0_26 = arith.constant 0 : index
    %c0_27 = arith.constant 0 : index
    %c0_28 = arith.constant 0 : index
    %45 = vector.load %arg4[%c0_26, %c0_27, %c0_28] : memref<3x384x128xbf16, #tpu.memory_space<vmem>>, vector<1x384x128xbf16>
    %46 = vector.shape_cast %45 : vector<1x384x128xbf16> to vector<384x128xbf16>
    %cst_29 = arith.constant dense<0.000000e+00> : vector<256x128xf32>
    %47 = tpu.matmul %44, %46, %cst_29 {dimension_numbers = #tpu.dot_dimension_numbers<[1], [0], [0], [1], [0, 0, 1, 1], [], []>} : vector<256x384xbf16>, vector<384x128xbf16>, vector<256x128xf32> -> vector<256x128xf32>
    %c0_30 = arith.constant 0 : index
    %c0_31 = arith.constant 0 : index
    %48 = vector.load %arg9[%c0_30, %c0_31] : memref<256x128xf32, #tpu.memory_space<vmem>>, vector<256x128xf32>
    tpu.vector_store %arg9[%c0_30, %c0_31], %47 {strides = array<i32>} : memref<256x128xf32, #tpu.memory_space<vmem>>, vector<256x128xf32>,
    %c0_32 = arith.constant 0 : index
    %c0_33 = arith.constant 0 : index
    %49 = vector.load %arg9[%c0_32, %c0_33] : memref<256x128xf32, #tpu.memory_space<vmem>>, vector<256x128xf32>
    %c1_34 = arith.constant 1 : index
    %c0_35 = arith.constant 0 : index
    %c0_36 = arith.constant 0 : index
    %50 = vector.load %arg8[%c1_34, %c0_35, %c0_36] : memref<18x16x384xbf16, #tpu.memory_space<vmem>>, vector<16x16x384xbf16>
    %51 = vector.shape_cast %50 : vector<16x16x384xbf16> to vector<256x384xbf16>
    %c1_37 = arith.constant 1 : index
    %c0_38 = arith.constant 0 : index
    %c0_39 = arith.constant 0 : index
    %52 = vector.load %arg4[%c1_37, %c0_38, %c0_39] : memref<3x384x128xbf16, #tpu.memory_space<vmem>>, vector<1x384x128xbf16>
    %53 = vector.shape_cast %52 : vector<1x384x128xbf16> to vector<384x128xbf16>
    %cst_40 = arith.constant dense<0.000000e+00> : vector<256x128xf32>
    %54 = tpu.matmul %51, %53, %cst_40 {dimension_numbers = #tpu.dot_dimension_numbers<[1], [0], [0], [1], [0, 0, 1, 1], [], []>} : vector<256x384xbf16>, vector<384x128xbf16>, vector<256x128xf32> -> vector<256x128xf32>
    %55 = arith.addf %49, %54 : vector<256x128xf32>
    %c0_41 = arith.constant 0 : index
    %c0_42 = arith.constant 0 : index
    %56 = vector.load %arg9[%c0_41, %c0_42] : memref<256x128xf32, #tpu.memory_space<vmem>>, vector<256x128xf32>
    tpu.vector_store %arg9[%c0_41, %c0_42], %55 {strides = array<i32>} : memref<256x128xf32, #tpu.memory_space<vmem>>, vector<256x128xf32>,
    %c0_43 = arith.constant 0 : index
    %c0_44 = arith.constant 0 : index
    %57 = vector.load %arg9[%c0_43, %c0_44] : memref<256x128xf32, #tpu.memory_space<vmem>>, vector<256x128xf32>
    %c2 = arith.constant 2 : index
    %c0_45 = arith.constant 0 : index
    %c0_46 = arith.constant 0 : index
    %58 = vector.load %arg8[%c2, %c0_45, %c0_46] : memref<18x16x384xbf16, #tpu.memory_space<vmem>>, vector<16x16x384xbf16>
    %59 = vector.shape_cast %58 : vector<16x16x384xbf16> to vector<256x384xbf16>
    %c2_47 = arith.constant 2 : index
    %c0_48 = arith.constant 0 : index
    %c0_49 = arith.constant 0 : index
    %60 = vector.load %arg4[%c2_47, %c0_48, %c0_49] : memref<3x384x128xbf16, #tpu.memory_space<vmem>>, vector<1x384x128xbf16>
    %61 = vector.shape_cast %60 : vector<1x384x128xbf16> to vector<384x128xbf16>
    %cst_50 = arith.constant dense<0.000000e+00> : vector<256x128xf32>
    %62 = tpu.matmul %59, %61, %cst_50 {dimension_numbers = #tpu.dot_dimension_numbers<[1], [0], [0], [1], [0, 0, 1, 1], [], []>} : vector<256x384xbf16>, vector<384x128xbf16>, vector<256x128xf32> -> vector<256x128xf32>
    %63 = arith.addf %57, %62 : vector<256x128xf32>
    %c0_51 = arith.constant 0 : index
    %c0_52 = arith.constant 0 : index
    %64 = vector.load %arg9[%c0_51, %c0_52] : memref<256x128xf32, #tpu.memory_space<vmem>>, vector<256x128xf32>
    tpu.vector_store %arg9[%c0_51, %c0_52], %63 {strides = array<i32>} : memref<256x128xf32, #tpu.memory_space<vmem>>, vector<256x128xf32>,
    %c0_53 = arith.constant 0 : index
    %c0_54 = arith.constant 0 : index
    %65 = vector.load %arg9[%c0_53, %c0_54] : memref<256x128xf32, #tpu.memory_space<vmem>>, vector<256x128xf32>
    %66 = vector.shape_cast %65 : vector<256x128xf32> to vector<16x16x128xf32>
    %c0_55 = arith.constant 0 : index
    %c0_56 = arith.constant 0 : index
    %c0_57 = arith.constant 0 : index
    %c0_58 = arith.constant 0 : index
    %67 = vector.load %arg5[%c0_55, %c0_56, %c0_57, %c0_58] : memref<1x16x16x128xf32, #tpu.memory_space<vmem>>, vector<1x16x16x128xf32>
    %68 = vector.shape_cast %67 : vector<1x16x16x128xf32> to vector<16x16x128xf32>
    %69 = vector.shape_cast %66 : vector<16x16x128xf32> to vector<1x16x16x128xf32>
    tpu.vector_store %arg5[%c0_55, %c0_56, %c0_57, %c0_58], %69 {strides = array<i32>} : memref<1x16x16x128xf32, #tpu.memory_space<vmem>>, vector<1x16x16x128xf32>,
    %cst_59 = arith.constant dense<0.000000e+00> : vector<128xf32>
    %70 = vector.multi_reduction <add>, %65, %cst_59 [0] : vector<256x128xf32> to vector<128xf32>
    %71 = vector.shape_cast %70 : vector<128xf32> to vector<1x128xf32>
    %c0_60 = arith.constant 0 : index
    %c0_61 = arith.constant 0 : index
    %c0_62 = arith.constant 0 : index
    %72 = vector.load %arg6[%c0_60, %c0_61, %c0_62] : memref<1x1x128xf32, #tpu.memory_space<vmem>>, vector<1x1x128xf32>
    %73 = vector.shape_cast %72 : vector<1x1x128xf32> to vector<1x128xf32>
    %74 = vector.shape_cast %71 : vector<1x128xf32> to vector<1x1x128xf32>
    tpu.vector_store %arg6[%c0_60, %c0_61, %c0_62], %74 {strides = array<i32>} : memref<1x1x128xf32, #tpu.memory_space<vmem>>, vector<1x1x128xf32>,
    %75 = arith.mulf %65, %65 : vector<256x128xf32>
    %cst_63 = arith.constant dense<0.000000e+00> : vector<128xf32>
    %76 = vector.multi_reduction <add>, %75, %cst_63 [0] : vector<256x128xf32> to vector<128xf32>
    %77 = vector.shape_cast %76 : vector<128xf32> to vector<1x128xf32>
    %c0_64 = arith.constant 0 : index
    %c0_65 = arith.constant 0 : index
    %c0_66 = arith.constant 0 : index
    %78 = vector.load %arg7[%c0_64, %c0_65, %c0_66] : memref<1x1x128xf32, #tpu.memory_space<vmem>>, vector<1x1x128xf32>
    %79 = vector.shape_cast %78 : vector<1x1x128xf32> to vector<1x128xf32>
    %80 = vector.shape_cast %77 : vector<1x128xf32> to vector<1x1x128xf32>
    tpu.vector_store %arg7[%c0_64, %c0_65, %c0_66], %80 {strides = array<i32>} : memref<1x1x128xf32, #tpu.memory_space<vmem>>, vector<1x1x128xf32>,
    return
  }
  func.func @transform_0(%arg0: i32) -> (i32, i32, i32, i32) {
    %c0_i32 = arith.constant 0 : i32
    %c0_i32_0 = arith.constant 0 : i32
    %c0_i32_1 = arith.constant 0 : i32
    %c0_i32_2 = arith.constant 0 : i32
    return %arg0, %c0_i32, %c0_i32_0, %c0_i32_1 : i32, i32, i32, i32
  }
  func.func @transform_1(%arg0: i32) -> (i32, i32) {
    %c0_i32 = arith.constant 0 : i32
    %c0_i32_0 = arith.constant 0 : i32
    %c0_i32_1 = arith.constant 0 : i32
    return %c0_i32, %c0_i32_0 : i32, i32
  }
  func.func @transform_2(%arg0: i32) -> (i32, i32) {
    %c0_i32 = arith.constant 0 : i32
    %c0_i32_0 = arith.constant 0 : i32
    %c0_i32_1 = arith.constant 0 : i32
    return %c0_i32, %c0_i32_0 : i32, i32
  }
  func.func @transform_3(%arg0: i32) -> (i32, i32, i32) {
    %c0_i32 = arith.constant 0 : i32
    %c0_i32_0 = arith.constant 0 : i32
    %c0_i32_1 = arith.constant 0 : i32
    %c0_i32_2 = arith.constant 0 : i32
    return %c0_i32, %c0_i32_0, %c0_i32_1 : i32, i32, i32
  }
  func.func @transform_4(%arg0: i32) -> (i32, i32, i32, i32) {
    %c0_i32 = arith.constant 0 : i32
    %c0_i32_0 = arith.constant 0 : i32
    %c0_i32_1 = arith.constant 0 : i32
    %c0_i32_2 = arith.constant 0 : i32
    return %arg0, %c0_i32, %c0_i32_0, %c0_i32_1 : i32, i32, i32, i32
  }
  func.func @transform_5(%arg0: i32) -> (i32, i32, i32) {
    %c0_i32 = arith.constant 0 : i32
    %c0_i32_0 = arith.constant 0 : i32
    %c0_i32_1 = arith.constant 0 : i32
    return %arg0, %c0_i32, %c0_i32_0 : i32, i32, i32
  }
  func.func @transform_6(%arg0: i32) -> (i32, i32, i32) {
    %c0_i32 = arith.constant 0 : i32
    %c0_i32_0 = arith.constant 0 : i32
    %c0_i32_1 = arith.constant 0 : i32
    return %arg0, %c0_i32, %c0_i32_0 : i32, i32, i32
  }
}

</mosaic_0001>

<llo_original>
// kernel: double_conv_forward.5
$region0: #{double_conv_forward.5}
  #allocation0 [shape = 'u32[]', space=smem, size = 0x4, offset = 0x4, fixed_abs, tag = 'smem constant byte address 0x4 - core index']
  #allocation1 [shape = 'u32[72,128]{1,0:T(1,128)}', space=vmem, size = 0x9000, scoped, tag = 'internal scratch']
  %s0 = inlined_call_operand.vmem [shape: f32[512,128], index: 0, kind: input, shape index: {}]
  %s1 = inlined_call_operand.vmem [shape: f32[1,128], index: 1, kind: input, shape index: {}]
  %s2 = inlined_call_operand.vmem [shape: f32[1,128], index: 2, kind: input, shape index: {}]
  %s3 = inlined_call_operand.vmem [shape: f32[512,128], index: 3, kind: output, shape index: {}]
  %s4 = sld [smem:[#allocation0]]
  $region22: #{double_conv_forward.5} parent=0
    _
  %s6 = ssub.s32 1, %s4
  %s7 = scalar_select 0, %s6, %s4
  // Predicated region
  $region2: #{double_conv_forward.5} parent=0 // pred_check
    _
  $region3: #{double_conv_forward.5} parent=0 // pred_check_branch
    %9 = sbr.rel (0) target = $region5
  $region4: #{double_conv_forward.5} parent=0 // pred_region
    _
  $region5: #{double_conv_forward.5} parent=0 // pred_fallthru
    _
  // Predicated region
  $region6: #{double_conv_forward.5} parent=0 // pred_check
    _
  $region7: #{double_conv_forward.5} parent=0 // pred_check_branch
    %11 = sbr.rel (0) target = $region9
  $region8: #{double_conv_forward.5} parent=0 // pred_region
    _
  $region9: #{double_conv_forward.5} parent=0 // pred_fallthru
    _
  // Predicated region
  $region10: #{double_conv_forward.5} parent=0 // pred_check
    _
  $region11: #{double_conv_forward.5} parent=0 // pred_check_branch
    %13 = sbr.rel (0) target = $region13
  $region12: #{double_conv_forward.5} parent=0 // pred_region
    _
  $region13: #{double_conv_forward.5} parent=0 // pred_fallthru
    _
  %v14 = vld [vmem:[%s0] sm:$0xff]
  %v15 = vld [vmem:[%s0 + $0x8] sm:$0xff]
  %v16 = vld [vmem:[%s0 + $0x10] sm:$0xff]
  %v17 = vld [vmem:[%s0 + $0x18] sm:$0xff]
  %v18 = vld [vmem:[%s0 + $0x20] sm:$0xff]
  %v19 = vld [vmem:[%s0 + $0x28] sm:$0xff]
  %v20 = vld [vmem:[%s0 + $0x30] sm:$0xff]
  %v21 = vld [vmem:[%s0 + $0x38] sm:$0xff]
  %v22 = vld [vmem:[%s0 + $0x40] sm:$0xff]
  %v23 = vld [vmem:[%s0 + $0x48] sm:$0xff]
  %v24 = vld [vmem:[%s0 + $0x50] sm:$0xff]
  %v25 = vld [vmem:[%s0 + $0x58] sm:$0xff]
  %v26 = vld [vmem:[%s0 + $0x60] sm:$0xff]
  %v27 = vld [vmem:[%s0 + $0x68] sm:$0xff]
  %v28 = vld [vmem:[%s0 + $0x70] sm:$0xff]
  %v29 = vld [vmem:[%s0 + $0x78] sm:$0xff]
  %v30 = vld [vmem:[%s0 + $0x80] sm:$0xff]
  %v31 = vld [vmem:[%s0 + $0x88] sm:$0xff]
  %v32 = vld [vmem:[%s0 + $0x90] sm:$0xff]
  %v33 = vld [vmem:[%s0 + $0x98] sm:$0xff]
  %v34 = vld [vmem:[%s0 + $0xa0] sm:$0xff]
  %v35 = vld [vmem:[%s0 + $0xa8] sm:$0xff]
  %v36 = vld [vmem:[%s0 + $0xb0] sm:$0xff]
  %v37 = vld [vmem:[%s0 + $0xb8] sm:$0xff]
  %v38 = vld [vmem:[%s0 + $0xc0] sm:$0xff]
  %v39 = vld [vmem:[%s0 + $0xc8] sm:$0xff]
  %v40 = vld [vmem:[%s0 + $0xd0] sm:$0xff]
  %v41 = vld [vmem:[%s0 + $0xd8] sm:$0xff]
  %v42 = vld [vmem:[%s0 + $0xe0] sm:$0xff]
  %v43 = vld [vmem:[%s0 + $0xe8] sm:$0xff]
  %v44 = vld [vmem:[%s0 + $0xf0] sm:$0xff]
  %v45 = vld [vmem:[%s0 + $0xf8] sm:$0xff]
  %v46 = vld [vmem:[%s0 + $0x100] sm:$0xff]
  %v47 = vld [vmem:[%s0 + $0x108] sm:$0xff]
  %v48 = vld [vmem:[%s0 + $0x110] sm:$0xff]
  %v49 = vld [vmem:[%s0 + $0x118] sm:$0xff]
  %v50 = vld [vmem:[%s0 + $0x120] sm:$0xff]
  %v51 = vld [vmem:[%s0 + $0x128] sm:$0xff]
  %v52 = vld [vmem:[%s0 + $0x130] sm:$0xff]
  %v53 = vld [vmem:[%s0 + $0x138] sm:$0xff]
  %v54 = vld [vmem:[%s0 + $0x140] sm:$0xff]
  %v55 = vld [vmem:[%s0 + $0x148] sm:$0xff]
  %v56 = vld [vmem:[%s0 + $0x150] sm:$0xff]
  %v57 = vld [vmem:[%s0 + $0x158] sm:$0xff]
  %v58 = vld [vmem:[%s0 + $0x160] sm:$0xff]
  %v59 = vld [vmem:[%s0 + $0x168] sm:$0xff]
  %v60 = vld [vmem:[%s0 + $0x170] sm:$0xff]
  %v61 = vld [vmem:[%s0 + $0x178] sm:$0xff]
  %v62 = vld [vmem:[%s0 + $0x180] sm:$0xff]
  %v63 = vld [vmem:[%s0 + $0x188] sm:$0xff]
  %v64 = vld [vmem:[%s0 + $0x190] sm:$0xff]
  %v65 = vld [vmem:[%s0 + $0x198] sm:$0xff]
  %v66 = vld [vmem:[%s0 + $0x1a0] sm:$0xff]
  %v67 = vld [vmem:[%s0 + $0x1a8] sm:$0xff]
  %v68 = vld [vmem:[%s0 + $0x1b0] sm:$0xff]
  %v69 = vld [vmem:[%s0 + $0x1b8] sm:$0xff]
  %v70 = vld [vmem:[%s0 + $0x1c0] sm:$0xff]
  %v71 = vld [vmem:[%s0 + $0x1c8] sm:$0xff]
  %v72 = vld [vmem:[%s0 + $0x1d0] sm:$0xff]
  %v73 = vld [vmem:[%s0 + $0x1d8] sm:$0xff]
  %v74 = vld [vmem:[%s0 + $0x1e0] sm:$0xff]
  %v75 = vld [vmem:[%s0 + $0x1e8] sm:$0xff]
  %v76 = vld [vmem:[%s0 + $0x1f0] sm:$0xff]
  %v77 = vld [vmem:[%s0 + $0x1f8] sm:$0xff]
  %v78 = vld [vmem:[%s1] sm:$0x1]
  %v80 = vperm.slane %v78, 0
  %v82 = vmul.f32 %v14, %v80
  %v83 = vmul.f32 %v15, %v80
  %v84 = vmul.f32 %v16, %v80
  %v85 = vmul.f32 %v17, %v80
  %v86 = vmul.f32 %v18, %v80
  %v87 = vmul.f32 %v19, %v80
  %v88 = vmul.f32 %v20, %v80
  %v89 = vmul.f32 %v21, %v80
  %v90 = vmul.f32 %v22, %v80
  %v91 = vmul.f32 %v23, %v80
  %v92 = vmul.f32 %v24, %v80
  %v93 = vmul.f32 %v25, %v80
  %v94 = vmul.f32 %v26, %v80
  %v95 = vmul.f32 %v27, %v80
  %v96 = vmul.f32 %v28, %v80
  %v97 = vmul.f32 %v29, %v80
  %v98 = vmul.f32 %v30, %v80
  %v99 = vmul.f32 %v31, %v80
  %v100 = vmul.f32 %v32, %v80
  %v101 = vmul.f32 %v33, %v80
  %v102 = vmul.f32 %v34, %v80
  %v103 = vmul.f32 %v35, %v80
  %v104 = vmul.f32 %v36, %v80
  %v105 = vmul.f32 %v37, %v80
  %v106 = vmul.f32 %v38, %v80
  %v107 = vmul.f32 %v39, %v80
  %v108 = vmul.f32 %v40, %v80
  %v109 = vmul.f32 %v41, %v80
  %v110 = vmul.f32 %v42, %v80
  %v111 = vmul.f32 %v43, %v80
  %v112 = vmul.f32 %v44, %v80
  %v113 = vmul.f32 %v45, %v80
  %v114 = vmul.f32 %v46, %v80
  %v115 = vmul.f32 %v47, %v80
  %v116 = vmul.f32 %v48, %v80
  %v117 = vmul.f32 %v49, %v80
  %v118 = vmul.f32 %v50, %v80
  %v119 = vmul.f32 %v51, %v80
  %v120 = vmul.f32 %v52, %v80
  %v121 = vmul.f32 %v53, %v80
  %v122 = vmul.f32 %v54, %v80
  %v123 = vmul.f32 %v55, %v80
  %v124 = vmul.f32 %v56, %v80
  %v125 = vmul.f32 %v57, %v80
  %v126 = vmul.f32 %v58, %v80
  %v127 = vmul.f32 %v59, %v80
  %v128 = vmul.f32 %v60, %v80
  %v129 = vmul.f32 %v61, %v80
  %v130 = vmul.f32 %v62, %v80
  %v131 = vmul.f32 %v63, %v80
  %v132 = vmul.f32 %v64, %v80
  %v133 = vmul.f32 %v65, %v80
  %v134 = vmul.f32 %v66, %v80
  %v135 = vmul.f32 %v67, %v80
  %v136 = vmul.f32 %v68, %v80
  %v137 = vmul.f32 %v69, %v80
  %v138 = vmul.f32 %v70, %v80
  %v139 = vmul.f32 %v71, %v80
  %v140 = vmul.f32 %v72, %v80
  %v141 = vmul.f32 %v73, %v80
  %v142 = vmul.f32 %v74, %v80
  %v143 = vmul.f32 %v75, %v80
  %v144 = vmul.f32 %v76, %v80
  %v145 = vmul.f32 %v77, %v80
  %v146 = vld [vmem:[%s2] sm:$0x1]
  %v148 = vperm.slane %v146, 0
  %v150 = vadd.f32 %v82, %v148
  %v151 = vadd.f32 %v83, %v148
  %v152 = vadd.f32 %v84, %v148
  %v153 = vadd.f32 %v85, %v148
  %v154 = vadd.f32 %v86, %v148
  %v155 = vadd.f32 %v87, %v148
  %v156 = vadd.f32 %v88, %v148
  %v157 = vadd.f32 %v89, %v148
  %v158 = vadd.f32 %v90, %v148
  %v159 = vadd.f32 %v91, %v148
  %v160 = vadd.f32 %v92, %v148
  %v161 = vadd.f32 %v93, %v148
  %v162 = vadd.f32 %v94, %v148
  %v163 = vadd.f32 %v95, %v148
  %v164 = vadd.f32 %v96, %v148
  %v165 = vadd.f32 %v97, %v148
  %v166 = vadd.f32 %v98, %v148
  %v167 = vadd.f32 %v99, %v148
  %v168 = vadd.f32 %v100, %v148
  %v169 = vadd.f32 %v101, %v148
  %v170 = vadd.f32 %v102, %v148
  %v171 = vadd.f32 %v103, %v148
  %v172 = vadd.f32 %v104, %v148
  %v173 = vadd.f32 %v105, %v148
  %v174 = vadd.f32 %v106, %v148
  %v175 = vadd.f32 %v107, %v148
  %v176 = vadd.f32 %v108, %v148
  %v177 = vadd.f32 %v109, %v148
  %v178 = vadd.f32 %v110, %v148
  %v179 = vadd.f32 %v111, %v148
  %v180 = vadd.f32 %v112, %v148
  %v181 = vadd.f32 %v113, %v148
  %v182 = vadd.f32 %v114, %v148
  %v183 = vadd.f32 %v115, %v148
  %v184 = vadd.f32 %v116, %v148
  %v185 = vadd.f32 %v117, %v148
  %v186 = vadd.f32 %v118, %v148
  %v187 = vadd.f32 %v119, %v148
  %v188 = vadd.f32 %v120, %v148
  %v189 = vadd.f32 %v121, %v148
  %v190 = vadd.f32 %v122, %v148
  %v191 = vadd.f32 %v123, %v148
  %v192 = vadd.f32 %v124, %v148
  %v193 = vadd.f32 %v125, %v148
  %v194 = vadd.f32 %v126, %v148
  %v195 = vadd.f32 %v127, %v148
  %v196 = vadd.f32 %v128, %v148
  %v197 = vadd.f32 %v129, %v148
  %v198 = vadd.f32 %v130, %v148
  %v199 = vadd.f32 %v131, %v148
  %v200 = vadd.f32 %v132, %v148
  %v201 = vadd.f32 %v133, %v148
  %v202 = vadd.f32 %v134, %v148
  %v203 = vadd.f32 %v135, %v148
  %v204 = vadd.f32 %v136, %v148
  %v205 = vadd.f32 %v137, %v148
  %v206 = vadd.f32 %v138, %v148
  %v207 = vadd.f32 %v139, %v148
  %v208 = vadd.f32 %v140, %v148
  %v209 = vadd.f32 %v141, %v148
  %v210 = vadd.f32 %v142, %v148
  %v211 = vadd.f32 %v143, %v148
  %v212 = vadd.f32 %v144, %v148
  %v213 = vadd.f32 %v145, %v148
  %v214 = vmax.f32 %v150, 0.0
  %v215 = vmax.f32 %v151, 0.0
  %v216 = vmax.f32 %v152, 0.0
  %v217 = vmax.f32 %v153, 0.0
  %v218 = vmax.f32 %v154, 0.0
  %v219 = vmax.f32 %v155, 0.0
  %v220 = vmax.f32 %v156, 0.0
  %v221 = vmax.f32 %v157, 0.0
  %v222 = vmax.f32 %v158, 0.0
  %v223 = vmax.f32 %v159, 0.0
  %v224 = vmax.f32 %v160, 0.0
  %v225 = vmax.f32 %v161, 0.0
  %v226 = vmax.f32 %v162, 0.0
  %v227 = vmax.f32 %v163, 0.0
  %v228 = vmax.f32 %v164, 0.0
  %v229 = vmax.f32 %v165, 0.0
  %v230 = vmax.f32 %v166, 0.0
  %v231 = vmax.f32 %v167, 0.0
  %v232 = vmax.f32 %v168, 0.0
  %v233 = vmax.f32 %v169, 0.0
  %v234 = vmax.f32 %v170, 0.0
  %v235 = vmax.f32 %v171, 0.0
  %v236 = vmax.f32 %v172, 0.0
  %v237 = vmax.f32 %v173, 0.0
  %v238 = vmax.f32 %v174, 0.0
  %v239 = vmax.f32 %v175, 0.0
  %v240 = vmax.f32 %v176, 0.0
  %v241 = vmax.f32 %v177, 0.0
  %v242 = vmax.f32 %v178, 0.0
  %v243 = vmax.f32 %v179, 0.0
  %v244 = vmax.f32 %v180, 0.0
  %v245 = vmax.f32 %v181, 0.0
  %v246 = vmax.f32 %v182, 0.0
  %v247 = vmax.f32 %v183, 0.0
  %v248 = vmax.f32 %v184, 0.0
  %v249 = vmax.f32 %v185, 0.0
  %v250 = vmax.f32 %v186, 0.0
  %v251 = vmax.f32 %v187, 0.0
  %v252 = vmax.f32 %v188, 0.0
  %v253 = vmax.f32 %v189, 0.0
  %v254 = vmax.f32 %v190, 0.0
  %v255 = vmax.f32 %v191, 0.0
  %v256 = vmax.f32 %v192, 0.0
  %v257 = vmax.f32 %v193, 0.0
  %v258 = vmax.f32 %v194, 0.0
  %v259 = vmax.f32 %v195, 0.0
  %v260 = vmax.f32 %v196, 0.0
  %v261 = vmax.f32 %v197, 0.0
  %v262 = vmax.f32 %v198, 0.0
  %v263 = vmax.f32 %v199, 0.0
  %v264 = vmax.f32 %v200, 0.0
  %v265 = vmax.f32 %v201, 0.0
  %v266 = vmax.f32 %v202, 0.0
  %v267 = vmax.f32 %v203, 0.0
  %v268 = vmax.f32 %v204, 0.0
  %v269 = vmax.f32 %v205, 0.0
  %v270 = vmax.f32 %v206, 0.0
  %v271 = vmax.f32 %v207, 0.0
  %v272 = vmax.f32 %v208, 0.0
  %v273 = vmax.f32 %v209, 0.0
  %v274 = vmax.f32 %v210, 0.0
  %v275 = vmax.f32 %v211, 0.0
  %v276 = vmax.f32 %v212, 0.0
  %v277 = vmax.f32 %v213, 0.0
  %278 = vst [vmem:[%s3] sm:$0xff] %v214
  %279 = vst [vmem:[%s3 + $0x8] sm:$0xff] %v215
  %280 = vst [vmem:[%s3 + $0x10] sm:$0xff] %v216
  %281 = vst [vmem:[%s3 + $0x18] sm:$0xff] %v217
  %282 = vst [vmem:[%s3 + $0x20] sm:$0xff] %v218
  %283 = vst [vmem:[%s3 + $0x28] sm:$0xff] %v219
  %284 = vst [vmem:[%s3 + $0x30] sm:$0xff] %v220
  %285 = vst [vmem:[%s3 + $0x38] sm:$0xff] %v221
  %286 = vst [vmem:[%s3 + $0x40] sm:$0xff] %v222
  %287 = vst [vmem:[%s3 + $0x48] sm:$0xff] %v223
  %288 = vst [vmem:[%s3 + $0x50] sm:$0xff] %v224
  %289 = vst [vmem:[%s3 + $0x58] sm:$0xff] %v225
  %290 = vst [vmem:[%s3 + $0x60] sm:$0xff] %v226
  %291 = vst [vmem:[%s3 + $0x68] sm:$0xff] %v227
  %292 = vst [vmem:[%s3 + $0x70] sm:$0xff] %v228
  %293 = vst [vmem:[%s3 + $0x78] sm:$0xff] %v229
  %294 = vst [vmem:[%s3 + $0x80] sm:$0xff] %v230
  %295 = vst [vmem:[%s3 + $0x88] sm:$0xff] %v231
  %296 = vst [vmem:[%s3 + $0x90] sm:$0xff] %v232
  %297 = vst [vmem:[%s3 + $0x98] sm:$0xff] %v233
  %298 = vst [vmem:[%s3 + $0xa0] sm:$0xff] %v234
  %299 = vst [vmem:[%s3 + $0xa8] sm:$0xff] %v235
  %300 = vst [vmem:[%s3 + $0xb0] sm:$0xff] %v236
  %301 = vst [vmem:[%s3 + $0xb8] sm:$0xff] %v237
  %302 = vst [vmem:[%s3 + $0xc0] sm:$0xff] %v238
  %303 = vst [vmem:[%s3 + $0xc8] sm:$0xff] %v239
  %304 = vst [vmem:[%s3 + $0xd0] sm:$0xff] %v240
  %305 = vst [vmem:[%s3 + $0xd8] sm:$0xff] %v241
  %306 = vst [vmem:[%s3 + $0xe0] sm:$0xff] %v242
  %307 = vst [vmem:[%s3 + $0xe8] sm:$0xff] %v243
  %308 = vst [vmem:[%s3 + $0xf0] sm:$0xff] %v244
  %309 = vst [vmem:[%s3 + $0xf8] sm:$0xff] %v245
  %310 = vst [vmem:[%s3 + $0x100] sm:$0xff] %v246
  %311 = vst [vmem:[%s3 + $0x108] sm:$0xff] %v247
  %312 = vst [vmem:[%s3 + $0x110] sm:$0xff] %v248
  %313 = vst [vmem:[%s3 + $0x118] sm:$0xff] %v249
  %314 = vst [vmem:[%s3 + $0x120] sm:$0xff] %v250
  %315 = vst [vmem:[%s3 + $0x128] sm:$0xff] %v251
  %316 = vst [vmem:[%s3 + $0x130] sm:$0xff] %v252
  %317 = vst [vmem:[%s3 + $0x138] sm:$0xff] %v253
  %318 = vst [vmem:[%s3 + $0x140] sm:$0xff] %v254
  %319 = vst [vmem:[%s3 + $0x148] sm:$0xff] %v255
  %320 = vst [vmem:[%s3 + $0x150] sm:$0xff] %v256
  %321 = vst [vmem:[%s3 + $0x158] sm:$0xff] %v257
  %322 = vst [vmem:[%s3 + $0x160] sm:$0xff] %v258
  %323 = vst [vmem:[%s3 + $0x168] sm:$0xff] %v259
  %324 = vst [vmem:[%s3 + $0x170] sm:$0xff] %v260
  %325 = vst [vmem:[%s3 + $0x178] sm:$0xff] %v261
  %326 = vst [vmem:[%s3 + $0x180] sm:$0xff] %v262
  %327 = vst [vmem:[%s3 + $0x188] sm:$0xff] %v263
  %328 = vst [vmem:[%s3 + $0x190] sm:$0xff] %v264
  %329 = vst [vmem:[%s3 + $0x198] sm:$0xff] %v265
  %330 = vst [vmem:[%s3 + $0x1a0] sm:$0xff] %v266
  %331 = vst [vmem:[%s3 + $0x1a8] sm:$0xff] %v267
  %332 = vst [vmem:[%s3 + $0x1b0] sm:$0xff] %v268
  %333 = vst [vmem:[%s3 + $0x1b8] sm:$0xff] %v269
  %334 = vst [vmem:[%s3 + $0x1c0] sm:$0xff] %v270
  %335 = vst [vmem:[%s3 + $0x1c8] sm:$0xff] %v271
  %336 = vst [vmem:[%s3 + $0x1d0] sm:$0xff] %v272
  %337 = vst [vmem:[%s3 + $0x1d8] sm:$0xff] %v273
  %338 = vst [vmem:[%s3 + $0x1e0] sm:$0xff] %v274
  %339 = vst [vmem:[%s3 + $0x1e8] sm:$0xff] %v275
  %340 = vst [vmem:[%s3 + $0x1f0] sm:$0xff] %v276
  %341 = vst [vmem:[%s3 + $0x1f8] sm:$0xff] %v277
  // Predicated region
  $region14: #{double_conv_forward.5} parent=0 // pred_check
    _
  $region15: #{double_conv_forward.5} parent=0 // pred_check_branch
    %343 = sbr.rel (0) target = $region17
  $region16: #{double_conv_forward.5} parent=0 // pred_region
    _
  $region17: #{double_conv_forward.5} parent=0 // pred_fallthru
    _
  // Predicated region
  $region18: #{double_conv_forward.5} parent=0 // pred_check
    _
  $region19: #{double_conv_forward.5} parent=0 // pred_check_branch
    %345 = sbr.rel (0) target = $region21
  $region20: #{double_conv_forward.5} parent=0 // pred_region
    _
  $region21: #{double_conv_forward.5} parent=0 // pred_fallthru
    _

// kernel: double_conv_forward.3
$region0: #{double_conv_forward.3}
  #allocation0 [shape = 'u32[]', space=smem, size = 0x4, offset = 0x4, fixed_abs, tag = 'smem constant byte address 0x4 - core index']
  #allocation1 [shape = 'u32[72,128]{1,0:T(1,128)}', space=vmem, size = 0x9000, scoped, tag = 'internal scratch']
  #allocation2 [shape = 'bf16[18,16,384]{2,1,0:T(8,128)(2,1)}', space=vmem, size = 0x36000, scoped, tag = 'scratch operand']
  #allocation3 [shape = 'f32[256,128]{1,0:T(8,128)}', space=vmem, size = 0x20000, scoped, tag = 'scratch operand']
  %s0 = inlined_call_operand.vmem [shape: f32[2,16,16,128], index: 0, kind: input, shape index: {}]
  %s1 = inlined_call_operand.vmem [shape: bf16[3,384,128], index: 1, kind: input, shape index: {}]
  %s2 = inlined_call_operand.vmem [shape: f32[2,16,16,128], index: 2, kind: output, shape index: {0}]
  %s3 = inlined_call_operand.vmem [shape: f32[2,1,128], index: 3, kind: output, shape index: {1}]
  %s4 = inlined_call_operand.vmem [shape: f32[2,1,128], index: 4, kind: output, shape index: {2}]
  %5 = xla_tuple %s2, %s3, %s4
  %s6 = sld [smem:[#allocation0]]
  $region57: #{double_conv_forward.3} parent=0
    _
  %s8 = ssub.s32 1, %s6
  %s9 = scalar_select 0, %s8, %s6
  loop: start=0, step=1, limit=4
  $region2: #{double_conv_forward.3} parent=0 // loop_pre_header
    _
  $region3: #{double_conv_forward.3} parent=0 // loop_header
    %s11 = sphi 0, %s15
    %p12 = scmp.ge.s32.totalorder %s11, 4
    %s21 = sphi 0, %s23
    %s24 = sphi 0, %s21
    %s25 = sphi 0, %s24
    %s41 = sphi 0, %s25
    %s45 = sphi 0, %s45
    %s47 = sphi 0, %s45
    %s48 = sphi 0, %s47
    %s62 = sphi 0, %s48
    %s68 = sphi 0, %s70
    %s71 = sphi 0, %s68
    %s72 = sphi 0, %s71
    %s88 = sphi 0, %s72
    %s94 = sphi 0, %s96
    %s97 = sphi 0, %s94
    %s98 = sphi 0, %s97
    %s114 = sphi 0, %s98
    %s120 = sphi 0, %s122
    %s123 = sphi 0, %s120
    %s124 = sphi 0, %s123
    %s140 = sphi 0, %s124
  $region4: #{double_conv_forward.3} parent=0 // loop_header_branch
    %14 = sbr.rel (%p12) target = $region8
  $region5: #{double_conv_forward.3} parent=0 // loop_body
    %s16 = ssub.s32 %s11, 1
    %s17 = ssub.s32 %s11, 2
    %s18 = sadd.s32 %s11, 1
    %s19 = ssub.s32 %s11, %s18
    %p20 = scmp.eq.s32.totalorder %s19, 0
    %s22 = sadd.s32 %s21, 1
    %s23 = scalar_select %p20, %s21, %s22
    %p26 = pneg %p20
    %p27 = scmp.eq.s32.totalorder %s11, 1
    %p28 = por %p26, %p27
    %p29 = scmp.ne.s32.totalorder %s21, %s24
    %p30 = scmp.eq.s32.totalorder %s11, 0
    %p31 = por %p29, %p30
    %p32 = scmp.ne.s32.totalorder %s21, %s24
    %p33 = scmp.eq.s32.totalorder %s16, 1
    %p34 = por %p32, %p33
    %p35 = scmp.ne.s32.totalorder %s24, %s25
    %p36 = scmp.eq.s32.totalorder %s16, 0
    %p37 = por %p35, %p36
    %p38 = scmp.ne.s32.totalorder %s24, %s25
    %p39 = scmp.eq.s32.totalorder %s17, 1
    %p40 = por %p38, %p39
    %p42 = scmp.ne.s32.totalorder %s25, %s41
    %p43 = scmp.eq.s32.totalorder %s17, 0
    %p44 = por %p42, %p43
    %s46 = sadd.s32 %s45, 1
    %p49 = scmp.eq.s32.totalorder %s11, 1
    %p50 = scmp.ne.s32.totalorder %s45, %s47
    %p51 = scmp.eq.s32.totalorder %s11, 0
    %p52 = por %p50, %p51
    %p53 = scmp.ne.s32.totalorder %s45, %s47
    %p54 = scmp.eq.s32.totalorder %s16, 1
    %p55 = por %p53, %p54
    %p56 = scmp.ne.s32.totalorder %s47, %s48
    %p57 = scmp.eq.s32.totalorder %s16, 0
    %p58 = por %p56, %p57
    %p59 = scmp.ne.s32.totalorder %s47, %s48
    %p60 = scmp.eq.s32.totalorder %s17, 1
    %p61 = por %p59, %p60
    %p63 = scmp.ne.s32.totalorder %s48, %s62
    %p64 = scmp.eq.s32.totalorder %s17, 0
    %p65 = por %p63, %p64
    %s66 = ssub.s32 %s11, %s18
    %p67 = scmp.eq.s32.totalorder %s66, 0
    %s69 = sadd.s32 %s68, 1
    %s70 = scalar_select %p67, %s68, %s69
    %p73 = pneg %p67
    %p74 = scmp.eq.s32.totalorder %s11, 1
    %p75 = por %p73, %p74
    %p76 = scmp.ne.s32.totalorder %s68, %s71
    %p77 = scmp.eq.s32.totalorder %s11, 0
    %p78 = por %p76, %p77
    %p79 = scmp.ne.s32.totalorder %s68, %s71
    %p80 = scmp.eq.s32.totalorder %s16, 1
    %p81 = por %p79, %p80
    %p82 = scmp.ne.s32.totalorder %s71, %s72
    %p83 = scmp.eq.s32.totalorder %s16, 0
    %p84 = por %p82, %p83
    %p85 = scmp.ne.s32.totalorder %s71, %s72
    %p86 = scmp.eq.s32.totalorder %s17, 1
    %p87 = por %p85, %p86
    %p89 = scmp.ne.s32.totalorder %s72, %s88
    %p90 = scmp.eq.s32.totalorder %s17, 0
    %p91 = por %p89, %p90
    %s92 = ssub.s32 %s11, %s18
    %p93 = scmp.eq.s32.totalorder %s92, 0
    %s95 = sadd.s32 %s94, 1
    %s96 = scalar_select %p93, %s94, %s95
    %p99 = pneg %p93
    %p100 = scmp.eq.s32.totalorder %s11, 1
    %p101 = por %p99, %p100
    %p102 = scmp.ne.s32.totalorder %s94, %s97
    %p103 = scmp.eq.s32.totalorder %s11, 0
    %p104 = por %p102, %p103
    %p105 = scmp.ne.s32.totalorder %s94, %s97
    %p106 = scmp.eq.s32.totalorder %s16, 1
    %p107 = por %p105, %p106
    %p108 = scmp.ne.s32.totalorder %s97, %s98
    %p109 = scmp.eq.s32.totalorder %s16, 0
    %p110 = por %p108, %p109
    %p111 = scmp.ne.s32.totalorder %s97, %s98
    %p112 = scmp.eq.s32.totalorder %s17, 1
    %p113 = por %p111, %p112
    %p115 = scmp.ne.s32.totalorder %s98, %s114
    %p116 = scmp.eq.s32.totalorder %s17, 0
    %p117 = por %p115, %p116
    %s118 = ssub.s32 %s11, %s18
    %p119 = scmp.eq.s32.totalorder %s118, 0
    %s121 = sadd.s32 %s120, 1
    %s122 = scalar_select %p119, %s120, %s121
    %p125 = pneg %p119
    %p126 = scmp.eq.s32.totalorder %s11, 1
    %p127 = por %p125, %p126
    %p128 = scmp.ne.s32.totalorder %s120, %s123
    %p129 = scmp.eq.s32.totalorder %s11, 0
    %p130 = por %p128, %p129
    %p131 = scmp.ne.s32.totalorder %s120, %s123
    %p132 = scmp.eq.s32.totalorder %s16, 1
    %p133 = por %p131, %p132
    %p134 = scmp.ne.s32.totalorder %s123, %s124
    %p135 = scmp.eq.s32.totalorder %s16, 0
    %p136 = por %p134, %p135
    %p137 = scmp.ne.s32.totalorder %s123, %s124
    %p138 = scmp.eq.s32.totalorder %s17, 1
    %p139 = por %p137, %p138
    %p141 = scmp.ne.s32.totalorder %s124, %s140
    %p142 = scmp.eq.s32.totalorder %s17, 0
    %p143 = por %p141, %p142
    %p144 = scmp.le.s32.totalorder 1, %s11
    %p145 = scmp.lt.s32.totalorder %s11, 3
    %p146 = pnand %p144, %p145
    %p147 = pneg %p146
    // Predicated region
    $region9: #{double_conv_forward.3} parent=5 // pred_check
      _
    $region10: #{double_conv_forward.3} parent=5 // pred_check_branch
      %149 = sbr.rel (%p146) target = $region12
    $region11: #{double_conv_forward.3} parent=5 // pred_region
      %s150 = ssub.s32 %s11, 1
      // Predicated region
      $region13: #{double_conv_forward.3} parent=11 // pred_check
        %p151 = pneg %p58
      $region14: #{double_conv_forward.3} parent=11 // pred_check_branch
        %153 = sbr.rel (%p151) target = $region16
      $region15: #{double_conv_forward.3} parent=11 // pred_region
        _
      $region16: #{double_conv_forward.3} parent=11 // pred_fallthru
        _
    $region12: #{double_conv_forward.3} parent=5 // pred_fallthru
      _
    %p154 = scmp.lt.s32.totalorder %s11, 2
    // Predicated region
    $region17: #{double_conv_forward.3} parent=5 // pred_check
      %p155 = pneg %p154
    $region18: #{double_conv_forward.3} parent=5 // pred_check_branch
      %157 = sbr.rel (%p155) target = $region20
    $region19: #{double_conv_forward.3} parent=5 // pred_region
      // Predicated region
      $region21: #{double_conv_forward.3} parent=19 // pred_check
        %p158 = pneg %p31
      $region22: #{double_conv_forward.3} parent=19 // pred_check_branch
        %160 = sbr.rel (%p158) target = $region24
      $region23: #{double_conv_forward.3} parent=19 // pred_region
        %p161 = scmp.lt.s32.totalorder %s11, 1
        %s162 = scalar_select %p161, %s11, 1
        %s163 = smul.addr %s162, 32
        %s164 = smul.addr %s163, 8
        %s165 = scalar_lea.vmem %s0, %s164
      $region24: #{double_conv_forward.3} parent=19 // pred_fallthru
        _
    $region20: #{double_conv_forward.3} parent=5 // pred_fallthru
      _
    %p166 = scmp.le.s32.totalorder 1, %s11
    %p167 = scmp.lt.s32.totalorder %s11, 3
    %p168 = pnand %p166, %p167
    %p169 = pneg %p168
    // Predicated region
    $region25: #{double_conv_forward.3} parent=5 // pred_check
      _
    $region26: #{double_conv_forward.3} parent=5 // pred_check_branch
      %171 = sbr.rel (%p168) target = $region28
    $region27: #{double_conv_forward.3} parent=5 // pred_region
      %s172 = ssub.s32 %s11, 1
      %p173 = scmp.lt.s32.totalorder %s16, 1
      %s174 = scalar_select %p173, %s16, 1
      %s175 = smul.addr %s174, 32
      %s176 = smul.addr %s175, 8
      %s177 = scalar_lea.vmem %s0, %s176
      %p178 = pneg %p37
      %p179 = pneg %p34
      %p180 = pneg %p58
      %p181 = pneg %p55
      %p182 = pneg %p84
      %p183 = pneg %p81
      %p184 = scmp.lt.s32.totalorder %s16, 1
      %s185 = scalar_select %p184, %s16, 1
      %s186 = smul.addr %s185, 32
      %s187 = smul.addr %s186, 8
      %s188 = scalar_lea.vmem %s2, %s187
      %p189 = pneg %p110
      %p190 = pneg %p107
      %p191 = scmp.lt.s32.totalorder %s16, 1
      %s192 = scalar_select %p191, %s16, 1
      %s193 = scalar_lea.vmem %s3, %s192
      %p194 = pneg %p136
      %p195 = pneg %p133
      %p196 = scmp.lt.s32.totalorder %s16, 1
      %s197 = scalar_select %p196, %s16, 1
      %s198 = scalar_lea.vmem %s4, %s197
      %p199 = scmp.lt.s32.totalorder %s16, 1
      %s200 = scalar_select %p199, %s16, 1
      %s201 = smul.addr %s200, 32
      %s202 = smul.addr %s201, 8
      %s203 = scalar_lea.vmem %s0, %s202
      %p204 = scmp.lt.s32.totalorder %s16, 1
      %s205 = scalar_select %p204, %s16, 1
      %s206 = smul.addr %s205, 32
      %s207 = smul.addr %s206, 8
      %s208 = scalar_lea.vmem %s2, %s207
      %p209 = scmp.lt.s32.totalorder %s16, 1
      %s210 = scalar_select %p209, %s16, 1
      %s211 = scalar_lea.vmem %s3, %s210
      %p212 = scmp.lt.s32.totalorder %s16, 1
      %s213 = scalar_select %p212, %s16, 1
      %s214 = scalar_lea.vmem %s4, %s213
      %v216 = vld [vmem:[%s203] sm:$0xff]
      %v217 = vld [vmem:[%s203 + $0x8] sm:$0xff]
      %v218 = vld [vmem:[%s203 + $0x10] sm:$0xff]
      %v219 = vld [vmem:[%s203 + $0x18] sm:$0xff]
      %v220 = vld [vmem:[%s203 + $0x20] sm:$0xff]
      %v221 = vld [vmem:[%s203 + $0x28] sm:$0xff]
      %v222 = vld [vmem:[%s203 + $0x30] sm:$0xff]
      %v223 = vld [vmem:[%s203 + $0x38] sm:$0xff]
      %v224 = vld [vmem:[%s203 + $0x40] sm:$0xff]
      %v225 = vld [vmem:[%s203 + $0x48] sm:$0xff]
      %v226 = vld [vmem:[%s203 + $0x50] sm:$0xff]
      %v227 = vld [vmem:[%s203 + $0x58] sm:$0xff]
      %v228 = vld [vmem:[%s203 + $0x60] sm:$0xff]
      %v229 = vld [vmem:[%s203 + $0x68] sm:$0xff]
      %v230 = vld [vmem:[%s203 + $0x70] sm:$0xff]
      %v231 = vld [vmem:[%s203 + $0x78] sm:$0xff]
      %v232 = vld [vmem:[%s203 + $0x80] sm:$0xff]
      %v233 = vld [vmem:[%s203 + $0x88] sm:$0xff]
      %v234 = vld [vmem:[%s203 + $0x90] sm:$0xff]
      %v235 = vld [vmem:[%s203 + $0x98] sm:$0xff]
      %v236 = vld [vmem:[%s203 + $0xa0] sm:$0xff]
      %v237 = vld [vmem:[%s203 + $0xa8] sm:$0xff]
      %v238 = vld [vmem:[%s203 + $0xb0] sm:$0xff]
      %v239 = vld [vmem:[%s203 + $0xb8] sm:$0xff]
      %v240 = vld [vmem:[%s203 + $0xc0] sm:$0xff]
      %v241 = vld [vmem:[%s203 + $0xc8] sm:$0xff]
      %v242 = vld [vmem:[%s203 + $0xd0] sm:$0xff]
      %v243 = vld [vmem:[%s203 + $0xd8] sm:$0xff]
      %v244 = vld [vmem:[%s203 + $0xe0] sm:$0xff]
      %v245 = vld [vmem:[%s203 + $0xe8] sm:$0xff]
      %v246 = vld [vmem:[%s203 + $0xf0] sm:$0xff]
      %v247 = vld [vmem:[%s203 + $0xf8] sm:$0xff]
      %248 = vst [vmem:[#allocation2] sm:$0xff] 0
      %249 = vst [vmem:[#allocation2 + $0x8] sm:$0xf] 0
      %250 = vst [vmem:[#allocation2 + $0xc] sm:$0xff] 0
      %251 = vst [vmem:[#allocation2 + $0x14] sm:$0xf] 0
      %s252 = scalar_lea.vmem [#allocation2], 408
      %253 = vst [vmem:[%s252] sm:$0xff] 0
      %254 = vst [vmem:[%s252 + $0x8] sm:$0xf] 0
      %255 = vst [vmem:[%s252 + $0xc] sm:$0xff] 0
      %256 = vst [vmem:[%s252 + $0x14] sm:$0xf] 0
      %v257 = vlaneseq
      %v258 = vshrl.u32 %v257, 7
      %v259 = vadd.s32 %v258, 8
      %vm260 = vcmp.eq.s32.totalorder %v258, 0
      %vm261 = vcmp.eq.s32.totalorder %v259, 0
      %v262 = vrot.slane %v216, 7
      %v263 = vrot.slane %v218, 7
      %v264 = vrot.slane %v220, 7
      %v265 = vrot.slane %v222, 7
      %v266 = vrot.slane %v224, 7
      %v267 = vrot.slane %v226, 7
      %v268 = vrot.slane %v228, 7
      %v269 = vrot.slane %v230, 7
      %v270 = vrot.slane %v232, 7
      %v271 = vrot.slane %v234, 7
      %v272 = vrot.slane %v236, 7
      %v273 = vrot.slane %v238, 7
      %v274 = vrot.slane %v240, 7
      %v275 = vrot.slane %v242, 7
      %v276 = vrot.slane %v244, 7
      %v277 = vrot.slane %v246, 7
      %v278 = vrot.slane %v217, 7
      %v279 = vrot.slane %v219, 7
      %v280 = vrot.slane %v221, 7
      %v281 = vrot.slane %v223, 7
      %v282 = vrot.slane %v225, 7
      %v283 = vrot.slane %v227, 7
      %v284 = vrot.slane %v229, 7
      %v285 = vrot.slane %v231, 7
      %v286 = vrot.slane %v233, 7
      %v287 = vrot.slane %v235, 7
      %v288 = vrot.slane %v237, 7
      %v289 = vrot.slane %v239, 7
      %v290 = vrot.slane %v241, 7
      %v291 = vrot.slane %v243, 7
      %v292 = vrot.slane %v245, 7
      %v293 = vrot.slane %v247, 7
      %vm294 = vcmp.lt.s32.totalorder %v258, 1
      %v295 = vsel %vm294, %v262, %v278
      %v296 = vsel %vm294, %v263, %v279
      %v297 = vsel %vm294, %v264, %v280
      %v298 = vsel %vm294, %v265, %v281
      %v299 = vsel %vm294, %v266, %v282
      %v300 = vsel %vm294, %v267, %v283
      %v301 = vsel %vm294, %v268, %v284
      %v302 = vsel %vm294, %v269, %v285
      %v303 = vsel %vm294, %v270, %v286
      %v304 = vsel %vm294, %v271, %v287
      %v305 = vsel %vm294, %v272, %v288
      %v306 = vsel %vm294, %v273, %v289
      %v307 = vsel %vm294, %v274, %v290
      %v308 = vsel %vm294, %v275, %v291
      %v309 = vsel %vm294, %v276, %v292
      %v310 = vsel %vm294, %v277, %v293
      %v311 = vsel %vm294, %v278, %v262
      %v312 = vsel %vm294, %v279, %v263
      %v313 = vsel %vm294, %v280, %v264
      %v314 = vsel %vm294, %v281, %v265
      %v315 = vsel %vm294, %v282, %v266
      %v316 = vsel %vm294, %v283, %v267
      %v317 = vsel %vm294, %v284, %v268
      %v318 = vsel %vm294, %v285, %v269
      %v319 = vsel %vm294, %v286, %v270
      %v320 = vsel %vm294, %v287, %v271
      %v321 = vsel %vm294, %v288, %v272
      %v322 = vsel %vm294, %v289, %v273
      %v323 = vsel %vm294, %v290, %v274
      %v324 = vsel %vm294, %v291, %v275
      %v325 = vsel %vm294, %v292, %v276
      %v326 = vsel %vm294, %v293, %v277
      %v327 = vsel %vm260, 1, 0
      %v328 = vsel %vm261, 1, 0
      %vm329 = vcmp.eq.s32.totalorder %v327, 1
      %vm330 = vcmp.eq.s32.totalorder %v328, 1
      %v331 = vsel %vm329, 0.0, %v311
      %v332 = vsel %vm330, 0.0, %v295
      %v333 = vsel %vm329, 0.0, %v312
      %v334 = vsel %vm330, 0.0, %v296
      %v335 = vsel %vm329, 0.0, %v313
      %v336 = vsel %vm330, 0.0, %v297
      %v337 = vsel %vm329, 0.0, %v314
      %v338 = vsel %vm330, 0.0, %v298
      %v339 = vsel %vm329, 0.0, %v315
      %v340 = vsel %vm330, 0.0, %v299
      %v341 = vsel %vm329, 0.0, %v316
      %v342 = vsel %vm330, 0.0, %v300
      %v343 = vsel %vm329, 0.0, %v317
      %v344 = vsel %vm330, 0.0, %v301
      %v345 = vsel %vm329, 0.0, %v318
      %v346 = vsel %vm330, 0.0, %v302
      %v347 = vsel %vm329, 0.0, %v319
      %v348 = vsel %vm330, 0.0, %v303
      %v349 = vsel %vm329, 0.0, %v320
      %v350 = vsel %vm330, 0.0, %v304
      %v351 = vsel %vm329, 0.0, %v321
      %v352 = vsel %vm330, 0.0, %v305
      %v353 = vsel %vm329, 0.0, %v322
      %v354 = vsel %vm330, 0.0, %v306
      %v355 = vsel %vm329, 0.0, %v323
      %v356 = vsel %vm330, 0.0, %v307
      %v357 = vsel %vm329, 0.0, %v324
      %v358 = vsel %vm330, 0.0, %v308
      %v359 = vsel %vm329, 0.0, %v325
      %v360 = vsel %vm330, 0.0, %v309
      %v361 = vsel %vm329, 0.0, %v326
      %v362 = vsel %vm330, 0.0, %v310
      %vm363 = vcmp.eq.s32.totalorder %v258, 15
      %vm364 = vcmp.eq.s32.totalorder %v259, 15
      %v365 = vrot.slane %v216, 1
      %v366 = vrot.slane %v218, 1
      %v367 = vrot.slane %v220, 1
      %v368 = vrot.slane %v222, 1
      %v369 = vrot.slane %v224, 1
      %v370 = vrot.slane %v226, 1
      %v371 = vrot.slane %v228, 1
      %v372 = vrot.slane %v230, 1
      %v373 = vrot.slane %v232, 1
      %v374 = vrot.slane %v234, 1
      %v375 = vrot.slane %v236, 1
      %v376 = vrot.slane %v238, 1
      %v377 = vrot.slane %v240, 1
      %v378 = vrot.slane %v242, 1
      %v379 = vrot.slane %v244, 1
      %v380 = vrot.slane %v246, 1
      %v381 = vrot.slane %v217, 1
      %v382 = vrot.slane %v219, 1
      %v383 = vrot.slane %v221, 1
      %v384 = vrot.slane %v223, 1
      %v385 = vrot.slane %v225, 1
      %v386 = vrot.slane %v227, 1
      %v387 = vrot.slane %v229, 1
      %v388 = vrot.slane %v231, 1
      %v389 = vrot.slane %v233, 1
      %v390 = vrot.slane %v235, 1
      %v391 = vrot.slane %v237, 1
      %v392 = vrot.slane %v239, 1
      %v393 = vrot.slane %v241, 1
      %v394 = vrot.slane %v243, 1
      %v395 = vrot.slane %v245, 1
      %v396 = vrot.slane %v247, 1
      %vm397 = vcmp.lt.s32.totalorder %v258, 7
      %v398 = vsel %vm397, %v365, %v381
      %v399 = vsel %vm397, %v366, %v382
      %v400 = vsel %vm397, %v367, %v383
      %v401 = vsel %vm397, %v368, %v384
      %v402 = vsel %vm397, %v369, %v385
      %v403 = vsel %vm397, %v370, %v386
      %v404 = vsel %vm397, %v371, %v387
      %v405 = vsel %vm397, %v372, %v388
      %v406 = vsel %vm397, %v373, %v389
      %v407 = vsel %vm397, %v374, %v390
      %v408 = vsel %vm397, %v375, %v391
      %v409 = vsel %vm397, %v376, %v392
      %v410 = vsel %vm397, %v377, %v393
      %v411 = vsel %vm397, %v378, %v394
      %v412 = vsel %vm397, %v379, %v395
      %v413 = vsel %vm397, %v380, %v396
      %v414 = vsel %vm397, %v381, %v365
      %v415 = vsel %vm397, %v382, %v366
      %v416 = vsel %vm397, %v383, %v367
      %v417 = vsel %vm397, %v384, %v368
      %v418 = vsel %vm397, %v385, %v369
      %v419 = vsel %vm397, %v386, %v370
      %v420 = vsel %vm397, %v387, %v371
      %v421 = vsel %vm397, %v388, %v372
      %v422 = vsel %vm397, %v389, %v373
      %v423 = vsel %vm397, %v390, %v374
      %v424 = vsel %vm397, %v391, %v375
      %v425 = vsel %vm397, %v392, %v376
      %v426 = vsel %vm397, %v393, %v377
      %v427 = vsel %vm397, %v394, %v378
      %v428 = vsel %vm397, %v395, %v379
      %v429 = vsel %vm397, %v396, %v380
      %v430 = vsel %vm363, 1, 0
      %v431 = vsel %vm364, 1, 0
      %vm432 = vcmp.eq.s32.totalorder %v430, 1
      %vm433 = vcmp.eq.s32.totalorder %v431, 1
      %v434 = vsel %vm432, 0.0, %v398
      %v435 = vsel %vm433, 0.0, %v414
      %v436 = vsel %vm432, 0.0, %v399
      %v437 = vsel %vm433, 0.0, %v415
      %v438 = vsel %vm432, 0.0, %v400
      %v439 = vsel %vm433, 0.0, %v416
      %v440 = vsel %vm432, 0.0, %v401
      %v441 = vsel %vm433, 0.0, %v417
      %v442 = vsel %vm432, 0.0, %v402
      %v443 = vsel %vm433, 0.0, %v418
      %v444 = vsel %vm432, 0.0, %v403
      %v445 = vsel %vm433, 0.0, %v419
      %v446 = vsel %vm432, 0.0, %v404
      %v447 = vsel %vm433, 0.0, %v420
      %v448 = vsel %vm432, 0.0, %v405
      %v449 = vsel %vm433, 0.0, %v421
      %v450 = vsel %vm432, 0.0, %v406
      %v451 = vsel %vm433, 0.0, %v422
      %v452 = vsel %vm432, 0.0, %v407
      %v453 = vsel %vm433, 0.0, %v423
      %v454 = vsel %vm432, 0.0, %v408
      %v455 = vsel %vm433, 0.0, %v424
      %v456 = vsel %vm432, 0.0, %v409
      %v457 = vsel %vm433, 0.0, %v425
      %v458 = vsel %vm432, 0.0, %v410
      %v459 = vsel %vm433, 0.0, %v426
      %v460 = vsel %vm432, 0.0, %v411
      %v461 = vsel %vm433, 0.0, %v427
      %v462 = vsel %vm432, 0.0, %v412
      %v463 = vsel %vm433, 0.0, %v428
      %v464 = vsel %vm432, 0.0, %v413
      %v465 = vsel %vm433, 0.0, %v429
      %v466 = vpack.c.bf16 %v331, %v331
      %v467 = vpack.c.bf16 %v332, %v332
      %v468 = vpack.c.bf16 %v333, %v333
      %v469 = vpack.c.bf16 %v334, %v334
      %v470 = vpack.c.bf16 %v335, %v335
      %v471 = vpack.c.bf16 %v336, %v336
      %v472 = vpack.c.bf16 %v337, %v337
      %v473 = vpack.c.bf16 %v338, %v338
      %v474 = vpack.c.bf16 %v339, %v339
      %v475 = vpack.c.bf16 %v340, %v340
      %v476 = vpack.c.bf16 %v341, %v341
      %v477 = vpack.c.bf16 %v342, %v342
      %v478 = vpack.c.bf16 %v343, %v343
      %v479 = vpack.c.bf16 %v344, %v344
      %v480 = vpack.c.bf16 %v345, %v345
      %v481 = vpack.c.bf16 %v346, %v346
      %v482 = vpack.c.bf16 %v347, %v347
      %v483 = vpack.c.bf16 %v348, %v348
      %v484 = vpack.c.bf16 %v349, %v349
      %v485 = vpack.c.bf16 %v350, %v350
      %v486 = vpack.c.bf16 %v351, %v351
      %v487 = vpack.c.bf16 %v352, %v352
      %v488 = vpack.c.bf16 %v353, %v353
      %v489 = vpack.c.bf16 %v354, %v354
      %v490 = vpack.c.bf16 %v355, %v355
      %v491 = vpack.c.bf16 %v356, %v356
      %v492 = vpack.c.bf16 %v357, %v357
      %v493 = vpack.c.bf16 %v358, %v358
      %v494 = vpack.c.bf16 %v359, %v359
      %v495 = vpack.c.bf16 %v360, %v360
      %v496 = vpack.c.bf16 %v361, %v361
      %v497 = vpack.c.bf16 %v362, %v362
      %s498 = scalar_lea.vmem [#allocation2], 24
      %499 = vst [vmem:[%s498] sm:$0xf] %v466
      %500 = vst [vmem:[%s498 + $0xc] sm:$0xf] %v467
      %501 = vst [vmem:[%s498 + $0x18] sm:$0xf] %v468
      %502 = vst [vmem:[%s498 + $0x24] sm:$0xf] %v469
      %503 = vst [vmem:[%s498 + $0x30] sm:$0xf] %v470
      %504 = vst [vmem:[%s498 + $0x3c] sm:$0xf] %v471
      %505 = vst [vmem:[%s498 + $0x48] sm:$0xf] %v472
      %506 = vst [vmem:[%s498 + $0x54] sm:$0xf] %v473
      %507 = vst [vmem:[%s498 + $0x60] sm:$0xf] %v474
      %508 = vst [vmem:[%s498 + $0x6c] sm:$0xf] %v475
      %509 = vst [vmem:[%s498 + $0x78] sm:$0xf] %v476
      %510 = vst [vmem:[%s498 + $0x84] sm:$0xf] %v477
      %511 = vst [vmem:[%s498 + $0x90] sm:$0xf] %v478
      %512 = vst [vmem:[%s498 + $0x9c] sm:$0xf] %v479
      %513 = vst [vmem:[%s498 + $0xa8] sm:$0xf] %v480
      %514 = vst [vmem:[%s498 + $0xb4] sm:$0xf] %v481
      %515 = vst [vmem:[%s498 + $0xc0] sm:$0xf] %v482
      %516 = vst [vmem:[%s498 + $0xcc] sm:$0xf] %v483
      %517 = vst [vmem:[%s498 + $0xd8] sm:$0xf] %v484
      %518 = vst [vmem:[%s498 + $0xe4] sm:$0xf] %v485
      %519 = vst [vmem:[%s498 + $0xf0] sm:$0xf] %v486
      %520 = vst [vmem:[%s498 + $0xfc] sm:$0xf] %v487
      %521 = vst [vmem:[%s498 + $0x108] sm:$0xf] %v488
      %522 = vst [vmem:[%s498 + $0x114] sm:$0xf] %v489
      %523 = vst [vmem:[%s498 + $0x120] sm:$0xf] %v490
      %524 = vst [vmem:[%s498 + $0x12c] sm:$0xf] %v491
      %525 = vst [vmem:[%s498 + $0x138] sm:$0xf] %v492
      %526 = vst [vmem:[%s498 + $0x144] sm:$0xf] %v493
      %527 = vst [vmem:[%s498 + $0x150] sm:$0xf] %v494
      %528 = vst [vmem:[%s498 + $0x15c] sm:$0xf] %v495
      %529 = vst [vmem:[%s498 + $0x168] sm:$0xf] %v496
      %530 = vst [vmem:[%s498 + $0x174] sm:$0xf] %v497
      %v531 = vpack.c.bf16 %v216, %v216
      %v532 = vpack.c.bf16 %v217, %v217
      %v533 = vpack.c.bf16 %v218, %v218
      %v534 = vpack.c.bf16 %v219, %v219
      %v535 = vpack.c.bf16 %v220, %v220
      %v536 = vpack.c.bf16 %v221, %v221
      %v537 = vpack.c.bf16 %v222, %v222
      %v538 = vpack.c.bf16 %v223, %v223
      %v539 = vpack.c.bf16 %v224, %v224
      %v540 = vpack.c.bf16 %v225, %v225
      %v541 = vpack.c.bf16 %v226, %v226
      %v542 = vpack.c.bf16 %v227, %v227
      %v543 = vpack.c.bf16 %v228, %v228
      %v544 = vpack.c.bf16 %v229, %v229
      %v545 = vpack.c.bf16 %v230, %v230
      %v546 = vpack.c.bf16 %v231, %v231
      %v547 = vpack.c.bf16 %v232, %v232
      %v548 = vpack.c.bf16 %v233, %v233
      %v549 = vpack.c.bf16 %v234, %v234
      %v550 = vpack.c.bf16 %v235, %v235
      %v551 = vpack.c.bf16 %v236, %v236
      %v552 = vpack.c.bf16 %v237, %v237
      %v553 = vpack.c.bf16 %v238, %v238
      %v554 = vpack.c.bf16 %v239, %v239
      %v555 = vpack.c.bf16 %v240, %v240
      %v556 = vpack.c.bf16 %v241, %v241
      %v557 = vpack.c.bf16 %v242, %v242
      %v558 = vpack.c.bf16 %v243, %v243
      %v559 = vpack.c.bf16 %v244, %v244
      %v560 = vpack.c.bf16 %v245, %v245
      %v561 = vpack.c.bf16 %v246, %v246
      %v562 = vpack.c.bf16 %v247, %v247
      %563 = vst [vmem:[%s498 + $0x4] sm:$0xf] %v531
      %564 = vst [vmem:[%s498 + $0x10] sm:$0xf] %v532
      %565 = vst [vmem:[%s498 + $0x1c] sm:$0xf] %v533
      %566 = vst [vmem:[%s498 + $0x28] sm:$0xf] %v534
      %567 = vst [vmem:[%s498 + $0x34] sm:$0xf] %v535
      %568 = vst [vmem:[%s498 + $0x40] sm:$0xf] %v536
      %569 = vst [vmem:[%s498 + $0x4c] sm:$0xf] %v537
      %570 = vst [vmem:[%s498 + $0x58] sm:$0xf] %v538
      %571 = vst [vmem:[%s498 + $0x64] sm:$0xf] %v539
      %572 = vst [vmem:[%s498 + $0x70] sm:$0xf] %v540
      %573 = vst [vmem:[%s498 + $0x7c] sm:$0xf] %v541
      %574 = vst [vmem:[%s498 + $0x88] sm:$0xf] %v542
      %575 = vst [vmem:[%s498 + $0x94] sm:$0xf] %v543
      %576 = vst [vmem:[%s498 + $0xa0] sm:$0xf] %v544
      %577 = vst [vmem:[%s498 + $0xac] sm:$0xf] %v545
      %578 = vst [vmem:[%s498 + $0xb8] sm:$0xf] %v546
      %579 = vst [vmem:[%s498 + $0xc4] sm:$0xf] %v547
      %580 = vst [vmem:[%s498 + $0xd0] sm:$0xf] %v548
      %581 = vst [vmem:[%s498 + $0xdc] sm:$0xf] %v549
      %582 = vst [vmem:[%s498 + $0xe8] sm:$0xf] %v550
      %583 = vst [vmem:[%s498 + $0xf4] sm:$0xf] %v551
      %584 = vst [vmem:[%s498 + $0x100] sm:$0xf] %v552
      %585 = vst [vmem:[%s498 + $0x10c] sm:$0xf] %v553
      %586 = vst [vmem:[%s498 + $0x118] sm:$0xf] %v554
      %587 = vst [vmem:[%s498 + $0x124] sm:$0xf] %v555
      %588 = vst [vmem:[%s498 + $0x130] sm:$0xf] %v556
      %589 = vst [vmem:[%s498 + $0x13c] sm:$0xf] %v557
      %590 = vst [vmem:[%s498 + $0x148] sm:$0xf] %v558
      %591 = vst [vmem:[%s498 + $0x154] sm:$0xf] %v559
      %592 = vst [vmem:[%s498 + $0x160] sm:$0xf] %v560
      %593 = vst [vmem:[%s498 + $0x16c] sm:$0xf] %v561
      %594 = vst [vmem:[%s498 + $0x178] sm:$0xf] %v562
      %v595 = vpack.c.bf16 %v434, %v434
      %v596 = vpack.c.bf16 %v435, %v435
      %v597 = vpack.c.bf16 %v436, %v436
      %v598 = vpack.c.bf16 %v437, %v437
      %v599 = vpack.c.bf16 %v438, %v438
      %v600 = vpack.c.bf16 %v439, %v439
      %v601 = vpack.c.bf16 %v440, %v440
      %v602 = vpack.c.bf16 %v441, %v441
      %v603 = vpack.c.bf16 %v442, %v442
      %v604 = vpack.c.bf16 %v443, %v443
      %v605 = vpack.c.bf16 %v444, %v444
      %v606 = vpack.c.bf16 %v445, %v445
      %v607 = vpack.c.bf16 %v446, %v446
      %v608 = vpack.c.bf16 %v447, %v447
      %v609 = vpack.c.bf16 %v448, %v448
      %v610 = vpack.c.bf16 %v449, %v449
      %v611 = vpack.c.bf16 %v450, %v450
      %v612 = vpack.c.bf16 %v451, %v451
      %v613 = vpack.c.bf16 %v452, %v452
      %v614 = vpack.c.bf16 %v453, %v453
      %v615 = vpack.c.bf16 %v454, %v454
      %v616 = vpack.c.bf16 %v455, %v455
      %v617 = vpack.c.bf16 %v456, %v456
      %v618 = vpack.c.bf16 %v457, %v457
      %v619 = vpack.c.bf16 %v458, %v458
      %v620 = vpack.c.bf16 %v459, %v459
      %v621 = vpack.c.bf16 %v460, %v460
      %v622 = vpack.c.bf16 %v461, %v461
      %v623 = vpack.c.bf16 %v462, %v462
      %v624 = vpack.c.bf16 %v463, %v463
      %v625 = vpack.c.bf16 %v464, %v464
      %v626 = vpack.c.bf16 %v465, %v465
      %627 = vst [vmem:[%s498 + $0x8] sm:$0xf] %v595
      %628 = vst [vmem:[%s498 + $0x14] sm:$0xf] %v596
      %629 = vst [vmem:[%s498 + $0x20] sm:$0xf] %v597
      %630 = vst [vmem:[%s498 + $0x2c] sm:$0xf] %v598
      %631 = vst [vmem:[%s498 + $0x38] sm:$0xf] %v599
      %632 = vst [vmem:[%s498 + $0x44] sm:$0xf] %v600
      %633 = vst [vmem:[%s498 + $0x50] sm:$0xf] %v601
      %634 = vst [vmem:[%s498 + $0x5c] sm:$0xf] %v602
      %635 = vst [vmem:[%s498 + $0x68] sm:$0xf] %v603
      %636 = vst [vmem:[%s498 + $0x74] sm:$0xf] %v604
      %637 = vst [vmem:[%s498 + $0x80] sm:$0xf] %v605
      %638 = vst [vmem:[%s498 + $0x8c] sm:$0xf] %v606
      %639 = vst [vmem:[%s498 + $0x98] sm:$0xf] %v607
      %640 = vst [vmem:[%s498 + $0xa4] sm:$0xf] %v608
      %641 = vst [vmem:[%s498 + $0xb0] sm:$0xf] %v609
      %642 = vst [vmem:[%s498 + $0xbc] sm:$0xf] %v610
      %643 = vst [vmem:[%s498 + $0xc8] sm:$0xf] %v611
      %644 = vst [vmem:[%s498 + $0xd4] sm:$0xf] %v612
      %645 = vst [vmem:[%s498 + $0xe0] sm:$0xf] %v613
      %646 = vst [vmem:[%s498 + $0xec] sm:$0xf] %v614
      %647 = vst [vmem:[%s498 + $0xf8] sm:$0xf] %v615
      %648 = vst [vmem:[%s498 + $0x104] sm:$0xf] %v616
      %649 = vst [vmem:[%s498 + $0x110] sm:$0xf] %v617
      %650 = vst [vmem:[%s498 + $0x11c] sm:$0xf] %v618
      %651 = vst [vmem:[%s498 + $0x128] sm:$0xf] %v619
      %652 = vst [vmem:[%s498 + $0x134] sm:$0xf] %v620
      %653 = vst [vmem:[%s498 + $0x140] sm:$0xf] %v621
      %654 = vst [vmem:[%s498 + $0x14c] sm:$0xf] %v622
      %655 = vst [vmem:[%s498 + $0x158] sm:$0xf] %v623
      %656 = vst [vmem:[%s498 + $0x164] sm:$0xf] %v624
      %657 = vst [vmem:[%s498 + $0x170] sm:$0xf] %v625
      %658 = vst [vmem:[%s498 + $0x17c] sm:$0xf] %v626
      %v659 = vld [vmem:[#allocation2] sm:$0xff]
      %v660 = vld [vmem:[#allocation2 + $0x8] sm:$0xf]
      %v661 = vld [vmem:[#allocation2 + $0xc] sm:$0xff]
      %v662 = vld [vmem:[#allocation2 + $0x14] sm:$0xf]
      %v663 = vld [vmem:[#allocation2 + $0x18] sm:$0xff]
      %v664 = vld [vmem:[#allocation2 + $0x20] sm:$0xf]
      %v665 = vld [vmem:[#allocation2 + $0x24] sm:$0xff]
      %v666 = vld [vmem:[#allocation2 + $0x2c] sm:$0xf]
      %v667 = vld [vmem:[#allocation2 + $0x30] sm:$0xff]
      %v668 = vld [vmem:[#allocation2 + $0x38] sm:$0xf]
      %v669 = vld [vmem:[#allocation2 + $0x3c] sm:$0xff]
      %v670 = vld [vmem:[#allocation2 + $0x44] sm:$0xf]
      %v671 = vld [vmem:[#allocation2 + $0x48] sm:$0xff]
      %v672 = vld [vmem:[#allocation2 + $0x50] sm:$0xf]
      %v673 = vld [vmem:[#allocation2 + $0x54] sm:$0xff]
      %v674 = vld [vmem:[#allocation2 + $0x5c] sm:$0xf]
      %v675 = vld [vmem:[#allocation2 + $0x60] sm:$0xff]
      %v676 = vld [vmem:[#allocation2 + $0x68] sm:$0xf]
      %v677 = vld [vmem:[#allocation2 + $0x6c] sm:$0xff]
      %v678 = vld [vmem:[#allocation2 + $0x74] sm:$0xf]
      %v679 = vld [vmem:[#allocation2 + $0x78] sm:$0xff]
      %v680 = vld [vmem:[#allocation2 + $0x80] sm:$0xf]
      %v681 = vld [vmem:[#allocation2 + $0x84] sm:$0xff]
      %v682 = vld [vmem:[#allocation2 + $0x8c] sm:$0xf]
      %v683 = vld [vmem:[#allocation2 + $0x90] sm:$0xff]
      %v684 = vld [vmem:[#allocation2 + $0x98] sm:$0xf]
      %v685 = vld [vmem:[#allocation2 + $0x9c] sm:$0xff]
      %v686 = vld [vmem:[#allocation2 + $0xa4] sm:$0xf]
      %v687 = vld [vmem:[#allocation2 + $0xa8] sm:$0xff]
      %v688 = vld [vmem:[#allocation2 + $0xb0] sm:$0xf]
      %v689 = vld [vmem:[#allocation2 + $0xb4] sm:$0xff]
      %v690 = vld [vmem:[#allocation2 + $0xbc] sm:$0xf]
      %v691 = vld [vmem:[#allocation2 + $0xc0] sm:$0xff]
      %v692 = vld [vmem:[#allocation2 + $0xc8] sm:$0xf]
      %v693 = vld [vmem:[#allocation2 + $0xcc] sm:$0xff]
      %v694 = vld [vmem:[#allocation2 + $0xd4] sm:$0xf]
      %v695 = vld [vmem:[#allocation2 + $0xd8] sm:$0xff]
      %v696 = vld [vmem:[#allocation2 + $0xe0] sm:$0xf]
      %v697 = vld [vmem:[#allocation2 + $0xe4] sm:$0xff]
      %v698 = vld [vmem:[#allocation2 + $0xec] sm:$0xf]
      %v699 = vld [vmem:[#allocation2 + $0xf0] sm:$0xff]
      %v700 = vld [vmem:[#allocation2 + $0xf8] sm:$0xf]
      %v701 = vld [vmem:[#allocation2 + $0xfc] sm:$0xff]
      %v702 = vld [vmem:[#allocation2 + $0x104] sm:$0xf]
      %v703 = vld [vmem:[#allocation2 + $0x108] sm:$0xff]
      %v704 = vld [vmem:[#allocation2 + $0x110] sm:$0xf]
      %v705 = vld [vmem:[#allocation2 + $0x114] sm:$0xff]
      %v706 = vld [vmem:[#allocation2 + $0x11c] sm:$0xf]
      %v707 = vld [vmem:[#allocation2 + $0x120] sm:$0xff]
      %v708 = vld [vmem:[#allocation2 + $0x128] sm:$0xf]
      %v709 = vld [vmem:[#allocation2 + $0x12c] sm:$0xff]
      %v710 = vld [vmem:[#allocation2 + $0x134] sm:$0xf]
      %v711 = vld [vmem:[#allocation2 + $0x138] sm:$0xff]
      %v712 = vld [vmem:[#allocation2 + $0x140] sm:$0xf]
      %v713 = vld [vmem:[#allocation2 + $0x144] sm:$0xff]
      %v714 = vld [vmem:[#allocation2 + $0x14c] sm:$0xf]
      %v715 = vld [vmem:[#allocation2 + $0x150] sm:$0xff]
      %v716 = vld [vmem:[#allocation2 + $0x158] sm:$0xf]
      %v717 = vld [vmem:[#allocation2 + $0x15c] sm:$0xff]
      %v718 = vld [vmem:[#allocation2 + $0x164] sm:$0xf]
      %v719 = vld [vmem:[#allocation2 + $0x168] sm:$0xff]
      %v720 = vld [vmem:[#allocation2 + $0x170] sm:$0xf]
      %v721 = vld [vmem:[#allocation2 + $0x174] sm:$0xff]
      %v722 = vld [vmem:[#allocation2 + $0x17c] sm:$0xf]
      %v723 = vld [vmem:[%s1] sm:$0xf]
      %v724 = vld [vmem:[%s1 + $0x4] sm:$0xf]
      %v725 = vld [vmem:[%s1 + $0x8] sm:$0xf]
      %v726 = vld [vmem:[%s1 + $0xc] sm:$0xf]
      %v727 = vld [vmem:[%s1 + $0x10] sm:$0xf]
      %v728 = vld [vmem:[%s1 + $0x14] sm:$0xf]
      %v729 = vld [vmem:[%s1 + $0x18] sm:$0xf]
      %v730 = vld [vmem:[%s1 + $0x1c] sm:$0xf]
      %v731 = vld [vmem:[%s1 + $0x20] sm:$0xf]
      %v732 = vld [vmem:[%s1 + $0x24] sm:$0xf]
      %v733 = vld [vmem:[%s1 + $0x28] sm:$0xf]
      %v734 = vld [vmem:[%s1 + $0x2c] sm:$0xf]
      %v735 = vld [vmem:[%s1 + $0x30] sm:$0xf]
      %v736 = vld [vmem:[%s1 + $0x34] sm:$0xf]
      %v737 = vld [vmem:[%s1 + $0x38] sm:$0xf]
      %v738 = vld [vmem:[%s1 + $0x3c] sm:$0xf]
      %v739 = vld [vmem:[%s1 + $0x40] sm:$0xf]
      %v740 = vld [vmem:[%s1 + $0x44] sm:$0xf]
      %v741 = vld [vmem:[%s1 + $0x48] sm:$0xf]
      %v742 = vld [vmem:[%s1 + $0x4c] sm:$0xf]
      %v743 = vld [vmem:[%s1 + $0x50] sm:$0xf]
      %v744 = vld [vmem:[%s1 + $0x54] sm:$0xf]
      %v745 = vld [vmem:[%s1 + $0x58] sm:$0xf]
      %v746 = vld [vmem:[%s1 + $0x5c] sm:$0xf]
      %v747 = vld [vmem:[%s1 + $0x60] sm:$0xf]
      %v748 = vld [vmem:[%s1 + $0x64] sm:$0xf]
      %v749 = vld [vmem:[%s1 + $0x68] sm:$0xf]
      %v750 = vld [vmem:[%s1 + $0x6c] sm:$0xf]
      %v751 = vld [vmem:[%s1 + $0x70] sm:$0xf]
      %v752 = vld [vmem:[%s1 + $0x74] sm:$0xf]
      %v753 = vld [vmem:[%s1 + $0x78] sm:$0xf]
      %v754 = vld [vmem:[%s1 + $0x7c] sm:$0xf]
      %v755 = vld [vmem:[%s1 + $0x80] sm:$0xf]
      %v756 = vld [vmem:[%s1 + $0x84] sm:$0xf]
      %v757 = vld [vmem:[%s1 + $0x88] sm:$0xf]
      %v758 = vld [vmem:[%s1 + $0x8c] sm:$0xf]
      %v759 = vld [vmem:[%s1 + $0x90] sm:$0xf]
      %v760 = vld [vmem:[%s1 + $0x94] sm:$0xf]
      %v761 = vld [vmem:[%s1 + $0x98] sm:$0xf]
      %v762 = vld [vmem:[%s1 + $0x9c] sm:$0xf]
      %v763 = vld [vmem:[%s1 + $0xa0] sm:$0xf]
      %v764 = vld [vmem:[%s1 + $0xa4] sm:$0xf]
      %v765 = vld [vmem:[%s1 + $0xa8] sm:$0xf]
      %v766 = vld [vmem:[%s1 + $0xac] sm:$0xf]
      %v767 = vld [vmem:[%s1 + $0xb0] sm:$0xf]
      %v768 = vld [vmem:[%s1 + $0xb4] sm:$0xf]
      %v769 = vld [vmem:[%s1 + $0xb8] sm:$0xf]
      %v770 = vld [vmem:[%s1 + $0xbc] sm:$0xf]
      %v835 = vunpack.c.l.b16 %v659
      %v836 = vunpack.c.h.b16 %v659
      %v837 = vunpack.c.l.b16 %v660
      %v838 = vunpack.c.l.b16 %v661
      %v839 = vunpack.c.h.b16 %v661
      %v840 = vunpack.c.l.b16 %v662
      %v841 = vunpack.c.l.b16 %v663
      %v842 = vunpack.c.h.b16 %v663
      %v843 = vunpack.c.l.b16 %v664
      %v844 = vunpack.c.l.b16 %v665
      %v845 = vunpack.c.h.b16 %v665
      %v846 = vunpack.c.l.b16 %v666
      %v847 = vunpack.c.l.b16 %v667
      %v848 = vunpack.c.h.b16 %v667
      %v849 = vunpack.c.l.b16 %v668
      %v850 = vunpack.c.l.b16 %v669
      %v851 = vunpack.c.h.b16 %v669
      %v852 = vunpack.c.l.b16 %v670
      %v853 = vunpack.c.l.b16 %v671
      %v854 = vunpack.c.h.b16 %v671
      %v855 = vunpack.c.l.b16 %v672
      %v856 = vunpack.c.l.b16 %v673
      %v857 = vunpack.c.h.b16 %v673
      %v858 = vunpack.c.l.b16 %v674
      %v859 = vunpack.c.l.b16 %v675
      %v860 = vunpack.c.h.b16 %v675
      %v861 = vunpack.c.l.b16 %v676
      %v862 = vunpack.c.l.b16 %v677
      %v863 = vunpack.c.h.b16 %v677
      %v864 = vunpack.c.l.b16 %v678
      %v865 = vunpack.c.l.b16 %v679
      %v866 = vunpack.c.h.b16 %v679
      %v867 = vunpack.c.l.b16 %v680
      %v868 = vunpack.c.l.b16 %v681
      %v869 = vunpack.c.h.b16 %v681
      %v870 = vunpack.c.l.b16 %v682
      %v871 = vunpack.c.l.b16 %v683
      %v872 = vunpack.c.h.b16 %v683
      %v873 = vunpack.c.l.b16 %v684
      %v874 = vunpack.c.l.b16 %v685
      %v875 = vunpack.c.h.b16 %v685
      %v876 = vunpack.c.l.b16 %v686
      %v877 = vunpack.c.l.b16 %v687
      %v878 = vunpack.c.h.b16 %v687
      %v879 = vunpack.c.l.b16 %v688
      %v880 = vunpack.c.l.b16 %v689
      %v881 = vunpack.c.h.b16 %v689
      %v882 = vunpack.c.l.b16 %v690
      %v883 = vunpack.c.l.b16 %v691
      %v884 = vunpack.c.h.b16 %v691
      %v885 = vunpack.c.l.b16 %v692
      %v886 = vunpack.c.l.b16 %v693
      %v887 = vunpack.c.h.b16 %v693
      %v888 = vunpack.c.l.b16 %v694
      %v889 = vunpack.c.l.b16 %v695
      %v890 = vunpack.c.h.b16 %v695
      %v891 = vunpack.c.l.b16 %v696
      %v892 = vunpack.c.l.b16 %v697
      %v893 = vunpack.c.h.b16 %v697
      %v894 = vunpack.c.l.b16 %v698
      %v895 = vunpack.c.l.b16 %v699
      %v896 = vunpack.c.h.b16 %v699
      %v897 = vunpack.c.l.b16 %v700
      %v898 = vunpack.c.l.b16 %v701
      %v899 = vunpack.c.h.b16 %v701
      %v900 = vunpack.c.l.b16 %v702
      %v901 = vunpack.c.l.b16 %v703
      %v902 = vunpack.c.h.b16 %v703
      %v903 = vunpack.c.l.b16 %v704
      %v904 = vunpack.c.l.b16 %v705
      %v905 = vunpack.c.h.b16 %v705
      %v906 = vunpack.c.l.b16 %v706
      %v907 = vunpack.c.l.b16 %v707
      %v908 = vunpack.c.h.b16 %v707
      %v909 = vunpack.c.l.b16 %v708
      %v910 = vunpack.c.l.b16 %v709
      %v911 = vunpack.c.h.b16 %v709
      %v912 = vunpack.c.l.b16 %v710
      %v913 = vunpack.c.l.b16 %v711
      %v914 = vunpack.c.h.b16 %v711
      %v915 = vunpack.c.l.b16 %v712
      %v916 = vunpack.c.l.b16 %v713
      %v917 = vunpack.c.h.b16 %v713
      %v918 = vunpack.c.l.b16 %v714
      %v919 = vunpack.c.l.b16 %v715
      %v920 = vunpack.c.h.b16 %v715
      %v921 = vunpack.c.l.b16 %v716
      %v922 = vunpack.c.l.b16 %v717
      %v923 = vunpack.c.h.b16 %v717
      %v924 = vunpack.c.l.b16 %v718
      %v925 = vunpack.c.l.b16 %v719
      %v926 = vunpack.c.h.b16 %v719
      %v927 = vunpack.c.l.b16 %v720
      %v928 = vunpack.c.l.b16 %v721
      %v929 = vunpack.c.h.b16 %v721
      %v930 = vunpack.c.l.b16 %v722
      %v931 = vpack.c.b16 %v838, %v835
      %v932 = vpack.c.b16 %v839, %v836
      %v933 = vpack.c.b16 %v840, %v837
      %v934 = vpack.c.b16 %v844, %v841
      %v935 = vpack.c.b16 %v845, %v842
      %v936 = vpack.c.b16 %v846, %v843
      %v937 = vpack.c.b16 %v850, %v847
      %v938 = vpack.c.b16 %v851, %v848
      %v939 = vpack.c.b16 %v852, %v849
      %v940 = vpack.c.b16 %v856, %v853
      %v941 = vpack.c.b16 %v857, %v854
      %v942 = vpack.c.b16 %v858, %v855
      %v943 = vpack.c.b16 %v862, %v859
      %v944 = vpack.c.b16 %v863, %v860
      %v945 = vpack.c.b16 %v864, %v861
      %v946 = vpack.c.b16 %v868, %v865
      %v947 = vpack.c.b16 %v869, %v866
      %v948 = vpack.c.b16 %v870, %v867
      %v949 = vpack.c.b16 %v874, %v871
      %v950 = vpack.c.b16 %v875, %v872
      %v951 = vpack.c.b16 %v876, %v873
      %v952 = vpack.c.b16 %v880, %v877
      %v953 = vpack.c.b16 %v881, %v878
      %v954 = vpack.c.b16 %v882, %v879
      %v955 = vpack.c.b16 %v886, %v883
      %v956 = vpack.c.b16 %v887, %v884
      %v957 = vpack.c.b16 %v888, %v885
      %v958 = vpack.c.b16 %v892, %v889
      %v959 = vpack.c.b16 %v893, %v890
      %v960 = vpack.c.b16 %v894, %v891
      %v961 = vpack.c.b16 %v898, %v895
      %v962 = vpack.c.b16 %v899, %v896
      %v963 = vpack.c.b16 %v900, %v897
      %v964 = vpack.c.b16 %v904, %v901
      %v965 = vpack.c.b16 %v905, %v902
      %v966 = vpack.c.b16 %v906, %v903
      %v967 = vpack.c.b16 %v910, %v907
      %v968 = vpack.c.b16 %v911, %v908
      %v969 = vpack.c.b16 %v912, %v909
      %v970 = vpack.c.b16 %v916, %v913
      %v971 = vpack.c.b16 %v917, %v914
      %v972 = vpack.c.b16 %v918, %v915
      %v973 = vpack.c.b16 %v922, %v919
      %v974 = vpack.c.b16 %v923, %v920
      %v975 = vpack.c.b16 %v924, %v921
      %v976 = vpack.c.b16 %v928, %v925
      %v977 = vpack.c.b16 %v929, %v926
      %v978 = vpack.c.b16 %v930, %v927
      %v1075 = vunpack.c.l.b16 %v723
      %v1076 = vunpack.c.l.b16 %v724
      %v1077 = vunpack.c.l.b16 %v725
      %v1078 = vunpack.c.l.b16 %v726
      %v1079 = vunpack.c.l.b16 %v727
      %v1080 = vunpack.c.l.b16 %v728
      %v1081 = vunpack.c.l.b16 %v729
      %v1082 = vunpack.c.l.b16 %v730
      %v1083 = vunpack.c.l.b16 %v731
      %v1084 = vunpack.c.l.b16 %v732
      %v1085 = vunpack.c.l.b16 %v733
      %v1086 = vunpack.c.l.b16 %v734
      %v1087 = vunpack.c.l.b16 %v735
      %v1088 = vunpack.c.l.b16 %v736
      %v1089 = vunpack.c.l.b16 %v737
      %v1090 = vunpack.c.l.b16 %v738
      %v1091 = vunpack.c.l.b16 %v739
      %v1092 = vunpack.c.l.b16 %v740
      %v1093 = vunpack.c.l.b16 %v741
      %v1094 = vunpack.c.l.b16 %v742
      %v1095 = vunpack.c.l.b16 %v743
      %v1096 = vunpack.c.l.b16 %v744
      %v1097 = vunpack.c.l.b16 %v745
      %v1098 = vunpack.c.l.b16 %v746
      %v1099 = vunpack.c.l.b16 %v747
      %v1100 = vunpack.c.l.b16 %v748
      %v1101 = vunpack.c.l.b16 %v749
      %v1102 = vunpack.c.l.b16 %v750
      %v1103 = vunpack.c.l.b16 %v751
      %v1104 = vunpack.c.l.b16 %v752
      %v1105 = vunpack.c.l.b16 %v753
      %v1106 = vunpack.c.l.b16 %v754
      %v1107 = vunpack.c.l.b16 %v755
      %v1108 = vunpack.c.l.b16 %v756
      %v1109 = vunpack.c.l.b16 %v757
      %v1110 = vunpack.c.l.b16 %v758
      %v1111 = vunpack.c.l.b16 %v759
      %v1112 = vunpack.c.l.b16 %v760
      %v1113 = vunpack.c.l.b16 %v761
      %v1114 = vunpack.c.l.b16 %v762
      %v1115 = vunpack.c.l.b16 %v763
      %v1116 = vunpack.c.l.b16 %v764
      %v1117 = vunpack.c.l.b16 %v765
      %v1118 = vunpack.c.l.b16 %v766
      %v1119 = vunpack.c.l.b16 %v767
      %v1120 = vunpack.c.l.b16 %v768
      %v1121 = vunpack.c.l.b16 %v769
      %v1122 = vunpack.c.l.b16 %v770
      %v1123 = vpack.c.b16 %v1076, %v1075
      %v1124 = vpack.c.b16 %v1078, %v1077
      %v1125 = vpack.c.b16 %v1080, %v1079
      %v1126 = vpack.c.b16 %v1082, %v1081
      %v1127 = vpack.c.b16 %v1084, %v1083
      %v1128 = vpack.c.b16 %v1086, %v1085
      %v1129 = vpack.c.b16 %v1088, %v1087
      %v1130 = vpack.c.b16 %v1090, %v1089
      %v1131 = vpack.c.b16 %v1092, %v1091
      %v1132 = vpack.c.b16 %v1094, %v1093
      %v1133 = vpack.c.b16 %v1096, %v1095
      %v1134 = vpack.c.b16 %v1098, %v1097
      %v1135 = vpack.c.b16 %v1100, %v1099
      %v1136 = vpack.c.b16 %v1102, %v1101
      %v1137 = vpack.c.b16 %v1104, %v1103
      %v1138 = vpack.c.b16 %v1106, %v1105
      %v1139 = vpack.c.b16 %v1108, %v1107
      %v1140 = vpack.c.b16 %v1110, %v1109
      %v1141 = vpack.c.b16 %v1112, %v1111
      %v1142 = vpack.c.b16 %v1114, %v1113
      %v1143 = vpack.c.b16 %v1116, %v1115
      %v1144 = vpack.c.b16 %v1118, %v1117
      %v1145 = vpack.c.b16 %v1120, %v1119
      %v1146 = vpack.c.b16 %v1122, %v1121
      %1171 = vmatpush.bf16.msra.mxu0 %v1130
      %1172 = vmatpush.bf16.msra.mxu0 %v1129
      %1173 = vmatpush.bf16.msra.mxu0 %v1128
      %1174 = vmatpush.bf16.msra.mxu0 %v1127
      %1175 = vmatpush.bf16.msra.mxu0 %v1126
      %1176 = vmatpush.bf16.msra.mxu0 %v1125
      %1177 = vmatpush.bf16.msra.mxu0 %v1124
      %1178 = vmatpush.bf16.msra.mxu0 %v1123
      %1179 = vmatmul.bf16.gmra.mxu0 %v931
      %v1180 = vpop.f32.mrf.mxu0
      %v1181 = vadd.f32 0.0, %v1180
      %v1182 = vpop.f32.mrf.mxu0
      %v1183 = vadd.f32 0.0, %v1182
      %1184 = vmatmul.bf16.gmra.mxu0 %v934
      %v1185 = vpop.f32.mrf.mxu0
      %v1186 = vadd.f32 0.0, %v1185
      %v1187 = vpop.f32.mrf.mxu0
      %v1188 = vadd.f32 0.0, %v1187
      %1189 = vmatmul.bf16.gmra.mxu0 %v937
      %v1190 = vpop.f32.mrf.mxu0
      %v1191 = vadd.f32 0.0, %v1190
      %v1192 = vpop.f32.mrf.mxu0
      %v1193 = vadd.f32 0.0, %v1192
      %1194 = vmatmul.bf16.gmra.mxu0 %v940
      %v1195 = vpop.f32.mrf.mxu0
      %v1196 = vadd.f32 0.0, %v1195
      %v1197 = vpop.f32.mrf.mxu0
      %v1198 = vadd.f32 0.0, %v1197
      %1199 = vmatmul.bf16.gmra.mxu0 %v943
      %v1200 = vpop.f32.mrf.mxu0
      %v1201 = vadd.f32 0.0, %v1200
      %v1202 = vpop.f32.mrf.mxu0
      %v1203 = vadd.f32 0.0, %v1202
      %1204 = vmatmul.bf16.gmra.mxu0 %v946
      %v1205 = vpop.f32.mrf.mxu0
      %v1206 = vadd.f32 0.0, %v1205
      %v1207 = vpop.f32.mrf.mxu0
      %v1208 = vadd.f32 0.0, %v1207
      %1209 = vmatmul.bf16.gmra.mxu0 %v949
      %v1210 = vpop.f32.mrf.mxu0
      %v1211 = vadd.f32 0.0, %v1210
      %v1212 = vpop.f32.mrf.mxu0
      %v1213 = vadd.f32 0.0, %v1212
      %1214 = vmatmul.bf16.gmra.mxu0 %v952
      %v1215 = vpop.f32.mrf.mxu0
      %v1216 = vadd.f32 0.0, %v1215
      %v1217 = vpop.f32.mrf.mxu0
      %v1218 = vadd.f32 0.0, %v1217
      %1219 = vmatmul.bf16.gmra.mxu0 %v955
      %v1220 = vpop.f32.mrf.mxu0
      %v1221 = vadd.f32 0.0, %v1220
      %v1222 = vpop.f32.mrf.mxu0
      %v1223 = vadd.f32 0.0, %v1222
      %1224 = vmatmul.bf16.gmra.mxu0 %v958
      %v1225 = vpop.f32.mrf.mxu0
      %v1226 = vadd.f32 0.0, %v1225
      %v1227 = vpop.f32.mrf.mxu0
      %v1228 = vadd.f32 0.0, %v1227
      %1229 = vmatmul.bf16.gmra.mxu0 %v961
      %v1230 = vpop.f32.mrf.mxu0
      %v1231 = vadd.f32 0.0, %v1230
      %v1232 = vpop.f32.mrf.mxu0
      %v1233 = vadd.f32 0.0, %v1232
      %1234 = vmatmul.bf16.gmra.mxu0 %v964
      %v1235 = vpop.f32.mrf.mxu0
      %v1236 = vadd.f32 0.0, %v1235
      %v1237 = vpop.f32.mrf.mxu0
      %v1238 = vadd.f32 0.0, %v1237
      %1239 = vmatmul.bf16.gmra.mxu0 %v967
      %v1240 = vpop.f32.mrf.mxu0
      %v1241 = vadd.f32 0.0, %v1240
      %v1242 = vpop.f32.mrf.mxu0
      %v1243 = vadd.f32 0.0, %v1242
      %1244 = vmatmul.bf16.gmra.mxu0 %v970
      %v1245 = vpop.f32.mrf.mxu0
      %v1246 = vadd.f32 0.0, %v1245
      %v1247 = vpop.f32.mrf.mxu0
      %v1248 = vadd.f32 0.0, %v1247
      %1249 = vmatmul.bf16.gmra.mxu0 %v973
      %v1250 = vpop.f32.mrf.mxu0
      %v1251 = vadd.f32 0.0, %v1250
      %v1252 = vpop.f32.mrf.mxu0
      %v1253 = vadd.f32 0.0, %v1252
      %1254 = vmatmul.bf16.gmra.mxu0 %v976
      %v1255 = vpop.f32.mrf.mxu0
      %v1256 = vadd.f32 0.0, %v1255
      %v1257 = vpop.f32.mrf.mxu0
      %v1258 = vadd.f32 0.0, %v1257
      %1259 = vdwg.mxu0
      %1260 = vmatpush.bf16.msra.mxu0 %v1138
      %1261 = vmatpush.bf16.msra.mxu0 %v1137
      %1262 = vmatpush.bf16.msra.mxu0 %v1136
      %1263 = vmatpush.bf16.msra.mxu0 %v1135
      %1264 = vmatpush.bf16.msra.mxu0 %v1134
      %1265 = vmatpush.bf16.msra.mxu0 %v1133
      %1266 = vmatpush.bf16.msra.mxu0 %v1132
      %1267 = vmatpush.bf16.msra.mxu0 %v1131
      %1268 = vmatmul.bf16.gmra.mxu0 %v932
      %v1269 = vpop.f32.mrf.mxu0
      %v1270 = vadd.f32 %v1181, %v1269
      %v1271 = vpop.f32.mrf.mxu0
      %v1272 = vadd.f32 %v1183, %v1271
      %1273 = vmatmul.bf16.gmra.mxu0 %v935
      %v1274 = vpop.f32.mrf.mxu0
      %v1275 = vadd.f32 %v1186, %v1274
      %v1276 = vpop.f32.mrf.mxu0
      %v1277 = vadd.f32 %v1188, %v1276
      %1278 = vmatmul.bf16.gmra.mxu0 %v938
      %v1279 = vpop.f32.mrf.mxu0
      %v1280 = vadd.f32 %v1191, %v1279
      %v1281 = vpop.f32.mrf.mxu0
      %v1282 = vadd.f32 %v1193, %v1281
      %1283 = vmatmul.bf16.gmra.mxu0 %v941
      %v1284 = vpop.f32.mrf.mxu0
      %v1285 = vadd.f32 %v1196, %v1284
      %v1286 = vpop.f32.mrf.mxu0
      %v1287 = vadd.f32 %v1198, %v1286
      %1288 = vmatmul.bf16.gmra.mxu0 %v944
      %v1289 = vpop.f32.mrf.mxu0
      %v1290 = vadd.f32 %v1201, %v1289
      %v1291 = vpop.f32.mrf.mxu0
      %v1292 = vadd.f32 %v1203, %v1291
      %1293 = vmatmul.bf16.gmra.mxu0 %v947
      %v1294 = vpop.f32.mrf.mxu0
      %v1295 = vadd.f32 %v1206, %v1294
      %v1296 = vpop.f32.mrf.mxu0
      %v1297 = vadd.f32 %v1208, %v1296
      %1298 = vmatmul.bf16.gmra.mxu0 %v950
      %v1299 = vpop.f32.mrf.mxu0
      %v1300 = vadd.f32 %v1211, %v1299
      %v1301 = vpop.f32.mrf.mxu0
      %v1302 = vadd.f32 %v1213, %v1301
      %1303 = vmatmul.bf16.gmra.mxu0 %v953
      %v1304 = vpop.f32.mrf.mxu0
      %v1305 = vadd.f32 %v1216, %v1304
      %v1306 = vpop.f32.mrf.mxu0
      %v1307 = vadd.f32 %v1218, %v1306
      %1308 = vmatmul.bf16.gmra.mxu0 %v956
      %v1309 = vpop.f32.mrf.mxu0
      %v1310 = vadd.f32 %v1221, %v1309
      %v1311 = vpop.f32.mrf.mxu0
      %v1312 = vadd.f32 %v1223, %v1311
      %1313 = vmatmul.bf16.gmra.mxu0 %v959
      %v1314 = vpop.f32.mrf.mxu0
      %v1315 = vadd.f32 %v1226, %v1314
      %v1316 = vpop.f32.mrf.mxu0
      %v1317 = vadd.f32 %v1228, %v1316
      %1318 = vmatmul.bf16.gmra.mxu0 %v962
      %v1319 = vpop.f32.mrf.mxu0
      %v1320 = vadd.f32 %v1231, %v1319
      %v1321 = vpop.f32.mrf.mxu0
      %v1322 = vadd.f32 %v1233, %v1321
      %1323 = vmatmul.bf16.gmra.mxu0 %v965
      %v1324 = vpop.f32.mrf.mxu0
      %v1325 = vadd.f32 %v1236, %v1324
      %v1326 = vpop.f32.mrf.mxu0
      %v1327 = vadd.f32 %v1238, %v1326
      %1328 = vmatmul.bf16.gmra.mxu0 %v968
      %v1329 = vpop.f32.mrf.mxu0
      %v1330 = vadd.f32 %v1241, %v1329
      %v1331 = vpop.f32.mrf.mxu0
      %v1332 = vadd.f32 %v1243, %v1331
      %1333 = vmatmul.bf16.gmra.mxu0 %v971
      %v1334 = vpop.f32.mrf.mxu0
      %v1335 = vadd.f32 %v1246, %v1334
      %v1336 = vpop.f32.mrf.mxu0
      %v1337 = vadd.f32 %v1248, %v1336
      %1338 = vmatmul.bf16.gmra.mxu0 %v974
      %v1339 = vpop.f32.mrf.mxu0
      %v1340 = vadd.f32 %v1251, %v1339
      %v1341 = vpop.f32.mrf.mxu0
      %v1342 = vadd.f32 %v1253, %v1341
      %1343 = vmatmul.bf16.gmra.mxu0 %v977
      %v1344 = vpop.f32.mrf.mxu0
      %v1345 = vadd.f32 %v1256, %v1344
      %v1346 = vpop.f32.mrf.mxu0
      %v1347 = vadd.f32 %v1258, %v1346
      %1348 = vdwg.mxu0
      %1349 = vmatpush.bf16.msra.mxu0 %v1146
      %1350 = vmatpush.bf16.msra.mxu0 %v1145
      %1351 = vmatpush.bf16.msra.mxu0 %v1144
      %1352 = vmatpush.bf16.msra.mxu0 %v1143
      %1353 = vmatpush.bf16.msra.mxu0 %v1142
      %1354 = vmatpush.bf16.msra.mxu0 %v1141
      %1355 = vmatpush.bf16.msra.mxu0 %v1140
      %1356 = vmatpush.bf16.msra.mxu0 %v1139
      %1357 = vmatmul.bf16.gmra.mxu0 %v933
      %v1358 = vpop.f32.mrf.mxu0
      %v1359 = vadd.f32 %v1270, %v1358
      %v1360 = vpop.f32.mrf.mxu0
      %v1361 = vadd.f32 %v1272, %v1360
      %1362 = vmatmul.bf16.gmra.mxu0 %v936
      %v1363 = vpop.f32.mrf.mxu0
      %v1364 = vadd.f32 %v1275, %v1363
      %v1365 = vpop.f32.mrf.mxu0
      %v1366 = vadd.f32 %v1277, %v1365
      %1367 = vmatmul.bf16.gmra.mxu0 %v939
      %v1368 = vpop.f32.mrf.mxu0
      %v1369 = vadd.f32 %v1280, %v1368
      %v1370 = vpop.f32.mrf.mxu0
      %v1371 = vadd.f32 %v1282, %v1370
      %1372 = vmatmul.bf16.gmra.mxu0 %v942
      %v1373 = vpop.f32.mrf.mxu0
      %v1374 = vadd.f32 %v1285, %v1373
      %v1375 = vpop.f32.mrf.mxu0
      %v1376 = vadd.f32 %v1287, %v1375
      %1377 = vmatmul.bf16.gmra.mxu0 %v945
      %v1378 = vpop.f32.mrf.mxu0
      %v1379 = vadd.f32 %v1290, %v1378
      %v1380 = vpop.f32.mrf.mxu0
      %v1381 = vadd.f32 %v1292, %v1380
      %1382 = vmatmul.bf16.gmra.mxu0 %v948
      %v1383 = vpop.f32.mrf.mxu0
      %v1384 = vadd.f32 %v1295, %v1383
      %v1385 = vpop.f32.mrf.mxu0
      %v1386 = vadd.f32 %v1297, %v1385
      %1387 = vmatmul.bf16.gmra.mxu0 %v951
      %v1388 = vpop.f32.mrf.mxu0
      %v1389 = vadd.f32 %v1300, %v1388
      %v1390 = vpop.f32.mrf.mxu0
      %v1391 = vadd.f32 %v1302, %v1390
      %1392 = vmatmul.bf16.gmra.mxu0 %v954
      %v1393 = vpop.f32.mrf.mxu0
      %v1394 = vadd.f32 %v1305, %v1393
      %v1395 = vpop.f32.mrf.mxu0
      %v1396 = vadd.f32 %v1307, %v1395
      %1397 = vmatmul.bf16.gmra.mxu0 %v957
      %v1398 = vpop.f32.mrf.mxu0
      %v1399 = vadd.f32 %v1310, %v1398
      %v1400 = vpop.f32.mrf.mxu0
      %v1401 = vadd.f32 %v1312, %v1400
      %1402 = vmatmul.bf16.gmra.mxu0 %v960
      %v1403 = vpop.f32.mrf.mxu0
      %v1404 = vadd.f32 %v1315, %v1403
      %v1405 = vpop.f32.mrf.mxu0
      %v1406 = vadd.f32 %v1317, %v1405
      %1407 = vmatmul.bf16.gmra.mxu0 %v963
      %v1408 = vpop.f32.mrf.mxu0
      %v1409 = vadd.f32 %v1320, %v1408
      %v1410 = vpop.f32.mrf.mxu0
      %v1411 = vadd.f32 %v1322, %v1410
      %1412 = vmatmul.bf16.gmra.mxu0 %v966
      %v1413 = vpop.f32.mrf.mxu0
      %v1414 = vadd.f32 %v1325, %v1413
      %v1415 = vpop.f32.mrf.mxu0
      %v1416 = vadd.f32 %v1327, %v1415
      %1417 = vmatmul.bf16.gmra.mxu0 %v969
      %v1418 = vpop.f32.mrf.mxu0
      %v1419 = vadd.f32 %v1330, %v1418
      %v1420 = vpop.f32.mrf.mxu0
      %v1421 = vadd.f32 %v1332, %v1420
      %1422 = vmatmul.bf16.gmra.mxu0 %v972
      %v1423 = vpop.f32.mrf.mxu0
      %v1424 = vadd.f32 %v1335, %v1423
      %v1425 = vpop.f32.mrf.mxu0
      %v1426 = vadd.f32 %v1337, %v1425
      %1427 = vmatmul.bf16.gmra.mxu0 %v975
      %v1428 = vpop.f32.mrf.mxu0
      %v1429 = vadd.f32 %v1340, %v1428
      %v1430 = vpop.f32.mrf.mxu0
      %v1431 = vadd.f32 %v1342, %v1430
      %1432 = vmatmul.bf16.gmra.mxu0 %v978
      %v1433 = vpop.f32.mrf.mxu0
      %v1434 = vadd.f32 %v1345, %v1433
      %v1435 = vpop.f32.mrf.mxu0
      %v1436 = vadd.f32 %v1347, %v1435
      %1437 = vdwg.mxu0
      %1438 = vst [vmem:[#allocation3] sm:$0xff] %v1359
      %1439 = vst [vmem:[#allocation3 + $0x8] sm:$0xff] %v1361
      %1440 = vst [vmem:[#allocation3 + $0x10] sm:$0xff] %v1364
      %1441 = vst [vmem:[#allocation3 + $0x18] sm:$0xff] %v1366
      %1442 = vst [vmem:[#allocation3 + $0x20] sm:$0xff] %v1369
      %1443 = vst [vmem:[#allocation3 + $0x28] sm:$0xff] %v1371
      %1444 = vst [vmem:[#allocation3 + $0x30] sm:$0xff] %v1374
      %1445 = vst [vmem:[#allocation3 + $0x38] sm:$0xff] %v1376
      %1446 = vst [vmem:[#allocation3 + $0x40] sm:$0xff] %v1379
      %1447 = vst [vmem:[#allocation3 + $0x48] sm:$0xff] %v1381
      %1448 = vst [vmem:[#allocation3 + $0x50] sm:$0xff] %v1384
      %1449 = vst [vmem:[#allocation3 + $0x58] sm:$0xff] %v1386
      %1450 = vst [vmem:[#allocation3 + $0x60] sm:$0xff] %v1389
      %1451 = vst [vmem:[#allocation3 + $0x68] sm:$0xff] %v1391
      %1452 = vst [vmem:[#allocation3 + $0x70] sm:$0xff] %v1394
      %1453 = vst [vmem:[#allocation3 + $0x78] sm:$0xff] %v1396
      %1454 = vst [vmem:[#allocation3 + $0x80] sm:$0xff] %v1399
      %1455 = vst [vmem:[#allocation3 + $0x88] sm:$0xff] %v1401
      %1456 = vst [vmem:[#allocation3 + $0x90] sm:$0xff] %v1404
      %1457 = vst [vmem:[#allocation3 + $0x98] sm:$0xff] %v1406
      %1458 = vst [vmem:[#allocation3 + $0xa0] sm:$0xff] %v1409
      %1459 = vst [vmem:[#allocation3 + $0xa8] sm:$0xff] %v1411
      %1460 = vst [vmem:[#allocation3 + $0xb0] sm:$0xff] %v1414
      %1461 = vst [vmem:[#allocation3 + $0xb8] sm:$0xff] %v1416
      %1462 = vst [vmem:[#allocation3 + $0xc0] sm:$0xff] %v1419
      %1463 = vst [vmem:[#allocation3 + $0xc8] sm:$0xff] %v1421
      %1464 = vst [vmem:[#allocation3 + $0xd0] sm:$0xff] %v1424
      %1465 = vst [vmem:[#allocation3 + $0xd8] sm:$0xff] %v1426
      %1466 = vst [vmem:[#allocation3 + $0xe0] sm:$0xff] %v1429
      %1467 = vst [vmem:[#allocation3 + $0xe8] sm:$0xff] %v1431
      %1468 = vst [vmem:[#allocation3 + $0xf0] sm:$0xff] %v1434
      %1469 = vst [vmem:[#allocation3 + $0xf8] sm:$0xff] %v1436
      %v1470 = vld [vmem:[#allocation3] sm:$0xff]
      %v1471 = vld [vmem:[#allocation3 + $0x8] sm:$0xff]
      %v1472 = vld [vmem:[#allocation3 + $0x10] sm:$0xff]
      %v1473 = vld [vmem:[#allocation3 + $0x18] sm:$0xff]
      %v1474 = vld [vmem:[#allocation3 + $0x20] sm:$0xff]
      %v1475 = vld [vmem:[#allocation3 + $0x28] sm:$0xff]
      %v1476 = vld [vmem:[#allocation3 + $0x30] sm:$0xff]
      %v1477 = vld [vmem:[#allocation3 + $0x38] sm:$0xff]
      %v1478 = vld [vmem:[#allocation3 + $0x40] sm:$0xff]
      %v1479 = vld [vmem:[#allocation3 + $0x48] sm:$0xff]
      %v1480 = vld [vmem:[#allocation3 + $0x50] sm:$0xff]
      %v1481 = vld [vmem:[#allocation3 + $0x58] sm:$0xff]
      %v1482 = vld [vmem:[#allocation3 + $0x60] sm:$0xff]
      %v1483 = vld [vmem:[#allocation3 + $0x68] sm:$0xff]
      %v1484 = vld [vmem:[#allocation3 + $0x70] sm:$0xff]
      %v1485 = vld [vmem:[#allocation3 + $0x78] sm:$0xff]
      %v1486 = vld [vmem:[#allocation3 + $0x80] sm:$0xff]
      %v1487 = vld [vmem:[#allocation3 + $0x88] sm:$0xff]
      %v1488 = vld [vmem:[#allocation3 + $0x90] sm:$0xff]
      %v1489 = vld [vmem:[#allocation3 + $0x98] sm:$0xff]
      %v1490 = vld [vmem:[#allocation3 + $0xa0] sm:$0xff]
      %v1491 = vld [vmem:[#allocation3 + $0xa8] sm:$0xff]
      %v1492 = vld [vmem:[#allocation3 + $0xb0] sm:$0xff]
      %v1493 = vld [vmem:[#allocation3 + $0xb8] sm:$0xff]
      %v1494 = vld [vmem:[#allocation3 + $0xc0] sm:$0xff]
      %v1495 = vld [vmem:[#allocation3 + $0xc8] sm:$0xff]
      %v1496 = vld [vmem:[#allocation3 + $0xd0] sm:$0xff]
      %v1497 = vld [vmem:[#allocation3 + $0xd8] sm:$0xff]
      %v1498 = vld [vmem:[#allocation3 + $0xe0] sm:$0xff]
      %v1499 = vld [vmem:[#allocation3 + $0xe8] sm:$0xff]
      %v1500 = vld [vmem:[#allocation3 + $0xf0] sm:$0xff]
      %v1501 = vld [vmem:[#allocation3 + $0xf8] sm:$0xff]
      %v1502 = vld [vmem:[%s498] sm:$0xff]
      %v1503 = vld [vmem:[%s498 + $0x8] sm:$0xf]
      %v1504 = vld [vmem:[%s498 + $0xc] sm:$0xff]
      %v1505 = vld [vmem:[%s498 + $0x14] sm:$0xf]
      %v1506 = vld [vmem:[%s498 + $0x18] sm:$0xff]
      %v1507 = vld [vmem:[%s498 + $0x20] sm:$0xf]
      %v1508 = vld [vmem:[%s498 + $0x24] sm:$0xff]
      %v1509 = vld [vmem:[%s498 + $0x2c] sm:$0xf]
      %v1510 = vld [vmem:[%s498 + $0x30] sm:$0xff]
      %v1511 = vld [vmem:[%s498 + $0x38] sm:$0xf]
      %v1512 = vld [vmem:[%s498 + $0x3c] sm:$0xff]
      %v1513 = vld [vmem:[%s498 + $0x44] sm:$0xf]
      %v1514 = vld [vmem:[%s498 + $0x48] sm:$0xff]
      %v1515 = vld [vmem:[%s498 + $0x50] sm:$0xf]
      %v1516 = vld [vmem:[%s498 + $0x54] sm:$0xff]
      %v1517 = vld [vmem:[%s498 + $0x5c] sm:$0xf]
      %v1518 = vld [vmem:[%s498 + $0x60] sm:$0xff]
      %v1519 = vld [vmem:[%s498 + $0x68] sm:$0xf]
      %v1520 = vld [vmem:[%s498 + $0x6c] sm:$0xff]
      %v1521 = vld [vmem:[%s498 + $0x74] sm:$0xf]
      %v1522 = vld [vmem:[%s498 + $0x78] sm:$0xff]
      %v1523 = vld [vmem:[%s498 + $0x80] sm:$0xf]
      %v1524 = vld [vmem:[%s498 + $0x84] sm:$0xff]
      %v1525 = vld [vmem:[%s498 + $0x8c] sm:$0xf]
      %v1526 = vld [vmem:[%s498 + $0x90] sm:$0xff]
      %v1527 = vld [vmem:[%s498 + $0x98] sm:$0xf]
      %v1528 = vld [vmem:[%s498 + $0x9c] sm:$0xff]
      %v1529 = vld [vmem:[%s498 + $0xa4] sm:$0xf]
      %v1530 = vld [vmem:[%s498 + $0xa8] sm:$0xff]
      %v1531 = vld [vmem:[%s498 + $0xb0] sm:$0xf]
      %v1532 = vld [vmem:[%s498 + $0xb4] sm:$0xff]
      %v1533 = vld [vmem:[%s498 + $0xbc] sm:$0xf]
      %v1534 = vld [vmem:[%s498 + $0xc0] sm:$0xff]
      %v1535 = vld [vmem:[%s498 + $0xc8] sm:$0xf]
      %v1536 = vld [vmem:[%s498 + $0xcc] sm:$0xff]
      %v1537 = vld [vmem:[%s498 + $0xd4] sm:$0xf]
      %v1538 = vld [vmem:[%s498 + $0xd8] sm:$0xff]
      %v1539 = vld [vmem:[%s498 + $0xe0] sm:$0xf]
      %v1540 = vld [vmem:[%s498 + $0xe4] sm:$0xff]
      %v1541 = vld [vmem:[%s498 + $0xec] sm:$0xf]
      %v1542 = vld [vmem:[%s498 + $0xf0] sm:$0xff]
      %v1543 = vld [vmem:[%s498 + $0xf8] sm:$0xf]
      %v1544 = vld [vmem:[%s498 + $0xfc] sm:$0xff]
      %v1545 = vld [vmem:[%s498 + $0x104] sm:$0xf]
      %v1546 = vld [vmem:[%s498 + $0x108] sm:$0xff]
      %v1547 = vld [vmem:[%s498 + $0x110] sm:$0xf]
      %v1548 = vld [vmem:[%s498 + $0x114] sm:$0xff]
      %v1549 = vld [vmem:[%s498 + $0x11c] sm:$0xf]
      %v1550 = vld [vmem:[%s498 + $0x120] sm:$0xff]
      %v1551 = vld [vmem:[%s498 + $0x128] sm:$0xf]
      %v1552 = vld [vmem:[%s498 + $0x12c] sm:$0xff]
      %v1553 = vld [vmem:[%s498 + $0x134] sm:$0xf]
      %v1554 = vld [vmem:[%s498 + $0x138] sm:$0xff]
      %v1555 = vld [vmem:[%s498 + $0x140] sm:$0xf]
      %v1556 = vld [vmem:[%s498 + $0x144] sm:$0xff]
      %v1557 = vld [vmem:[%s498 + $0x14c] sm:$0xf]
      %v1558 = vld [vmem:[%s498 + $0x150] sm:$0xff]
      %v1559 = vld [vmem:[%s498 + $0x158] sm:$0xf]
      %v1560 = vld [vmem:[%s498 + $0x15c] sm:$0xff]
      %v1561 = vld [vmem:[%s498 + $0x164] sm:$0xf]
      %v1562 = vld [vmem:[%s498 + $0x168] sm:$0xff]
      %v1563 = vld [vmem:[%s498 + $0x170] sm:$0xf]
      %v1564 = vld [vmem:[%s498 + $0x174] sm:$0xff]
      %v1565 = vld [vmem:[%s498 + $0x17c] sm:$0xf]
      %s1566 = scalar_lea.vmem %s1, 192
      %v1567 = vld [vmem:[%s1566] sm:$0xf]
      %v1568 = vld [vmem:[%s1566 + $0x4] sm:$0xf]
      %v1569 = vld [vmem:[%s1566 + $0x8] sm:$0xf]
      %v1570 = vld [vmem:[%s1566 + $0xc] sm:$0xf]
      %v1571 = vld [vmem:[%s1566 + $0x10] sm:$0xf]
      %v1572 = vld [vmem:[%s1566 + $0x14] sm:$0xf]
      %v1573 = vld [vmem:[%s1566 + $0x18] sm:$0xf]
      %v1574 = vld [vmem:[%s1566 + $0x1c] sm:$0xf]
      %v1575 = vld [vmem:[%s1566 + $0x20] sm:$0xf]
      %v1576 = vld [vmem:[%s1566 + $0x24] sm:$0xf]
      %v1577 = vld [vmem:[%s1566 + $0x28] sm:$0xf]
      %v1578 = vld [vmem:[%s1566 + $0x2c] sm:$0xf]
      %v1579 = vld [vmem:[%s1566 + $0x30] sm:$0xf]
      %v1580 = vld [vmem:[%s1566 + $0x34] sm:$0xf]
      %v1581 = vld [vmem:[%s1566 + $0x38] sm:$0xf]
      %v1582 = vld [vmem:[%s1566 + $0x3c] sm:$0xf]
      %v1583 = vld [vmem:[%s1566 + $0x40] sm:$0xf]
      %v1584 = vld [vmem:[%s1566 + $0x44] sm:$0xf]
      %v1585 = vld [vmem:[%s1566 + $0x48] sm:$0xf]
      %v1586 = vld [vmem:[%s1566 + $0x4c] sm:$0xf]
      %v1587 = vld [vmem:[%s1566 + $0x50] sm:$0xf]
      %v1588 = vld [vmem:[%s1566 + $0x54] sm:$0xf]
      %v1589 = vld [vmem:[%s1566 + $0x58] sm:$0xf]
      %v1590 = vld [vmem:[%s1566 + $0x5c] sm:$0xf]
      %v1591 = vld [vmem:[%s1566 + $0x60] sm:$0xf]
      %v1592 = vld [vmem:[%s1566 + $0x64] sm:$0xf]
      %v1593 = vld [vmem:[%s1566 + $0x68] sm:$0xf]
      %v1594 = vld [vmem:[%s1566 + $0x6c] sm:$0xf]
      %v1595 = vld [vmem:[%s1566 + $0x70] sm:$0xf]
      %v1596 = vld [vmem:[%s1566 + $0x74] sm:$0xf]
      %v1597 = vld [vmem:[%s1566 + $0x78] sm:$0xf]
      %v1598 = vld [vmem:[%s1566 + $0x7c] sm:$0xf]
      %v1599 = vld [vmem:[%s1566 + $0x80] sm:$0xf]
      %v1600 = vld [vmem:[%s1566 + $0x84] sm:$0xf]
      %v1601 = vld [vmem:[%s1566 + $0x88] sm:$0xf]
      %v1602 = vld [vmem:[%s1566 + $0x8c] sm:$0xf]
      %v1603 = vld [vmem:[%s1566 + $0x90] sm:$0xf]
      %v1604 = vld [vmem:[%s1566 + $0x94] sm:$0xf]
      %v1605 = vld [vmem:[%s1566 + $0x98] sm:$0xf]
      %v1606 = vld [vmem:[%s1566 + $0x9c] sm:$0xf]
      %v1607 = vld [vmem:[%s1566 + $0xa0] sm:$0xf]
      %v1608 = vld [vmem:[%s1566 + $0xa4] sm:$0xf]
      %v1609 = vld [vmem:[%s1566 + $0xa8] sm:$0xf]
      %v1610 = vld [vmem:[%s1566 + $0xac] sm:$0xf]
      %v1611 = vld [vmem:[%s1566 + $0xb0] sm:$0xf]
      %v1612 = vld [vmem:[%s1566 + $0xb4] sm:$0xf]
      %v1613 = vld [vmem:[%s1566 + $0xb8] sm:$0xf]
      %v1614 = vld [vmem:[%s1566 + $0xbc] sm:$0xf]
      %v1679 = vunpack.c.l.b16 %v1502
      %v1680 = vunpack.c.h.b16 %v1502
      %v1681 = vunpack.c.l.b16 %v1503
      %v1682 = vunpack.c.l.b16 %v1504
      %v1683 = vunpack.c.h.b16 %v1504
      %v1684 = vunpack.c.l.b16 %v1505
      %v1685 = vunpack.c.l.b16 %v1506
      %v1686 = vunpack.c.h.b16 %v1506
      %v1687 = vunpack.c.l.b16 %v1507
      %v1688 = vunpack.c.l.b16 %v1508
      %v1689 = vunpack.c.h.b16 %v1508
      %v1690 = vunpack.c.l.b16 %v1509
      %v1691 = vunpack.c.l.b16 %v1510
      %v1692 = vunpack.c.h.b16 %v1510
      %v1693 = vunpack.c.l.b16 %v1511
      %v1694 = vunpack.c.l.b16 %v1512
      %v1695 = vunpack.c.h.b16 %v1512
      %v1696 = vunpack.c.l.b16 %v1513
      %v1697 = vunpack.c.l.b16 %v1514
      %v1698 = vunpack.c.h.b16 %v1514
      %v1699 = vunpack.c.l.b16 %v1515
      %v1700 = vunpack.c.l.b16 %v1516
      %v1701 = vunpack.c.h.b16 %v1516
      %v1702 = vunpack.c.l.b16 %v1517
      %v1703 = vunpack.c.l.b16 %v1518
      %v1704 = vunpack.c.h.b16 %v1518
      %v1705 = vunpack.c.l.b16 %v1519
      %v1706 = vunpack.c.l.b16 %v1520
      %v1707 = vunpack.c.h.b16 %v1520
      %v1708 = vunpack.c.l.b16 %v1521
      %v1709 = vunpack.c.l.b16 %v1522
      %v1710 = vunpack.c.h.b16 %v1522
      %v1711 = vunpack.c.l.b16 %v1523
      %v1712 = vunpack.c.l.b16 %v1524
      %v1713 = vunpack.c.h.b16 %v1524
      %v1714 = vunpack.c.l.b16 %v1525
      %v1715 = vunpack.c.l.b16 %v1526
      %v1716 = vunpack.c.h.b16 %v1526
      %v1717 = vunpack.c.l.b16 %v1527
      %v1718 = vunpack.c.l.b16 %v1528
      %v1719 = vunpack.c.h.b16 %v1528
      %v1720 = vunpack.c.l.b16 %v1529
      %v1721 = vunpack.c.l.b16 %v1530
      %v1722 = vunpack.c.h.b16 %v1530
      %v1723 = vunpack.c.l.b16 %v1531
      %v1724 = vunpack.c.l.b16 %v1532
      %v1725 = vunpack.c.h.b16 %v1532
      %v1726 = vunpack.c.l.b16 %v1533
      %v1727 = vunpack.c.l.b16 %v1534
      %v1728 = vunpack.c.h.b16 %v1534
      %v1729 = vunpack.c.l.b16 %v1535
      %v1730 = vunpack.c.l.b16 %v1536
      %v1731 = vunpack.c.h.b16 %v1536
      %v1732 = vunpack.c.l.b16 %v1537
      %v1733 = vunpack.c.l.b16 %v1538
      %v1734 = vunpack.c.h.b16 %v1538
      %v1735 = vunpack.c.l.b16 %v1539
      %v1736 = vunpack.c.l.b16 %v1540
      %v1737 = vunpack.c.h.b16 %v1540
      %v1738 = vunpack.c.l.b16 %v1541
      %v1739 = vunpack.c.l.b16 %v1542
      %v1740 = vunpack.c.h.b16 %v1542
      %v1741 = vunpack.c.l.b16 %v1543
      %v1742 = vunpack.c.l.b16 %v1544
      %v1743 = vunpack.c.h.b16 %v1544
      %v1744 = vunpack.c.l.b16 %v1545
      %v1745 = vunpack.c.l.b16 %v1546
      %v1746 = vunpack.c.h.b16 %v1546
      %v1747 = vunpack.c.l.b16 %v1547
      %v1748 = vunpack.c.l.b16 %v1548
      %v1749 = vunpack.c.h.b16 %v1548
      %v1750 = vunpack.c.l.b16 %v1549
      %v1751 = vunpack.c.l.b16 %v1550
      %v1752 = vunpack.c.h.b16 %v1550
      %v1753 = vunpack.c.l.b16 %v1551
      %v1754 = vunpack.c.l.b16 %v1552
      %v1755 = vunpack.c.h.b16 %v1552
      %v1756 = vunpack.c.l.b16 %v1553
      %v1757 = vunpack.c.l.b16 %v1554
      %v1758 = vunpack.c.h.b16 %v1554
      %v1759 = vunpack.c.l.b16 %v1555
      %v1760 = vunpack.c.l.b16 %v1556
      %v1761 = vunpack.c.h.b16 %v1556
      %v1762 = vunpack.c.l.b16 %v1557
      %v1763 = vunpack.c.l.b16 %v1558
      %v1764 = vunpack.c.h.b16 %v1558
      %v1765 = vunpack.c.l.b16 %v1559
      %v1766 = vunpack.c.l.b16 %v1560
      %v1767 = vunpack.c.h.b16 %v1560
      %v1768 = vunpack.c.l.b16 %v1561
      %v1769 = vunpack.c.l.b16 %v1562
      %v1770 = vunpack.c.h.b16 %v1562
      %v1771 = vunpack.c.l.b16 %v1563
      %v1772 = vunpack.c.l.b16 %v1564
      %v1773 = vunpack.c.h.b16 %v1564
      %v1774 = vunpack.c.l.b16 %v1565
      %v1775 = vpack.c.b16 %v1682, %v1679
      %v1776 = vpack.c.b16 %v1683, %v1680
      %v1777 = vpack.c.b16 %v1684, %v1681
      %v1778 = vpack.c.b16 %v1688, %v1685
      %v1779 = vpack.c.b16 %v1689, %v1686
      %v1780 = vpack.c.b16 %v1690, %v1687
      %v1781 = vpack.c.b16 %v1694, %v1691
      %v1782 = vpack.c.b16 %v1695, %v1692
      %v1783 = vpack.c.b16 %v1696, %v1693
      %v1784 = vpack.c.b16 %v1700, %v1697
      %v1785 = vpack.c.b16 %v1701, %v1698
      %v1786 = vpack.c.b16 %v1702, %v1699
      %v1787 = vpack.c.b16 %v1706, %v1703
      %v1788 = vpack.c.b16 %v1707, %v1704
      %v1789 = vpack.c.b16 %v1708, %v1705
      %v1790 = vpack.c.b16 %v1712, %v1709
      %v1791 = vpack.c.b16 %v1713, %v1710
      %v1792 = vpack.c.b16 %v1714, %v1711
      %v1793 = vpack.c.b16 %v1718, %v1715
      %v1794 = vpack.c.b16 %v1719, %v1716
      %v1795 = vpack.c.b16 %v1720, %v1717
      %v1796 = vpack.c.b16 %v1724, %v1721
      %v1797 = vpack.c.b16 %v1725, %v1722
      %v1798 = vpack.c.b16 %v1726, %v1723
      %v1799 = vpack.c.b16 %v1730, %v1727
      %v1800 = vpack.c.b16 %v1731, %v1728
      %v1801 = vpack.c.b16 %v1732, %v1729
      %v1802 = vpack.c.b16 %v1736, %v1733
      %v1803 = vpack.c.b16 %v1737, %v1734
      %v1804 = vpack.c.b16 %v1738, %v1735
      %v1805 = vpack.c.b16 %v1742, %v1739
      %v1806 = vpack.c.b16 %v1743, %v1740
      %v1807 = vpack.c.b16 %v1744, %v1741
      %v1808 = vpack.c.b16 %v1748, %v1745
      %v1809 = vpack.c.b16 %v1749, %v1746
      %v1810 = vpack.c.b16 %v1750, %v1747
      %v1811 = vpack.c.b16 %v1754, %v1751
      %v1812 = vpack.c.b16 %v1755, %v1752
      %v1813 = vpack.c.b16 %v1756, %v1753
      %v1814 = vpack.c.b16 %v1760, %v1757
      %v1815 = vpack.c.b16 %v1761, %v1758
      %v1816 = vpack.c.b16 %v1762, %v1759
      %v1817 = vpack.c.b16 %v1766, %v1763
      %v1818 = vpack.c.b16 %v1767, %v1764
      %v1819 = vpack.c.b16 %v1768, %v1765
      %v1820 = vpack.c.b16 %v1772, %v1769
      %v1821 = vpack.c.b16 %v1773, %v1770
      %v1822 = vpack.c.b16 %v1774, %v1771
      %v1919 = vunpack.c.l.b16 %v1567
      %v1920 = vunpack.c.l.b16 %v1568
      %v1921 = vunpack.c.l.b16 %v1569
      %v1922 = vunpack.c.l.b16 %v1570
      %v1923 = vunpack.c.l.b16 %v1571
      %v1924 = vunpack.c.l.b16 %v1572
      %v1925 = vunpack.c.l.b16 %v1573
      %v1926 = vunpack.c.l.b16 %v1574
      %v1927 = vunpack.c.l.b16 %v1575
      %v1928 = vunpack.c.l.b16 %v1576
      %v1929 = vunpack.c.l.b16 %v1577
      %v1930 = vunpack.c.l.b16 %v1578
      %v1931 = vunpack.c.l.b16 %v1579
      %v1932 = vunpack.c.l.b16 %v1580
      %v1933 = vunpack.c.l.b16 %v1581
      %v1934 = vunpack.c.l.b16 %v1582
      %v1935 = vunpack.c.l.b16 %v1583
      %v1936 = vunpack.c.l.b16 %v1584
      %v1937 = vunpack.c.l.b16 %v1585
      %v1938 = vunpack.c.l.b16 %v1586
      %v1939 = vunpack.c.l.b16 %v1587
      %v1940 = vunpack.c.l.b16 %v1588
      %v1941 = vunpack.c.l.b16 %v1589
      %v1942 = vunpack.c.l.b16 %v1590
      %v1943 = vunpack.c.l.b16 %v1591
      %v1944 = vunpack.c.l.b16 %v1592
      %v1945 = vunpack.c.l.b16 %v1593
      %v1946 = vunpack.c.l.b16 %v1594
      %v1947 = vunpack.c.l.b16 %v1595
      %v1948 = vunpack.c.l.b16 %v1596
      %v1949 = vunpack.c.l.b16 %v1597
      %v1950 = vunpack.c.l.b16 %v1598
      %v1951 = vunpack.c.l.b16 %v1599
      %v1952 = vunpack.c.l.b16 %v1600
      %v1953 = vunpack.c.l.b16 %v1601
      %v1954 = vunpack.c.l.b16 %v1602
      %v1955 = vunpack.c.l.b16 %v1603
      %v1956 = vunpack.c.l.b16 %v1604
      %v1957 = vunpack.c.l.b16 %v1605
      %v1958 = vunpack.c.l.b16 %v1606
      %v1959 = vunpack.c.l.b16 %v1607
      %v1960 = vunpack.c.l.b16 %v1608
      %v1961 = vunpack.c.l.b16 %v1609
      %v1962 = vunpack.c.l.b16 %v1610
      %v1963 = vunpack.c.l.b16 %v1611
      %v1964 = vunpack.c.l.b16 %v1612
      %v1965 = vunpack.c.l.b16 %v1613
      %v1966 = vunpack.c.l.b16 %v1614
      %v1967 = vpack.c.b16 %v1920, %v1919
      %v1968 = vpack.c.b16 %v1922, %v1921
      %v1969 = vpack.c.b16 %v1924, %v1923
      %v1970 = vpack.c.b16 %v1926, %v1925
      %v1971 = vpack.c.b16 %v1928, %v1927
      %v1972 = vpack.c.b16 %v1930, %v1929
      %v1973 = vpack.c.b16 %v1932, %v1931
      %v1974 = vpack.c.b16 %v1934, %v1933
      %v1975 = vpack.c.b16 %v1936, %v1935
      %v1976 = vpack.c.b16 %v1938, %v1937
      %v1977 = vpack.c.b16 %v1940, %v1939
      %v1978 = vpack.c.b16 %v1942, %v1941
      %v1979 = vpack.c.b16 %v1944, %v1943
      %v1980 = vpack.c.b16 %v1946, %v1945
      %v1981 = vpack.c.b16 %v1948, %v1947
      %v1982 = vpack.c.b16 %v1950, %v1949
      %v1983 = vpack.c.b16 %v1952, %v1951
      %v1984 = vpack.c.b16 %v1954, %v1953
      %v1985 = vpack.c.b16 %v1956, %v1955
      %v1986 = vpack.c.b16 %v1958, %v1957
      %v1987 = vpack.c.b16 %v1960, %v1959
      %v1988 = vpack.c.b16 %v1962, %v1961
      %v1989 = vpack.c.b16 %v1964, %v1963
      %v1990 = vpack.c.b16 %v1966, %v1965
      %2015 = vmatpush.bf16.msra.mxu0 %v1974
      %2016 = vmatpush.bf16.msra.mxu0 %v1973
      %2017 = vmatpush.bf16.msra.mxu0 %v1972
      %2018 = vmatpush.bf16.msra.mxu0 %v1971
      %2019 = vmatpush.bf16.msra.mxu0 %v1970
      %2020 = vmatpush.bf16.msra.mxu0 %v1969
      %2021 = vmatpush.bf16.msra.mxu0 %v1968
      %2022 = vmatpush.bf16.msra.mxu0 %v1967
      %2023 = vmatmul.bf16.gmra.mxu0 %v1775
      %v2024 = vpop.f32.mrf.mxu0
      %v2025 = vadd.f32 0.0, %v2024
      %v2026 = vpop.f32.mrf.mxu0
      %v2027 = vadd.f32 0.0, %v2026
      %2028 = vmatmul.bf16.gmra.mxu0 %v1778
      %v2029 = vpop.f32.mrf.mxu0
      %v2030 = vadd.f32 0.0, %v2029
      %v2031 = vpop.f32.mrf.mxu0
      %v2032 = vadd.f32 0.0, %v2031
      %2033 = vmatmul.bf16.gmra.mxu0 %v1781
      %v2034 = vpop.f32.mrf.mxu0
      %v2035 = vadd.f32 0.0, %v2034
      %v2036 = vpop.f32.mrf.mxu0
      %v2037 = vadd.f32 0.0, %v2036
      %2038 = vmatmul.bf16.gmra.mxu0 %v1784
      %v2039 = vpop.f32.mrf.mxu0
      %v2040 = vadd.f32 0.0, %v2039
      %v2041 = vpop.f32.mrf.mxu0
      %v2042 = vadd.f32 0.0, %v2041
      %2043 = vmatmul.bf16.gmra.mxu0 %v1787
      %v2044 = vpop.f32.mrf.mxu0
      %v2045 = vadd.f32 0.0, %v2044
      %v2046 = vpop.f32.mrf.mxu0
      %v2047 = vadd.f32 0.0, %v2046
      %2048 = vmatmul.bf16.gmra.mxu0 %v1790
      %v2049 = vpop.f32.mrf.mxu0
      %v2050 = vadd.f32 0.0, %v2049
      %v2051 = vpop.f32.mrf.mxu0
      %v2052 = vadd.f32 0.0, %v2051
      %2053 = vmatmul.bf16.gmra.mxu0 %v1793
      %v2054 = vpop.f32.mrf.mxu0
      %v2055 = vadd.f32 0.0, %v2054
      %v2056 = vpop.f32.mrf.mxu0
      %v2057 = vadd.f32 0.0, %v2056
      %2058 = vmatmul.bf16.gmra.mxu0 %v1796
      %v2059 = vpop.f32.mrf.mxu0
      %v2060 = vadd.f32 0.0, %v2059
      %v2061 = vpop.f32.mrf.mxu0
      %v2062 = vadd.f32 0.0, %v2061
      %2063 = vmatmul.bf16.gmra.mxu0 %v1799
      %v2064 = vpop.f32.mrf.mxu0
      %v2065 = vadd.f32 0.0, %v2064
      %v2066 = vpop.f32.mrf.mxu0
      %v2067 = vadd.f32 0.0, %v2066
      %2068 = vmatmul.bf16.gmra.mxu0 %v1802
      %v2069 = vpop.f32.mrf.mxu0
      %v2070 = vadd.f32 0.0, %v2069
      %v2071 = vpop.f32.mrf.mxu0
      %v2072 = vadd.f32 0.0, %v2071
      %2073 = vmatmul.bf16.gmra.mxu0 %v1805
      %v2074 = vpop.f32.mrf.mxu0
      %v2075 = vadd.f32 0.0, %v2074
      %v2076 = vpop.f32.mrf.mxu0
      %v2077 = vadd.f32 0.0, %v2076
      %2078 = vmatmul.bf16.gmra.mxu0 %v1808
      %v2079 = vpop.f32.mrf.mxu0
      %v2080 = vadd.f32 0.0, %v2079
      %v2081 = vpop.f32.mrf.mxu0
      %v2082 = vadd.f32 0.0, %v2081
      %2083 = vmatmul.bf16.gmra.mxu0 %v1811
      %v2084 = vpop.f32.mrf.mxu0
      %v2085 = vadd.f32 0.0, %v2084
      %v2086 = vpop.f32.mrf.mxu0
      %v2087 = vadd.f32 0.0, %v2086
      %2088 = vmatmul.bf16.gmra.mxu0 %v1814
      %v2089 = vpop.f32.mrf.mxu0
      %v2090 = vadd.f32 0.0, %v2089
      %v2091 = vpop.f32.mrf.mxu0
      %v2092 = vadd.f32 0.0, %v2091
      %2093 = vmatmul.bf16.gmra.mxu0 %v1817
      %v2094 = vpop.f32.mrf.mxu0
      %v2095 = vadd.f32 0.0, %v2094
      %v2096 = vpop.f32.mrf.mxu0
      %v2097 = vadd.f32 0.0, %v2096
      %2098 = vmatmul.bf16.gmra.mxu0 %v1820
      %v2099 = vpop.f32.mrf.mxu0
      %v2100 = vadd.f32 0.0, %v2099
      %v2101 = vpop.f32.mrf.mxu0
      %v2102 = vadd.f32 0.0, %v2101
      %2103 = vdwg.mxu0
      %2104 = vmatpush.bf16.msra.mxu0 %v1982
      %2105 = vmatpush.bf16.msra.mxu0 %v1981
      %2106 = vmatpush.bf16.msra.mxu0 %v1980
      %2107 = vmatpush.bf16.msra.mxu0 %v1979
      %2108 = vmatpush.bf16.msra.mxu0 %v1978
      %2109 = vmatpush.bf16.msra.mxu0 %v1977
      %2110 = vmatpush.bf16.msra.mxu0 %v1976
      %2111 = vmatpush.bf16.msra.mxu0 %v1975
      %2112 = vmatmul.bf16.gmra.mxu0 %v1776
      %v2113 = vpop.f32.mrf.mxu0
      %v2114 = vadd.f32 %v2025, %v2113
      %v2115 = vpop.f32.mrf.mxu0
      %v2116 = vadd.f32 %v2027, %v2115
      %2117 = vmatmul.bf16.gmra.mxu0 %v1779
      %v2118 = vpop.f32.mrf.mxu0
      %v2119 = vadd.f32 %v2030, %v2118
      %v2120 = vpop.f32.mrf.mxu0
      %v2121 = vadd.f32 %v2032, %v2120
      %2122 = vmatmul.bf16.gmra.mxu0 %v1782
      %v2123 = vpop.f32.mrf.mxu0
      %v2124 = vadd.f32 %v2035, %v2123
      %v2125 = vpop.f32.mrf.mxu0
      %v2126 = vadd.f32 %v2037, %v2125
      %2127 = vmatmul.bf16.gmra.mxu0 %v1785
      %v2128 = vpop.f32.mrf.mxu0
      %v2129 = vadd.f32 %v2040, %v2128
      %v2130 = vpop.f32.mrf.mxu0
      %v2131 = vadd.f32 %v2042, %v2130
      %2132 = vmatmul.bf16.gmra.mxu0 %v1788
      %v2133 = vpop.f32.mrf.mxu0
      %v2134 = vadd.f32 %v2045, %v2133
      %v2135 = vpop.f32.mrf.mxu0
      %v2136 = vadd.f32 %v2047, %v2135
      %2137 = vmatmul.bf16.gmra.mxu0 %v1791
      %v2138 = vpop.f32.mrf.mxu0
      %v2139 = vadd.f32 %v2050, %v2138
      %v2140 = vpop.f32.mrf.mxu0
      %v2141 = vadd.f32 %v2052, %v2140
      %2142 = vmatmul.bf16.gmra.mxu0 %v1794
      %v2143 = vpop.f32.mrf.mxu0
      %v2144 = vadd.f32 %v2055, %v2143
      %v2145 = vpop.f32.mrf.mxu0
      %v2146 = vadd.f32 %v2057, %v2145
      %2147 = vmatmul.bf16.gmra.mxu0 %v1797
      %v2148 = vpop.f32.mrf.mxu0
      %v2149 = vadd.f32 %v2060, %v2148
      %v2150 = vpop.f32.mrf.mxu0
      %v2151 = vadd.f32 %v2062, %v2150
      %2152 = vmatmul.bf16.gmra.mxu0 %v1800
      %v2153 = vpop.f32.mrf.mxu0
      %v2154 = vadd.f32 %v2065, %v2153
      %v2155 = vpop.f32.mrf.mxu0
      %v2156 = vadd.f32 %v2067, %v2155
      %2157 = vmatmul.bf16.gmra.mxu0 %v1803
      %v2158 = vpop.f32.mrf.mxu0
      %v2159 = vadd.f32 %v2070, %v2158
      %v2160 = vpop.f32.mrf.mxu0
      %v2161 = vadd.f32 %v2072, %v2160
      %2162 = vmatmul.bf16.gmra.mxu0 %v1806
      %v2163 = vpop.f32.mrf.mxu0
      %v2164 = vadd.f32 %v2075, %v2163
      %v2165 = vpop.f32.mrf.mxu0
      %v2166 = vadd.f32 %v2077, %v2165
      %2167 = vmatmul.bf16.gmra.mxu0 %v1809
      %v2168 = vpop.f32.mrf.mxu0
      %v2169 = vadd.f32 %v2080, %v2168
      %v2170 = vpop.f32.mrf.mxu0
      %v2171 = vadd.f32 %v2082, %v2170
      %2172 = vmatmul.bf16.gmra.mxu0 %v1812
      %v2173 = vpop.f32.mrf.mxu0
      %v2174 = vadd.f32 %v2085, %v2173
      %v2175 = vpop.f32.mrf.mxu0
      %v2176 = vadd.f32 %v2087, %v2175
      %2177 = vmatmul.bf16.gmra.mxu0 %v1815
      %v2178 = vpop.f32.mrf.mxu0
      %v2179 = vadd.f32 %v2090, %v2178
      %v2180 = vpop.f32.mrf.mxu0
      %v2181 = vadd.f32 %v2092, %v2180
      %2182 = vmatmul.bf16.gmra.mxu0 %v1818
      %v2183 = vpop.f32.mrf.mxu0
      %v2184 = vadd.f32 %v2095, %v2183
      %v2185 = vpop.f32.mrf.mxu0
      %v2186 = vadd.f32 %v2097, %v2185
      %2187 = vmatmul.bf16.gmra.mxu0 %v1821
      %v2188 = vpop.f32.mrf.mxu0
      %v2189 = vadd.f32 %v2100, %v2188
      %v2190 = vpop.f32.mrf.mxu0
      %v2191 = vadd.f32 %v2102, %v2190
      %2192 = vdwg.mxu0
      %2193 = vmatpush.bf16.msra.mxu0 %v1990
      %2194 = vmatpush.bf16.msra.mxu0 %v1989
      %2195 = vmatpush.bf16.msra.mxu0 %v1988
      %2196 = vmatpush.bf16.msra.mxu0 %v1987
      %2197 = vmatpush.bf16.msra.mxu0 %v1986
      %2198 = vmatpush.bf16.msra.mxu0 %v1985
      %2199 = vmatpush.bf16.msra.mxu0 %v1984
      %2200 = vmatpush.bf16.msra.mxu0 %v1983
      %2201 = vmatmul.bf16.gmra.mxu0 %v1777
      %v2202 = vpop.f32.mrf.mxu0
      %v2203 = vadd.f32 %v2114, %v2202
      %v2204 = vpop.f32.mrf.mxu0
      %v2205 = vadd.f32 %v2116, %v2204
      %2206 = vmatmul.bf16.gmra.mxu0 %v1780
      %v2207 = vpop.f32.mrf.mxu0
      %v2208 = vadd.f32 %v2119, %v2207
      %v2209 = vpop.f32.mrf.mxu0
      %v2210 = vadd.f32 %v2121, %v2209
      %2211 = vmatmul.bf16.gmra.mxu0 %v1783
      %v2212 = vpop.f32.mrf.mxu0
      %v2213 = vadd.f32 %v2124, %v2212
      %v2214 = vpop.f32.mrf.mxu0
      %v2215 = vadd.f32 %v2126, %v2214
      %2216 = vmatmul.bf16.gmra.mxu0 %v1786
      %v2217 = vpop.f32.mrf.mxu0
      %v2218 = vadd.f32 %v2129, %v2217
      %v2219 = vpop.f32.mrf.mxu0
      %v2220 = vadd.f32 %v2131, %v2219
      %2221 = vmatmul.bf16.gmra.mxu0 %v1789
      %v2222 = vpop.f32.mrf.mxu0
      %v2223 = vadd.f32 %v2134, %v2222
      %v2224 = vpop.f32.mrf.mxu0
      %v2225 = vadd.f32 %v2136, %v2224
      %2226 = vmatmul.bf16.gmra.mxu0 %v1792
      %v2227 = vpop.f32.mrf.mxu0
      %v2228 = vadd.f32 %v2139, %v2227
      %v2229 = vpop.f32.mrf.mxu0
      %v2230 = vadd.f32 %v2141, %v2229
      %2231 = vmatmul.bf16.gmra.mxu0 %v1795
      %v2232 = vpop.f32.mrf.mxu0
      %v2233 = vadd.f32 %v2144, %v2232
      %v2234 = vpop.f32.mrf.mxu0
      %v2235 = vadd.f32 %v2146, %v2234
      %2236 = vmatmul.bf16.gmra.mxu0 %v1798
      %v2237 = vpop.f32.mrf.mxu0
      %v2238 = vadd.f32 %v2149, %v2237
      %v2239 = vpop.f32.mrf.mxu0
      %v2240 = vadd.f32 %v2151, %v2239
      %2241 = vmatmul.bf16.gmra.mxu0 %v1801
      %v2242 = vpop.f32.mrf.mxu0
      %v2243 = vadd.f32 %v2154, %v2242
      %v2244 = vpop.f32.mrf.mxu0
      %v2245 = vadd.f32 %v2156, %v2244
      %2246 = vmatmul.bf16.gmra.mxu0 %v1804
      %v2247 = vpop.f32.mrf.mxu0
      %v2248 = vadd.f32 %v2159, %v2247
      %v2249 = vpop.f32.mrf.mxu0
      %v2250 = vadd.f32 %v2161, %v2249
      %2251 = vmatmul.bf16.gmra.mxu0 %v1807
      %v2252 = vpop.f32.mrf.mxu0
      %v2253 = vadd.f32 %v2164, %v2252
      %v2254 = vpop.f32.mrf.mxu0
      %v2255 = vadd.f32 %v2166, %v2254
      %2256 = vmatmul.bf16.gmra.mxu0 %v1810
      %v2257 = vpop.f32.mrf.mxu0
      %v2258 = vadd.f32 %v2169, %v2257
      %v2259 = vpop.f32.mrf.mxu0
      %v2260 = vadd.f32 %v2171, %v2259
      %2261 = vmatmul.bf16.gmra.mxu0 %v1813
      %v2262 = vpop.f32.mrf.mxu0
      %v2263 = vadd.f32 %v2174, %v2262
      %v2264 = vpop.f32.mrf.mxu0
      %v2265 = vadd.f32 %v2176, %v2264
      %2266 = vmatmul.bf16.gmra.mxu0 %v1816
      %v2267 = vpop.f32.mrf.mxu0
      %v2268 = vadd.f32 %v2179, %v2267
      %v2269 = vpop.f32.mrf.mxu0
      %v2270 = vadd.f32 %v2181, %v2269
      %2271 = vmatmul.bf16.gmra.mxu0 %v1819
      %v2272 = vpop.f32.mrf.mxu0
      %v2273 = vadd.f32 %v2184, %v2272
      %v2274 = vpop.f32.mrf.mxu0
      %v2275 = vadd.f32 %v2186, %v2274
      %2276 = vmatmul.bf16.gmra.mxu0 %v1822
      %v2277 = vpop.f32.mrf.mxu0
      %v2278 = vadd.f32 %v2189, %v2277
      %v2279 = vpop.f32.mrf.mxu0
      %v2280 = vadd.f32 %v2191, %v2279
      %2281 = vdwg.mxu0
      %v2282 = vadd.f32 %v1470, %v2203
      %v2283 = vadd.f32 %v1471, %v2205
      %v2284 = vadd.f32 %v1472, %v2208
      %v2285 = vadd.f32 %v1473, %v2210
      %v2286 = vadd.f32 %v1474, %v2213
      %v2287 = vadd.f32 %v1475, %v2215
      %v2288 = vadd.f32 %v1476, %v2218
      %v2289 = vadd.f32 %v1477, %v2220
      %v2290 = vadd.f32 %v1478, %v2223
      %v2291 = vadd.f32 %v1479, %v2225
      %v2292 = vadd.f32 %v1480, %v2228
      %v2293 = vadd.f32 %v1481, %v2230
      %v2294 = vadd.f32 %v1482, %v2233
      %v2295 = vadd.f32 %v1483, %v2235
      %v2296 = vadd.f32 %v1484, %v2238
      %v2297 = vadd.f32 %v1485, %v2240
      %v2298 = vadd.f32 %v1486, %v2243
      %v2299 = vadd.f32 %v1487, %v2245
      %v2300 = vadd.f32 %v1488, %v2248
      %v2301 = vadd.f32 %v1489, %v2250
      %v2302 = vadd.f32 %v1490, %v2253
      %v2303 = vadd.f32 %v1491, %v2255
      %v2304 = vadd.f32 %v1492, %v2258
      %v2305 = vadd.f32 %v1493, %v2260
      %v2306 = vadd.f32 %v1494, %v2263
      %v2307 = vadd.f32 %v1495, %v2265
      %v2308 = vadd.f32 %v1496, %v2268
      %v2309 = vadd.f32 %v1497, %v2270
      %v2310 = vadd.f32 %v1498, %v2273
      %v2311 = vadd.f32 %v1499, %v2275
      %v2312 = vadd.f32 %v1500, %v2278
      %v2313 = vadd.f32 %v1501, %v2280
      %2314 = vst [vmem:[#allocation3] sm:$0xff] %v2282
      %2315 = vst [vmem:[#allocation3 + $0x8] sm:$0xff] %v2283
      %2316 = vst [vmem:[#allocation3 + $0x10] sm:$0xff] %v2284
      %2317 = vst [vmem:[#allocation3 + $0x18] sm:$0xff] %v2285
      %2318 = vst [vmem:[#allocation3 + $0x20] sm:$0xff] %v2286
      %2319 = vst [vmem:[#allocation3 + $0x28] sm:$0xff] %v2287
      %2320 = vst [vmem:[#allocation3 + $0x30] sm:$0xff] %v2288
      %2321 = vst [vmem:[#allocation3 + $0x38] sm:$0xff] %v2289
      %2322 = vst [vmem:[#allocation3 + $0x40] sm:$0xff] %v2290
      %2323 = vst [vmem:[#allocation3 + $0x48] sm:$0xff] %v2291
      %2324 = vst [vmem:[#allocation3 + $0x50] sm:$0xff] %v2292
      %2325 = vst [vmem:[#allocation3 + $0x58] sm:$0xff] %v2293
      %2326 = vst [vmem:[#allocation3 + $0x60] sm:$0xff] %v2294
      %2327 = vst [vmem:[#allocation3 + $0x68] sm:$0xff] %v2295
      %2328 = vst [vmem:[#allocation3 + $0x70] sm:$0xff] %v2296
      %2329 = vst [vmem:[#allocation3 + $0x78] sm:$0xff] %v2297
      %2330 = vst [vmem:[#allocation3 + $0x80] sm:$0xff] %v2298
      %2331 = vst [vmem:[#allocation3 + $0x88] sm:$0xff] %v2299
      %2332 = vst [vmem:[#allocation3 + $0x90] sm:$0xff] %v2300
      %2333 = vst [vmem:[#allocation3 + $0x98] sm:$0xff] %v2301
      %2334 = vst [vmem:[#allocation3 + $0xa0] sm:$0xff] %v2302
      %2335 = vst [vmem:[#allocation3 + $0xa8] sm:$0xff] %v2303
      %2336 = vst [vmem:[#allocation3 + $0xb0] sm:$0xff] %v2304
      %2337 = vst [vmem:[#allocation3 + $0xb8] sm:$0xff] %v2305
      %2338 = vst [vmem:[#allocation3 + $0xc0] sm:$0xff] %v2306
      %2339 = vst [vmem:[#allocation3 + $0xc8] sm:$0xff] %v2307
      %2340 = vst [vmem:[#allocation3 + $0xd0] sm:$0xff] %v2308
      %2341 = vst [vmem:[#allocation3 + $0xd8] sm:$0xff] %v2309
      %2342 = vst [vmem:[#allocation3 + $0xe0] sm:$0xff] %v2310
      %2343 = vst [vmem:[#allocation3 + $0xe8] sm:$0xff] %v2311
      %2344 = vst [vmem:[#allocation3 + $0xf0] sm:$0xff] %v2312
      %2345 = vst [vmem:[#allocation3 + $0xf8] sm:$0xff] %v2313
      %v2346 = vld [vmem:[#allocation3] sm:$0xff]
      %v2347 = vld [vmem:[#allocation3 + $0x8] sm:$0xff]
      %v2348 = vld [vmem:[#allocation3 + $0x10] sm:$0xff]
      %v2349 = vld [vmem:[#allocation3 + $0x18] sm:$0xff]
      %v2350 = vld [vmem:[#allocation3 + $0x20] sm:$0xff]
      %v2351 = vld [vmem:[#allocation3 + $0x28] sm:$0xff]
      %v2352 = vld [vmem:[#allocation3 + $0x30] sm:$0xff]
      %v2353 = vld [vmem:[#allocation3 + $0x38] sm:$0xff]
      %v2354 = vld [vmem:[#allocation3 + $0x40] sm:$0xff]
      %v2355 = vld [vmem:[#allocation3 + $0x48] sm:$0xff]
      %v2356 = vld [vmem:[#allocation3 + $0x50] sm:$0xff]
      %v2357 = vld [vmem:[#allocation3 + $0x58] sm:$0xff]
      %v2358 = vld [vmem:[#allocation3 + $0x60] sm:$0xff]
      %v2359 = vld [vmem:[#allocation3 + $0x68] sm:$0xff]
      %v2360 = vld [vmem:[#allocation3 + $0x70] sm:$0xff]
      %v2361 = vld [vmem:[#allocation3 + $0x78] sm:$0xff]
      %v2362 = vld [vmem:[#allocation3 + $0x80] sm:$0xff]
      %v2363 = vld [vmem:[#allocation3 + $0x88] sm:$0xff]
      %v2364 = vld [vmem:[#allocation3 + $0x90] sm:$0xff]
      %v2365 = vld [vmem:[#allocation3 + $0x98] sm:$0xff]
      %v2366 = vld [vmem:[#allocation3 + $0xa0] sm:$0xff]
      %v2367 = vld [vmem:[#allocation3 + $0xa8] sm:$0xff]
      %v2368 = vld [vmem:[#allocation3 + $0xb0] sm:$0xff]
      %v2369 = vld [vmem:[#allocation3 + $0xb8] sm:$0xff]
      %v2370 = vld [vmem:[#allocation3 + $0xc0] sm:$0xff]
      %v2371 = vld [vmem:[#allocation3 + $0xc8] sm:$0xff]
      %v2372 = vld [vmem:[#allocation3 + $0xd0] sm:$0xff]
      %v2373 = vld [vmem:[#allocation3 + $0xd8] sm:$0xff]
      %v2374 = vld [vmem:[#allocation3 + $0xe0] sm:$0xff]
      %v2375 = vld [vmem:[#allocation3 + $0xe8] sm:$0xff]
      %v2376 = vld [vmem:[#allocation3 + $0xf0] sm:$0xff]
      %v2377 = vld [vmem:[#allocation3 + $0xf8] sm:$0xff]
      %s2378 = scalar_lea.vmem [#allocation2], 48
      %v2379 = vld [vmem:[%s2378] sm:$0xff]
      %v2380 = vld [vmem:[%s2378 + $0x8] sm:$0xf]
      %v2381 = vld [vmem:[%s2378 + $0xc] sm:$0xff]
      %v2382 = vld [vmem:[%s2378 + $0x14] sm:$0xf]
      %v2383 = vld [vmem:[%s2378 + $0x18] sm:$0xff]
      %v2384 = vld [vmem:[%s2378 + $0x20] sm:$0xf]
      %v2385 = vld [vmem:[%s2378 + $0x24] sm:$0xff]
      %v2386 = vld [vmem:[%s2378 + $0x2c] sm:$0xf]
      %v2387 = vld [vmem:[%s2378 + $0x30] sm:$0xff]
      %v2388 = vld [vmem:[%s2378 + $0x38] sm:$0xf]
      %v2389 = vld [vmem:[%s2378 + $0x3c] sm:$0xff]
      %v2390 = vld [vmem:[%s2378 + $0x44] sm:$0xf]
      %v2391 = vld [vmem:[%s2378 + $0x48] sm:$0xff]
      %v2392 = vld [vmem:[%s2378 + $0x50] sm:$0xf]
      %v2393 = vld [vmem:[%s2378 + $0x54] sm:$0xff]
      %v2394 = vld [vmem:[%s2378 + $0x5c] sm:$0xf]
      %v2395 = vld [vmem:[%s2378 + $0x60] sm:$0xff]
      %v2396 = vld [vmem:[%s2378 + $0x68] sm:$0xf]
      %v2397 = vld [vmem:[%s2378 + $0x6c] sm:$0xff]
      %v2398 = vld [vmem:[%s2378 + $0x74] sm:$0xf]
      %v2399 = vld [vmem:[%s2378 + $0x78] sm:$0xff]
      %v2400 = vld [vmem:[%s2378 + $0x80] sm:$0xf]
      %v2401 = vld [vmem:[%s2378 + $0x84] sm:$0xff]
      %v2402 = vld [vmem:[%s2378 + $0x8c] sm:$0xf]
      %v2403 = vld [vmem:[%s2378 + $0x90] sm:$0xff]
      %v2404 = vld [vmem:[%s2378 + $0x98] sm:$0xf]
      %v2405 = vld [vmem:[%s2378 + $0x9c] sm:$0xff]
      %v2406 = vld [vmem:[%s2378 + $0xa4] sm:$0xf]
      %v2407 = vld [vmem:[%s2378 + $0xa8] sm:$0xff]
      %v2408 = vld [vmem:[%s2378 + $0xb0] sm:$0xf]
      %v2409 = vld [vmem:[%s2378 + $0xb4] sm:$0xff]
      %v2410 = vld [vmem:[%s2378 + $0xbc] sm:$0xf]
      %v2411 = vld [vmem:[%s2378 + $0xc0] sm:$0xff]
      %v2412 = vld [vmem:[%s2378 + $0xc8] sm:$0xf]
      %v2413 = vld [vmem:[%s2378 + $0xcc] sm:$0xff]
      %v2414 = vld [vmem:[%s2378 + $0xd4] sm:$0xf]
      %v2415 = vld [vmem:[%s2378 + $0xd8] sm:$0xff]
      %v2416 = vld [vmem:[%s2378 + $0xe0] sm:$0xf]
      %v2417 = vld [vmem:[%s2378 + $0xe4] sm:$0xff]
      %v2418 = vld [vmem:[%s2378 + $0xec] sm:$0xf]
      %v2419 = vld [vmem:[%s2378 + $0xf0] sm:$0xff]
      %v2420 = vld [vmem:[%s2378 + $0xf8] sm:$0xf]
      %v2421 = vld [vmem:[%s2378 + $0xfc] sm:$0xff]
      %v2422 = vld [vmem:[%s2378 + $0x104] sm:$0xf]
      %v2423 = vld [vmem:[%s2378 + $0x108] sm:$0xff]
      %v2424 = vld [vmem:[%s2378 + $0x110] sm:$0xf]
      %v2425 = vld [vmem:[%s2378 + $0x114] sm:$0xff]
      %v2426 = vld [vmem:[%s2378 + $0x11c] sm:$0xf]
      %v2427 = vld [vmem:[%s2378 + $0x120] sm:$0xff]
      %v2428 = vld [vmem:[%s2378 + $0x128] sm:$0xf]
      %v2429 = vld [vmem:[%s2378 + $0x12c] sm:$0xff]
      %v2430 = vld [vmem:[%s2378 + $0x134] sm:$0xf]
      %v2431 = vld [vmem:[%s2378 + $0x138] sm:$0xff]
      %v2432 = vld [vmem:[%s2378 + $0x140] sm:$0xf]
      %v2433 = vld [vmem:[%s2378 + $0x144] sm:$0xff]
      %v2434 = vld [vmem:[%s2378 + $0x14c] sm:$0xf]
      %v2435 = vld [vmem:[%s2378 + $0x150] sm:$0xff]
      %v2436 = vld [vmem:[%s2378 + $0x158] sm:$0xf]
      %v2437 = vld [vmem:[%s2378 + $0x15c] sm:$0xff]
      %v2438 = vld [vmem:[%s2378 + $0x164] sm:$0xf]
      %v2439 = vld [vmem:[%s2378 + $0x168] sm:$0xff]
      %v2440 = vld [vmem:[%s2378 + $0x170] sm:$0xf]
      %v2441 = vld [vmem:[%s2378 + $0x174] sm:$0xff]
      %v2442 = vld [vmem:[%s2378 + $0x17c] sm:$0xf]
      %s2443 = scalar_lea.vmem %s1, 384
      %v2444 = vld [vmem:[%s2443] sm:$0xf]
      %v2445 = vld [vmem:[%s2443 + $0x4] sm:$0xf]
      %v2446 = vld [vmem:[%s2443 + $0x8] sm:$0xf]
      %v2447 = vld [vmem:[%s2443 + $0xc] sm:$0xf]
      %v2448 = vld [vmem:[%s2443 + $0x10] sm:$0xf]
      %v2449 = vld [vmem:[%s2443 + $0x14] sm:$0xf]
      %v2450 = vld [vmem:[%s2443 + $0x18] sm:$0xf]
      %v2451 = vld [vmem:[%s2443 + $0x1c] sm:$0xf]
      %v2452 = vld [vmem:[%s2443 + $0x20] sm:$0xf]
      %v2453 = vld [vmem:[%s2443 + $0x24] sm:$0xf]
      %v2454 = vld [vmem:[%s2443 + $0x28] sm:$0xf]
      %v2455 = vld [vmem:[%s2443 + $0x2c] sm:$0xf]
      %v2456 = vld [vmem:[%s2443 + $0x30] sm:$0xf]
      %v2457 = vld [vmem:[%s2443 + $0x34] sm:$0xf]
      %v2458 = vld [vmem:[%s2443 + $0x38] sm:$0xf]
      %v2459 = vld [vmem:[%s2443 + $0x3c] sm:$0xf]
      %v2460 = vld [vmem:[%s2443 + $0x40] sm:$0xf]
      %v2461 = vld [vmem:[%s2443 + $0x44] sm:$0xf]
      %v2462 = vld [vmem:[%s2443 + $0x48] sm:$0xf]
      %v2463 = vld [vmem:[%s2443 + $0x4c] sm:$0xf]
      %v2464 = vld [vmem:[%s2443 + $0x50] sm:$0xf]
      %v2465 = vld [vmem:[%s2443 + $0x54] sm:$0xf]
      %v2466 = vld [vmem:[%s2443 + $0x58] sm:$0xf]
      %v2467 = vld [vmem:[%s2443 + $0x5c] sm:$0xf]
      %v2468 = vld [vmem:[%s2443 + $0x60] sm:$0xf]
      %v2469 = vld [vmem:[%s2443 + $0x64] sm:$0xf]
      %v2470 = vld [vmem:[%s2443 + $0x68] sm:$0xf]
      %v2471 = vld [vmem:[%s2443 + $0x6c] sm:$0xf]
      %v2472 = vld [vmem:[%s2443 + $0x70] sm:$0xf]
      %v2473 = vld [vmem:[%s2443 + $0x74] sm:$0xf]
      %v2474 = vld [vmem:[%s2443 + $0x78] sm:$0xf]
      %v2475 = vld [vmem:[%s2443 + $0x7c] sm:$0xf]
      %v2476 = vld [vmem:[%s2443 + $0x80] sm:$0xf]
      %v2477 = vld [vmem:[%s2443 + $0x84] sm:$0xf]
      %v2478 = vld [vmem:[%s2443 + $0x88] sm:$0xf]
      %v2479 = vld [vmem:[%s2443 + $0x8c] sm:$0xf]
      %v2480 = vld [vmem:[%s2443 + $0x90] sm:$0xf]
      %v2481 = vld [vmem:[%s2443 + $0x94] sm:$0xf]
      %v2482 = vld [vmem:[%s2443 + $0x98] sm:$0xf]
      %v2483 = vld [vmem:[%s2443 + $0x9c] sm:$0xf]
      %v2484 = vld [vmem:[%s2443 + $0xa0] sm:$0xf]
      %v2485 = vld [vmem:[%s2443 + $0xa4] sm:$0xf]
      %v2486 = vld [vmem:[%s2443 + $0xa8] sm:$0xf]
      %v2487 = vld [vmem:[%s2443 + $0xac] sm:$0xf]
      %v2488 = vld [vmem:[%s2443 + $0xb0] sm:$0xf]
      %v2489 = vld [vmem:[%s2443 + $0xb4] sm:$0xf]
      %v2490 = vld [vmem:[%s2443 + $0xb8] sm:$0xf]
      %v2491 = vld [vmem:[%s2443 + $0xbc] sm:$0xf]
      %v2556 = vunpack.c.l.b16 %v2379
      %v2557 = vunpack.c.h.b16 %v2379
      %v2558 = vunpack.c.l.b16 %v2380
      %v2559 = vunpack.c.l.b16 %v2381
      %v2560 = vunpack.c.h.b16 %v2381
      %v2561 = vunpack.c.l.b16 %v2382
      %v2562 = vunpack.c.l.b16 %v2383
      %v2563 = vunpack.c.h.b16 %v2383
      %v2564 = vunpack.c.l.b16 %v2384
      %v2565 = vunpack.c.l.b16 %v2385
      %v2566 = vunpack.c.h.b16 %v2385
      %v2567 = vunpack.c.l.b16 %v2386
      %v2568 = vunpack.c.l.b16 %v2387
      %v2569 = vunpack.c.h.b16 %v2387
      %v2570 = vunpack.c.l.b16 %v2388
      %v2571 = vunpack.c.l.b16 %v2389
      %v2572 = vunpack.c.h.b16 %v2389
      %v2573 = vunpack.c.l.b16 %v2390
      %v2574 = vunpack.c.l.b16 %v2391
      %v2575 = vunpack.c.h.b16 %v2391
      %v2576 = vunpack.c.l.b16 %v2392
      %v2577 = vunpack.c.l.b16 %v2393
      %v2578 = vunpack.c.h.b16 %v2393
      %v2579 = vunpack.c.l.b16 %v2394
      %v2580 = vunpack.c.l.b16 %v2395
      %v2581 = vunpack.c.h.b16 %v2395
      %v2582 = vunpack.c.l.b16 %v2396
      %v2583 = vunpack.c.l.b16 %v2397
      %v2584 = vunpack.c.h.b16 %v2397
      %v2585 = vunpack.c.l.b16 %v2398
      %v2586 = vunpack.c.l.b16 %v2399
      %v2587 = vunpack.c.h.b16 %v2399
      %v2588 = vunpack.c.l.b16 %v2400
      %v2589 = vunpack.c.l.b16 %v2401
      %v2590 = vunpack.c.h.b16 %v2401
      %v2591 = vunpack.c.l.b16 %v2402
      %v2592 = vunpack.c.l.b16 %v2403
      %v2593 = vunpack.c.h.b16 %v2403
      %v2594 = vunpack.c.l.b16 %v2404
      %v2595 = vunpack.c.l.b16 %v2405
      %v2596 = vunpack.c.h.b16 %v2405
      %v2597 = vunpack.c.l.b16 %v2406
      %v2598 = vunpack.c.l.b16 %v2407
      %v2599 = vunpack.c.h.b16 %v2407
      %v2600 = vunpack.c.l.b16 %v2408
      %v2601 = vunpack.c.l.b16 %v2409
      %v2602 = vunpack.c.h.b16 %v2409
      %v2603 = vunpack.c.l.b16 %v2410
      %v2604 = vunpack.c.l.b16 %v2411
      %v2605 = vunpack.c.h.b16 %v2411
      %v2606 = vunpack.c.l.b16 %v2412
      %v2607 = vunpack.c.l.b16 %v2413
      %v2608 = vunpack.c.h.b16 %v2413
      %v2609 = vunpack.c.l.b16 %v2414
      %v2610 = vunpack.c.l.b16 %v2415
      %v2611 = vunpack.c.h.b16 %v2415
      %v2612 = vunpack.c.l.b16 %v2416
      %v2613 = vunpack.c.l.b16 %v2417
      %v2614 = vunpack.c.h.b16 %v2417
      %v2615 = vunpack.c.l.b16 %v2418
      %v2616 = vunpack.c.l.b16 %v2419
      %v2617 = vunpack.c.h.b16 %v2419
      %v2618 = vunpack.c.l.b16 %v2420
      %v2619 = vunpack.c.l.b16 %v2421
      %v2620 = vunpack.c.h.b16 %v2421
      %v2621 = vunpack.c.l.b16 %v2422
      %v2622 = vunpack.c.l.b16 %v2423
      %v2623 = vunpack.c.h.b16 %v2423
      %v2624 = vunpack.c.l.b16 %v2424
      %v2625 = vunpack.c.l.b16 %v2425
      %v2626 = vunpack.c.h.b16 %v2425
      %v2627 = vunpack.c.l.b16 %v2426
      %v2628 = vunpack.c.l.b16 %v2427
      %v2629 = vunpack.c.h.b16 %v2427
      %v2630 = vunpack.c.l.b16 %v2428
      %v2631 = vunpack.c.l.b16 %v2429
      %v2632 = vunpack.c.h.b16 %v2429
      %v2633 = vunpack.c.l.b16 %v2430
      %v2634 = vunpack.c.l.b16 %v2431
      %v2635 = vunpack.c.h.b16 %v2431
      %v2636 = vunpack.c.l.b16 %v2432
      %v2637 = vunpack.c.l.b16 %v2433
      %v2638 = vunpack.c.h.b16 %v2433
      %v2639 = vunpack.c.l.b16 %v2434
      %v2640 = vunpack.c.l.b16 %v2435
      %v2641 = vunpack.c.h.b16 %v2435
      %v2642 = vunpack.c.l.b16 %v2436
      %v2643 = vunpack.c.l.b16 %v2437
      %v2644 = vunpack.c.h.b16 %v2437
      %v2645 = vunpack.c.l.b16 %v2438
      %v2646 = vunpack.c.l.b16 %v2439
      %v2647 = vunpack.c.h.b16 %v2439
      %v2648 = vunpack.c.l.b16 %v2440
      %v2649 = vunpack.c.l.b16 %v2441
      %v2650 = vunpack.c.h.b16 %v2441
      %v2651 = vunpack.c.l.b16 %v2442
      %v2652 = vpack.c.b16 %v2559, %v2556
      %v2653 = vpack.c.b16 %v2560, %v2557
      %v2654 = vpack.c.b16 %v2561, %v2558
      %v2655 = vpack.c.b16 %v2565, %v2562
      %v2656 = vpack.c.b16 %v2566, %v2563
      %v2657 = vpack.c.b16 %v2567, %v2564
      %v2658 = vpack.c.b16 %v2571, %v2568
      %v2659 = vpack.c.b16 %v2572, %v2569
      %v2660 = vpack.c.b16 %v2573, %v2570
      %v2661 = vpack.c.b16 %v2577, %v2574
      %v2662 = vpack.c.b16 %v2578, %v2575
      %v2663 = vpack.c.b16 %v2579, %v2576
      %v2664 = vpack.c.b16 %v2583, %v2580
      %v2665 = vpack.c.b16 %v2584, %v2581
      %v2666 = vpack.c.b16 %v2585, %v2582
      %v2667 = vpack.c.b16 %v2589, %v2586
      %v2668 = vpack.c.b16 %v2590, %v2587
      %v2669 = vpack.c.b16 %v2591, %v2588
      %v2670 = vpack.c.b16 %v2595, %v2592
      %v2671 = vpack.c.b16 %v2596, %v2593
      %v2672 = vpack.c.b16 %v2597, %v2594
      %v2673 = vpack.c.b16 %v2601, %v2598
      %v2674 = vpack.c.b16 %v2602, %v2599
      %v2675 = vpack.c.b16 %v2603, %v2600
      %v2676 = vpack.c.b16 %v2607, %v2604
      %v2677 = vpack.c.b16 %v2608, %v2605
      %v2678 = vpack.c.b16 %v2609, %v2606
      %v2679 = vpack.c.b16 %v2613, %v2610
      %v2680 = vpack.c.b16 %v2614, %v2611
      %v2681 = vpack.c.b16 %v2615, %v2612
      %v2682 = vpack.c.b16 %v2619, %v2616
      %v2683 = vpack.c.b16 %v2620, %v2617
      %v2684 = vpack.c.b16 %v2621, %v2618
      %v2685 = vpack.c.b16 %v2625, %v2622
      %v2686 = vpack.c.b16 %v2626, %v2623
      %v2687 = vpack.c.b16 %v2627, %v2624
      %v2688 = vpack.c.b16 %v2631, %v2628
      %v2689 = vpack.c.b16 %v2632, %v2629
      %v2690 = vpack.c.b16 %v2633, %v2630
      %v2691 = vpack.c.b16 %v2637, %v2634
      %v2692 = vpack.c.b16 %v2638, %v2635
      %v2693 = vpack.c.b16 %v2639, %v2636
      %v2694 = vpack.c.b16 %v2643, %v2640
      %v2695 = vpack.c.b16 %v2644, %v2641
      %v2696 = vpack.c.b16 %v2645, %v2642
      %v2697 = vpack.c.b16 %v2649, %v2646
      %v2698 = vpack.c.b16 %v2650, %v2647
      %v2699 = vpack.c.b16 %v2651, %v2648
      %v2796 = vunpack.c.l.b16 %v2444
      %v2797 = vunpack.c.l.b16 %v2445
      %v2798 = vunpack.c.l.b16 %v2446
      %v2799 = vunpack.c.l.b16 %v2447
      %v2800 = vunpack.c.l.b16 %v2448
      %v2801 = vunpack.c.l.b16 %v2449
      %v2802 = vunpack.c.l.b16 %v2450
      %v2803 = vunpack.c.l.b16 %v2451
      %v2804 = vunpack.c.l.b16 %v2452
      %v2805 = vunpack.c.l.b16 %v2453
      %v2806 = vunpack.c.l.b16 %v2454
      %v2807 = vunpack.c.l.b16 %v2455
      %v2808 = vunpack.c.l.b16 %v2456
      %v2809 = vunpack.c.l.b16 %v2457
      %v2810 = vunpack.c.l.b16 %v2458
      %v2811 = vunpack.c.l.b16 %v2459
      %v2812 = vunpack.c.l.b16 %v2460
      %v2813 = vunpack.c.l.b16 %v2461
      %v2814 = vunpack.c.l.b16 %v2462
      %v2815 = vunpack.c.l.b16 %v2463
      %v2816 = vunpack.c.l.b16 %v2464
      %v2817 = vunpack.c.l.b16 %v2465
      %v2818 = vunpack.c.l.b16 %v2466
      %v2819 = vunpack.c.l.b16 %v2467
      %v2820 = vunpack.c.l.b16 %v2468
      %v2821 = vunpack.c.l.b16 %v2469
      %v2822 = vunpack.c.l.b16 %v2470
      %v2823 = vunpack.c.l.b16 %v2471
      %v2824 = vunpack.c.l.b16 %v2472
      %v2825 = vunpack.c.l.b16 %v2473
      %v2826 = vunpack.c.l.b16 %v2474
      %v2827 = vunpack.c.l.b16 %v2475
      %v2828 = vunpack.c.l.b16 %v2476
      %v2829 = vunpack.c.l.b16 %v2477
      %v2830 = vunpack.c.l.b16 %v2478
      %v2831 = vunpack.c.l.b16 %v2479
      %v2832 = vunpack.c.l.b16 %v2480
      %v2833 = vunpack.c.l.b16 %v2481
      %v2834 = vunpack.c.l.b16 %v2482
      %v2835 = vunpack.c.l.b16 %v2483
      %v2836 = vunpack.c.l.b16 %v2484
      %v2837 = vunpack.c.l.b16 %v2485
      %v2838 = vunpack.c.l.b16 %v2486
      %v2839 = vunpack.c.l.b16 %v2487
      %v2840 = vunpack.c.l.b16 %v2488
      %v2841 = vunpack.c.l.b16 %v2489
      %v2842 = vunpack.c.l.b16 %v2490
      %v2843 = vunpack.c.l.b16 %v2491
      %v2844 = vpack.c.b16 %v2797, %v2796
      %v2845 = vpack.c.b16 %v2799, %v2798
      %v2846 = vpack.c.b16 %v2801, %v2800
      %v2847 = vpack.c.b16 %v2803, %v2802
      %v2848 = vpack.c.b16 %v2805, %v2804
      %v2849 = vpack.c.b16 %v2807, %v2806
      %v2850 = vpack.c.b16 %v2809, %v2808
      %v2851 = vpack.c.b16 %v2811, %v2810
      %v2852 = vpack.c.b16 %v2813, %v2812
      %v2853 = vpack.c.b16 %v2815, %v2814
      %v2854 = vpack.c.b16 %v2817, %v2816
      %v2855 = vpack.c.b16 %v2819, %v2818
      %v2856 = vpack.c.b16 %v2821, %v2820
      %v2857 = vpack.c.b16 %v2823, %v2822
      %v2858 = vpack.c.b16 %v2825, %v2824
      %v2859 = vpack.c.b16 %v2827, %v2826
      %v2860 = vpack.c.b16 %v2829, %v2828
      %v2861 = vpack.c.b16 %v2831, %v2830
      %v2862 = vpack.c.b16 %v2833, %v2832
      %v2863 = vpack.c.b16 %v2835, %v2834
      %v2864 = vpack.c.b16 %v2837, %v2836
      %v2865 = vpack.c.b16 %v2839, %v2838
      %v2866 = vpack.c.b16 %v2841, %v2840
      %v2867 = vpack.c.b16 %v2843, %v2842
      %2892 = vmatpush.bf16.msra.mxu0 %v2851
      %2893 = vmatpush.bf16.msra.mxu0 %v2850
      %2894 = vmatpush.bf16.msra.mxu0 %v2849
      %2895 = vmatpush.bf16.msra.mxu0 %v2848
      %2896 = vmatpush.bf16.msra.mxu0 %v2847
      %2897 = vmatpush.bf16.msra.mxu0 %v2846
      %2898 = vmatpush.bf16.msra.mxu0 %v2845
      %2899 = vmatpush.bf16.msra.mxu0 %v2844
      %2900 = vmatmul.bf16.gmra.mxu0 %v2652
      %v2901 = vpop.f32.mrf.mxu0
      %v2902 = vadd.f32 0.0, %v2901
      %v2903 = vpop.f32.mrf.mxu0
      %v2904 = vadd.f32 0.0, %v2903
      %2905 = vmatmul.bf16.gmra.mxu0 %v2655
      %v2906 = vpop.f32.mrf.mxu0
      %v2907 = vadd.f32 0.0, %v2906
      %v2908 = vpop.f32.mrf.mxu0
      %v2909 = vadd.f32 0.0, %v2908
      %2910 = vmatmul.bf16.gmra.mxu0 %v2658
      %v2911 = vpop.f32.mrf.mxu0
      %v2912 = vadd.f32 0.0, %v2911
      %v2913 = vpop.f32.mrf.mxu0
      %v2914 = vadd.f32 0.0, %v2913
      %2915 = vmatmul.bf16.gmra.mxu0 %v2661
      %v2916 = vpop.f32.mrf.mxu0
      %v2917 = vadd.f32 0.0, %v2916
      %v2918 = vpop.f32.mrf.mxu0
      %v2919 = vadd.f32 0.0, %v2918
      %2920 = vmatmul.bf16.gmra.mxu0 %v2664
      %v2921 = vpop.f32.mrf.mxu0
      %v2922 = vadd.f32 0.0, %v2921
      %v2923 = vpop.f32.mrf.mxu0
      %v2924 = vadd.f32 0.0, %v2923
      %2925 = vmatmul.bf16.gmra.mxu0 %v2667
      %v2926 = vpop.f32.mrf.mxu0
      %v2927 = vadd.f32 0.0, %v2926
      %v2928 = vpop.f32.mrf.mxu0
      %v2929 = vadd.f32 0.0, %v2928
      %2930 = vmatmul.bf16.gmra.mxu0 %v2670
      %v2931 = vpop.f32.mrf.mxu0
      %v2932 = vadd.f32 0.0, %v2931
      %v2933 = vpop.f32.mrf.mxu0
      %v2934 = vadd.f32 0.0, %v2933
      %2935 = vmatmul.bf16.gmra.mxu0 %v2673
      %v2936 = vpop.f32.mrf.mxu0
      %v2937 = vadd.f32 0.0, %v2936
      %v2938 = vpop.f32.mrf.mxu0
      %v2939 = vadd.f32 0.0, %v2938
      %2940 = vmatmul.bf16.gmra.mxu0 %v2676
      %v2941 = vpop.f32.mrf.mxu0
      %v2942 = vadd.f32 0.0, %v2941
      %v2943 = vpop.f32.mrf.mxu0
      %v2944 = vadd.f32 0.0, %v2943
      %2945 = vmatmul.bf16.gmra.mxu0 %v2679
      %v2946 = vpop.f32.mrf.mxu0
      %v2947 = vadd.f32 0.0, %v2946
      %v2948 = vpop.f32.mrf.mxu0
      %v2949 = vadd.f32 0.0, %v2948
      %2950 = vmatmul.bf16.gmra.mxu0 %v2682
      %v2951 = vpop.f32.mrf.mxu0
      %v2952 = vadd.f32 0.0, %v2951
      %v2953 = vpop.f32.mrf.mxu0
      %v2954 = vadd.f32 0.0, %v2953
      %2955 = vmatmul.bf16.gmra.mxu0 %v2685
      %v2956 = vpop.f32.mrf.mxu0
      %v2957 = vadd.f32 0.0, %v2956
      %v2958 = vpop.f32.mrf.mxu0
      %v2959 = vadd.f32 0.0, %v2958
      %2960 = vmatmul.bf16.gmra.mxu0 %v2688
      %v2961 = vpop.f32.mrf.mxu0
      %v2962 = vadd.f32 0.0, %v2961
      %v2963 = vpop.f32.mrf.mxu0
      %v2964 = vadd.f32 0.0, %v2963
      %2965 = vmatmul.bf16.gmra.mxu0 %v2691
      %v2966 = vpop.f32.mrf.mxu0
      %v2967 = vadd.f32 0.0, %v2966
      %v2968 = vpop.f32.mrf.mxu0
      %v2969 = vadd.f32 0.0, %v2968
      %2970 = vmatmul.bf16.gmra.mxu0 %v2694
      %v2971 = vpop.f32.mrf.mxu0
      %v2972 = vadd.f32 0.0, %v2971
      %v2973 = vpop.f32.mrf.mxu0
      %v2974 = vadd.f32 0.0, %v2973
      %2975 = vmatmul.bf16.gmra.mxu0 %v2697
      %v2976 = vpop.f32.mrf.mxu0
      %v2977 = vadd.f32 0.0, %v2976
      %v2978 = vpop.f32.mrf.mxu0
      %v2979 = vadd.f32 0.0, %v2978
      %2980 = vdwg.mxu0
      %2981 = vmatpush.bf16.msra.mxu0 %v2859
      %2982 = vmatpush.bf16.msra.mxu0 %v2858
      %2983 = vmatpush.bf16.msra.mxu0 %v2857
      %2984 = vmatpush.bf16.msra.mxu0 %v2856
      %2985 = vmatpush.bf16.msra.mxu0 %v2855
      %2986 = vmatpush.bf16.msra.mxu0 %v2854
      %2987 = vmatpush.bf16.msra.mxu0 %v2853
      %2988 = vmatpush.bf16.msra.mxu0 %v2852
      %2989 = vmatmul.bf16.gmra.mxu0 %v2653
      %v2990 = vpop.f32.mrf.mxu0
      %v2991 = vadd.f32 %v2902, %v2990
      %v2992 = vpop.f32.mrf.mxu0
      %v2993 = vadd.f32 %v2904, %v2992
      %2994 = vmatmul.bf16.gmra.mxu0 %v2656
      %v2995 = vpop.f32.mrf.mxu0
      %v2996 = vadd.f32 %v2907, %v2995
      %v2997 = vpop.f32.mrf.mxu0
      %v2998 = vadd.f32 %v2909, %v2997
      %2999 = vmatmul.bf16.gmra.mxu0 %v2659
      %v3000 = vpop.f32.mrf.mxu0
      %v3001 = vadd.f32 %v2912, %v3000
      %v3002 = vpop.f32.mrf.mxu0
      %v3003 = vadd.f32 %v2914, %v3002
      %3004 = vmatmul.bf16.gmra.mxu0 %v2662
      %v3005 = vpop.f32.mrf.mxu0
      %v3006 = vadd.f32 %v2917, %v3005
      %v3007 = vpop.f32.mrf.mxu0
      %v3008 = vadd.f32 %v2919, %v3007
      %3009 = vmatmul.bf16.gmra.mxu0 %v2665
      %v3010 = vpop.f32.mrf.mxu0
      %v3011 = vadd.f32 %v2922, %v3010
      %v3012 = vpop.f32.mrf.mxu0
      %v3013 = vadd.f32 %v2924, %v3012
      %3014 = vmatmul.bf16.gmra.mxu0 %v2668
      %v3015 = vpop.f32.mrf.mxu0
      %v3016 = vadd.f32 %v2927, %v3015
      %v3017 = vpop.f32.mrf.mxu0
      %v3018 = vadd.f32 %v2929, %v3017
      %3019 = vmatmul.bf16.gmra.mxu0 %v2671
      %v3020 = vpop.f32.mrf.mxu0
      %v3021 = vadd.f32 %v2932, %v3020
      %v3022 = vpop.f32.mrf.mxu0
      %v3023 = vadd.f32 %v2934, %v3022
      %3024 = vmatmul.bf16.gmra.mxu0 %v2674
      %v3025 = vpop.f32.mrf.mxu0
      %v3026 = vadd.f32 %v2937, %v3025
      %v3027 = vpop.f32.mrf.mxu0
      %v3028 = vadd.f32 %v2939, %v3027
      %3029 = vmatmul.bf16.gmra.mxu0 %v2677
      %v3030 = vpop.f32.mrf.mxu0
      %v3031 = vadd.f32 %v2942, %v3030
      %v3032 = vpop.f32.mrf.mxu0
      %v3033 = vadd.f32 %v2944, %v3032
      %3034 = vmatmul.bf16.gmra.mxu0 %v2680
      %v3035 = vpop.f32.mrf.mxu0
      %v3036 = vadd.f32 %v2947, %v3035
      %v3037 = vpop.f32.mrf.mxu0
      %v3038 = vadd.f32 %v2949, %v3037
      %3039 = vmatmul.bf16.gmra.mxu0 %v2683
      %v3040 = vpop.f32.mrf.mxu0
      %v3041 = vadd.f32 %v2952, %v3040
      %v3042 = vpop.f32.mrf.mxu0
      %v3043 = vadd.f32 %v2954, %v3042
      %3044 = vmatmul.bf16.gmra.mxu0 %v2686
      %v3045 = vpop.f32.mrf.mxu0
      %v3046 = vadd.f32 %v2957, %v3045
      %v3047 = vpop.f32.mrf.mxu0
      %v3048 = vadd.f32 %v2959, %v3047
      %3049 = vmatmul.bf16.gmra.mxu0 %v2689
      %v3050 = vpop.f32.mrf.mxu0
      %v3051 = vadd.f32 %v2962, %v3050
      %v3052 = vpop.f32.mrf.mxu0
      %v3053 = vadd.f32 %v2964, %v3052
      %3054 = vmatmul.bf16.gmra.mxu0 %v2692
      %v3055 = vpop.f32.mrf.mxu0
      %v3056 = vadd.f32 %v2967, %v3055
      %v3057 = vpop.f32.mrf.mxu0
      %v3058 = vadd.f32 %v2969, %v3057
      %3059 = vmatmul.bf16.gmra.mxu0 %v2695
      %v3060 = vpop.f32.mrf.mxu0
      %v3061 = vadd.f32 %v2972, %v3060
      %v3062 = vpop.f32.mrf.mxu0
      %v3063 = vadd.f32 %v2974, %v3062
      %3064 = vmatmul.bf16.gmra.mxu0 %v2698
      %v3065 = vpop.f32.mrf.mxu0
      %v3066 = vadd.f32 %v2977, %v3065
      %v3067 = vpop.f32.mrf.mxu0
      %v3068 = vadd.f32 %v2979, %v3067
      %3069 = vdwg.mxu0
      %3070 = vmatpush.bf16.msra.mxu0 %v2867
      %3071 = vmatpush.bf16.msra.mxu0 %v2866
      %3072 = vmatpush.bf16.msra.mxu0 %v2865
      %3073 = vmatpush.bf16.msra.mxu0 %v2864
      %3074 = vmatpush.bf16.msra.mxu0 %v2863
      %3075 = vmatpush.bf16.msra.mxu0 %v2862
      %3076 = vmatpush.bf16.msra.mxu0 %v2861
      %3077 = vmatpush.bf16.msra.mxu0 %v2860
      %3078 = vmatmul.bf16.gmra.mxu0 %v2654
      %v3079 = vpop.f32.mrf.mxu0
      %v3080 = vadd.f32 %v2991, %v3079
      %v3081 = vpop.f32.mrf.mxu0
      %v3082 = vadd.f32 %v2993, %v3081
      %3083 = vmatmul.bf16.gmra.mxu0 %v2657
      %v3084 = vpop.f32.mrf.mxu0
      %v3085 = vadd.f32 %v2996, %v3084
      %v3086 = vpop.f32.mrf.mxu0
      %v3087 = vadd.f32 %v2998, %v3086
      %3088 = vmatmul.bf16.gmra.mxu0 %v2660
      %v3089 = vpop.f32.mrf.mxu0
      %v3090 = vadd.f32 %v3001, %v3089
      %v3091 = vpop.f32.mrf.mxu0
      %v3092 = vadd.f32 %v3003, %v3091
      %3093 = vmatmul.bf16.gmra.mxu0 %v2663
      %v3094 = vpop.f32.mrf.mxu0
      %v3095 = vadd.f32 %v3006, %v3094
      %v3096 = vpop.f32.mrf.mxu0
      %v3097 = vadd.f32 %v3008, %v3096
      %3098 = vmatmul.bf16.gmra.mxu0 %v2666
      %v3099 = vpop.f32.mrf.mxu0
      %v3100 = vadd.f32 %v3011, %v3099
      %v3101 = vpop.f32.mrf.mxu0
      %v3102 = vadd.f32 %v3013, %v3101
      %3103 = vmatmul.bf16.gmra.mxu0 %v2669
      %v3104 = vpop.f32.mrf.mxu0
      %v3105 = vadd.f32 %v3016, %v3104
      %v3106 = vpop.f32.mrf.mxu0
      %v3107 = vadd.f32 %v3018, %v3106
      %3108 = vmatmul.bf16.gmra.mxu0 %v2672
      %v3109 = vpop.f32.mrf.mxu0
      %v3110 = vadd.f32 %v3021, %v3109
      %v3111 = vpop.f32.mrf.mxu0
      %v3112 = vadd.f32 %v3023, %v3111
      %3113 = vmatmul.bf16.gmra.mxu0 %v2675
      %v3114 = vpop.f32.mrf.mxu0
      %v3115 = vadd.f32 %v3026, %v3114
      %v3116 = vpop.f32.mrf.mxu0
      %v3117 = vadd.f32 %v3028, %v3116
      %3118 = vmatmul.bf16.gmra.mxu0 %v2678
      %v3119 = vpop.f32.mrf.mxu0
      %v3120 = vadd.f32 %v3031, %v3119
      %v3121 = vpop.f32.mrf.mxu0
      %v3122 = vadd.f32 %v3033, %v3121
      %3123 = vmatmul.bf16.gmra.mxu0 %v2681
      %v3124 = vpop.f32.mrf.mxu0
      %v3125 = vadd.f32 %v3036, %v3124
      %v3126 = vpop.f32.mrf.mxu0
      %v3127 = vadd.f32 %v3038, %v3126
      %3128 = vmatmul.bf16.gmra.mxu0 %v2684
      %v3129 = vpop.f32.mrf.mxu0
      %v3130 = vadd.f32 %v3041, %v3129
      %v3131 = vpop.f32.mrf.mxu0
      %v3132 = vadd.f32 %v3043, %v3131
      %3133 = vmatmul.bf16.gmra.mxu0 %v2687
      %v3134 = vpop.f32.mrf.mxu0
      %v3135 = vadd.f32 %v3046, %v3134
      %v3136 = vpop.f32.mrf.mxu0
      %v3137 = vadd.f32 %v3048, %v3136
      %3138 = vmatmul.bf16.gmra.mxu0 %v2690
      %v3139 = vpop.f32.mrf.mxu0
      %v3140 = vadd.f32 %v3051, %v3139
      %v3141 = vpop.f32.mrf.mxu0
      %v3142 = vadd.f32 %v3053, %v3141
      %3143 = vmatmul.bf16.gmra.mxu0 %v2693
      %v3144 = vpop.f32.mrf.mxu0
      %v3145 = vadd.f32 %v3056, %v3144
      %v3146 = vpop.f32.mrf.mxu0
      %v3147 = vadd.f32 %v3058, %v3146
      %3148 = vmatmul.bf16.gmra.mxu0 %v2696
      %v3149 = vpop.f32.mrf.mxu0
      %v3150 = vadd.f32 %v3061, %v3149
      %v3151 = vpop.f32.mrf.mxu0
      %v3152 = vadd.f32 %v3063, %v3151
      %3153 = vmatmul.bf16.gmra.mxu0 %v2699
      %v3154 = vpop.f32.mrf.mxu0
      %v3155 = vadd.f32 %v3066, %v3154
      %v3156 = vpop.f32.mrf.mxu0
      %v3157 = vadd.f32 %v3068, %v3156
      %3158 = vdwg.mxu0
      %v3159 = vadd.f32 %v2346, %v3080
      %v3160 = vadd.f32 %v2347, %v3082
      %v3161 = vadd.f32 %v2348, %v3085
      %v3162 = vadd.f32 %v2349, %v3087
      %v3163 = vadd.f32 %v2350, %v3090
      %v3164 = vadd.f32 %v2351, %v3092
      %v3165 = vadd.f32 %v2352, %v3095
      %v3166 = vadd.f32 %v2353, %v3097
      %v3167 = vadd.f32 %v2354, %v3100
      %v3168 = vadd.f32 %v2355, %v3102
      %v3169 = vadd.f32 %v2356, %v3105
      %v3170 = vadd.f32 %v2357, %v3107
      %v3171 = vadd.f32 %v2358, %v3110
      %v3172 = vadd.f32 %v2359, %v3112
      %v3173 = vadd.f32 %v2360, %v3115
      %v3174 = vadd.f32 %v2361, %v3117
      %v3175 = vadd.f32 %v2362, %v3120
      %v3176 = vadd.f32 %v2363, %v3122
      %v3177 = vadd.f32 %v2364, %v3125
      %v3178 = vadd.f32 %v2365, %v3127
      %v3179 = vadd.f32 %v2366, %v3130
      %v3180 = vadd.f32 %v2367, %v3132
      %v3181 = vadd.f32 %v2368, %v3135
      %v3182 = vadd.f32 %v2369, %v3137
      %v3183 = vadd.f32 %v2370, %v3140
      %v3184 = vadd.f32 %v2371, %v3142
      %v3185 = vadd.f32 %v2372, %v3145
      %v3186 = vadd.f32 %v2373, %v3147
      %v3187 = vadd.f32 %v2374, %v3150
      %v3188 = vadd.f32 %v2375, %v3152
      %v3189 = vadd.f32 %v2376, %v3155
      %v3190 = vadd.f32 %v2377, %v3157
      %3191 = vst [vmem:[#allocation3] sm:$0xff] %v3159
      %3192 = vst [vmem:[#allocation3 + $0x8] sm:$0xff] %v3160
      %3193 = vst [vmem:[#allocation3 + $0x10] sm:$0xff] %v3161
      %3194 = vst [vmem:[#allocation3 + $0x18] sm:$0xff] %v3162
      %3195 = vst [vmem:[#allocation3 + $0x20] sm:$0xff] %v3163
      %3196 = vst [vmem:[#allocation3 + $0x28] sm:$0xff] %v3164
      %3197 = vst [vmem:[#allocation3 + $0x30] sm:$0xff] %v3165
      %3198 = vst [vmem:[#allocation3 + $0x38] sm:$0xff] %v3166
      %3199 = vst [vmem:[#allocation3 + $0x40] sm:$0xff] %v3167
      %3200 = vst [vmem:[#allocation3 + $0x48] sm:$0xff] %v3168
      %3201 = vst [vmem:[#allocation3 + $0x50] sm:$0xff] %v3169
      %3202 = vst [vmem:[#allocation3 + $0x58] sm:$0xff] %v3170
      %3203 = vst [vmem:[#allocation3 + $0x60] sm:$0xff] %v3171
      %3204 = vst [vmem:[#allocation3 + $0x68] sm:$0xff] %v3172
      %3205 = vst [vmem:[#allocation3 + $0x70] sm:$0xff] %v3173
      %3206 = vst [vmem:[#allocation3 + $0x78] sm:$0xff] %v3174
      %3207 = vst [vmem:[#allocation3 + $0x80] sm:$0xff] %v3175
      %3208 = vst [vmem:[#allocation3 + $0x88] sm:$0xff] %v3176
      %3209 = vst [vmem:[#allocation3 + $0x90] sm:$0xff] %v3177
      %3210 = vst [vmem:[#allocation3 + $0x98] sm:$0xff] %v3178
      %3211 = vst [vmem:[#allocation3 + $0xa0] sm:$0xff] %v3179
      %3212 = vst [vmem:[#allocation3 + $0xa8] sm:$0xff] %v3180
      %3213 = vst [vmem:[#allocation3 + $0xb0] sm:$0xff] %v3181
      %3214 = vst [vmem:[#allocation3 + $0xb8] sm:$0xff] %v3182
      %3215 = vst [vmem:[#allocation3 + $0xc0] sm:$0xff] %v3183
      %3216 = vst [vmem:[#allocation3 + $0xc8] sm:$0xff] %v3184
      %3217 = vst [vmem:[#allocation3 + $0xd0] sm:$0xff] %v3185
      %3218 = vst [vmem:[#allocation3 + $0xd8] sm:$0xff] %v3186
      %3219 = vst [vmem:[#allocation3 + $0xe0] sm:$0xff] %v3187
      %3220 = vst [vmem:[#allocation3 + $0xe8] sm:$0xff] %v3188
      %3221 = vst [vmem:[#allocation3 + $0xf0] sm:$0xff] %v3189
      %3222 = vst [vmem:[#allocation3 + $0xf8] sm:$0xff] %v3190
      %v3223 = vld [vmem:[#allocation3] sm:$0xff]
      %v3224 = vld [vmem:[#allocation3 + $0x8] sm:$0xff]
      %v3225 = vld [vmem:[#allocation3 + $0x10] sm:$0xff]
      %v3226 = vld [vmem:[#allocation3 + $0x18] sm:$0xff]
      %v3227 = vld [vmem:[#allocation3 + $0x20] sm:$0xff]
      %v3228 = vld [vmem:[#allocation3 + $0x28] sm:$0xff]
      %v3229 = vld [vmem:[#allocation3 + $0x30] sm:$0xff]
      %v3230 = vld [vmem:[#allocation3 + $0x38] sm:$0xff]
      %v3231 = vld [vmem:[#allocation3 + $0x40] sm:$0xff]
      %v3232 = vld [vmem:[#allocation3 + $0x48] sm:$0xff]
      %v3233 = vld [vmem:[#allocation3 + $0x50] sm:$0xff]
      %v3234 = vld [vmem:[#allocation3 + $0x58] sm:$0xff]
      %v3235 = vld [vmem:[#allocation3 + $0x60] sm:$0xff]
      %v3236 = vld [vmem:[#allocation3 + $0x68] sm:$0xff]
      %v3237 = vld [vmem:[#allocation3 + $0x70] sm:$0xff]
      %v3238 = vld [vmem:[#allocation3 + $0x78] sm:$0xff]
      %v3239 = vld [vmem:[#allocation3 + $0x80] sm:$0xff]
      %v3240 = vld [vmem:[#allocation3 + $0x88] sm:$0xff]
      %v3241 = vld [vmem:[#allocation3 + $0x90] sm:$0xff]
      %v3242 = vld [vmem:[#allocation3 + $0x98] sm:$0xff]
      %v3243 = vld [vmem:[#allocation3 + $0xa0] sm:$0xff]
      %v3244 = vld [vmem:[#allocation3 + $0xa8] sm:$0xff]
      %v3245 = vld [vmem:[#allocation3 + $0xb0] sm:$0xff]
      %v3246 = vld [vmem:[#allocation3 + $0xb8] sm:$0xff]
      %v3247 = vld [vmem:[#allocation3 + $0xc0] sm:$0xff]
      %v3248 = vld [vmem:[#allocation3 + $0xc8] sm:$0xff]
      %v3249 = vld [vmem:[#allocation3 + $0xd0] sm:$0xff]
      %v3250 = vld [vmem:[#allocation3 + $0xd8] sm:$0xff]
      %v3251 = vld [vmem:[#allocation3 + $0xe0] sm:$0xff]
      %v3252 = vld [vmem:[#allocation3 + $0xe8] sm:$0xff]
      %v3253 = vld [vmem:[#allocation3 + $0xf0] sm:$0xff]
      %v3254 = vld [vmem:[#allocation3 + $0xf8] sm:$0xff]
      %3255 = vst [vmem:[%s208] sm:$0xff] %v3223
      %3256 = vst [vmem:[%s208 + $0x8] sm:$0xff] %v3224
      %3257 = vst [vmem:[%s208 + $0x10] sm:$0xff] %v3225
      %3258 = vst [vmem:[%s208 + $0x18] sm:$0xff] %v3226
      %3259 = vst [vmem:[%s208 + $0x20] sm:$0xff] %v3227
      %3260 = vst [vmem:[%s208 + $0x28] sm:$0xff] %v3228
      %3261 = vst [vmem:[%s208 + $0x30] sm:$0xff] %v3229
      %3262 = vst [vmem:[%s208 + $0x38] sm:$0xff] %v3230
      %3263 = vst [vmem:[%s208 + $0x40] sm:$0xff] %v3231
      %3264 = vst [vmem:[%s208 + $0x48] sm:$0xff] %v3232
      %3265 = vst [vmem:[%s208 + $0x50] sm:$0xff] %v3233
      %3266 = vst [vmem:[%s208 + $0x58] sm:$0xff] %v3234
      %3267 = vst [vmem:[%s208 + $0x60] sm:$0xff] %v3235
      %3268 = vst [vmem:[%s208 + $0x68] sm:$0xff] %v3236
      %3269 = vst [vmem:[%s208 + $0x70] sm:$0xff] %v3237
      %3270 = vst [vmem:[%s208 + $0x78] sm:$0xff] %v3238
      %3271 = vst [vmem:[%s208 + $0x80] sm:$0xff] %v3239
      %3272 = vst [vmem:[%s208 + $0x88] sm:$0xff] %v3240
      %3273 = vst [vmem:[%s208 + $0x90] sm:$0xff] %v3241
      %3274 = vst [vmem:[%s208 + $0x98] sm:$0xff] %v3242
      %3275 = vst [vmem:[%s208 + $0xa0] sm:$0xff] %v3243
      %3276 = vst [vmem:[%s208 + $0xa8] sm:$0xff] %v3244
      %3277 = vst [vmem:[%s208 + $0xb0] sm:$0xff] %v3245
      %3278 = vst [vmem:[%s208 + $0xb8] sm:$0xff] %v3246
      %3279 = vst [vmem:[%s208 + $0xc0] sm:$0xff] %v3247
      %3280 = vst [vmem:[%s208 + $0xc8] sm:$0xff] %v3248
      %3281 = vst [vmem:[%s208 + $0xd0] sm:$0xff] %v3249
      %3282 = vst [vmem:[%s208 + $0xd8] sm:$0xff] %v3250
      %3283 = vst [vmem:[%s208 + $0xe0] sm:$0xff] %v3251
      %3284 = vst [vmem:[%s208 + $0xe8] sm:$0xff] %v3252
      %3285 = vst [vmem:[%s208 + $0xf0] sm:$0xff] %v3253
      %3286 = vst [vmem:[%s208 + $0xf8] sm:$0xff] %v3254
      %v3287 = vadd.f32 %v3223, %v3224
      %v3288 = vadd.f32 %v3287, %v3225
      %v3289 = vadd.f32 %v3288, %v3226
      %v3290 = vadd.f32 %v3289, %v3227
      %v3291 = vadd.f32 %v3290, %v3228
      %v3292 = vadd.f32 %v3291, %v3229
      %v3293 = vadd.f32 %v3292, %v3230
      %v3294 = vadd.f32 %v3293, %v3231
      %v3295 = vadd.f32 %v3294, %v3232
      %v3296 = vadd.f32 %v3295, %v3233
      %v3297 = vadd.f32 %v3296, %v3234
      %v3298 = vadd.f32 %v3297, %v3235
      %v3299 = vadd.f32 %v3298, %v3236
      %v3300 = vadd.f32 %v3299, %v3237
      %v3301 = vadd.f32 %v3300, %v3238
      %v3302 = vadd.f32 %v3301, %v3239
      %v3303 = vadd.f32 %v3302, %v3240
      %v3304 = vadd.f32 %v3303, %v3241
      %v3305 = vadd.f32 %v3304, %v3242
      %v3306 = vadd.f32 %v3305, %v3243
      %v3307 = vadd.f32 %v3306, %v3244
      %v3308 = vadd.f32 %v3307, %v3245
      %v3309 = vadd.f32 %v3308, %v3246
      %v3310 = vadd.f32 %v3309, %v3247
      %v3311 = vadd.f32 %v3310, %v3248
      %v3312 = vadd.f32 %v3311, %v3249
      %v3313 = vadd.f32 %v3312, %v3250
      %v3314 = vadd.f32 %v3313, %v3251
      %v3315 = vadd.f32 %v3314, %v3252
      %v3316 = vadd.f32 %v3315, %v3253
      %v3317 = vadd.f32 %v3316, %v3254
      %v3318 = vrot.slane %v3317, 4
      %v3319 = vadd.f32 %v3317, %v3318
      %v3320 = vrot.slane %v3319, 2
      %v3321 = vadd.f32 %v3319, %v3320
      %v3322 = vrot.slane %v3321, 1
      %v3323 = vadd.f32 %v3321, %v3322
      %3324 = vst [vmem:[%s211] sm:$0x1] %v3323
      %v3325 = vmul.f32 %v3223, %v3223
      %v3326 = vmul.f32 %v3224, %v3224
      %v3327 = vmul.f32 %v3225, %v3225
      %v3328 = vmul.f32 %v3226, %v3226
      %v3329 = vmul.f32 %v3227, %v3227
      %v3330 = vmul.f32 %v3228, %v3228
      %v3331 = vmul.f32 %v3229, %v3229
      %v3332 = vmul.f32 %v3230, %v3230
      %v3333 = vmul.f32 %v3231, %v3231
      %v3334 = vmul.f32 %v3232, %v3232
      %v3335 = vmul.f32 %v3233, %v3233
      %v3336 = vmul.f32 %v3234, %v3234
      %v3337 = vmul.f32 %v3235, %v3235
      %v3338 = vmul.f32 %v3236, %v3236
      %v3339 = vmul.f32 %v3237, %v3237
      %v3340 = vmul.f32 %v3238, %v3238
      %v3341 = vmul.f32 %v3239, %v3239
      %v3342 = vmul.f32 %v3240, %v3240
      %v3343 = vmul.f32 %v3241, %v3241
      %v3344 = vmul.f32 %v3242, %v3242
      %v3345 = vmul.f32 %v3243, %v3243
      %v3346 = vmul.f32 %v3244, %v3244
      %v3347 = vmul.f32 %v3245, %v3245
      %v3348 = vmul.f32 %v3246, %v3246
      %v3349 = vmul.f32 %v3247, %v3247
      %v3350 = vmul.f32 %v3248, %v3248
      %v3351 = vmul.f32 %v3249, %v3249
      %v3352 = vmul.f32 %v3250, %v3250
      %v3353 = vmul.f32 %v3251, %v3251
      %v3354 = vmul.f32 %v3252, %v3252
      %v3355 = vmul.f32 %v3253, %v3253
      %v3356 = vmul.f32 %v3254, %v3254
      %v3357 = vadd.f32 %v3325, %v3326
      %v3358 = vadd.f32 %v3357, %v3327
      %v3359 = vadd.f32 %v3358, %v3328
      %v3360 = vadd.f32 %v3359, %v3329
      %v3361 = vadd.f32 %v3360, %v3330
      %v3362 = vadd.f32 %v3361, %v3331
      %v3363 = vadd.f32 %v3362, %v3332
      %v3364 = vadd.f32 %v3363, %v3333
      %v3365 = vadd.f32 %v3364, %v3334
      %v3366 = vadd.f32 %v3365, %v3335
      %v3367 = vadd.f32 %v3366, %v3336
      %v3368 = vadd.f32 %v3367, %v3337
      %v3369 = vadd.f32 %v3368, %v3338
      %v3370 = vadd.f32 %v3369, %v3339
      %v3371 = vadd.f32 %v3370, %v3340
      %v3372 = vadd.f32 %v3371, %v3341
      %v3373 = vadd.f32 %v3372, %v3342
      %v3374 = vadd.f32 %v3373, %v3343
      %v3375 = vadd.f32 %v3374, %v3344
      %v3376 = vadd.f32 %v3375, %v3345
      %v3377 = vadd.f32 %v3376, %v3346
      %v3378 = vadd.f32 %v3377, %v3347
      %v3379 = vadd.f32 %v3378, %v3348
      %v3380 = vadd.f32 %v3379, %v3349
      %v3381 = vadd.f32 %v3380, %v3350
      %v3382 = vadd.f32 %v3381, %v3351
      %v3383 = vadd.f32 %v3382, %v3352
      %v3384 = vadd.f32 %v3383, %v3353
      %v3385 = vadd.f32 %v3384, %v3354
      %v3386 = vadd.f32 %v3385, %v3355
      %v3387 = vadd.f32 %v3386, %v3356
      %v3388 = vrot.slane %v3387, 4
      %v3389 = vadd.f32 %v3387, %v3388
      %v3390 = vrot.slane %v3389, 2
      %v3391 = vadd.f32 %v3389, %v3390
      %v3392 = vrot.slane %v3391, 1
      %v3393 = vadd.f32 %v3391, %v3392
      %3394 = vst [vmem:[%s214] sm:$0x1] %v3393
      %p3395 = scmp.lt.s32.totalorder %s16, 1
      %s3396 = scalar_select %p3395, %s16, 1
      %s3397 = smul.addr %s3396, 32
      %s3398 = smul.addr %s3397, 8
      %s3399 = scalar_lea.vmem %s2, %s3398
      %p3400 = scmp.lt.s32.totalorder %s16, 1
      %s3401 = scalar_select %p3400, %s16, 1
      %s3402 = scalar_lea.vmem %s3, %s3401
      %p3403 = scmp.lt.s32.totalorder %s16, 1
      %s3404 = scalar_select %p3403, %s16, 1
      %s3405 = scalar_lea.vmem %s4, %s3404
      // Predicated region
      $region29: #{double_conv_forward.3} parent=27 // pred_check
        %p3406 = pneg %p81
      $region30: #{double_conv_forward.3} parent=27 // pred_check_branch
        %3408 = sbr.rel (%p3406) target = $region32
      $region31: #{double_conv_forward.3} parent=27 // pred_region
        _
      $region32: #{double_conv_forward.3} parent=27 // pred_fallthru
        _
      // Predicated region
      $region33: #{double_conv_forward.3} parent=27 // pred_check
        %p3409 = pneg %p107
      $region34: #{double_conv_forward.3} parent=27 // pred_check_branch
        %3411 = sbr.rel (%p3409) target = $region36
      $region35: #{double_conv_forward.3} parent=27 // pred_region
        _
      $region36: #{double_conv_forward.3} parent=27 // pred_fallthru
        _
      // Predicated region
      $region37: #{double_conv_forward.3} parent=27 // pred_check
        %p3412 = pneg %p133
      $region38: #{double_conv_forward.3} parent=27 // pred_check_branch
        %3414 = sbr.rel (%p3412) target = $region40
      $region39: #{double_conv_forward.3} parent=27 // pred_region
        _
      $region40: #{double_conv_forward.3} parent=27 // pred_fallthru
        _
    $region28: #{double_conv_forward.3} parent=5 // pred_fallthru
      _
    %p3415 = scmp.le.s32.totalorder 2, %s11
    // Predicated region
    $region41: #{double_conv_forward.3} parent=5 // pred_check
      %p3416 = pneg %p3415
    $region42: #{double_conv_forward.3} parent=5 // pred_check_branch
      %3418 = sbr.rel (%p3416) target = $region44
    $region43: #{double_conv_forward.3} parent=5 // pred_region
      %s3419 = ssub.s32 %s11, 2
      // Predicated region
      $region45: #{double_conv_forward.3} parent=43 // pred_check
        %p3420 = pneg %p87
      $region46: #{double_conv_forward.3} parent=43 // pred_check_branch
        %3422 = sbr.rel (%p3420) target = $region48
      $region47: #{double_conv_forward.3} parent=43 // pred_region
        %p3423 = scmp.lt.s32.totalorder %s17, 1
        %s3424 = scalar_select %p3423, %s17, 1
        %s3425 = smul.addr %s3424, 32
        %s3426 = smul.addr %s3425, 8
        %s3427 = scalar_lea.vmem %s2, %s3426
      $region48: #{double_conv_forward.3} parent=43 // pred_fallthru
        _
      // Predicated region
      $region49: #{double_conv_forward.3} parent=43 // pred_check
        %p3428 = pneg %p113
      $region50: #{double_conv_forward.3} parent=43 // pred_check_branch
        %3430 = sbr.rel (%p3428) target = $region52
      $region51: #{double_conv_forward.3} parent=43 // pred_region
        %p3431 = scmp.lt.s32.totalorder %s17, 1
        %s3432 = scalar_select %p3431, %s17, 1
        %s3433 = scalar_lea.vmem %s3, %s3432
      $region52: #{double_conv_forward.3} parent=43 // pred_fallthru
        _
      // Predicated region
      $region53: #{double_conv_forward.3} parent=43 // pred_check
        %p3434 = pneg %p139
      $region54: #{double_conv_forward.3} parent=43 // pred_check_branch
        %3436 = sbr.rel (%p3434) target = $region56
      $region55: #{double_conv_forward.3} parent=43 // pred_region
        %p3437 = scmp.lt.s32.totalorder %s17, 1
        %s3438 = scalar_select %p3437, %s17, 1
        %s3439 = scalar_lea.vmem %s4, %s3438
      $region56: #{double_conv_forward.3} parent=43 // pred_fallthru
        _
    $region44: #{double_conv_forward.3} parent=5 // pred_fallthru
      _
  $region6: #{double_conv_forward.3} parent=0 // loop_footer
    %s15 = sadd.s32 1, %s11
  $region7: #{double_conv_forward.3} parent=0 // loop_footer_branch
    %10 = sbr.rel target = $region3
  $region8: #{double_conv_forward.3} parent=0 // loop_exit
    _

// kernel: double_conv_forward.4
$region0: #{double_conv_forward.4}
  #allocation0 [shape = 'u32[]', space=smem, size = 0x4, offset = 0x4, fixed_abs, tag = 'smem constant byte address 0x4 - core index']
  #allocation1 [shape = 'u32[72,128]{1,0:T(1,128)}', space=vmem, size = 0x9000, scoped, tag = 'internal scratch']
  #allocation2 [shape = 'bf16[18,16,384]{2,1,0:T(8,128)(2,1)}', space=vmem, size = 0x36000, scoped, tag = 'scratch operand']
  #allocation3 [shape = 'f32[256,128]{1,0:T(8,128)}', space=vmem, size = 0x20000, scoped, tag = 'scratch operand']
  %s0 = inlined_call_operand.vmem [shape: f32[2,16,16,128], index: 0, kind: input, shape index: {}]
  %s1 = inlined_call_operand.vmem [shape: f32[1,128], index: 1, kind: input, shape index: {}]
  %s2 = inlined_call_operand.vmem [shape: f32[1,128], index: 2, kind: input, shape index: {}]
  %s3 = inlined_call_operand.vmem [shape: bf16[3,384,128], index: 3, kind: input, shape index: {}]
  %s4 = inlined_call_operand.vmem [shape: f32[2,16,16,128], index: 4, kind: output, shape index: {0}]
  %s5 = inlined_call_operand.vmem [shape: f32[2,1,128], index: 5, kind: output, shape index: {1}]
  %s6 = inlined_call_operand.vmem [shape: f32[2,1,128], index: 6, kind: output, shape index: {2}]
  %7 = xla_tuple %s4, %s5, %s6
  %s8 = sld [smem:[#allocation0]]
  $region65: #{double_conv_forward.4} parent=0
    _
  %s10 = ssub.s32 1, %s8
  %s11 = scalar_select 0, %s10, %s8
  loop: start=0, step=1, limit=4
  $region2: #{double_conv_forward.4} parent=0 // loop_pre_header
    _
  $region3: #{double_conv_forward.4} parent=0 // loop_header
    %s13 = sphi 0, %s17
    %p14 = scmp.ge.s32.totalorder %s13, 4
    %s23 = sphi 0, %s25
    %s26 = sphi 0, %s23
    %s27 = sphi 0, %s26
    %s43 = sphi 0, %s27
    %s47 = sphi 0, %s47
    %s49 = sphi 0, %s47
    %s50 = sphi 0, %s49
    %s64 = sphi 0, %s50
    %s68 = sphi 0, %s68
    %s70 = sphi 0, %s68
    %s71 = sphi 0, %s70
    %s85 = sphi 0, %s71
    %s89 = sphi 0, %s89
    %s91 = sphi 0, %s89
    %s92 = sphi 0, %s91
    %s106 = sphi 0, %s92
    %s112 = sphi 0, %s114
    %s115 = sphi 0, %s112
    %s116 = sphi 0, %s115
    %s132 = sphi 0, %s116
    %s138 = sphi 0, %s140
    %s141 = sphi 0, %s138
    %s142 = sphi 0, %s141
    %s158 = sphi 0, %s142
    %s164 = sphi 0, %s166
    %s167 = sphi 0, %s164
    %s168 = sphi 0, %s167
    %s184 = sphi 0, %s168
  $region4: #{double_conv_forward.4} parent=0 // loop_header_branch
    %16 = sbr.rel (%p14) target = $region8
  $region5: #{double_conv_forward.4} parent=0 // loop_body
    %s18 = ssub.s32 %s13, 1
    %s19 = ssub.s32 %s13, 2
    %s20 = sadd.s32 %s13, 1
    %s21 = ssub.s32 %s13, %s20
    %p22 = scmp.eq.s32.totalorder %s21, 0
    %s24 = sadd.s32 %s23, 1
    %s25 = scalar_select %p22, %s23, %s24
    %p28 = pneg %p22
    %p29 = scmp.eq.s32.totalorder %s13, 1
    %p30 = por %p28, %p29
    %p31 = scmp.ne.s32.totalorder %s23, %s26
    %p32 = scmp.eq.s32.totalorder %s13, 0
    %p33 = por %p31, %p32
    %p34 = scmp.ne.s32.totalorder %s23, %s26
    %p35 = scmp.eq.s32.totalorder %s18, 1
    %p36 = por %p34, %p35
    %p37 = scmp.ne.s32.totalorder %s26, %s27
    %p38 = scmp.eq.s32.totalorder %s18, 0
    %p39 = por %p37, %p38
    %p40 = scmp.ne.s32.totalorder %s26, %s27
    %p41 = scmp.eq.s32.totalorder %s19, 1
    %p42 = por %p40, %p41
    %p44 = scmp.ne.s32.totalorder %s27, %s43
    %p45 = scmp.eq.s32.totalorder %s19, 0
    %p46 = por %p44, %p45
    %s48 = sadd.s32 %s47, 1
    %p51 = scmp.eq.s32.totalorder %s13, 1
    %p52 = scmp.ne.s32.totalorder %s47, %s49
    %p53 = scmp.eq.s32.totalorder %s13, 0
    %p54 = por %p52, %p53
    %p55 = scmp.ne.s32.totalorder %s47, %s49
    %p56 = scmp.eq.s32.totalorder %s18, 1
    %p57 = por %p55, %p56
    %p58 = scmp.ne.s32.totalorder %s49, %s50
    %p59 = scmp.eq.s32.totalorder %s18, 0
    %p60 = por %p58, %p59
    %p61 = scmp.ne.s32.totalorder %s49, %s50
    %p62 = scmp.eq.s32.totalorder %s19, 1
    %p63 = por %p61, %p62
    %p65 = scmp.ne.s32.totalorder %s50, %s64
    %p66 = scmp.eq.s32.totalorder %s19, 0
    %p67 = por %p65, %p66
    %s69 = sadd.s32 %s68, 1
    %p72 = scmp.eq.s32.totalorder %s13, 1
    %p73 = scmp.ne.s32.totalorder %s68, %s70
    %p74 = scmp.eq.s32.totalorder %s13, 0
    %p75 = por %p73, %p74
    %p76 = scmp.ne.s32.totalorder %s68, %s70
    %p77 = scmp.eq.s32.totalorder %s18, 1
    %p78 = por %p76, %p77
    %p79 = scmp.ne.s32.totalorder %s70, %s71
    %p80 = scmp.eq.s32.totalorder %s18, 0
    %p81 = por %p79, %p80
    %p82 = scmp.ne.s32.totalorder %s70, %s71
    %p83 = scmp.eq.s32.totalorder %s19, 1
    %p84 = por %p82, %p83
    %p86 = scmp.ne.s32.totalorder %s71, %s85
    %p87 = scmp.eq.s32.totalorder %s19, 0
    %p88 = por %p86, %p87
    %s90 = sadd.s32 %s89, 1
    %p93 = scmp.eq.s32.totalorder %s13, 1
    %p94 = scmp.ne.s32.totalorder %s89, %s91
    %p95 = scmp.eq.s32.totalorder %s13, 0
    %p96 = por %p94, %p95
    %p97 = scmp.ne.s32.totalorder %s89, %s91
    %p98 = scmp.eq.s32.totalorder %s18, 1
    %p99 = por %p97, %p98
    %p100 = scmp.ne.s32.totalorder %s91, %s92
    %p101 = scmp.eq.s32.totalorder %s18, 0
    %p102 = por %p100, %p101
    %p103 = scmp.ne.s32.totalorder %s91, %s92
    %p104 = scmp.eq.s32.totalorder %s19, 1
    %p105 = por %p103, %p104
    %p107 = scmp.ne.s32.totalorder %s92, %s106
    %p108 = scmp.eq.s32.totalorder %s19, 0
    %p109 = por %p107, %p108
    %s110 = ssub.s32 %s13, %s20
    %p111 = scmp.eq.s32.totalorder %s110, 0
    %s113 = sadd.s32 %s112, 1
    %s114 = scalar_select %p111, %s112, %s113
    %p117 = pneg %p111
    %p118 = scmp.eq.s32.totalorder %s13, 1
    %p119 = por %p117, %p118
    %p120 = scmp.ne.s32.totalorder %s112, %s115
    %p121 = scmp.eq.s32.totalorder %s13, 0
    %p122 = por %p120, %p121
    %p123 = scmp.ne.s32.totalorder %s112, %s115
    %p124 = scmp.eq.s32.totalorder %s18, 1
    %p125 = por %p123, %p124
    %p126 = scmp.ne.s32.totalorder %s115, %s116
    %p127 = scmp.eq.s32.totalorder %s18, 0
    %p128 = por %p126, %p127
    %p129 = scmp.ne.s32.totalorder %s115, %s116
    %p130 = scmp.eq.s32.totalorder %s19, 1
    %p131 = por %p129, %p130
    %p133 = scmp.ne.s32.totalorder %s116, %s132
    %p134 = scmp.eq.s32.totalorder %s19, 0
    %p135 = por %p133, %p134
    %s136 = ssub.s32 %s13, %s20
    %p137 = scmp.eq.s32.totalorder %s136, 0
    %s139 = sadd.s32 %s138, 1
    %s140 = scalar_select %p137, %s138, %s139
    %p143 = pneg %p137
    %p144 = scmp.eq.s32.totalorder %s13, 1
    %p145 = por %p143, %p144
    %p146 = scmp.ne.s32.totalorder %s138, %s141
    %p147 = scmp.eq.s32.totalorder %s13, 0
    %p148 = por %p146, %p147
    %p149 = scmp.ne.s32.totalorder %s138, %s141
    %p150 = scmp.eq.s32.totalorder %s18, 1
    %p151 = por %p149, %p150
    %p152 = scmp.ne.s32.totalorder %s141, %s142
    %p153 = scmp.eq.s32.totalorder %s18, 0
    %p154 = por %p152, %p153
    %p155 = scmp.ne.s32.totalorder %s141, %s142
    %p156 = scmp.eq.s32.totalorder %s19, 1
    %p157 = por %p155, %p156
    %p159 = scmp.ne.s32.totalorder %s142, %s158
    %p160 = scmp.eq.s32.totalorder %s19, 0
    %p161 = por %p159, %p160
    %s162 = ssub.s32 %s13, %s20
    %p163 = scmp.eq.s32.totalorder %s162, 0
    %s165 = sadd.s32 %s164, 1
    %s166 = scalar_select %p163, %s164, %s165
    %p169 = pneg %p163
    %p170 = scmp.eq.s32.totalorder %s13, 1
    %p171 = por %p169, %p170
    %p172 = scmp.ne.s32.totalorder %s164, %s167
    %p173 = scmp.eq.s32.totalorder %s13, 0
    %p174 = por %p172, %p173
    %p175 = scmp.ne.s32.totalorder %s164, %s167
    %p176 = scmp.eq.s32.totalorder %s18, 1
    %p177 = por %p175, %p176
    %p178 = scmp.ne.s32.totalorder %s167, %s168
    %p179 = scmp.eq.s32.totalorder %s18, 0
    %p180 = por %p178, %p179
    %p181 = scmp.ne.s32.totalorder %s167, %s168
    %p182 = scmp.eq.s32.totalorder %s19, 1
    %p183 = por %p181, %p182
    %p185 = scmp.ne.s32.totalorder %s168, %s184
    %p186 = scmp.eq.s32.totalorder %s19, 0
    %p187 = por %p185, %p186
    %p188 = scmp.le.s32.totalorder 1, %s13
    %p189 = scmp.lt.s32.totalorder %s13, 3
    %p190 = pnand %p188, %p189
    %p191 = pneg %p190
    // Predicated region
    $region9: #{double_conv_forward.4} parent=5 // pred_check
      _
    $region10: #{double_conv_forward.4} parent=5 // pred_check_branch
      %193 = sbr.rel (%p190) target = $region12
    $region11: #{double_conv_forward.4} parent=5 // pred_region
      %s194 = ssub.s32 %s13, 1
      // Predicated region
      $region13: #{double_conv_forward.4} parent=11 // pred_check
        %p195 = pneg %p60
      $region14: #{double_conv_forward.4} parent=11 // pred_check_branch
        %197 = sbr.rel (%p195) target = $region16
      $region15: #{double_conv_forward.4} parent=11 // pred_region
        _
      $region16: #{double_conv_forward.4} parent=11 // pred_fallthru
        _
      // Predicated region
      $region17: #{double_conv_forward.4} parent=11 // pred_check
        %p198 = pneg %p81
      $region18: #{double_conv_forward.4} parent=11 // pred_check_branch
        %200 = sbr.rel (%p198) target = $region20
      $region19: #{double_conv_forward.4} parent=11 // pred_region
        _
      $region20: #{double_conv_forward.4} parent=11 // pred_fallthru
        _
      // Predicated region
      $region21: #{double_conv_forward.4} parent=11 // pred_check
        %p201 = pneg %p102
      $region22: #{double_conv_forward.4} parent=11 // pred_check_branch
        %203 = sbr.rel (%p201) target = $region24
      $region23: #{double_conv_forward.4} parent=11 // pred_region
        _
      $region24: #{double_conv_forward.4} parent=11 // pred_fallthru
        _
    $region12: #{double_conv_forward.4} parent=5 // pred_fallthru
      _
    %p204 = scmp.lt.s32.totalorder %s13, 2
    // Predicated region
    $region25: #{double_conv_forward.4} parent=5 // pred_check
      %p205 = pneg %p204
    $region26: #{double_conv_forward.4} parent=5 // pred_check_branch
      %207 = sbr.rel (%p205) target = $region28
    $region27: #{double_conv_forward.4} parent=5 // pred_region
      // Predicated region
      $region29: #{double_conv_forward.4} parent=27 // pred_check
        %p208 = pneg %p33
      $region30: #{double_conv_forward.4} parent=27 // pred_check_branch
        %210 = sbr.rel (%p208) target = $region32
      $region31: #{double_conv_forward.4} parent=27 // pred_region
        %p211 = scmp.lt.s32.totalorder %s13, 1
        %s212 = scalar_select %p211, %s13, 1
        %s213 = smul.addr %s212, 32
        %s214 = smul.addr %s213, 8
        %s215 = scalar_lea.vmem %s0, %s214
      $region32: #{double_conv_forward.4} parent=27 // pred_fallthru
        _
    $region28: #{double_conv_forward.4} parent=5 // pred_fallthru
      _
    %p216 = scmp.le.s32.totalorder 1, %s13
    %p217 = scmp.lt.s32.totalorder %s13, 3
    %p218 = pnand %p216, %p217
    %p219 = pneg %p218
    // Predicated region
    $region33: #{double_conv_forward.4} parent=5 // pred_check
      _
    $region34: #{double_conv_forward.4} parent=5 // pred_check_branch
      %221 = sbr.rel (%p218) target = $region36
    $region35: #{double_conv_forward.4} parent=5 // pred_region
      %s222 = ssub.s32 %s13, 1
      %p223 = scmp.lt.s32.totalorder %s18, 1
      %s224 = scalar_select %p223, %s18, 1
      %s225 = smul.addr %s224, 32
      %s226 = smul.addr %s225, 8
      %s227 = scalar_lea.vmem %s0, %s226
      %p228 = pneg %p39
      %p229 = pneg %p36
      %p230 = pneg %p60
      %p231 = pneg %p57
      %p232 = pneg %p81
      %p233 = pneg %p78
      %p234 = pneg %p102
      %p235 = pneg %p99
      %p236 = pneg %p128
      %p237 = pneg %p125
      %p238 = scmp.lt.s32.totalorder %s18, 1
      %s239 = scalar_select %p238, %s18, 1
      %s240 = smul.addr %s239, 32
      %s241 = smul.addr %s240, 8
      %s242 = scalar_lea.vmem %s4, %s241
      %p243 = pneg %p154
      %p244 = pneg %p151
      %p245 = scmp.lt.s32.totalorder %s18, 1
      %s246 = scalar_select %p245, %s18, 1
      %s247 = scalar_lea.vmem %s5, %s246
      %p248 = pneg %p180
      %p249 = pneg %p177
      %p250 = scmp.lt.s32.totalorder %s18, 1
      %s251 = scalar_select %p250, %s18, 1
      %s252 = scalar_lea.vmem %s6, %s251
      %p253 = scmp.lt.s32.totalorder %s18, 1
      %s254 = scalar_select %p253, %s18, 1
      %s255 = smul.addr %s254, 32
      %s256 = smul.addr %s255, 8
      %s257 = scalar_lea.vmem %s0, %s256
      %p258 = scmp.lt.s32.totalorder %s18, 1
      %s259 = scalar_select %p258, %s18, 1
      %s260 = smul.addr %s259, 32
      %s261 = smul.addr %s260, 8
      %s262 = scalar_lea.vmem %s4, %s261
      %p263 = scmp.lt.s32.totalorder %s18, 1
      %s264 = scalar_select %p263, %s18, 1
      %s265 = scalar_lea.vmem %s5, %s264
      %p266 = scmp.lt.s32.totalorder %s18, 1
      %s267 = scalar_select %p266, %s18, 1
      %s268 = scalar_lea.vmem %s6, %s267
      %v270 = vld [vmem:[%s257] sm:$0xff]
      %v271 = vld [vmem:[%s257 + $0x8] sm:$0xff]
      %v272 = vld [vmem:[%s257 + $0x10] sm:$0xff]
      %v273 = vld [vmem:[%s257 + $0x18] sm:$0xff]
      %v274 = vld [vmem:[%s257 + $0x20] sm:$0xff]
      %v275 = vld [vmem:[%s257 + $0x28] sm:$0xff]
      %v276 = vld [vmem:[%s257 + $0x30] sm:$0xff]
      %v277 = vld [vmem:[%s257 + $0x38] sm:$0xff]
      %v278 = vld [vmem:[%s257 + $0x40] sm:$0xff]
      %v279 = vld [vmem:[%s257 + $0x48] sm:$0xff]
      %v280 = vld [vmem:[%s257 + $0x50] sm:$0xff]
      %v281 = vld [vmem:[%s257 + $0x58] sm:$0xff]
      %v282 = vld [vmem:[%s257 + $0x60] sm:$0xff]
      %v283 = vld [vmem:[%s257 + $0x68] sm:$0xff]
      %v284 = vld [vmem:[%s257 + $0x70] sm:$0xff]
      %v285 = vld [vmem:[%s257 + $0x78] sm:$0xff]
      %v286 = vld [vmem:[%s257 + $0x80] sm:$0xff]
      %v287 = vld [vmem:[%s257 + $0x88] sm:$0xff]
      %v288 = vld [vmem:[%s257 + $0x90] sm:$0xff]
      %v289 = vld [vmem:[%s257 + $0x98] sm:$0xff]
      %v290 = vld [vmem:[%s257 + $0xa0] sm:$0xff]
      %v291 = vld [vmem:[%s257 + $0xa8] sm:$0xff]
      %v292 = vld [vmem:[%s257 + $0xb0] sm:$0xff]
      %v293 = vld [vmem:[%s257 + $0xb8] sm:$0xff]
      %v294 = vld [vmem:[%s257 + $0xc0] sm:$0xff]
      %v295 = vld [vmem:[%s257 + $0xc8] sm:$0xff]
      %v296 = vld [vmem:[%s257 + $0xd0] sm:$0xff]
      %v297 = vld [vmem:[%s257 + $0xd8] sm:$0xff]
      %v298 = vld [vmem:[%s257 + $0xe0] sm:$0xff]
      %v299 = vld [vmem:[%s257 + $0xe8] sm:$0xff]
      %v300 = vld [vmem:[%s257 + $0xf0] sm:$0xff]
      %v301 = vld [vmem:[%s257 + $0xf8] sm:$0xff]
      %v302 = vld [vmem:[%s1] sm:$0x1]
      %v304 = vperm.slane %v302, 0
      %v306 = vmul.f32 %v270, %v304
      %v307 = vmul.f32 %v271, %v304
      %v308 = vmul.f32 %v272, %v304
      %v309 = vmul.f32 %v273, %v304
      %v310 = vmul.f32 %v274, %v304
      %v311 = vmul.f32 %v275, %v304
      %v312 = vmul.f32 %v276, %v304
      %v313 = vmul.f32 %v277, %v304
      %v314 = vmul.f32 %v278, %v304
      %v315 = vmul.f32 %v279, %v304
      %v316 = vmul.f32 %v280, %v304
      %v317 = vmul.f32 %v281, %v304
      %v318 = vmul.f32 %v282, %v304
      %v319 = vmul.f32 %v283, %v304
      %v320 = vmul.f32 %v284, %v304
      %v321 = vmul.f32 %v285, %v304
      %v322 = vmul.f32 %v286, %v304
      %v323 = vmul.f32 %v287, %v304
      %v324 = vmul.f32 %v288, %v304
      %v325 = vmul.f32 %v289, %v304
      %v326 = vmul.f32 %v290, %v304
      %v327 = vmul.f32 %v291, %v304
      %v328 = vmul.f32 %v292, %v304
      %v329 = vmul.f32 %v293, %v304
      %v330 = vmul.f32 %v294, %v304
      %v331 = vmul.f32 %v295, %v304
      %v332 = vmul.f32 %v296, %v304
      %v333 = vmul.f32 %v297, %v304
      %v334 = vmul.f32 %v298, %v304
      %v335 = vmul.f32 %v299, %v304
      %v336 = vmul.f32 %v300, %v304
      %v337 = vmul.f32 %v301, %v304
      %v338 = vld [vmem:[%s2] sm:$0x1]
      %v340 = vperm.slane %v338, 0
      %v342 = vadd.f32 %v306, %v340
      %v343 = vadd.f32 %v307, %v340
      %v344 = vadd.f32 %v308, %v340
      %v345 = vadd.f32 %v309, %v340
      %v346 = vadd.f32 %v310, %v340
      %v347 = vadd.f32 %v311, %v340
      %v348 = vadd.f32 %v312, %v340
      %v349 = vadd.f32 %v313, %v340
      %v350 = vadd.f32 %v314, %v340
      %v351 = vadd.f32 %v315, %v340
      %v352 = vadd.f32 %v316, %v340
      %v353 = vadd.f32 %v317, %v340
      %v354 = vadd.f32 %v318, %v340
      %v355 = vadd.f32 %v319, %v340
      %v356 = vadd.f32 %v320, %v340
      %v357 = vadd.f32 %v321, %v340
      %v358 = vadd.f32 %v322, %v340
      %v359 = vadd.f32 %v323, %v340
      %v360 = vadd.f32 %v324, %v340
      %v361 = vadd.f32 %v325, %v340
      %v362 = vadd.f32 %v326, %v340
      %v363 = vadd.f32 %v327, %v340
      %v364 = vadd.f32 %v328, %v340
      %v365 = vadd.f32 %v329, %v340
      %v366 = vadd.f32 %v330, %v340
      %v367 = vadd.f32 %v331, %v340
      %v368 = vadd.f32 %v332, %v340
      %v369 = vadd.f32 %v333, %v340
      %v370 = vadd.f32 %v334, %v340
      %v371 = vadd.f32 %v335, %v340
      %v372 = vadd.f32 %v336, %v340
      %v373 = vadd.f32 %v337, %v340
      %v374 = vmax.f32 %v342, 0.0
      %v375 = vmax.f32 %v343, 0.0
      %v376 = vmax.f32 %v344, 0.0
      %v377 = vmax.f32 %v345, 0.0
      %v378 = vmax.f32 %v346, 0.0
      %v379 = vmax.f32 %v347, 0.0
      %v380 = vmax.f32 %v348, 0.0
      %v381 = vmax.f32 %v349, 0.0
      %v382 = vmax.f32 %v350, 0.0
      %v383 = vmax.f32 %v351, 0.0
      %v384 = vmax.f32 %v352, 0.0
      %v385 = vmax.f32 %v353, 0.0
      %v386 = vmax.f32 %v354, 0.0
      %v387 = vmax.f32 %v355, 0.0
      %v388 = vmax.f32 %v356, 0.0
      %v389 = vmax.f32 %v357, 0.0
      %v390 = vmax.f32 %v358, 0.0
      %v391 = vmax.f32 %v359, 0.0
      %v392 = vmax.f32 %v360, 0.0
      %v393 = vmax.f32 %v361, 0.0
      %v394 = vmax.f32 %v362, 0.0
      %v395 = vmax.f32 %v363, 0.0
      %v396 = vmax.f32 %v364, 0.0
      %v397 = vmax.f32 %v365, 0.0
      %v398 = vmax.f32 %v366, 0.0
      %v399 = vmax.f32 %v367, 0.0
      %v400 = vmax.f32 %v368, 0.0
      %v401 = vmax.f32 %v369, 0.0
      %v402 = vmax.f32 %v370, 0.0
      %v403 = vmax.f32 %v371, 0.0
      %v404 = vmax.f32 %v372, 0.0
      %v405 = vmax.f32 %v373, 0.0
      %406 = vst [vmem:[#allocation2] sm:$0xff] 0
      %407 = vst [vmem:[#allocation2 + $0x8] sm:$0xf] 0
      %408 = vst [vmem:[#allocation2 + $0xc] sm:$0xff] 0
      %409 = vst [vmem:[#allocation2 + $0x14] sm:$0xf] 0
      %s410 = scalar_lea.vmem [#allocation2], 408
      %411 = vst [vmem:[%s410] sm:$0xff] 0
      %412 = vst [vmem:[%s410 + $0x8] sm:$0xf] 0
      %413 = vst [vmem:[%s410 + $0xc] sm:$0xff] 0
      %414 = vst [vmem:[%s410 + $0x14] sm:$0xf] 0
      %v415 = vlaneseq
      %v416 = vshrl.u32 %v415, 7
      %v417 = vadd.s32 %v416, 8
      %vm418 = vcmp.eq.s32.totalorder %v416, 0
      %vm419 = vcmp.eq.s32.totalorder %v417, 0
      %v420 = vrot.slane %v374, 7
      %v421 = vrot.slane %v376, 7
      %v422 = vrot.slane %v378, 7
      %v423 = vrot.slane %v380, 7
      %v424 = vrot.slane %v382, 7
      %v425 = vrot.slane %v384, 7
      %v426 = vrot.slane %v386, 7
      %v427 = vrot.slane %v388, 7
      %v428 = vrot.slane %v390, 7
      %v429 = vrot.slane %v392, 7
      %v430 = vrot.slane %v394, 7
      %v431 = vrot.slane %v396, 7
      %v432 = vrot.slane %v398, 7
      %v433 = vrot.slane %v400, 7
      %v434 = vrot.slane %v402, 7
      %v435 = vrot.slane %v404, 7
      %v436 = vrot.slane %v375, 7
      %v437 = vrot.slane %v377, 7
      %v438 = vrot.slane %v379, 7
      %v439 = vrot.slane %v381, 7
      %v440 = vrot.slane %v383, 7
      %v441 = vrot.slane %v385, 7
      %v442 = vrot.slane %v387, 7
      %v443 = vrot.slane %v389, 7
      %v444 = vrot.slane %v391, 7
      %v445 = vrot.slane %v393, 7
      %v446 = vrot.slane %v395, 7
      %v447 = vrot.slane %v397, 7
      %v448 = vrot.slane %v399, 7
      %v449 = vrot.slane %v401, 7
      %v450 = vrot.slane %v403, 7
      %v451 = vrot.slane %v405, 7
      %vm452 = vcmp.lt.s32.totalorder %v416, 1
      %v453 = vsel %vm452, %v420, %v436
      %v454 = vsel %vm452, %v421, %v437
      %v455 = vsel %vm452, %v422, %v438
      %v456 = vsel %vm452, %v423, %v439
      %v457 = vsel %vm452, %v424, %v440
      %v458 = vsel %vm452, %v425, %v441
      %v459 = vsel %vm452, %v426, %v442
      %v460 = vsel %vm452, %v427, %v443
      %v461 = vsel %vm452, %v428, %v444
      %v462 = vsel %vm452, %v429, %v445
      %v463 = vsel %vm452, %v430, %v446
      %v464 = vsel %vm452, %v431, %v447
      %v465 = vsel %vm452, %v432, %v448
      %v466 = vsel %vm452, %v433, %v449
      %v467 = vsel %vm452, %v434, %v450
      %v468 = vsel %vm452, %v435, %v451
      %v469 = vsel %vm452, %v436, %v420
      %v470 = vsel %vm452, %v437, %v421
      %v471 = vsel %vm452, %v438, %v422
      %v472 = vsel %vm452, %v439, %v423
      %v473 = vsel %vm452, %v440, %v424
      %v474 = vsel %vm452, %v441, %v425
      %v475 = vsel %vm452, %v442, %v426
      %v476 = vsel %vm452, %v443, %v427
      %v477 = vsel %vm452, %v444, %v428
      %v478 = vsel %vm452, %v445, %v429
      %v479 = vsel %vm452, %v446, %v430
      %v480 = vsel %vm452, %v447, %v431
      %v481 = vsel %vm452, %v448, %v432
      %v482 = vsel %vm452, %v449, %v433
      %v483 = vsel %vm452, %v450, %v434
      %v484 = vsel %vm452, %v451, %v435
      %v485 = vsel %vm418, 1, 0
      %v486 = vsel %vm419, 1, 0
      %vm487 = vcmp.eq.s32.totalorder %v485, 1
      %vm488 = vcmp.eq.s32.totalorder %v486, 1
      %v489 = vsel %vm487, 0.0, %v469
      %v490 = vsel %vm488, 0.0, %v453
      %v491 = vsel %vm487, 0.0, %v470
      %v492 = vsel %vm488, 0.0, %v454
      %v493 = vsel %vm487, 0.0, %v471
      %v494 = vsel %vm488, 0.0, %v455
      %v495 = vsel %vm487, 0.0, %v472
      %v496 = vsel %vm488, 0.0, %v456
      %v497 = vsel %vm487, 0.0, %v473
      %v498 = vsel %vm488, 0.0, %v457
      %v499 = vsel %vm487, 0.0, %v474
      %v500 = vsel %vm488, 0.0, %v458
      %v501 = vsel %vm487, 0.0, %v475
      %v502 = vsel %vm488, 0.0, %v459
      %v503 = vsel %vm487, 0.0, %v476
      %v504 = vsel %vm488, 0.0, %v460
      %v505 = vsel %vm487, 0.0, %v477
      %v506 = vsel %vm488, 0.0, %v461
      %v507 = vsel %vm487, 0.0, %v478
      %v508 = vsel %vm488, 0.0, %v462
      %v509 = vsel %vm487, 0.0, %v479
      %v510 = vsel %vm488, 0.0, %v463
      %v511 = vsel %vm487, 0.0, %v480
      %v512 = vsel %vm488, 0.0, %v464
      %v513 = vsel %vm487, 0.0, %v481
      %v514 = vsel %vm488, 0.0, %v465
      %v515 = vsel %vm487, 0.0, %v482
      %v516 = vsel %vm488, 0.0, %v466
      %v517 = vsel %vm487, 0.0, %v483
      %v518 = vsel %vm488, 0.0, %v467
      %v519 = vsel %vm487, 0.0, %v484
      %v520 = vsel %vm488, 0.0, %v468
      %vm521 = vcmp.eq.s32.totalorder %v416, 15
      %vm522 = vcmp.eq.s32.totalorder %v417, 15
      %v523 = vrot.slane %v374, 1
      %v524 = vrot.slane %v376, 1
      %v525 = vrot.slane %v378, 1
      %v526 = vrot.slane %v380, 1
      %v527 = vrot.slane %v382, 1
      %v528 = vrot.slane %v384, 1
      %v529 = vrot.slane %v386, 1
      %v530 = vrot.slane %v388, 1
      %v531 = vrot.slane %v390, 1
      %v532 = vrot.slane %v392, 1
      %v533 = vrot.slane %v394, 1
      %v534 = vrot.slane %v396, 1
      %v535 = vrot.slane %v398, 1
      %v536 = vrot.slane %v400, 1
      %v537 = vrot.slane %v402, 1
      %v538 = vrot.slane %v404, 1
      %v539 = vrot.slane %v375, 1
      %v540 = vrot.slane %v377, 1
      %v541 = vrot.slane %v379, 1
      %v542 = vrot.slane %v381, 1
      %v543 = vrot.slane %v383, 1
      %v544 = vrot.slane %v385, 1
      %v545 = vrot.slane %v387, 1
      %v546 = vrot.slane %v389, 1
      %v547 = vrot.slane %v391, 1
      %v548 = vrot.slane %v393, 1
      %v549 = vrot.slane %v395, 1
      %v550 = vrot.slane %v397, 1
      %v551 = vrot.slane %v399, 1
      %v552 = vrot.slane %v401, 1
      %v553 = vrot.slane %v403, 1
      %v554 = vrot.slane %v405, 1
      %vm555 = vcmp.lt.s32.totalorder %v416, 7
      %v556 = vsel %vm555, %v523, %v539
      %v557 = vsel %vm555, %v524, %v540
      %v558 = vsel %vm555, %v525, %v541
      %v559 = vsel %vm555, %v526, %v542
      %v560 = vsel %vm555, %v527, %v543
      %v561 = vsel %vm555, %v528, %v544
      %v562 = vsel %vm555, %v529, %v545
      %v563 = vsel %vm555, %v530, %v546
      %v564 = vsel %vm555, %v531, %v547
      %v565 = vsel %vm555, %v532, %v548
      %v566 = vsel %vm555, %v533, %v549
      %v567 = vsel %vm555, %v534, %v550
      %v568 = vsel %vm555, %v535, %v551
      %v569 = vsel %vm555, %v536, %v552
      %v570 = vsel %vm555, %v537, %v553
      %v571 = vsel %vm555, %v538, %v554
      %v572 = vsel %vm555, %v539, %v523
      %v573 = vsel %vm555, %v540, %v524
      %v574 = vsel %vm555, %v541, %v525
      %v575 = vsel %vm555, %v542, %v526
      %v576 = vsel %vm555, %v543, %v527
      %v577 = vsel %vm555, %v544, %v528
      %v578 = vsel %vm555, %v545, %v529
      %v579 = vsel %vm555, %v546, %v530
      %v580 = vsel %vm555, %v547, %v531
      %v581 = vsel %vm555, %v548, %v532
      %v582 = vsel %vm555, %v549, %v533
      %v583 = vsel %vm555, %v550, %v534
      %v584 = vsel %vm555, %v551, %v535
      %v585 = vsel %vm555, %v552, %v536
      %v586 = vsel %vm555, %v553, %v537
      %v587 = vsel %vm555, %v554, %v538
      %v588 = vsel %vm521, 1, 0
      %v589 = vsel %vm522, 1, 0
      %vm590 = vcmp.eq.s32.totalorder %v588, 1
      %vm591 = vcmp.eq.s32.totalorder %v589, 1
      %v592 = vsel %vm590, 0.0, %v556
      %v593 = vsel %vm591, 0.0, %v572
      %v594 = vsel %vm590, 0.0, %v557
      %v595 = vsel %vm591, 0.0, %v573
      %v596 = vsel %vm590, 0.0, %v558
      %v597 = vsel %vm591, 0.0, %v574
      %v598 = vsel %vm590, 0.0, %v559
      %v599 = vsel %vm591, 0.0, %v575
      %v600 = vsel %vm590, 0.0, %v560
      %v601 = vsel %vm591, 0.0, %v576
      %v602 = vsel %vm590, 0.0, %v561
      %v603 = vsel %vm591, 0.0, %v577
      %v604 = vsel %vm590, 0.0, %v562
      %v605 = vsel %vm591, 0.0, %v578
      %v606 = vsel %vm590, 0.0, %v563
      %v607 = vsel %vm591, 0.0, %v579
      %v608 = vsel %vm590, 0.0, %v564
      %v609 = vsel %vm591, 0.0, %v580
      %v610 = vsel %vm590, 0.0, %v565
      %v611 = vsel %vm591, 0.0, %v581
      %v612 = vsel %vm590, 0.0, %v566
      %v613 = vsel %vm591, 0.0, %v582
      %v614 = vsel %vm590, 0.0, %v567
      %v615 = vsel %vm591, 0.0, %v583
      %v616 = vsel %vm590, 0.0, %v568
      %v617 = vsel %vm591, 0.0, %v584
      %v618 = vsel %vm590, 0.0, %v569
      %v619 = vsel %vm591, 0.0, %v585
      %v620 = vsel %vm590, 0.0, %v570
      %v621 = vsel %vm591, 0.0, %v586
      %v622 = vsel %vm590, 0.0, %v571
      %v623 = vsel %vm591, 0.0, %v587
      %v624 = vpack.c.bf16 %v489, %v489
      %v625 = vpack.c.bf16 %v490, %v490
      %v626 = vpack.c.bf16 %v491, %v491
      %v627 = vpack.c.bf16 %v492, %v492
      %v628 = vpack.c.bf16 %v493, %v493
      %v629 = vpack.c.bf16 %v494, %v494
      %v630 = vpack.c.bf16 %v495, %v495
      %v631 = vpack.c.bf16 %v496, %v496
      %v632 = vpack.c.bf16 %v497, %v497
      %v633 = vpack.c.bf16 %v498, %v498
      %v634 = vpack.c.bf16 %v499, %v499
      %v635 = vpack.c.bf16 %v500, %v500
      %v636 = vpack.c.bf16 %v501, %v501
      %v637 = vpack.c.bf16 %v502, %v502
      %v638 = vpack.c.bf16 %v503, %v503
      %v639 = vpack.c.bf16 %v504, %v504
      %v640 = vpack.c.bf16 %v505, %v505
      %v641 = vpack.c.bf16 %v506, %v506
      %v642 = vpack.c.bf16 %v507, %v507
      %v643 = vpack.c.bf16 %v508, %v508
      %v644 = vpack.c.bf16 %v509, %v509
      %v645 = vpack.c.bf16 %v510, %v510
      %v646 = vpack.c.bf16 %v511, %v511
      %v647 = vpack.c.bf16 %v512, %v512
      %v648 = vpack.c.bf16 %v513, %v513
      %v649 = vpack.c.bf16 %v514, %v514
      %v650 = vpack.c.bf16 %v515, %v515
      %v651 = vpack.c.bf16 %v516, %v516
      %v652 = vpack.c.bf16 %v517, %v517
      %v653 = vpack.c.bf16 %v518, %v518
      %v654 = vpack.c.bf16 %v519, %v519
      %v655 = vpack.c.bf16 %v520, %v520
      %s656 = scalar_lea.vmem [#allocation2], 24
      %657 = vst [vmem:[%s656] sm:$0xf] %v624
      %658 = vst [vmem:[%s656 + $0xc] sm:$0xf] %v625
      %659 = vst [vmem:[%s656 + $0x18] sm:$0xf] %v626
      %660 = vst [vmem:[%s656 + $0x24] sm:$0xf] %v627
      %661 = vst [vmem:[%s656 + $0x30] sm:$0xf] %v628
      %662 = vst [vmem:[%s656 + $0x3c] sm:$0xf] %v629
      %663 = vst [vmem:[%s656 + $0x48] sm:$0xf] %v630
      %664 = vst [vmem:[%s656 + $0x54] sm:$0xf] %v631
      %665 = vst [vmem:[%s656 + $0x60] sm:$0xf] %v632
      %666 = vst [vmem:[%s656 + $0x6c] sm:$0xf] %v633
      %667 = vst [vmem:[%s656 + $0x78] sm:$0xf] %v634
      %668 = vst [vmem:[%s656 + $0x84] sm:$0xf] %v635
      %669 = vst [vmem:[%s656 + $0x90] sm:$0xf] %v636
      %670 = vst [vmem:[%s656 + $0x9c] sm:$0xf] %v637
      %671 = vst [vmem:[%s656 + $0xa8] sm:$0xf] %v638
      %672 = vst [vmem:[%s656 + $0xb4] sm:$0xf] %v639
      %673 = vst [vmem:[%s656 + $0xc0] sm:$0xf] %v640
      %674 = vst [vmem:[%s656 + $0xcc] sm:$0xf] %v641
      %675 = vst [vmem:[%s656 + $0xd8] sm:$0xf] %v642
      %676 = vst [vmem:[%s656 + $0xe4] sm:$0xf] %v643
      %677 = vst [vmem:[%s656 + $0xf0] sm:$0xf] %v644
      %678 = vst [vmem:[%s656 + $0xfc] sm:$0xf] %v645
      %679 = vst [vmem:[%s656 + $0x108] sm:$0xf] %v646
      %680 = vst [vmem:[%s656 + $0x114] sm:$0xf] %v647
      %681 = vst [vmem:[%s656 + $0x120] sm:$0xf] %v648
      %682 = vst [vmem:[%s656 + $0x12c] sm:$0xf] %v649
      %683 = vst [vmem:[%s656 + $0x138] sm:$0xf] %v650
      %684 = vst [vmem:[%s656 + $0x144] sm:$0xf] %v651
      %685 = vst [vmem:[%s656 + $0x150] sm:$0xf] %v652
      %686 = vst [vmem:[%s656 + $0x15c] sm:$0xf] %v653
      %687 = vst [vmem:[%s656 + $0x168] sm:$0xf] %v654
      %688 = vst [vmem:[%s656 + $0x174] sm:$0xf] %v655
      %v689 = vpack.c.bf16 %v374, %v374
      %v690 = vpack.c.bf16 %v375, %v375
      %v691 = vpack.c.bf16 %v376, %v376
      %v692 = vpack.c.bf16 %v377, %v377
      %v693 = vpack.c.bf16 %v378, %v378
      %v694 = vpack.c.bf16 %v379, %v379
      %v695 = vpack.c.bf16 %v380, %v380
      %v696 = vpack.c.bf16 %v381, %v381
      %v697 = vpack.c.bf16 %v382, %v382
      %v698 = vpack.c.bf16 %v383, %v383
      %v699 = vpack.c.bf16 %v384, %v384
      %v700 = vpack.c.bf16 %v385, %v385
      %v701 = vpack.c.bf16 %v386, %v386
      %v702 = vpack.c.bf16 %v387, %v387
      %v703 = vpack.c.bf16 %v388, %v388
      %v704 = vpack.c.bf16 %v389, %v389
      %v705 = vpack.c.bf16 %v390, %v390
      %v706 = vpack.c.bf16 %v391, %v391
      %v707 = vpack.c.bf16 %v392, %v392
      %v708 = vpack.c.bf16 %v393, %v393
      %v709 = vpack.c.bf16 %v394, %v394
      %v710 = vpack.c.bf16 %v395, %v395
      %v711 = vpack.c.bf16 %v396, %v396
      %v712 = vpack.c.bf16 %v397, %v397
      %v713 = vpack.c.bf16 %v398, %v398
      %v714 = vpack.c.bf16 %v399, %v399
      %v715 = vpack.c.bf16 %v400, %v400
      %v716 = vpack.c.bf16 %v401, %v401
      %v717 = vpack.c.bf16 %v402, %v402
      %v718 = vpack.c.bf16 %v403, %v403
      %v719 = vpack.c.bf16 %v404, %v404
      %v720 = vpack.c.bf16 %v405, %v405
      %721 = vst [vmem:[%s656 + $0x4] sm:$0xf] %v689
      %722 = vst [vmem:[%s656 + $0x10] sm:$0xf] %v690
      %723 = vst [vmem:[%s656 + $0x1c] sm:$0xf] %v691
      %724 = vst [vmem:[%s656 + $0x28] sm:$0xf] %v692
      %725 = vst [vmem:[%s656 + $0x34] sm:$0xf] %v693
      %726 = vst [vmem:[%s656 + $0x40] sm:$0xf] %v694
      %727 = vst [vmem:[%s656 + $0x4c] sm:$0xf] %v695
      %728 = vst [vmem:[%s656 + $0x58] sm:$0xf] %v696
      %729 = vst [vmem:[%s656 + $0x64] sm:$0xf] %v697
      %730 = vst [vmem:[%s656 + $0x70] sm:$0xf] %v698
      %731 = vst [vmem:[%s656 + $0x7c] sm:$0xf] %v699
      %732 = vst [vmem:[%s656 + $0x88] sm:$0xf] %v700
      %733 = vst [vmem:[%s656 + $0x94] sm:$0xf] %v701
      %734 = vst [vmem:[%s656 + $0xa0] sm:$0xf] %v702
      %735 = vst [vmem:[%s656 + $0xac] sm:$0xf] %v703
      %736 = vst [vmem:[%s656 + $0xb8] sm:$0xf] %v704
      %737 = vst [vmem:[%s656 + $0xc4] sm:$0xf] %v705
      %738 = vst [vmem:[%s656 + $0xd0] sm:$0xf] %v706
      %739 = vst [vmem:[%s656 + $0xdc] sm:$0xf] %v707
      %740 = vst [vmem:[%s656 + $0xe8] sm:$0xf] %v708
      %741 = vst [vmem:[%s656 + $0xf4] sm:$0xf] %v709
      %742 = vst [vmem:[%s656 + $0x100] sm:$0xf] %v710
      %743 = vst [vmem:[%s656 + $0x10c] sm:$0xf] %v711
      %744 = vst [vmem:[%s656 + $0x118] sm:$0xf] %v712
      %745 = vst [vmem:[%s656 + $0x124] sm:$0xf] %v713
      %746 = vst [vmem:[%s656 + $0x130] sm:$0xf] %v714
      %747 = vst [vmem:[%s656 + $0x13c] sm:$0xf] %v715
      %748 = vst [vmem:[%s656 + $0x148] sm:$0xf] %v716
      %749 = vst [vmem:[%s656 + $0x154] sm:$0xf] %v717
      %750 = vst [vmem:[%s656 + $0x160] sm:$0xf] %v718
      %751 = vst [vmem:[%s656 + $0x16c] sm:$0xf] %v719
      %752 = vst [vmem:[%s656 + $0x178] sm:$0xf] %v720
      %v753 = vpack.c.bf16 %v592, %v592
      %v754 = vpack.c.bf16 %v593, %v593
      %v755 = vpack.c.bf16 %v594, %v594
      %v756 = vpack.c.bf16 %v595, %v595
      %v757 = vpack.c.bf16 %v596, %v596
      %v758 = vpack.c.bf16 %v597, %v597
      %v759 = vpack.c.bf16 %v598, %v598
      %v760 = vpack.c.bf16 %v599, %v599
      %v761 = vpack.c.bf16 %v600, %v600
      %v762 = vpack.c.bf16 %v601, %v601
      %v763 = vpack.c.bf16 %v602, %v602
      %v764 = vpack.c.bf16 %v603, %v603
      %v765 = vpack.c.bf16 %v604, %v604
      %v766 = vpack.c.bf16 %v605, %v605
      %v767 = vpack.c.bf16 %v606, %v606
      %v768 = vpack.c.bf16 %v607, %v607
      %v769 = vpack.c.bf16 %v608, %v608
      %v770 = vpack.c.bf16 %v609, %v609
      %v771 = vpack.c.bf16 %v610, %v610
      %v772 = vpack.c.bf16 %v611, %v611
      %v773 = vpack.c.bf16 %v612, %v612
      %v774 = vpack.c.bf16 %v613, %v613
      %v775 = vpack.c.bf16 %v614, %v614
      %v776 = vpack.c.bf16 %v615, %v615
      %v777 = vpack.c.bf16 %v616, %v616
      %v778 = vpack.c.bf16 %v617, %v617
      %v779 = vpack.c.bf16 %v618, %v618
      %v780 = vpack.c.bf16 %v619, %v619
      %v781 = vpack.c.bf16 %v620, %v620
      %v782 = vpack.c.bf16 %v621, %v621
      %v783 = vpack.c.bf16 %v622, %v622
      %v784 = vpack.c.bf16 %v623, %v623
      %785 = vst [vmem:[%s656 + $0x8] sm:$0xf] %v753
      %786 = vst [vmem:[%s656 + $0x14] sm:$0xf] %v754
      %787 = vst [vmem:[%s656 + $0x20] sm:$0xf] %v755
      %788 = vst [vmem:[%s656 + $0x2c] sm:$0xf] %v756
      %789 = vst [vmem:[%s656 + $0x38] sm:$0xf] %v757
      %790 = vst [vmem:[%s656 + $0x44] sm:$0xf] %v758
      %791 = vst [vmem:[%s656 + $0x50] sm:$0xf] %v759
      %792 = vst [vmem:[%s656 + $0x5c] sm:$0xf] %v760
      %793 = vst [vmem:[%s656 + $0x68] sm:$0xf] %v761
      %794 = vst [vmem:[%s656 + $0x74] sm:$0xf] %v762
      %795 = vst [vmem:[%s656 + $0x80] sm:$0xf] %v763
      %796 = vst [vmem:[%s656 + $0x8c] sm:$0xf] %v764
      %797 = vst [vmem:[%s656 + $0x98] sm:$0xf] %v765
      %798 = vst [vmem:[%s656 + $0xa4] sm:$0xf] %v766
      %799 = vst [vmem:[%s656 + $0xb0] sm:$0xf] %v767
      %800 = vst [vmem:[%s656 + $0xbc] sm:$0xf] %v768
      %801 = vst [vmem:[%s656 + $0xc8] sm:$0xf] %v769
      %802 = vst [vmem:[%s656 + $0xd4] sm:$0xf] %v770
      %803 = vst [vmem:[%s656 + $0xe0] sm:$0xf] %v771
      %804 = vst [vmem:[%s656 + $0xec] sm:$0xf] %v772
      %805 = vst [vmem:[%s656 + $0xf8] sm:$0xf] %v773
      %806 = vst [vmem:[%s656 + $0x104] sm:$0xf] %v774
      %807 = vst [vmem:[%s656 + $0x110] sm:$0xf] %v775
      %808 = vst [vmem:[%s656 + $0x11c] sm:$0xf] %v776
      %809 = vst [vmem:[%s656 + $0x128] sm:$0xf] %v777
      %810 = vst [vmem:[%s656 + $0x134] sm:$0xf] %v778
      %811 = vst [vmem:[%s656 + $0x140] sm:$0xf] %v779
      %812 = vst [vmem:[%s656 + $0x14c] sm:$0xf] %v780
      %813 = vst [vmem:[%s656 + $0x158] sm:$0xf] %v781
      %814 = vst [vmem:[%s656 + $0x164] sm:$0xf] %v782
      %815 = vst [vmem:[%s656 + $0x170] sm:$0xf] %v783
      %816 = vst [vmem:[%s656 + $0x17c] sm:$0xf] %v784
      %v817 = vld [vmem:[#allocation2] sm:$0xff]
      %v818 = vld [vmem:[#allocation2 + $0x8] sm:$0xf]
      %v819 = vld [vmem:[#allocation2 + $0xc] sm:$0xff]
      %v820 = vld [vmem:[#allocation2 + $0x14] sm:$0xf]
      %v821 = vld [vmem:[#allocation2 + $0x18] sm:$0xff]
      %v822 = vld [vmem:[#allocation2 + $0x20] sm:$0xf]
      %v823 = vld [vmem:[#allocation2 + $0x24] sm:$0xff]
      %v824 = vld [vmem:[#allocation2 + $0x2c] sm:$0xf]
      %v825 = vld [vmem:[#allocation2 + $0x30] sm:$0xff]
      %v826 = vld [vmem:[#allocation2 + $0x38] sm:$0xf]
      %v827 = vld [vmem:[#allocation2 + $0x3c] sm:$0xff]
      %v828 = vld [vmem:[#allocation2 + $0x44] sm:$0xf]
      %v829 = vld [vmem:[#allocation2 + $0x48] sm:$0xff]
      %v830 = vld [vmem:[#allocation2 + $0x50] sm:$0xf]
      %v831 = vld [vmem:[#allocation2 + $0x54] sm:$0xff]
      %v832 = vld [vmem:[#allocation2 + $0x5c] sm:$0xf]
      %v833 = vld [vmem:[#allocation2 + $0x60] sm:$0xff]
      %v834 = vld [vmem:[#allocation2 + $0x68] sm:$0xf]
      %v835 = vld [vmem:[#allocation2 + $0x6c] sm:$0xff]
      %v836 = vld [vmem:[#allocation2 + $0x74] sm:$0xf]
      %v837 = vld [vmem:[#allocation2 + $0x78] sm:$0xff]
      %v838 = vld [vmem:[#allocation2 + $0x80] sm:$0xf]
      %v839 = vld [vmem:[#allocation2 + $0x84] sm:$0xff]
      %v840 = vld [vmem:[#allocation2 + $0x8c] sm:$0xf]
      %v841 = vld [vmem:[#allocation2 + $0x90] sm:$0xff]
      %v842 = vld [vmem:[#allocation2 + $0x98] sm:$0xf]
      %v843 = vld [vmem:[#allocation2 + $0x9c] sm:$0xff]
      %v844 = vld [vmem:[#allocation2 + $0xa4] sm:$0xf]
      %v845 = vld [vmem:[#allocation2 + $0xa8] sm:$0xff]
      %v846 = vld [vmem:[#allocation2 + $0xb0] sm:$0xf]
      %v847 = vld [vmem:[#allocation2 + $0xb4] sm:$0xff]
      %v848 = vld [vmem:[#allocation2 + $0xbc] sm:$0xf]
      %v849 = vld [vmem:[#allocation2 + $0xc0] sm:$0xff]
      %v850 = vld [vmem:[#allocation2 + $0xc8] sm:$0xf]
      %v851 = vld [vmem:[#allocation2 + $0xcc] sm:$0xff]
      %v852 = vld [vmem:[#allocation2 + $0xd4] sm:$0xf]
      %v853 = vld [vmem:[#allocation2 + $0xd8] sm:$0xff]
      %v854 = vld [vmem:[#allocation2 + $0xe0] sm:$0xf]
      %v855 = vld [vmem:[#allocation2 + $0xe4] sm:$0xff]
      %v856 = vld [vmem:[#allocation2 + $0xec] sm:$0xf]
      %v857 = vld [vmem:[#allocation2 + $0xf0] sm:$0xff]
      %v858 = vld [vmem:[#allocation2 + $0xf8] sm:$0xf]
      %v859 = vld [vmem:[#allocation2 + $0xfc] sm:$0xff]
      %v860 = vld [vmem:[#allocation2 + $0x104] sm:$0xf]
      %v861 = vld [vmem:[#allocation2 + $0x108] sm:$0xff]
      %v862 = vld [vmem:[#allocation2 + $0x110] sm:$0xf]
      %v863 = vld [vmem:[#allocation2 + $0x114] sm:$0xff]
      %v864 = vld [vmem:[#allocation2 + $0x11c] sm:$0xf]
      %v865 = vld [vmem:[#allocation2 + $0x120] sm:$0xff]
      %v866 = vld [vmem:[#allocation2 + $0x128] sm:$0xf]
      %v867 = vld [vmem:[#allocation2 + $0x12c] sm:$0xff]
      %v868 = vld [vmem:[#allocation2 + $0x134] sm:$0xf]
      %v869 = vld [vmem:[#allocation2 + $0x138] sm:$0xff]
      %v870 = vld [vmem:[#allocation2 + $0x140] sm:$0xf]
      %v871 = vld [vmem:[#allocation2 + $0x144] sm:$0xff]
      %v872 = vld [vmem:[#allocation2 + $0x14c] sm:$0xf]
      %v873 = vld [vmem:[#allocation2 + $0x150] sm:$0xff]
      %v874 = vld [vmem:[#allocation2 + $0x158] sm:$0xf]
      %v875 = vld [vmem:[#allocation2 + $0x15c] sm:$0xff]
      %v876 = vld [vmem:[#allocation2 + $0x164] sm:$0xf]
      %v877 = vld [vmem:[#allocation2 + $0x168] sm:$0xff]
      %v878 = vld [vmem:[#allocation2 + $0x170] sm:$0xf]
      %v879 = vld [vmem:[#allocation2 + $0x174] sm:$0xff]
      %v880 = vld [vmem:[#allocation2 + $0x17c] sm:$0xf]
      %v881 = vld [vmem:[%s3] sm:$0xf]
      %v882 = vld [vmem:[%s3 + $0x4] sm:$0xf]
      %v883 = vld [vmem:[%s3 + $0x8] sm:$0xf]
      %v884 = vld [vmem:[%s3 + $0xc] sm:$0xf]
      %v885 = vld [vmem:[%s3 + $0x10] sm:$0xf]
      %v886 = vld [vmem:[%s3 + $0x14] sm:$0xf]
      %v887 = vld [vmem:[%s3 + $0x18] sm:$0xf]
      %v888 = vld [vmem:[%s3 + $0x1c] sm:$0xf]
      %v889 = vld [vmem:[%s3 + $0x20] sm:$0xf]
      %v890 = vld [vmem:[%s3 + $0x24] sm:$0xf]
      %v891 = vld [vmem:[%s3 + $0x28] sm:$0xf]
      %v892 = vld [vmem:[%s3 + $0x2c] sm:$0xf]
      %v893 = vld [vmem:[%s3 + $0x30] sm:$0xf]
      %v894 = vld [vmem:[%s3 + $0x34] sm:$0xf]
      %v895 = vld [vmem:[%s3 + $0x38] sm:$0xf]
      %v896 = vld [vmem:[%s3 + $0x3c] sm:$0xf]
      %v897 = vld [vmem:[%s3 + $0x40] sm:$0xf]
      %v898 = vld [vmem:[%s3 + $0x44] sm:$0xf]
      %v899 = vld [vmem:[%s3 + $0x48] sm:$0xf]
      %v900 = vld [vmem:[%s3 + $0x4c] sm:$0xf]
      %v901 = vld [vmem:[%s3 + $0x50] sm:$0xf]
      %v902 = vld [vmem:[%s3 + $0x54] sm:$0xf]
      %v903 = vld [vmem:[%s3 + $0x58] sm:$0xf]
      %v904 = vld [vmem:[%s3 + $0x5c] sm:$0xf]
      %v905 = vld [vmem:[%s3 + $0x60] sm:$0xf]
      %v906 = vld [vmem:[%s3 + $0x64] sm:$0xf]
      %v907 = vld [vmem:[%s3 + $0x68] sm:$0xf]
      %v908 = vld [vmem:[%s3 + $0x6c] sm:$0xf]
      %v909 = vld [vmem:[%s3 + $0x70] sm:$0xf]
      %v910 = vld [vmem:[%s3 + $0x74] sm:$0xf]
      %v911 = vld [vmem:[%s3 + $0x78] sm:$0xf]
      %v912 = vld [vmem:[%s3 + $0x7c] sm:$0xf]
      %v913 = vld [vmem:[%s3 + $0x80] sm:$0xf]
      %v914 = vld [vmem:[%s3 + $0x84] sm:$0xf]
      %v915 = vld [vmem:[%s3 + $0x88] sm:$0xf]
      %v916 = vld [vmem:[%s3 + $0x8c] sm:$0xf]
      %v917 = vld [vmem:[%s3 + $0x90] sm:$0xf]
      %v918 = vld [vmem:[%s3 + $0x94] sm:$0xf]
      %v919 = vld [vmem:[%s3 + $0x98] sm:$0xf]
      %v920 = vld [vmem:[%s3 + $0x9c] sm:$0xf]
      %v921 = vld [vmem:[%s3 + $0xa0] sm:$0xf]
      %v922 = vld [vmem:[%s3 + $0xa4] sm:$0xf]
      %v923 = vld [vmem:[%s3 + $0xa8] sm:$0xf]
      %v924 = vld [vmem:[%s3 + $0xac] sm:$0xf]
      %v925 = vld [vmem:[%s3 + $0xb0] sm:$0xf]
      %v926 = vld [vmem:[%s3 + $0xb4] sm:$0xf]
      %v927 = vld [vmem:[%s3 + $0xb8] sm:$0xf]
      %v928 = vld [vmem:[%s3 + $0xbc] sm:$0xf]
      %v993 = vunpack.c.l.b16 %v817
      %v994 = vunpack.c.h.b16 %v817
      %v995 = vunpack.c.l.b16 %v818
      %v996 = vunpack.c.l.b16 %v819
      %v997 = vunpack.c.h.b16 %v819
      %v998 = vunpack.c.l.b16 %v820
      %v999 = vunpack.c.l.b16 %v821
      %v1000 = vunpack.c.h.b16 %v821
      %v1001 = vunpack.c.l.b16 %v822
      %v1002 = vunpack.c.l.b16 %v823
      %v1003 = vunpack.c.h.b16 %v823
      %v1004 = vunpack.c.l.b16 %v824
      %v1005 = vunpack.c.l.b16 %v825
      %v1006 = vunpack.c.h.b16 %v825
      %v1007 = vunpack.c.l.b16 %v826
      %v1008 = vunpack.c.l.b16 %v827
      %v1009 = vunpack.c.h.b16 %v827
      %v1010 = vunpack.c.l.b16 %v828
      %v1011 = vunpack.c.l.b16 %v829
      %v1012 = vunpack.c.h.b16 %v829
      %v1013 = vunpack.c.l.b16 %v830
      %v1014 = vunpack.c.l.b16 %v831
      %v1015 = vunpack.c.h.b16 %v831
      %v1016 = vunpack.c.l.b16 %v832
      %v1017 = vunpack.c.l.b16 %v833
      %v1018 = vunpack.c.h.b16 %v833
      %v1019 = vunpack.c.l.b16 %v834
      %v1020 = vunpack.c.l.b16 %v835
      %v1021 = vunpack.c.h.b16 %v835
      %v1022 = vunpack.c.l.b16 %v836
      %v1023 = vunpack.c.l.b16 %v837
      %v1024 = vunpack.c.h.b16 %v837
      %v1025 = vunpack.c.l.b16 %v838
      %v1026 = vunpack.c.l.b16 %v839
      %v1027 = vunpack.c.h.b16 %v839
      %v1028 = vunpack.c.l.b16 %v840
      %v1029 = vunpack.c.l.b16 %v841
      %v1030 = vunpack.c.h.b16 %v841
      %v1031 = vunpack.c.l.b16 %v842
      %v1032 = vunpack.c.l.b16 %v843
      %v1033 = vunpack.c.h.b16 %v843
      %v1034 = vunpack.c.l.b16 %v844
      %v1035 = vunpack.c.l.b16 %v845
      %v1036 = vunpack.c.h.b16 %v845
      %v1037 = vunpack.c.l.b16 %v846
      %v1038 = vunpack.c.l.b16 %v847
      %v1039 = vunpack.c.h.b16 %v847
      %v1040 = vunpack.c.l.b16 %v848
      %v1041 = vunpack.c.l.b16 %v849
      %v1042 = vunpack.c.h.b16 %v849
      %v1043 = vunpack.c.l.b16 %v850
      %v1044 = vunpack.c.l.b16 %v851
      %v1045 = vunpack.c.h.b16 %v851
      %v1046 = vunpack.c.l.b16 %v852
      %v1047 = vunpack.c.l.b16 %v853
      %v1048 = vunpack.c.h.b16 %v853
      %v1049 = vunpack.c.l.b16 %v854
      %v1050 = vunpack.c.l.b16 %v855
      %v1051 = vunpack.c.h.b16 %v855
      %v1052 = vunpack.c.l.b16 %v856
      %v1053 = vunpack.c.l.b16 %v857
      %v1054 = vunpack.c.h.b16 %v857
      %v1055 = vunpack.c.l.b16 %v858
      %v1056 = vunpack.c.l.b16 %v859
      %v1057 = vunpack.c.h.b16 %v859
      %v1058 = vunpack.c.l.b16 %v860
      %v1059 = vunpack.c.l.b16 %v861
      %v1060 = vunpack.c.h.b16 %v861
      %v1061 = vunpack.c.l.b16 %v862
      %v1062 = vunpack.c.l.b16 %v863
      %v1063 = vunpack.c.h.b16 %v863
      %v1064 = vunpack.c.l.b16 %v864
      %v1065 = vunpack.c.l.b16 %v865
      %v1066 = vunpack.c.h.b16 %v865
      %v1067 = vunpack.c.l.b16 %v866
      %v1068 = vunpack.c.l.b16 %v867
      %v1069 = vunpack.c.h.b16 %v867
      %v1070 = vunpack.c.l.b16 %v868
      %v1071 = vunpack.c.l.b16 %v869
      %v1072 = vunpack.c.h.b16 %v869
      %v1073 = vunpack.c.l.b16 %v870
      %v1074 = vunpack.c.l.b16 %v871
      %v1075 = vunpack.c.h.b16 %v871
      %v1076 = vunpack.c.l.b16 %v872
      %v1077 = vunpack.c.l.b16 %v873
      %v1078 = vunpack.c.h.b16 %v873
      %v1079 = vunpack.c.l.b16 %v874
      %v1080 = vunpack.c.l.b16 %v875
      %v1081 = vunpack.c.h.b16 %v875
      %v1082 = vunpack.c.l.b16 %v876
      %v1083 = vunpack.c.l.b16 %v877
      %v1084 = vunpack.c.h.b16 %v877
      %v1085 = vunpack.c.l.b16 %v878
      %v1086 = vunpack.c.l.b16 %v879
      %v1087 = vunpack.c.h.b16 %v879
      %v1088 = vunpack.c.l.b16 %v880
      %v1089 = vpack.c.b16 %v996, %v993
      %v1090 = vpack.c.b16 %v997, %v994
      %v1091 = vpack.c.b16 %v998, %v995
      %v1092 = vpack.c.b16 %v1002, %v999
      %v1093 = vpack.c.b16 %v1003, %v1000
      %v1094 = vpack.c.b16 %v1004, %v1001
      %v1095 = vpack.c.b16 %v1008, %v1005
      %v1096 = vpack.c.b16 %v1009, %v1006
      %v1097 = vpack.c.b16 %v1010, %v1007
      %v1098 = vpack.c.b16 %v1014, %v1011
      %v1099 = vpack.c.b16 %v1015, %v1012
      %v1100 = vpack.c.b16 %v1016, %v1013
      %v1101 = vpack.c.b16 %v1020, %v1017
      %v1102 = vpack.c.b16 %v1021, %v1018
      %v1103 = vpack.c.b16 %v1022, %v1019
      %v1104 = vpack.c.b16 %v1026, %v1023
      %v1105 = vpack.c.b16 %v1027, %v1024
      %v1106 = vpack.c.b16 %v1028, %v1025
      %v1107 = vpack.c.b16 %v1032, %v1029
      %v1108 = vpack.c.b16 %v1033, %v1030
      %v1109 = vpack.c.b16 %v1034, %v1031
      %v1110 = vpack.c.b16 %v1038, %v1035
      %v1111 = vpack.c.b16 %v1039, %v1036
      %v1112 = vpack.c.b16 %v1040, %v1037
      %v1113 = vpack.c.b16 %v1044, %v1041
      %v1114 = vpack.c.b16 %v1045, %v1042
      %v1115 = vpack.c.b16 %v1046, %v1043
      %v1116 = vpack.c.b16 %v1050, %v1047
      %v1117 = vpack.c.b16 %v1051, %v1048
      %v1118 = vpack.c.b16 %v1052, %v1049
      %v1119 = vpack.c.b16 %v1056, %v1053
      %v1120 = vpack.c.b16 %v1057, %v1054
      %v1121 = vpack.c.b16 %v1058, %v1055
      %v1122 = vpack.c.b16 %v1062, %v1059
      %v1123 = vpack.c.b16 %v1063, %v1060
      %v1124 = vpack.c.b16 %v1064, %v1061
      %v1125 = vpack.c.b16 %v1068, %v1065
      %v1126 = vpack.c.b16 %v1069, %v1066
      %v1127 = vpack.c.b16 %v1070, %v1067
      %v1128 = vpack.c.b16 %v1074, %v1071
      %v1129 = vpack.c.b16 %v1075, %v1072
      %v1130 = vpack.c.b16 %v1076, %v1073
      %v1131 = vpack.c.b16 %v1080, %v1077
      %v1132 = vpack.c.b16 %v1081, %v1078
      %v1133 = vpack.c.b16 %v1082, %v1079
      %v1134 = vpack.c.b16 %v1086, %v1083
      %v1135 = vpack.c.b16 %v1087, %v1084
      %v1136 = vpack.c.b16 %v1088, %v1085
      %v1233 = vunpack.c.l.b16 %v881
      %v1234 = vunpack.c.l.b16 %v882
      %v1235 = vunpack.c.l.b16 %v883
      %v1236 = vunpack.c.l.b16 %v884
      %v1237 = vunpack.c.l.b16 %v885
      %v1238 = vunpack.c.l.b16 %v886
      %v1239 = vunpack.c.l.b16 %v887
      %v1240 = vunpack.c.l.b16 %v888
      %v1241 = vunpack.c.l.b16 %v889
      %v1242 = vunpack.c.l.b16 %v890
      %v1243 = vunpack.c.l.b16 %v891
      %v1244 = vunpack.c.l.b16 %v892
      %v1245 = vunpack.c.l.b16 %v893
      %v1246 = vunpack.c.l.b16 %v894
      %v1247 = vunpack.c.l.b16 %v895
      %v1248 = vunpack.c.l.b16 %v896
      %v1249 = vunpack.c.l.b16 %v897
      %v1250 = vunpack.c.l.b16 %v898
      %v1251 = vunpack.c.l.b16 %v899
      %v1252 = vunpack.c.l.b16 %v900
      %v1253 = vunpack.c.l.b16 %v901
      %v1254 = vunpack.c.l.b16 %v902
      %v1255 = vunpack.c.l.b16 %v903
      %v1256 = vunpack.c.l.b16 %v904
      %v1257 = vunpack.c.l.b16 %v905
      %v1258 = vunpack.c.l.b16 %v906
      %v1259 = vunpack.c.l.b16 %v907
      %v1260 = vunpack.c.l.b16 %v908
      %v1261 = vunpack.c.l.b16 %v909
      %v1262 = vunpack.c.l.b16 %v910
      %v1263 = vunpack.c.l.b16 %v911
      %v1264 = vunpack.c.l.b16 %v912
      %v1265 = vunpack.c.l.b16 %v913
      %v1266 = vunpack.c.l.b16 %v914
      %v1267 = vunpack.c.l.b16 %v915
      %v1268 = vunpack.c.l.b16 %v916
      %v1269 = vunpack.c.l.b16 %v917
      %v1270 = vunpack.c.l.b16 %v918
      %v1271 = vunpack.c.l.b16 %v919
      %v1272 = vunpack.c.l.b16 %v920
      %v1273 = vunpack.c.l.b16 %v921
      %v1274 = vunpack.c.l.b16 %v922
      %v1275 = vunpack.c.l.b16 %v923
      %v1276 = vunpack.c.l.b16 %v924
      %v1277 = vunpack.c.l.b16 %v925
      %v1278 = vunpack.c.l.b16 %v926
      %v1279 = vunpack.c.l.b16 %v927
      %v1280 = vunpack.c.l.b16 %v928
      %v1281 = vpack.c.b16 %v1234, %v1233
      %v1282 = vpack.c.b16 %v1236, %v1235
      %v1283 = vpack.c.b16 %v1238, %v1237
      %v1284 = vpack.c.b16 %v1240, %v1239
      %v1285 = vpack.c.b16 %v1242, %v1241
      %v1286 = vpack.c.b16 %v1244, %v1243
      %v1287 = vpack.c.b16 %v1246, %v1245
      %v1288 = vpack.c.b16 %v1248, %v1247
      %v1289 = vpack.c.b16 %v1250, %v1249
      %v1290 = vpack.c.b16 %v1252, %v1251
      %v1291 = vpack.c.b16 %v1254, %v1253
      %v1292 = vpack.c.b16 %v1256, %v1255
      %v1293 = vpack.c.b16 %v1258, %v1257
      %v1294 = vpack.c.b16 %v1260, %v1259
      %v1295 = vpack.c.b16 %v1262, %v1261
      %v1296 = vpack.c.b16 %v1264, %v1263
      %v1297 = vpack.c.b16 %v1266, %v1265
      %v1298 = vpack.c.b16 %v1268, %v1267
      %v1299 = vpack.c.b16 %v1270, %v1269
      %v1300 = vpack.c.b16 %v1272, %v1271
      %v1301 = vpack.c.b16 %v1274, %v1273
      %v1302 = vpack.c.b16 %v1276, %v1275
      %v1303 = vpack.c.b16 %v1278, %v1277
      %v1304 = vpack.c.b16 %v1280, %v1279
      %1329 = vmatpush.bf16.msra.mxu0 %v1288
      %1330 = vmatpush.bf16.msra.mxu0 %v1287
      %1331 = vmatpush.bf16.msra.mxu0 %v1286
      %1332 = vmatpush.bf16.msra.mxu0 %v1285
      %1333 = vmatpush.bf16.msra.mxu0 %v1284
      %1334 = vmatpush.bf16.msra.mxu0 %v1283
      %1335 = vmatpush.bf16.msra.mxu0 %v1282
      %1336 = vmatpush.bf16.msra.mxu0 %v1281
      %1337 = vmatmul.bf16.gmra.mxu0 %v1089
      %v1338 = vpop.f32.mrf.mxu0
      %v1339 = vadd.f32 0.0, %v1338
      %v1340 = vpop.f32.mrf.mxu0
      %v1341 = vadd.f32 0.0, %v1340
      %1342 = vmatmul.bf16.gmra.mxu0 %v1092
      %v1343 = vpop.f32.mrf.mxu0
      %v1344 = vadd.f32 0.0, %v1343
      %v1345 = vpop.f32.mrf.mxu0
      %v1346 = vadd.f32 0.0, %v1345
      %1347 = vmatmul.bf16.gmra.mxu0 %v1095
      %v1348 = vpop.f32.mrf.mxu0
      %v1349 = vadd.f32 0.0, %v1348
      %v1350 = vpop.f32.mrf.mxu0
      %v1351 = vadd.f32 0.0, %v1350
      %1352 = vmatmul.bf16.gmra.mxu0 %v1098
      %v1353 = vpop.f32.mrf.mxu0
      %v1354 = vadd.f32 0.0, %v1353
      %v1355 = vpop.f32.mrf.mxu0
      %v1356 = vadd.f32 0.0, %v1355
      %1357 = vmatmul.bf16.gmra.mxu0 %v1101
      %v1358 = vpop.f32.mrf.mxu0
      %v1359 = vadd.f32 0.0, %v1358
      %v1360 = vpop.f32.mrf.mxu0
      %v1361 = vadd.f32 0.0, %v1360
      %1362 = vmatmul.bf16.gmra.mxu0 %v1104
      %v1363 = vpop.f32.mrf.mxu0
      %v1364 = vadd.f32 0.0, %v1363
      %v1365 = vpop.f32.mrf.mxu0
      %v1366 = vadd.f32 0.0, %v1365
      %1367 = vmatmul.bf16.gmra.mxu0 %v1107
      %v1368 = vpop.f32.mrf.mxu0
      %v1369 = vadd.f32 0.0, %v1368
      %v1370 = vpop.f32.mrf.mxu0
      %v1371 = vadd.f32 0.0, %v1370
      %1372 = vmatmul.bf16.gmra.mxu0 %v1110
      %v1373 = vpop.f32.mrf.mxu0
      %v1374 = vadd.f32 0.0, %v1373
      %v1375 = vpop.f32.mrf.mxu0
      %v1376 = vadd.f32 0.0, %v1375
      %1377 = vmatmul.bf16.gmra.mxu0 %v1113
      %v1378 = vpop.f32.mrf.mxu0
      %v1379 = vadd.f32 0.0, %v1378
      %v1380 = vpop.f32.mrf.mxu0
      %v1381 = vadd.f32 0.0, %v1380
      %1382 = vmatmul.bf16.gmra.mxu0 %v1116
      %v1383 = vpop.f32.mrf.mxu0
      %v1384 = vadd.f32 0.0, %v1383
      %v1385 = vpop.f32.mrf.mxu0
      %v1386 = vadd.f32 0.0, %v1385
      %1387 = vmatmul.bf16.gmra.mxu0 %v1119
      %v1388 = vpop.f32.mrf.mxu0
      %v1389 = vadd.f32 0.0, %v1388
      %v1390 = vpop.f32.mrf.mxu0
      %v1391 = vadd.f32 0.0, %v1390
      %1392 = vmatmul.bf16.gmra.mxu0 %v1122
      %v1393 = vpop.f32.mrf.mxu0
      %v1394 = vadd.f32 0.0, %v1393
      %v1395 = vpop.f32.mrf.mxu0
      %v1396 = vadd.f32 0.0, %v1395
      %1397 = vmatmul.bf16.gmra.mxu0 %v1125
      %v1398 = vpop.f32.mrf.mxu0
      %v1399 = vadd.f32 0.0, %v1398
      %v1400 = vpop.f32.mrf.mxu0
      %v1401 = vadd.f32 0.0, %v1400
      %1402 = vmatmul.bf16.gmra.mxu0 %v1128
      %v1403 = vpop.f32.mrf.mxu0
      %v1404 = vadd.f32 0.0, %v1403
      %v1405 = vpop.f32.mrf.mxu0
      %v1406 = vadd.f32 0.0, %v1405
      %1407 = vmatmul.bf16.gmra.mxu0 %v1131
      %v1408 = vpop.f32.mrf.mxu0
      %v1409 = vadd.f32 0.0, %v1408
      %v1410 = vpop.f32.mrf.mxu0
      %v1411 = vadd.f32 0.0, %v1410
      %1412 = vmatmul.bf16.gmra.mxu0 %v1134
      %v1413 = vpop.f32.mrf.mxu0
      %v1414 = vadd.f32 0.0, %v1413
      %v1415 = vpop.f32.mrf.mxu0
      %v1416 = vadd.f32 0.0, %v1415
      %1417 = vdwg.mxu0
      %1418 = vmatpush.bf16.msra.mxu0 %v1296
      %1419 = vmatpush.bf16.msra.mxu0 %v1295
      %1420 = vmatpush.bf16.msra.mxu0 %v1294
      %1421 = vmatpush.bf16.msra.mxu0 %v1293
      %1422 = vmatpush.bf16.msra.mxu0 %v1292
      %1423 = vmatpush.bf16.msra.mxu0 %v1291
      %1424 = vmatpush.bf16.msra.mxu0 %v1290
      %1425 = vmatpush.bf16.msra.mxu0 %v1289
      %1426 = vmatmul.bf16.gmra.mxu0 %v1090
      %v1427 = vpop.f32.mrf.mxu0
      %v1428 = vadd.f32 %v1339, %v1427
      %v1429 = vpop.f32.mrf.mxu0
      %v1430 = vadd.f32 %v1341, %v1429
      %1431 = vmatmul.bf16.gmra.mxu0 %v1093
      %v1432 = vpop.f32.mrf.mxu0
      %v1433 = vadd.f32 %v1344, %v1432
      %v1434 = vpop.f32.mrf.mxu0
      %v1435 = vadd.f32 %v1346, %v1434
      %1436 = vmatmul.bf16.gmra.mxu0 %v1096
      %v1437 = vpop.f32.mrf.mxu0
      %v1438 = vadd.f32 %v1349, %v1437
      %v1439 = vpop.f32.mrf.mxu0
      %v1440 = vadd.f32 %v1351, %v1439
      %1441 = vmatmul.bf16.gmra.mxu0 %v1099
      %v1442 = vpop.f32.mrf.mxu0
      %v1443 = vadd.f32 %v1354, %v1442
      %v1444 = vpop.f32.mrf.mxu0
      %v1445 = vadd.f32 %v1356, %v1444
      %1446 = vmatmul.bf16.gmra.mxu0 %v1102
      %v1447 = vpop.f32.mrf.mxu0
      %v1448 = vadd.f32 %v1359, %v1447
      %v1449 = vpop.f32.mrf.mxu0
      %v1450 = vadd.f32 %v1361, %v1449
      %1451 = vmatmul.bf16.gmra.mxu0 %v1105
      %v1452 = vpop.f32.mrf.mxu0
      %v1453 = vadd.f32 %v1364, %v1452
      %v1454 = vpop.f32.mrf.mxu0
      %v1455 = vadd.f32 %v1366, %v1454
      %1456 = vmatmul.bf16.gmra.mxu0 %v1108
      %v1457 = vpop.f32.mrf.mxu0
      %v1458 = vadd.f32 %v1369, %v1457
      %v1459 = vpop.f32.mrf.mxu0
      %v1460 = vadd.f32 %v1371, %v1459
      %1461 = vmatmul.bf16.gmra.mxu0 %v1111
      %v1462 = vpop.f32.mrf.mxu0
      %v1463 = vadd.f32 %v1374, %v1462
      %v1464 = vpop.f32.mrf.mxu0
      %v1465 = vadd.f32 %v1376, %v1464
      %1466 = vmatmul.bf16.gmra.mxu0 %v1114
      %v1467 = vpop.f32.mrf.mxu0
      %v1468 = vadd.f32 %v1379, %v1467
      %v1469 = vpop.f32.mrf.mxu0
      %v1470 = vadd.f32 %v1381, %v1469
      %1471 = vmatmul.bf16.gmra.mxu0 %v1117
      %v1472 = vpop.f32.mrf.mxu0
      %v1473 = vadd.f32 %v1384, %v1472
      %v1474 = vpop.f32.mrf.mxu0
      %v1475 = vadd.f32 %v1386, %v1474
      %1476 = vmatmul.bf16.gmra.mxu0 %v1120
      %v1477 = vpop.f32.mrf.mxu0
      %v1478 = vadd.f32 %v1389, %v1477
      %v1479 = vpop.f32.mrf.mxu0
      %v1480 = vadd.f32 %v1391, %v1479
      %1481 = vmatmul.bf16.gmra.mxu0 %v1123
      %v1482 = vpop.f32.mrf.mxu0
      %v1483 = vadd.f32 %v1394, %v1482
      %v1484 = vpop.f32.mrf.mxu0
      %v1485 = vadd.f32 %v1396, %v1484
      %1486 = vmatmul.bf16.gmra.mxu0 %v1126
      %v1487 = vpop.f32.mrf.mxu0
      %v1488 = vadd.f32 %v1399, %v1487
      %v1489 = vpop.f32.mrf.mxu0
      %v1490 = vadd.f32 %v1401, %v1489
      %1491 = vmatmul.bf16.gmra.mxu0 %v1129
      %v1492 = vpop.f32.mrf.mxu0
      %v1493 = vadd.f32 %v1404, %v1492
      %v1494 = vpop.f32.mrf.mxu0
      %v1495 = vadd.f32 %v1406, %v1494
      %1496 = vmatmul.bf16.gmra.mxu0 %v1132
      %v1497 = vpop.f32.mrf.mxu0
      %v1498 = vadd.f32 %v1409, %v1497
      %v1499 = vpop.f32.mrf.mxu0
      %v1500 = vadd.f32 %v1411, %v1499
      %1501 = vmatmul.bf16.gmra.mxu0 %v1135
      %v1502 = vpop.f32.mrf.mxu0
      %v1503 = vadd.f32 %v1414, %v1502
      %v1504 = vpop.f32.mrf.mxu0
      %v1505 = vadd.f32 %v1416, %v1504
      %1506 = vdwg.mxu0
      %1507 = vmatpush.bf16.msra.mxu0 %v1304
      %1508 = vmatpush.bf16.msra.mxu0 %v1303
      %1509 = vmatpush.bf16.msra.mxu0 %v1302
      %1510 = vmatpush.bf16.msra.mxu0 %v1301
      %1511 = vmatpush.bf16.msra.mxu0 %v1300
      %1512 = vmatpush.bf16.msra.mxu0 %v1299
      %1513 = vmatpush.bf16.msra.mxu0 %v1298
      %1514 = vmatpush.bf16.msra.mxu0 %v1297
      %1515 = vmatmul.bf16.gmra.mxu0 %v1091
      %v1516 = vpop.f32.mrf.mxu0
      %v1517 = vadd.f32 %v1428, %v1516
      %v1518 = vpop.f32.mrf.mxu0
      %v1519 = vadd.f32 %v1430, %v1518
      %1520 = vmatmul.bf16.gmra.mxu0 %v1094
      %v1521 = vpop.f32.mrf.mxu0
      %v1522 = vadd.f32 %v1433, %v1521
      %v1523 = vpop.f32.mrf.mxu0
      %v1524 = vadd.f32 %v1435, %v1523
      %1525 = vmatmul.bf16.gmra.mxu0 %v1097
      %v1526 = vpop.f32.mrf.mxu0
      %v1527 = vadd.f32 %v1438, %v1526
      %v1528 = vpop.f32.mrf.mxu0
      %v1529 = vadd.f32 %v1440, %v1528
      %1530 = vmatmul.bf16.gmra.mxu0 %v1100
      %v1531 = vpop.f32.mrf.mxu0
      %v1532 = vadd.f32 %v1443, %v1531
      %v1533 = vpop.f32.mrf.mxu0
      %v1534 = vadd.f32 %v1445, %v1533
      %1535 = vmatmul.bf16.gmra.mxu0 %v1103
      %v1536 = vpop.f32.mrf.mxu0
      %v1537 = vadd.f32 %v1448, %v1536
      %v1538 = vpop.f32.mrf.mxu0
      %v1539 = vadd.f32 %v1450, %v1538
      %1540 = vmatmul.bf16.gmra.mxu0 %v1106
      %v1541 = vpop.f32.mrf.mxu0
      %v1542 = vadd.f32 %v1453, %v1541
      %v1543 = vpop.f32.mrf.mxu0
      %v1544 = vadd.f32 %v1455, %v1543
      %1545 = vmatmul.bf16.gmra.mxu0 %v1109
      %v1546 = vpop.f32.mrf.mxu0
      %v1547 = vadd.f32 %v1458, %v1546
      %v1548 = vpop.f32.mrf.mxu0
      %v1549 = vadd.f32 %v1460, %v1548
      %1550 = vmatmul.bf16.gmra.mxu0 %v1112
      %v1551 = vpop.f32.mrf.mxu0
      %v1552 = vadd.f32 %v1463, %v1551
      %v1553 = vpop.f32.mrf.mxu0
      %v1554 = vadd.f32 %v1465, %v1553
      %1555 = vmatmul.bf16.gmra.mxu0 %v1115
      %v1556 = vpop.f32.mrf.mxu0
      %v1557 = vadd.f32 %v1468, %v1556
      %v1558 = vpop.f32.mrf.mxu0
      %v1559 = vadd.f32 %v1470, %v1558
      %1560 = vmatmul.bf16.gmra.mxu0 %v1118
      %v1561 = vpop.f32.mrf.mxu0
      %v1562 = vadd.f32 %v1473, %v1561
      %v1563 = vpop.f32.mrf.mxu0
      %v1564 = vadd.f32 %v1475, %v1563
      %1565 = vmatmul.bf16.gmra.mxu0 %v1121
      %v1566 = vpop.f32.mrf.mxu0
      %v1567 = vadd.f32 %v1478, %v1566
      %v1568 = vpop.f32.mrf.mxu0
      %v1569 = vadd.f32 %v1480, %v1568
      %1570 = vmatmul.bf16.gmra.mxu0 %v1124
      %v1571 = vpop.f32.mrf.mxu0
      %v1572 = vadd.f32 %v1483, %v1571
      %v1573 = vpop.f32.mrf.mxu0
      %v1574 = vadd.f32 %v1485, %v1573
      %1575 = vmatmul.bf16.gmra.mxu0 %v1127
      %v1576 = vpop.f32.mrf.mxu0
      %v1577 = vadd.f32 %v1488, %v1576
      %v1578 = vpop.f32.mrf.mxu0
      %v1579 = vadd.f32 %v1490, %v1578
      %1580 = vmatmul.bf16.gmra.mxu0 %v1130
      %v1581 = vpop.f32.mrf.mxu0
      %v1582 = vadd.f32 %v1493, %v1581
      %v1583 = vpop.f32.mrf.mxu0
      %v1584 = vadd.f32 %v1495, %v1583
      %1585 = vmatmul.bf16.gmra.mxu0 %v1133
      %v1586 = vpop.f32.mrf.mxu0
      %v1587 = vadd.f32 %v1498, %v1586
      %v1588 = vpop.f32.mrf.mxu0
      %v1589 = vadd.f32 %v1500, %v1588
      %1590 = vmatmul.bf16.gmra.mxu0 %v1136
      %v1591 = vpop.f32.mrf.mxu0
      %v1592 = vadd.f32 %v1503, %v1591
      %v1593 = vpop.f32.mrf.mxu0
      %v1594 = vadd.f32 %v1505, %v1593
      %1595 = vdwg.mxu0
      %1596 = vst [vmem:[#allocation3] sm:$0xff] %v1517
      %1597 = vst [vmem:[#allocation3 + $0x8] sm:$0xff] %v1519
      %1598 = vst [vmem:[#allocation3 + $0x10] sm:$0xff] %v1522
      %1599 = vst [vmem:[#allocation3 + $0x18] sm:$0xff] %v1524
      %1600 = vst [vmem:[#allocation3 + $0x20] sm:$0xff] %v1527
      %1601 = vst [vmem:[#allocation3 + $0x28] sm:$0xff] %v1529
      %1602 = vst [vmem:[#allocation3 + $0x30] sm:$0xff] %v1532
      %1603 = vst [vmem:[#allocation3 + $0x38] sm:$0xff] %v1534
      %1604 = vst [vmem:[#allocation3 + $0x40] sm:$0xff] %v1537
      %1605 = vst [vmem:[#allocation3 + $0x48] sm:$0xff] %v1539
      %1606 = vst [vmem:[#allocation3 + $0x50] sm:$0xff] %v1542
      %1607 = vst [vmem:[#allocation3 + $0x58] sm:$0xff] %v1544
      %1608 = vst [vmem:[#allocation3 + $0x60] sm:$0xff] %v1547
      %1609 = vst [vmem:[#allocation3 + $0x68] sm:$0xff] %v1549
      %1610 = vst [vmem:[#allocation3 + $0x70] sm:$0xff] %v1552
      %1611 = vst [vmem:[#allocation3 + $0x78] sm:$0xff] %v1554
      %1612 = vst [vmem:[#allocation3 + $0x80] sm:$0xff] %v1557
      %1613 = vst [vmem:[#allocation3 + $0x88] sm:$0xff] %v1559
      %1614 = vst [vmem:[#allocation3 + $0x90] sm:$0xff] %v1562
      %1615 = vst [vmem:[#allocation3 + $0x98] sm:$0xff] %v1564
      %1616 = vst [vmem:[#allocation3 + $0xa0] sm:$0xff] %v1567
      %1617 = vst [vmem:[#allocation3 + $0xa8] sm:$0xff] %v1569
      %1618 = vst [vmem:[#allocation3 + $0xb0] sm:$0xff] %v1572
      %1619 = vst [vmem:[#allocation3 + $0xb8] sm:$0xff] %v1574
      %1620 = vst [vmem:[#allocation3 + $0xc0] sm:$0xff] %v1577
      %1621 = vst [vmem:[#allocation3 + $0xc8] sm:$0xff] %v1579
      %1622 = vst [vmem:[#allocation3 + $0xd0] sm:$0xff] %v1582
      %1623 = vst [vmem:[#allocation3 + $0xd8] sm:$0xff] %v1584
      %1624 = vst [vmem:[#allocation3 + $0xe0] sm:$0xff] %v1587
      %1625 = vst [vmem:[#allocation3 + $0xe8] sm:$0xff] %v1589
      %1626 = vst [vmem:[#allocation3 + $0xf0] sm:$0xff] %v1592
      %1627 = vst [vmem:[#allocation3 + $0xf8] sm:$0xff] %v1594
      %v1628 = vld [vmem:[#allocation3] sm:$0xff]
      %v1629 = vld [vmem:[#allocation3 + $0x8] sm:$0xff]
      %v1630 = vld [vmem:[#allocation3 + $0x10] sm:$0xff]
      %v1631 = vld [vmem:[#allocation3 + $0x18] sm:$0xff]
      %v1632 = vld [vmem:[#allocation3 + $0x20] sm:$0xff]
      %v1633 = vld [vmem:[#allocation3 + $0x28] sm:$0xff]
      %v1634 = vld [vmem:[#allocation3 + $0x30] sm:$0xff]
      %v1635 = vld [vmem:[#allocation3 + $0x38] sm:$0xff]
      %v1636 = vld [vmem:[#allocation3 + $0x40] sm:$0xff]
      %v1637 = vld [vmem:[#allocation3 + $0x48] sm:$0xff]
      %v1638 = vld [vmem:[#allocation3 + $0x50] sm:$0xff]
      %v1639 = vld [vmem:[#allocation3 + $0x58] sm:$0xff]
      %v1640 = vld [vmem:[#allocation3 + $0x60] sm:$0xff]
      %v1641 = vld [vmem:[#allocation3 + $0x68] sm:$0xff]
      %v1642 = vld [vmem:[#allocation3 + $0x70] sm:$0xff]
      %v1643 = vld [vmem:[#allocation3 + $0x78] sm:$0xff]
      %v1644 = vld [vmem:[#allocation3 + $0x80] sm:$0xff]
      %v1645 = vld [vmem:[#allocation3 + $0x88] sm:$0xff]
      %v1646 = vld [vmem:[#allocation3 + $0x90] sm:$0xff]
      %v1647 = vld [vmem:[#allocation3 + $0x98] sm:$0xff]
      %v1648 = vld [vmem:[#allocation3 + $0xa0] sm:$0xff]
      %v1649 = vld [vmem:[#allocation3 + $0xa8] sm:$0xff]
      %v1650 = vld [vmem:[#allocation3 + $0xb0] sm:$0xff]
      %v1651 = vld [vmem:[#allocation3 + $0xb8] sm:$0xff]
      %v1652 = vld [vmem:[#allocation3 + $0xc0] sm:$0xff]
      %v1653 = vld [vmem:[#allocation3 + $0xc8] sm:$0xff]
      %v1654 = vld [vmem:[#allocation3 + $0xd0] sm:$0xff]
      %v1655 = vld [vmem:[#allocation3 + $0xd8] sm:$0xff]
      %v1656 = vld [vmem:[#allocation3 + $0xe0] sm:$0xff]
      %v1657 = vld [vmem:[#allocation3 + $0xe8] sm:$0xff]
      %v1658 = vld [vmem:[#allocation3 + $0xf0] sm:$0xff]
      %v1659 = vld [vmem:[#allocation3 + $0xf8] sm:$0xff]
      %v1660 = vld [vmem:[%s656] sm:$0xff]
      %v1661 = vld [vmem:[%s656 + $0x8] sm:$0xf]
      %v1662 = vld [vmem:[%s656 + $0xc] sm:$0xff]
      %v1663 = vld [vmem:[%s656 + $0x14] sm:$0xf]
      %v1664 = vld [vmem:[%s656 + $0x18] sm:$0xff]
      %v1665 = vld [vmem:[%s656 + $0x20] sm:$0xf]
      %v1666 = vld [vmem:[%s656 + $0x24] sm:$0xff]
      %v1667 = vld [vmem:[%s656 + $0x2c] sm:$0xf]
      %v1668 = vld [vmem:[%s656 + $0x30] sm:$0xff]
      %v1669 = vld [vmem:[%s656 + $0x38] sm:$0xf]
      %v1670 = vld [vmem:[%s656 + $0x3c] sm:$0xff]
      %v1671 = vld [vmem:[%s656 + $0x44] sm:$0xf]
      %v1672 = vld [vmem:[%s656 + $0x48] sm:$0xff]
      %v1673 = vld [vmem:[%s656 + $0x50] sm:$0xf]
      %v1674 = vld [vmem:[%s656 + $0x54] sm:$0xff]
      %v1675 = vld [vmem:[%s656 + $0x5c] sm:$0xf]
      %v1676 = vld [vmem:[%s656 + $0x60] sm:$0xff]
      %v1677 = vld [vmem:[%s656 + $0x68] sm:$0xf]
      %v1678 = vld [vmem:[%s656 + $0x6c] sm:$0xff]
      %v1679 = vld [vmem:[%s656 + $0x74] sm:$0xf]
      %v1680 = vld [vmem:[%s656 + $0x78] sm:$0xff]
      %v1681 = vld [vmem:[%s656 + $0x80] sm:$0xf]
      %v1682 = vld [vmem:[%s656 + $0x84] sm:$0xff]
      %v1683 = vld [vmem:[%s656 + $0x8c] sm:$0xf]
      %v1684 = vld [vmem:[%s656 + $0x90] sm:$0xff]
      %v1685 = vld [vmem:[%s656 + $0x98] sm:$0xf]
      %v1686 = vld [vmem:[%s656 + $0x9c] sm:$0xff]
      %v1687 = vld [vmem:[%s656 + $0xa4] sm:$0xf]
      %v1688 = vld [vmem:[%s656 + $0xa8] sm:$0xff]
      %v1689 = vld [vmem:[%s656 + $0xb0] sm:$0xf]
      %v1690 = vld [vmem:[%s656 + $0xb4] sm:$0xff]
      %v1691 = vld [vmem:[%s656 + $0xbc] sm:$0xf]
      %v1692 = vld [vmem:[%s656 + $0xc0] sm:$0xff]
      %v1693 = vld [vmem:[%s656 + $0xc8] sm:$0xf]
      %v1694 = vld [vmem:[%s656 + $0xcc] sm:$0xff]
      %v1695 = vld [vmem:[%s656 + $0xd4] sm:$0xf]
      %v1696 = vld [vmem:[%s656 + $0xd8] sm:$0xff]
      %v1697 = vld [vmem:[%s656 + $0xe0] sm:$0xf]
      %v1698 = vld [vmem:[%s656 + $0xe4] sm:$0xff]
      %v1699 = vld [vmem:[%s656 + $0xec] sm:$0xf]
      %v1700 = vld [vmem:[%s656 + $0xf0] sm:$0xff]
      %v1701 = vld [vmem:[%s656 + $0xf8] sm:$0xf]
      %v1702 = vld [vmem:[%s656 + $0xfc] sm:$0xff]
      %v1703 = vld [vmem:[%s656 + $0x104] sm:$0xf]
      %v1704 = vld [vmem:[%s656 + $0x108] sm:$0xff]
      %v1705 = vld [vmem:[%s656 + $0x110] sm:$0xf]
      %v1706 = vld [vmem:[%s656 + $0x114] sm:$0xff]
      %v1707 = vld [vmem:[%s656 + $0x11c] sm:$0xf]
      %v1708 = vld [vmem:[%s656 + $0x120] sm:$0xff]
      %v1709 = vld [vmem:[%s656 + $0x128] sm:$0xf]
      %v1710 = vld [vmem:[%s656 + $0x12c] sm:$0xff]
      %v1711 = vld [vmem:[%s656 + $0x134] sm:$0xf]
      %v1712 = vld [vmem:[%s656 + $0x138] sm:$0xff]
      %v1713 = vld [vmem:[%s656 + $0x140] sm:$0xf]
      %v1714 = vld [vmem:[%s656 + $0x144] sm:$0xff]
      %v1715 = vld [vmem:[%s656 + $0x14c] sm:$0xf]
      %v1716 = vld [vmem:[%s656 + $0x150] sm:$0xff]
      %v1717 = vld [vmem:[%s656 + $0x158] sm:$0xf]
      %v1718 = vld [vmem:[%s656 + $0x15c] sm:$0xff]
      %v1719 = vld [vmem:[%s656 + $0x164] sm:$0xf]
      %v1720 = vld [vmem:[%s656 + $0x168] sm:$0xff]
      %v1721 = vld [vmem:[%s656 + $0x170] sm:$0xf]
      %v1722 = vld [vmem:[%s656 + $0x174] sm:$0xff]
      %v1723 = vld [vmem:[%s656 + $0x17c] sm:$0xf]
      %s1724 = scalar_lea.vmem %s3, 192
      %v1725 = vld [vmem:[%s1724] sm:$0xf]
      %v1726 = vld [vmem:[%s1724 + $0x4] sm:$0xf]
      %v1727 = vld [vmem:[%s1724 + $0x8] sm:$0xf]
      %v1728 = vld [vmem:[%s1724 + $0xc] sm:$0xf]
      %v1729 = vld [vmem:[%s1724 + $0x10] sm:$0xf]
      %v1730 = vld [vmem:[%s1724 + $0x14] sm:$0xf]
      %v1731 = vld [vmem:[%s1724 + $0x18] sm:$0xf]
      %v1732 = vld [vmem:[%s1724 + $0x1c] sm:$0xf]
      %v1733 = vld [vmem:[%s1724 + $0x20] sm:$0xf]
      %v1734 = vld [vmem:[%s1724 + $0x24] sm:$0xf]
      %v1735 = vld [vmem:[%s1724 + $0x28] sm:$0xf]
      %v1736 = vld [vmem:[%s1724 + $0x2c] sm:$0xf]
      %v1737 = vld [vmem:[%s1724 + $0x30] sm:$0xf]
      %v1738 = vld [vmem:[%s1724 + $0x34] sm:$0xf]
      %v1739 = vld [vmem:[%s1724 + $0x38] sm:$0xf]
      %v1740 = vld [vmem:[%s1724 + $0x3c] sm:$0xf]
      %v1741 = vld [vmem:[%s1724 + $0x40] sm:$0xf]
      %v1742 = vld [vmem:[%s1724 + $0x44] sm:$0xf]
      %v1743 = vld [vmem:[%s1724 + $0x48] sm:$0xf]
      %v1744 = vld [vmem:[%s1724 + $0x4c] sm:$0xf]
      %v1745 = vld [vmem:[%s1724 + $0x50] sm:$0xf]
      %v1746 = vld [vmem:[%s1724 + $0x54] sm:$0xf]
      %v1747 = vld [vmem:[%s1724 + $0x58] sm:$0xf]
      %v1748 = vld [vmem:[%s1724 + $0x5c] sm:$0xf]
      %v1749 = vld [vmem:[%s1724 + $0x60] sm:$0xf]
      %v1750 = vld [vmem:[%s1724 + $0x64] sm:$0xf]
      %v1751 = vld [vmem:[%s1724 + $0x68] sm:$0xf]
      %v1752 = vld [vmem:[%s1724 + $0x6c] sm:$0xf]
      %v1753 = vld [vmem:[%s1724 + $0x70] sm:$0xf]
      %v1754 = vld [vmem:[%s1724 + $0x74] sm:$0xf]
      %v1755 = vld [vmem:[%s1724 + $0x78] sm:$0xf]
      %v1756 = vld [vmem:[%s1724 + $0x7c] sm:$0xf]
      %v1757 = vld [vmem:[%s1724 + $0x80] sm:$0xf]
      %v1758 = vld [vmem:[%s1724 + $0x84] sm:$0xf]
      %v1759 = vld [vmem:[%s1724 + $0x88] sm:$0xf]
      %v1760 = vld [vmem:[%s1724 + $0x8c] sm:$0xf]
      %v1761 = vld [vmem:[%s1724 + $0x90] sm:$0xf]
      %v1762 = vld [vmem:[%s1724 + $0x94] sm:$0xf]
      %v1763 = vld [vmem:[%s1724 + $0x98] sm:$0xf]
      %v1764 = vld [vmem:[%s1724 + $0x9c] sm:$0xf]
      %v1765 = vld [vmem:[%s1724 + $0xa0] sm:$0xf]
      %v1766 = vld [vmem:[%s1724 + $0xa4] sm:$0xf]
      %v1767 = vld [vmem:[%s1724 + $0xa8] sm:$0xf]
      %v1768 = vld [vmem:[%s1724 + $0xac] sm:$0xf]
      %v1769 = vld [vmem:[%s1724 + $0xb0] sm:$0xf]
      %v1770 = vld [vmem:[%s1724 + $0xb4] sm:$0xf]
      %v1771 = vld [vmem:[%s1724 + $0xb8] sm:$0xf]
      %v1772 = vld [vmem:[%s1724 + $0xbc] sm:$0xf]
      %v1837 = vunpack.c.l.b16 %v1660
      %v1838 = vunpack.c.h.b16 %v1660
      %v1839 = vunpack.c.l.b16 %v1661
      %v1840 = vunpack.c.l.b16 %v1662
      %v1841 = vunpack.c.h.b16 %v1662
      %v1842 = vunpack.c.l.b16 %v1663
      %v1843 = vunpack.c.l.b16 %v1664
      %v1844 = vunpack.c.h.b16 %v1664
      %v1845 = vunpack.c.l.b16 %v1665
      %v1846 = vunpack.c.l.b16 %v1666
      %v1847 = vunpack.c.h.b16 %v1666
      %v1848 = vunpack.c.l.b16 %v1667
      %v1849 = vunpack.c.l.b16 %v1668
      %v1850 = vunpack.c.h.b16 %v1668
      %v1851 = vunpack.c.l.b16 %v1669
      %v1852 = vunpack.c.l.b16 %v1670
      %v1853 = vunpack.c.h.b16 %v1670
      %v1854 = vunpack.c.l.b16 %v1671
      %v1855 = vunpack.c.l.b16 %v1672
      %v1856 = vunpack.c.h.b16 %v1672
      %v1857 = vunpack.c.l.b16 %v1673
      %v1858 = vunpack.c.l.b16 %v1674
      %v1859 = vunpack.c.h.b16 %v1674
      %v1860 = vunpack.c.l.b16 %v1675
      %v1861 = vunpack.c.l.b16 %v1676
      %v1862 = vunpack.c.h.b16 %v1676
      %v1863 = vunpack.c.l.b16 %v1677
      %v1864 = vunpack.c.l.b16 %v1678
      %v1865 = vunpack.c.h.b16 %v1678
      %v1866 = vunpack.c.l.b16 %v1679
      %v1867 = vunpack.c.l.b16 %v1680
      %v1868 = vunpack.c.h.b16 %v1680
      %v1869 = vunpack.c.l.b16 %v1681
      %v1870 = vunpack.c.l.b16 %v1682
      %v1871 = vunpack.c.h.b16 %v1682
      %v1872 = vunpack.c.l.b16 %v1683
      %v1873 = vunpack.c.l.b16 %v1684
      %v1874 = vunpack.c.h.b16 %v1684
      %v1875 = vunpack.c.l.b16 %v1685
      %v1876 = vunpack.c.l.b16 %v1686
      %v1877 = vunpack.c.h.b16 %v1686
      %v1878 = vunpack.c.l.b16 %v1687
      %v1879 = vunpack.c.l.b16 %v1688
      %v1880 = vunpack.c.h.b16 %v1688
      %v1881 = vunpack.c.l.b16 %v1689
      %v1882 = vunpack.c.l.b16 %v1690
      %v1883 = vunpack.c.h.b16 %v1690
      %v1884 = vunpack.c.l.b16 %v1691
      %v1885 = vunpack.c.l.b16 %v1692
      %v1886 = vunpack.c.h.b16 %v1692
      %v1887 = vunpack.c.l.b16 %v1693
      %v1888 = vunpack.c.l.b16 %v1694
      %v1889 = vunpack.c.h.b16 %v1694
      %v1890 = vunpack.c.l.b16 %v1695
      %v1891 = vunpack.c.l.b16 %v1696
      %v1892 = vunpack.c.h.b16 %v1696
      %v1893 = vunpack.c.l.b16 %v1697
      %v1894 = vunpack.c.l.b16 %v1698
      %v1895 = vunpack.c.h.b16 %v1698
      %v1896 = vunpack.c.l.b16 %v1699
      %v1897 = vunpack.c.l.b16 %v1700
      %v1898 = vunpack.c.h.b16 %v1700
      %v1899 = vunpack.c.l.b16 %v1701
      %v1900 = vunpack.c.l.b16 %v1702
      %v1901 = vunpack.c.h.b16 %v1702
      %v1902 = vunpack.c.l.b16 %v1703
      %v1903 = vunpack.c.l.b16 %v1704
      %v1904 = vunpack.c.h.b16 %v1704
      %v1905 = vunpack.c.l.b16 %v1705
      %v1906 = vunpack.c.l.b16 %v1706
      %v1907 = vunpack.c.h.b16 %v1706
      %v1908 = vunpack.c.l.b16 %v1707
      %v1909 = vunpack.c.l.b16 %v1708
      %v1910 = vunpack.c.h.b16 %v1708
      %v1911 = vunpack.c.l.b16 %v1709
      %v1912 = vunpack.c.l.b16 %v1710
      %v1913 = vunpack.c.h.b16 %v1710
      %v1914 = vunpack.c.l.b16 %v1711
      %v1915 = vunpack.c.l.b16 %v1712
      %v1916 = vunpack.c.h.b16 %v1712
      %v1917 = vunpack.c.l.b16 %v1713
      %v1918 = vunpack.c.l.b16 %v1714
      %v1919 = vunpack.c.h.b16 %v1714
      %v1920 = vunpack.c.l.b16 %v1715
      %v1921 = vunpack.c.l.b16 %v1716
      %v1922 = vunpack.c.h.b16 %v1716
      %v1923 = vunpack.c.l.b16 %v1717
      %v1924 = vunpack.c.l.b16 %v1718
      %v1925 = vunpack.c.h.b16 %v1718
      %v1926 = vunpack.c.l.b16 %v1719
      %v1927 = vunpack.c.l.b16 %v1720
      %v1928 = vunpack.c.h.b16 %v1720
      %v1929 = vunpack.c.l.b16 %v1721
      %v1930 = vunpack.c.l.b16 %v1722
      %v1931 = vunpack.c.h.b16 %v1722
      %v1932 = vunpack.c.l.b16 %v1723
      %v1933 = vpack.c.b16 %v1840, %v1837
      %v1934 = vpack.c.b16 %v1841, %v1838
      %v1935 = vpack.c.b16 %v1842, %v1839
      %v1936 = vpack.c.b16 %v1846, %v1843
      %v1937 = vpack.c.b16 %v1847, %v1844
      %v1938 = vpack.c.b16 %v1848, %v1845
      %v1939 = vpack.c.b16 %v1852, %v1849
      %v1940 = vpack.c.b16 %v1853, %v1850
      %v1941 = vpack.c.b16 %v1854, %v1851
      %v1942 = vpack.c.b16 %v1858, %v1855
      %v1943 = vpack.c.b16 %v1859, %v1856
      %v1944 = vpack.c.b16 %v1860, %v1857
      %v1945 = vpack.c.b16 %v1864, %v1861
      %v1946 = vpack.c.b16 %v1865, %v1862
      %v1947 = vpack.c.b16 %v1866, %v1863
      %v1948 = vpack.c.b16 %v1870, %v1867
      %v1949 = vpack.c.b16 %v1871, %v1868
      %v1950 = vpack.c.b16 %v1872, %v1869
      %v1951 = vpack.c.b16 %v1876, %v1873
      %v1952 = vpack.c.b16 %v1877, %v1874
      %v1953 = vpack.c.b16 %v1878, %v1875
      %v1954 = vpack.c.b16 %v1882, %v1879
      %v1955 = vpack.c.b16 %v1883, %v1880
      %v1956 = vpack.c.b16 %v1884, %v1881
      %v1957 = vpack.c.b16 %v1888, %v1885
      %v1958 = vpack.c.b16 %v1889, %v1886
      %v1959 = vpack.c.b16 %v1890, %v1887
      %v1960 = vpack.c.b16 %v1894, %v1891
      %v1961 = vpack.c.b16 %v1895, %v1892
      %v1962 = vpack.c.b16 %v1896, %v1893
      %v1963 = vpack.c.b16 %v1900, %v1897
      %v1964 = vpack.c.b16 %v1901, %v1898
      %v1965 = vpack.c.b16 %v1902, %v1899
      %v1966 = vpack.c.b16 %v1906, %v1903
      %v1967 = vpack.c.b16 %v1907, %v1904
      %v1968 = vpack.c.b16 %v1908, %v1905
      %v1969 = vpack.c.b16 %v1912, %v1909
      %v1970 = vpack.c.b16 %v1913, %v1910
      %v1971 = vpack.c.b16 %v1914, %v1911
      %v1972 = vpack.c.b16 %v1918, %v1915
      %v1973 = vpack.c.b16 %v1919, %v1916
      %v1974 = vpack.c.b16 %v1920, %v1917
      %v1975 = vpack.c.b16 %v1924, %v1921
      %v1976 = vpack.c.b16 %v1925, %v1922
      %v1977 = vpack.c.b16 %v1926, %v1923
      %v1978 = vpack.c.b16 %v1930, %v1927
      %v1979 = vpack.c.b16 %v1931, %v1928
      %v1980 = vpack.c.b16 %v1932, %v1929
      %v2077 = vunpack.c.l.b16 %v1725
      %v2078 = vunpack.c.l.b16 %v1726
      %v2079 = vunpack.c.l.b16 %v1727
      %v2080 = vunpack.c.l.b16 %v1728
      %v2081 = vunpack.c.l.b16 %v1729
      %v2082 = vunpack.c.l.b16 %v1730
      %v2083 = vunpack.c.l.b16 %v1731
      %v2084 = vunpack.c.l.b16 %v1732
      %v2085 = vunpack.c.l.b16 %v1733
      %v2086 = vunpack.c.l.b16 %v1734
      %v2087 = vunpack.c.l.b16 %v1735
      %v2088 = vunpack.c.l.b16 %v1736
      %v2089 = vunpack.c.l.b16 %v1737
      %v2090 = vunpack.c.l.b16 %v1738
      %v2091 = vunpack.c.l.b16 %v1739
      %v2092 = vunpack.c.l.b16 %v1740
      %v2093 = vunpack.c.l.b16 %v1741
      %v2094 = vunpack.c.l.b16 %v1742
      %v2095 = vunpack.c.l.b16 %v1743
      %v2096 = vunpack.c.l.b16 %v1744
      %v2097 = vunpack.c.l.b16 %v1745
      %v2098 = vunpack.c.l.b16 %v1746
      %v2099 = vunpack.c.l.b16 %v1747
      %v2100 = vunpack.c.l.b16 %v1748
      %v2101 = vunpack.c.l.b16 %v1749
      %v2102 = vunpack.c.l.b16 %v1750
      %v2103 = vunpack.c.l.b16 %v1751
      %v2104 = vunpack.c.l.b16 %v1752
      %v2105 = vunpack.c.l.b16 %v1753
      %v2106 = vunpack.c.l.b16 %v1754
      %v2107 = vunpack.c.l.b16 %v1755
      %v2108 = vunpack.c.l.b16 %v1756
      %v2109 = vunpack.c.l.b16 %v1757
      %v2110 = vunpack.c.l.b16 %v1758
      %v2111 = vunpack.c.l.b16 %v1759
      %v2112 = vunpack.c.l.b16 %v1760
      %v2113 = vunpack.c.l.b16 %v1761
      %v2114 = vunpack.c.l.b16 %v1762
      %v2115 = vunpack.c.l.b16 %v1763
      %v2116 = vunpack.c.l.b16 %v1764
      %v2117 = vunpack.c.l.b16 %v1765
      %v2118 = vunpack.c.l.b16 %v1766
      %v2119 = vunpack.c.l.b16 %v1767
      %v2120 = vunpack.c.l.b16 %v1768
      %v2121 = vunpack.c.l.b16 %v1769
      %v2122 = vunpack.c.l.b16 %v1770
      %v2123 = vunpack.c.l.b16 %v1771
      %v2124 = vunpack.c.l.b16 %v1772
      %v2125 = vpack.c.b16 %v2078, %v2077
      %v2126 = vpack.c.b16 %v2080, %v2079
      %v2127 = vpack.c.b16 %v2082, %v2081
      %v2128 = vpack.c.b16 %v2084, %v2083
      %v2129 = vpack.c.b16 %v2086, %v2085
      %v2130 = vpack.c.b16 %v2088, %v2087
      %v2131 = vpack.c.b16 %v2090, %v2089
      %v2132 = vpack.c.b16 %v2092, %v2091
      %v2133 = vpack.c.b16 %v2094, %v2093
      %v2134 = vpack.c.b16 %v2096, %v2095
      %v2135 = vpack.c.b16 %v2098, %v2097
      %v2136 = vpack.c.b16 %v2100, %v2099
      %v2137 = vpack.c.b16 %v2102, %v2101
      %v2138 = vpack.c.b16 %v2104, %v2103
      %v2139 = vpack.c.b16 %v2106, %v2105
      %v2140 = vpack.c.b16 %v2108, %v2107
      %v2141 = vpack.c.b16 %v2110, %v2109
      %v2142 = vpack.c.b16 %v2112, %v2111
      %v2143 = vpack.c.b16 %v2114, %v2113
      %v2144 = vpack.c.b16 %v2116, %v2115
      %v2145 = vpack.c.b16 %v2118, %v2117
      %v2146 = vpack.c.b16 %v2120, %v2119
      %v2147 = vpack.c.b16 %v2122, %v2121
      %v2148 = vpack.c.b16 %v2124, %v2123
      %2173 = vmatpush.bf16.msra.mxu0 %v2132
      %2174 = vmatpush.bf16.msra.mxu0 %v2131
      %2175 = vmatpush.bf16.msra.mxu0 %v2130
      %2176 = vmatpush.bf16.msra.mxu0 %v2129
      %2177 = vmatpush.bf16.msra.mxu0 %v2128
      %2178 = vmatpush.bf16.msra.mxu0 %v2127
      %2179 = vmatpush.bf16.msra.mxu0 %v2126
      %2180 = vmatpush.bf16.msra.mxu0 %v2125
      %2181 = vmatmul.bf16.gmra.mxu0 %v1933
      %v2182 = vpop.f32.mrf.mxu0
      %v2183 = vadd.f32 0.0, %v2182
      %v2184 = vpop.f32.mrf.mxu0
      %v2185 = vadd.f32 0.0, %v2184
      %2186 = vmatmul.bf16.gmra.mxu0 %v1936
      %v2187 = vpop.f32.mrf.mxu0
      %v2188 = vadd.f32 0.0, %v2187
      %v2189 = vpop.f32.mrf.mxu0
      %v2190 = vadd.f32 0.0, %v2189
      %2191 = vmatmul.bf16.gmra.mxu0 %v1939
      %v2192 = vpop.f32.mrf.mxu0
      %v2193 = vadd.f32 0.0, %v2192
      %v2194 = vpop.f32.mrf.mxu0
      %v2195 = vadd.f32 0.0, %v2194
      %2196 = vmatmul.bf16.gmra.mxu0 %v1942
      %v2197 = vpop.f32.mrf.mxu0
      %v2198 = vadd.f32 0.0, %v2197
      %v2199 = vpop.f32.mrf.mxu0
      %v2200 = vadd.f32 0.0, %v2199
      %2201 = vmatmul.bf16.gmra.mxu0 %v1945
      %v2202 = vpop.f32.mrf.mxu0
      %v2203 = vadd.f32 0.0, %v2202
      %v2204 = vpop.f32.mrf.mxu0
      %v2205 = vadd.f32 0.0, %v2204
      %2206 = vmatmul.bf16.gmra.mxu0 %v1948
      %v2207 = vpop.f32.mrf.mxu0
      %v2208 = vadd.f32 0.0, %v2207
      %v2209 = vpop.f32.mrf.mxu0
      %v2210 = vadd.f32 0.0, %v2209
      %2211 = vmatmul.bf16.gmra.mxu0 %v1951
      %v2212 = vpop.f32.mrf.mxu0
      %v2213 = vadd.f32 0.0, %v2212
      %v2214 = vpop.f32.mrf.mxu0
      %v2215 = vadd.f32 0.0, %v2214
      %2216 = vmatmul.bf16.gmra.mxu0 %v1954
      %v2217 = vpop.f32.mrf.mxu0
      %v2218 = vadd.f32 0.0, %v2217
      %v2219 = vpop.f32.mrf.mxu0
      %v2220 = vadd.f32 0.0, %v2219
      %2221 = vmatmul.bf16.gmra.mxu0 %v1957
      %v2222 = vpop.f32.mrf.mxu0
      %v2223 = vadd.f32 0.0, %v2222
      %v2224 = vpop.f32.mrf.mxu0
      %v2225 = vadd.f32 0.0, %v2224
      %2226 = vmatmul.bf16.gmra.mxu0 %v1960
      %v2227 = vpop.f32.mrf.mxu0
      %v2228 = vadd.f32 0.0, %v2227
      %v2229 = vpop.f32.mrf.mxu0
      %v2230 = vadd.f32 0.0, %v2229
      %2231 = vmatmul.bf16.gmra.mxu0 %v1963
      %v2232 = vpop.f32.mrf.mxu0
      %v2233 = vadd.f32 0.0, %v2232
      %v2234 = vpop.f32.mrf.mxu0
      %v2235 = vadd.f32 0.0, %v2234
      %2236 = vmatmul.bf16.gmra.mxu0 %v1966
      %v2237 = vpop.f32.mrf.mxu0
      %v2238 = vadd.f32 0.0, %v2237
      %v2239 = vpop.f32.mrf.mxu0
      %v2240 = vadd.f32 0.0, %v2239
      %2241 = vmatmul.bf16.gmra.mxu0 %v1969
      %v2242 = vpop.f32.mrf.mxu0
      %v2243 = vadd.f32 0.0, %v2242
      %v2244 = vpop.f32.mrf.mxu0
      %v2245 = vadd.f32 0.0, %v2244
      %2246 = vmatmul.bf16.gmra.mxu0 %v1972
      %v2247 = vpop.f32.mrf.mxu0
      %v2248 = vadd.f32 0.0, %v2247
      %v2249 = vpop.f32.mrf.mxu0
      %v2250 = vadd.f32 0.0, %v2249
      %2251 = vmatmul.bf16.gmra.mxu0 %v1975
      %v2252 = vpop.f32.mrf.mxu0
      %v2253 = vadd.f32 0.0, %v2252
      %v2254 = vpop.f32.mrf.mxu0
      %v2255 = vadd.f32 0.0, %v2254
      %2256 = vmatmul.bf16.gmra.mxu0 %v1978
      %v2257 = vpop.f32.mrf.mxu0
      %v2258 = vadd.f32 0.0, %v2257
      %v2259 = vpop.f32.mrf.mxu0
      %v2260 = vadd.f32 0.0, %v2259
      %2261 = vdwg.mxu0
      %2262 = vmatpush.bf16.msra.mxu0 %v2140
      %2263 = vmatpush.bf16.msra.mxu0 %v2139
      %2264 = vmatpush.bf16.msra.mxu0 %v2138
      %2265 = vmatpush.bf16.msra.mxu0 %v2137
      %2266 = vmatpush.bf16.msra.mxu0 %v2136
      %2267 = vmatpush.bf16.msra.mxu0 %v2135
      %2268 = vmatpush.bf16.msra.mxu0 %v2134
      %2269 = vmatpush.bf16.msra.mxu0 %v2133
      %2270 = vmatmul.bf16.gmra.mxu0 %v1934
      %v2271 = vpop.f32.mrf.mxu0
      %v2272 = vadd.f32 %v2183, %v2271
      %v2273 = vpop.f32.mrf.mxu0
      %v2274 = vadd.f32 %v2185, %v2273
      %2275 = vmatmul.bf16.gmra.mxu0 %v1937
      %v2276 = vpop.f32.mrf.mxu0
      %v2277 = vadd.f32 %v2188, %v2276
      %v2278 = vpop.f32.mrf.mxu0
      %v2279 = vadd.f32 %v2190, %v2278
      %2280 = vmatmul.bf16.gmra.mxu0 %v1940
      %v2281 = vpop.f32.mrf.mxu0
      %v2282 = vadd.f32 %v2193, %v2281
      %v2283 = vpop.f32.mrf.mxu0
      %v2284 = vadd.f32 %v2195, %v2283
      %2285 = vmatmul.bf16.gmra.mxu0 %v1943
      %v2286 = vpop.f32.mrf.mxu0
      %v2287 = vadd.f32 %v2198, %v2286
      %v2288 = vpop.f32.mrf.mxu0
      %v2289 = vadd.f32 %v2200, %v2288
      %2290 = vmatmul.bf16.gmra.mxu0 %v1946
      %v2291 = vpop.f32.mrf.mxu0
      %v2292 = vadd.f32 %v2203, %v2291
      %v2293 = vpop.f32.mrf.mxu0
      %v2294 = vadd.f32 %v2205, %v2293
      %2295 = vmatmul.bf16.gmra.mxu0 %v1949
      %v2296 = vpop.f32.mrf.mxu0
      %v2297 = vadd.f32 %v2208, %v2296
      %v2298 = vpop.f32.mrf.mxu0
      %v2299 = vadd.f32 %v2210, %v2298
      %2300 = vmatmul.bf16.gmra.mxu0 %v1952
      %v2301 = vpop.f32.mrf.mxu0
      %v2302 = vadd.f32 %v2213, %v2301
      %v2303 = vpop.f32.mrf.mxu0
      %v2304 = vadd.f32 %v2215, %v2303
      %2305 = vmatmul.bf16.gmra.mxu0 %v1955
      %v2306 = vpop.f32.mrf.mxu0
      %v2307 = vadd.f32 %v2218, %v2306
      %v2308 = vpop.f32.mrf.mxu0
      %v2309 = vadd.f32 %v2220, %v2308
      %2310 = vmatmul.bf16.gmra.mxu0 %v1958
      %v2311 = vpop.f32.mrf.mxu0
      %v2312 = vadd.f32 %v2223, %v2311
      %v2313 = vpop.f32.mrf.mxu0
      %v2314 = vadd.f32 %v2225, %v2313
      %2315 = vmatmul.bf16.gmra.mxu0 %v1961
      %v2316 = vpop.f32.mrf.mxu0
      %v2317 = vadd.f32 %v2228, %v2316
      %v2318 = vpop.f32.mrf.mxu0
      %v2319 = vadd.f32 %v2230, %v2318
      %2320 = vmatmul.bf16.gmra.mxu0 %v1964
      %v2321 = vpop.f32.mrf.mxu0
      %v2322 = vadd.f32 %v2233, %v2321
      %v2323 = vpop.f32.mrf.mxu0
      %v2324 = vadd.f32 %v2235, %v2323
      %2325 = vmatmul.bf16.gmra.mxu0 %v1967
      %v2326 = vpop.f32.mrf.mxu0
      %v2327 = vadd.f32 %v2238, %v2326
      %v2328 = vpop.f32.mrf.mxu0
      %v2329 = vadd.f32 %v2240, %v2328
      %2330 = vmatmul.bf16.gmra.mxu0 %v1970
      %v2331 = vpop.f32.mrf.mxu0
      %v2332 = vadd.f32 %v2243, %v2331
      %v2333 = vpop.f32.mrf.mxu0
      %v2334 = vadd.f32 %v2245, %v2333
      %2335 = vmatmul.bf16.gmra.mxu0 %v1973
      %v2336 = vpop.f32.mrf.mxu0
      %v2337 = vadd.f32 %v2248, %v2336
      %v2338 = vpop.f32.mrf.mxu0
      %v2339 = vadd.f32 %v2250, %v2338
      %2340 = vmatmul.bf16.gmra.mxu0 %v1976
      %v2341 = vpop.f32.mrf.mxu0
      %v2342 = vadd.f32 %v2253, %v2341
      %v2343 = vpop.f32.mrf.mxu0
      %v2344 = vadd.f32 %v2255, %v2343
      %2345 = vmatmul.bf16.gmra.mxu0 %v1979
      %v2346 = vpop.f32.mrf.mxu0
      %v2347 = vadd.f32 %v2258, %v2346
      %v2348 = vpop.f32.mrf.mxu0
      %v2349 = vadd.f32 %v2260, %v2348
      %2350 = vdwg.mxu0
      %2351 = vmatpush.bf16.msra.mxu0 %v2148
      %2352 = vmatpush.bf16.msra.mxu0 %v2147
      %2353 = vmatpush.bf16.msra.mxu0 %v2146
      %2354 = vmatpush.bf16.msra.mxu0 %v2145
      %2355 = vmatpush.bf16.msra.mxu0 %v2144
      %2356 = vmatpush.bf16.msra.mxu0 %v2143
      %2357 = vmatpush.bf16.msra.mxu0 %v2142
      %2358 = vmatpush.bf16.msra.mxu0 %v2141
      %2359 = vmatmul.bf16.gmra.mxu0 %v1935
      %v2360 = vpop.f32.mrf.mxu0
      %v2361 = vadd.f32 %v2272, %v2360
      %v2362 = vpop.f32.mrf.mxu0
      %v2363 = vadd.f32 %v2274, %v2362
      %2364 = vmatmul.bf16.gmra.mxu0 %v1938
      %v2365 = vpop.f32.mrf.mxu0
      %v2366 = vadd.f32 %v2277, %v2365
      %v2367 = vpop.f32.mrf.mxu0
      %v2368 = vadd.f32 %v2279, %v2367
      %2369 = vmatmul.bf16.gmra.mxu0 %v1941
      %v2370 = vpop.f32.mrf.mxu0
      %v2371 = vadd.f32 %v2282, %v2370
      %v2372 = vpop.f32.mrf.mxu0
      %v2373 = vadd.f32 %v2284, %v2372
      %2374 = vmatmul.bf16.gmra.mxu0 %v1944
      %v2375 = vpop.f32.mrf.mxu0
      %v2376 = vadd.f32 %v2287, %v2375
      %v2377 = vpop.f32.mrf.mxu0
      %v2378 = vadd.f32 %v2289, %v2377
      %2379 = vmatmul.bf16.gmra.mxu0 %v1947
      %v2380 = vpop.f32.mrf.mxu0
      %v2381 = vadd.f32 %v2292, %v2380
      %v2382 = vpop.f32.mrf.mxu0
      %v2383 = vadd.f32 %v2294, %v2382
      %2384 = vmatmul.bf16.gmra.mxu0 %v1950
      %v2385 = vpop.f32.mrf.mxu0
      %v2386 = vadd.f32 %v2297, %v2385
      %v2387 = vpop.f32.mrf.mxu0
      %v2388 = vadd.f32 %v2299, %v2387
      %2389 = vmatmul.bf16.gmra.mxu0 %v1953
      %v2390 = vpop.f32.mrf.mxu0
      %v2391 = vadd.f32 %v2302, %v2390
      %v2392 = vpop.f32.mrf.mxu0
      %v2393 = vadd.f32 %v2304, %v2392
      %2394 = vmatmul.bf16.gmra.mxu0 %v1956
      %v2395 = vpop.f32.mrf.mxu0
      %v2396 = vadd.f32 %v2307, %v2395
      %v2397 = vpop.f32.mrf.mxu0
      %v2398 = vadd.f32 %v2309, %v2397
      %2399 = vmatmul.bf16.gmra.mxu0 %v1959
      %v2400 = vpop.f32.mrf.mxu0
      %v2401 = vadd.f32 %v2312, %v2400
      %v2402 = vpop.f32.mrf.mxu0
      %v2403 = vadd.f32 %v2314, %v2402
      %2404 = vmatmul.bf16.gmra.mxu0 %v1962
      %v2405 = vpop.f32.mrf.mxu0
      %v2406 = vadd.f32 %v2317, %v2405
      %v2407 = vpop.f32.mrf.mxu0
      %v2408 = vadd.f32 %v2319, %v2407
      %2409 = vmatmul.bf16.gmra.mxu0 %v1965
      %v2410 = vpop.f32.mrf.mxu0
      %v2411 = vadd.f32 %v2322, %v2410
      %v2412 = vpop.f32.mrf.mxu0
      %v2413 = vadd.f32 %v2324, %v2412
      %2414 = vmatmul.bf16.gmra.mxu0 %v1968
      %v2415 = vpop.f32.mrf.mxu0
      %v2416 = vadd.f32 %v2327, %v2415
      %v2417 = vpop.f32.mrf.mxu0
      %v2418 = vadd.f32 %v2329, %v2417
      %2419 = vmatmul.bf16.gmra.mxu0 %v1971
      %v2420 = vpop.f32.mrf.mxu0
      %v2421 = vadd.f32 %v2332, %v2420
      %v2422 = vpop.f32.mrf.mxu0
      %v2423 = vadd.f32 %v2334, %v2422
      %2424 = vmatmul.bf16.gmra.mxu0 %v1974
      %v2425 = vpop.f32.mrf.mxu0
      %v2426 = vadd.f32 %v2337, %v2425
      %v2427 = vpop.f32.mrf.mxu0
      %v2428 = vadd.f32 %v2339, %v2427
      %2429 = vmatmul.bf16.gmra.mxu0 %v1977
      %v2430 = vpop.f32.mrf.mxu0
      %v2431 = vadd.f32 %v2342, %v2430
      %v2432 = vpop.f32.mrf.mxu0
      %v2433 = vadd.f32 %v2344, %v2432
      %2434 = vmatmul.bf16.gmra.mxu0 %v1980
      %v2435 = vpop.f32.mrf.mxu0
      %v2436 = vadd.f32 %v2347, %v2435
      %v2437 = vpop.f32.mrf.mxu0
      %v2438 = vadd.f32 %v2349, %v2437
      %2439 = vdwg.mxu0
      %v2440 = vadd.f32 %v1628, %v2361
      %v2441 = vadd.f32 %v1629, %v2363
      %v2442 = vadd.f32 %v1630, %v2366
      %v2443 = vadd.f32 %v1631, %v2368
      %v2444 = vadd.f32 %v1632, %v2371
      %v2445 = vadd.f32 %v1633, %v2373
      %v2446 = vadd.f32 %v1634, %v2376
      %v2447 = vadd.f32 %v1635, %v2378
      %v2448 = vadd.f32 %v1636, %v2381
      %v2449 = vadd.f32 %v1637, %v2383
      %v2450 = vadd.f32 %v1638, %v2386
      %v2451 = vadd.f32 %v1639, %v2388
      %v2452 = vadd.f32 %v1640, %v2391
      %v2453 = vadd.f32 %v1641, %v2393
      %v2454 = vadd.f32 %v1642, %v2396
      %v2455 = vadd.f32 %v1643, %v2398
      %v2456 = vadd.f32 %v1644, %v2401
      %v2457 = vadd.f32 %v1645, %v2403
      %v2458 = vadd.f32 %v1646, %v2406
      %v2459 = vadd.f32 %v1647, %v2408
      %v2460 = vadd.f32 %v1648, %v2411
      %v2461 = vadd.f32 %v1649, %v2413
      %v2462 = vadd.f32 %v1650, %v2416
      %v2463 = vadd.f32 %v1651, %v2418
      %v2464 = vadd.f32 %v1652, %v2421
      %v2465 = vadd.f32 %v1653, %v2423
      %v2466 = vadd.f32 %v1654, %v2426
      %v2467 = vadd.f32 %v1655, %v2428
      %v2468 = vadd.f32 %v1656, %v2431
      %v2469 = vadd.f32 %v1657, %v2433
      %v2470 = vadd.f32 %v1658, %v2436
      %v2471 = vadd.f32 %v1659, %v2438
      %2472 = vst [vmem:[#allocation3] sm:$0xff] %v2440
      %2473 = vst [vmem:[#allocation3 + $0x8] sm:$0xff] %v2441
      %2474 = vst [vmem:[#allocation3 + $0x10] sm:$0xff] %v2442
      %2475 = vst [vmem:[#allocation3 + $0x18] sm:$0xff] %v2443
      %2476 = vst [vmem:[#allocation3 + $0x20] sm:$0xff] %v2444
      %2477 = vst [vmem:[#allocation3 + $0x28] sm:$0xff] %v2445
      %2478 = vst [vmem:[#allocation3 + $0x30] sm:$0xff] %v2446
      %2479 = vst [vmem:[#allocation3 + $0x38] sm:$0xff] %v2447
      %2480 = vst [vmem:[#allocation3 + $0x40] sm:$0xff] %v2448
      %2481 = vst [vmem:[#allocation3 + $0x48] sm:$0xff] %v2449
      %2482 = vst [vmem:[#allocation3 + $0x50] sm:$0xff] %v2450
      %2483 = vst [vmem:[#allocation3 + $0x58] sm:$0xff] %v2451
      %2484 = vst [vmem:[#allocation3 + $0x60] sm:$0xff] %v2452
      %2485 = vst [vmem:[#allocation3 + $0x68] sm:$0xff] %v2453
      %2486 = vst [vmem:[#allocation3 + $0x70] sm:$0xff] %v2454
      %2487 = vst [vmem:[#allocation3 + $0x78] sm:$0xff] %v2455
      %2488 = vst [vmem:[#allocation3 + $0x80] sm:$0xff] %v2456
      %2489 = vst [vmem:[#allocation3 + $0x88] sm:$0xff] %v2457
      %2490 = vst [vmem:[#allocation3 + $0x90] sm:$0xff] %v2458
      %2491 = vst [vmem:[#allocation3 + $0x98] sm:$0xff] %v2459
      %2492 = vst [vmem:[#allocation3 + $0xa0] sm:$0xff] %v2460
      %2493 = vst [vmem:[#allocation3 + $0xa8] sm:$0xff] %v2461
      %2494 = vst [vmem:[#allocation3 + $0xb0] sm:$0xff] %v2462
      %2495 = vst [vmem:[#allocation3 + $0xb8] sm:$0xff] %v2463
      %2496 = vst [vmem:[#allocation3 + $0xc0] sm:$0xff] %v2464
      %2497 = vst [vmem:[#allocation3 + $0xc8] sm:$0xff] %v2465
      %2498 = vst [vmem:[#allocation3 + $0xd0] sm:$0xff] %v2466
      %2499 = vst [vmem:[#allocation3 + $0xd8] sm:$0xff] %v2467
      %2500 = vst [vmem:[#allocation3 + $0xe0] sm:$0xff] %v2468
      %2501 = vst [vmem:[#allocation3 + $0xe8] sm:$0xff] %v2469
      %2502 = vst [vmem:[#allocation3 + $0xf0] sm:$0xff] %v2470
      %2503 = vst [vmem:[#allocation3 + $0xf8] sm:$0xff] %v2471
      %v2504 = vld [vmem:[#allocation3] sm:$0xff]
      %v2505 = vld [vmem:[#allocation3 + $0x8] sm:$0xff]
      %v2506 = vld [vmem:[#allocation3 + $0x10] sm:$0xff]
      %v2507 = vld [vmem:[#allocation3 + $0x18] sm:$0xff]
      %v2508 = vld [vmem:[#allocation3 + $0x20] sm:$0xff]
      %v2509 = vld [vmem:[#allocation3 + $0x28] sm:$0xff]
      %v2510 = vld [vmem:[#allocation3 + $0x30] sm:$0xff]
      %v2511 = vld [vmem:[#allocation3 + $0x38] sm:$0xff]
      %v2512 = vld [vmem:[#allocation3 + $0x40] sm:$0xff]
      %v2513 = vld [vmem:[#allocation3 + $0x48] sm:$0xff]
      %v2514 = vld [vmem:[#allocation3 + $0x50] sm:$0xff]
      %v2515 = vld [vmem:[#allocation3 + $0x58] sm:$0xff]
      %v2516 = vld [vmem:[#allocation3 + $0x60] sm:$0xff]
      %v2517 = vld [vmem:[#allocation3 + $0x68] sm:$0xff]
      %v2518 = vld [vmem:[#allocation3 + $0x70] sm:$0xff]
      %v2519 = vld [vmem:[#allocation3 + $0x78] sm:$0xff]
      %v2520 = vld [vmem:[#allocation3 + $0x80] sm:$0xff]
      %v2521 = vld [vmem:[#allocation3 + $0x88] sm:$0xff]
      %v2522 = vld [vmem:[#allocation3 + $0x90] sm:$0xff]
      %v2523 = vld [vmem:[#allocation3 + $0x98] sm:$0xff]
      %v2524 = vld [vmem:[#allocation3 + $0xa0] sm:$0xff]
      %v2525 = vld [vmem:[#allocation3 + $0xa8] sm:$0xff]
      %v2526 = vld [vmem:[#allocation3 + $0xb0] sm:$0xff]
      %v2527 = vld [vmem:[#allocation3 + $0xb8] sm:$0xff]
      %v2528 = vld [vmem:[#allocation3 + $0xc0] sm:$0xff]
      %v2529 = vld [vmem:[#allocation3 + $0xc8] sm:$0xff]
      %v2530 = vld [vmem:[#allocation3 + $0xd0] sm:$0xff]
      %v2531 = vld [vmem:[#allocation3 + $0xd8] sm:$0xff]
      %v2532 = vld [vmem:[#allocation3 + $0xe0] sm:$0xff]
      %v2533 = vld [vmem:[#allocation3 + $0xe8] sm:$0xff]
      %v2534 = vld [vmem:[#allocation3 + $0xf0] sm:$0xff]
      %v2535 = vld [vmem:[#allocation3 + $0xf8] sm:$0xff]
      %s2536 = scalar_lea.vmem [#allocation2], 48
      %v2537 = vld [vmem:[%s2536] sm:$0xff]
      %v2538 = vld [vmem:[%s2536 + $0x8] sm:$0xf]
      %v2539 = vld [vmem:[%s2536 + $0xc] sm:$0xff]
      %v2540 = vld [vmem:[%s2536 + $0x14] sm:$0xf]
      %v2541 = vld [vmem:[%s2536 + $0x18] sm:$0xff]
      %v2542 = vld [vmem:[%s2536 + $0x20] sm:$0xf]
      %v2543 = vld [vmem:[%s2536 + $0x24] sm:$0xff]
      %v2544 = vld [vmem:[%s2536 + $0x2c] sm:$0xf]
      %v2545 = vld [vmem:[%s2536 + $0x30] sm:$0xff]
      %v2546 = vld [vmem:[%s2536 + $0x38] sm:$0xf]
      %v2547 = vld [vmem:[%s2536 + $0x3c] sm:$0xff]
      %v2548 = vld [vmem:[%s2536 + $0x44] sm:$0xf]
      %v2549 = vld [vmem:[%s2536 + $0x48] sm:$0xff]
      %v2550 = vld [vmem:[%s2536 + $0x50] sm:$0xf]
      %v2551 = vld [vmem:[%s2536 + $0x54] sm:$0xff]
      %v2552 = vld [vmem:[%s2536 + $0x5c] sm:$0xf]
      %v2553 = vld [vmem:[%s2536 + $0x60] sm:$0xff]
      %v2554 = vld [vmem:[%s2536 + $0x68] sm:$0xf]
      %v2555 = vld [vmem:[%s2536 + $0x6c] sm:$0xff]
      %v2556 = vld [vmem:[%s2536 + $0x74] sm:$0xf]
      %v2557 = vld [vmem:[%s2536 + $0x78] sm:$0xff]
      %v2558 = vld [vmem:[%s2536 + $0x80] sm:$0xf]
      %v2559 = vld [vmem:[%s2536 + $0x84] sm:$0xff]
      %v2560 = vld [vmem:[%s2536 + $0x8c] sm:$0xf]
      %v2561 = vld [vmem:[%s2536 + $0x90] sm:$0xff]
      %v2562 = vld [vmem:[%s2536 + $0x98] sm:$0xf]
      %v2563 = vld [vmem:[%s2536 + $0x9c] sm:$0xff]
      %v2564 = vld [vmem:[%s2536 + $0xa4] sm:$0xf]
      %v2565 = vld [vmem:[%s2536 + $0xa8] sm:$0xff]
      %v2566 = vld [vmem:[%s2536 + $0xb0] sm:$0xf]
      %v2567 = vld [vmem:[%s2536 + $0xb4] sm:$0xff]
      %v2568 = vld [vmem:[%s2536 + $0xbc] sm:$0xf]
      %v2569 = vld [vmem:[%s2536 + $0xc0] sm:$0xff]
      %v2570 = vld [vmem:[%s2536 + $0xc8] sm:$0xf]
      %v2571 = vld [vmem:[%s2536 + $0xcc] sm:$0xff]
      %v2572 = vld [vmem:[%s2536 + $0xd4] sm:$0xf]
      %v2573 = vld [vmem:[%s2536 + $0xd8] sm:$0xff]
      %v2574 = vld [vmem:[%s2536 + $0xe0] sm:$0xf]
      %v2575 = vld [vmem:[%s2536 + $0xe4] sm:$0xff]
      %v2576 = vld [vmem:[%s2536 + $0xec] sm:$0xf]
      %v2577 = vld [vmem:[%s2536 + $0xf0] sm:$0xff]
      %v2578 = vld [vmem:[%s2536 + $0xf8] sm:$0xf]
      %v2579 = vld [vmem:[%s2536 + $0xfc] sm:$0xff]
      %v2580 = vld [vmem:[%s2536 + $0x104] sm:$0xf]
      %v2581 = vld [vmem:[%s2536 + $0x108] sm:$0xff]
      %v2582 = vld [vmem:[%s2536 + $0x110] sm:$0xf]
      %v2583 = vld [vmem:[%s2536 + $0x114] sm:$0xff]
      %v2584 = vld [vmem:[%s2536 + $0x11c] sm:$0xf]
      %v2585 = vld [vmem:[%s2536 + $0x120] sm:$0xff]
      %v2586 = vld [vmem:[%s2536 + $0x128] sm:$0xf]
      %v2587 = vld [vmem:[%s2536 + $0x12c] sm:$0xff]
      %v2588 = vld [vmem:[%s2536 + $0x134] sm:$0xf]
      %v2589 = vld [vmem:[%s2536 + $0x138] sm:$0xff]
      %v2590 = vld [vmem:[%s2536 + $0x140] sm:$0xf]
      %v2591 = vld [vmem:[%s2536 + $0x144] sm:$0xff]
      %v2592 = vld [vmem:[%s2536 + $0x14c] sm:$0xf]
      %v2593 = vld [vmem:[%s2536 + $0x150] sm:$0xff]
      %v2594 = vld [vmem:[%s2536 + $0x158] sm:$0xf]
      %v2595 = vld [vmem:[%s2536 + $0x15c] sm:$0xff]
      %v2596 = vld [vmem:[%s2536 + $0x164] sm:$0xf]
      %v2597 = vld [vmem:[%s2536 + $0x168] sm:$0xff]
      %v2598 = vld [vmem:[%s2536 + $0x170] sm:$0xf]
      %v2599 = vld [vmem:[%s2536 + $0x174] sm:$0xff]
      %v2600 = vld [vmem:[%s2536 + $0x17c] sm:$0xf]
      %s2601 = scalar_lea.vmem %s3, 384
      %v2602 = vld [vmem:[%s2601] sm:$0xf]
      %v2603 = vld [vmem:[%s2601 + $0x4] sm:$0xf]
      %v2604 = vld [vmem:[%s2601 + $0x8] sm:$0xf]
      %v2605 = vld [vmem:[%s2601 + $0xc] sm:$0xf]
      %v2606 = vld [vmem:[%s2601 + $0x10] sm:$0xf]
      %v2607 = vld [vmem:[%s2601 + $0x14] sm:$0xf]
      %v2608 = vld [vmem:[%s2601 + $0x18] sm:$0xf]
      %v2609 = vld [vmem:[%s2601 + $0x1c] sm:$0xf]
      %v2610 = vld [vmem:[%s2601 + $0x20] sm:$0xf]
      %v2611 = vld [vmem:[%s2601 + $0x24] sm:$0xf]
      %v2612 = vld [vmem:[%s2601 + $0x28] sm:$0xf]
      %v2613 = vld [vmem:[%s2601 + $0x2c] sm:$0xf]
      %v2614 = vld [vmem:[%s2601 + $0x30] sm:$0xf]
      %v2615 = vld [vmem:[%s2601 + $0x34] sm:$0xf]
      %v2616 = vld [vmem:[%s2601 + $0x38] sm:$0xf]
      %v2617 = vld [vmem:[%s2601 + $0x3c] sm:$0xf]
      %v2618 = vld [vmem:[%s2601 + $0x40] sm:$0xf]
      %v2619 = vld [vmem:[%s2601 + $0x44] sm:$0xf]
      %v2620 = vld [vmem:[%s2601 + $0x48] sm:$0xf]
      %v2621 = vld [vmem:[%s2601 + $0x4c] sm:$0xf]
      %v2622 = vld [vmem:[%s2601 + $0x50] sm:$0xf]
      %v2623 = vld [vmem:[%s2601 + $0x54] sm:$0xf]
      %v2624 = vld [vmem:[%s2601 + $0x58] sm:$0xf]
      %v2625 = vld [vmem:[%s2601 + $0x5c] sm:$0xf]
      %v2626 = vld [vmem:[%s2601 + $0x60] sm:$0xf]
      %v2627 = vld [vmem:[%s2601 + $0x64] sm:$0xf]
      %v2628 = vld [vmem:[%s2601 + $0x68] sm:$0xf]
      %v2629 = vld [vmem:[%s2601 + $0x6c] sm:$0xf]
      %v2630 = vld [vmem:[%s2601 + $0x70] sm:$0xf]
      %v2631 = vld [vmem:[%s2601 + $0x74] sm:$0xf]
      %v2632 = vld [vmem:[%s2601 + $0x78] sm:$0xf]
      %v2633 = vld [vmem:[%s2601 + $0x7c] sm:$0xf]
      %v2634 = vld [vmem:[%s2601 + $0x80] sm:$0xf]
      %v2635 = vld [vmem:[%s2601 + $0x84] sm:$0xf]
      %v2636 = vld [vmem:[%s2601 + $0x88] sm:$0xf]
      %v2637 = vld [vmem:[%s2601 + $0x8c] sm:$0xf]
      %v2638 = vld [vmem:[%s2601 + $0x90] sm:$0xf]
      %v2639 = vld [vmem:[%s2601 + $0x94] sm:$0xf]
      %v2640 = vld [vmem:[%s2601 + $0x98] sm:$0xf]
      %v2641 = vld [vmem:[%s2601 + $0x9c] sm:$0xf]
      %v2642 = vld [vmem:[%s2601 + $0xa0] sm:$0xf]
      %v2643 = vld [vmem:[%s2601 + $0xa4] sm:$0xf]
      %v2644 = vld [vmem:[%s2601 + $0xa8] sm:$0xf]
      %v2645 = vld [vmem:[%s2601 + $0xac] sm:$0xf]
      %v2646 = vld [vmem:[%s2601 + $0xb0] sm:$0xf]
      %v2647 = vld [vmem:[%s2601 + $0xb4] sm:$0xf]
      %v2648 = vld [vmem:[%s2601 + $0xb8] sm:$0xf]
      %v2649 = vld [vmem:[%s2601 + $0xbc] sm:$0xf]
      %v2714 = vunpack.c.l.b16 %v2537
      %v2715 = vunpack.c.h.b16 %v2537
      %v2716 = vunpack.c.l.b16 %v2538
      %v2717 = vunpack.c.l.b16 %v2539
      %v2718 = vunpack.c.h.b16 %v2539
      %v2719 = vunpack.c.l.b16 %v2540
      %v2720 = vunpack.c.l.b16 %v2541
      %v2721 = vunpack.c.h.b16 %v2541
      %v2722 = vunpack.c.l.b16 %v2542
      %v2723 = vunpack.c.l.b16 %v2543
      %v2724 = vunpack.c.h.b16 %v2543
      %v2725 = vunpack.c.l.b16 %v2544
      %v2726 = vunpack.c.l.b16 %v2545
      %v2727 = vunpack.c.h.b16 %v2545
      %v2728 = vunpack.c.l.b16 %v2546
      %v2729 = vunpack.c.l.b16 %v2547
      %v2730 = vunpack.c.h.b16 %v2547
      %v2731 = vunpack.c.l.b16 %v2548
      %v2732 = vunpack.c.l.b16 %v2549
      %v2733 = vunpack.c.h.b16 %v2549
      %v2734 = vunpack.c.l.b16 %v2550
      %v2735 = vunpack.c.l.b16 %v2551
      %v2736 = vunpack.c.h.b16 %v2551
      %v2737 = vunpack.c.l.b16 %v2552
      %v2738 = vunpack.c.l.b16 %v2553
      %v2739 = vunpack.c.h.b16 %v2553
      %v2740 = vunpack.c.l.b16 %v2554
      %v2741 = vunpack.c.l.b16 %v2555
      %v2742 = vunpack.c.h.b16 %v2555
      %v2743 = vunpack.c.l.b16 %v2556
      %v2744 = vunpack.c.l.b16 %v2557
      %v2745 = vunpack.c.h.b16 %v2557
      %v2746 = vunpack.c.l.b16 %v2558
      %v2747 = vunpack.c.l.b16 %v2559
      %v2748 = vunpack.c.h.b16 %v2559
      %v2749 = vunpack.c.l.b16 %v2560
      %v2750 = vunpack.c.l.b16 %v2561
      %v2751 = vunpack.c.h.b16 %v2561
      %v2752 = vunpack.c.l.b16 %v2562
      %v2753 = vunpack.c.l.b16 %v2563
      %v2754 = vunpack.c.h.b16 %v2563
      %v2755 = vunpack.c.l.b16 %v2564
      %v2756 = vunpack.c.l.b16 %v2565
      %v2757 = vunpack.c.h.b16 %v2565
      %v2758 = vunpack.c.l.b16 %v2566
      %v2759 = vunpack.c.l.b16 %v2567
      %v2760 = vunpack.c.h.b16 %v2567
      %v2761 = vunpack.c.l.b16 %v2568
      %v2762 = vunpack.c.l.b16 %v2569
      %v2763 = vunpack.c.h.b16 %v2569
      %v2764 = vunpack.c.l.b16 %v2570
      %v2765 = vunpack.c.l.b16 %v2571
      %v2766 = vunpack.c.h.b16 %v2571
      %v2767 = vunpack.c.l.b16 %v2572
      %v2768 = vunpack.c.l.b16 %v2573
      %v2769 = vunpack.c.h.b16 %v2573
      %v2770 = vunpack.c.l.b16 %v2574
      %v2771 = vunpack.c.l.b16 %v2575
      %v2772 = vunpack.c.h.b16 %v2575
      %v2773 = vunpack.c.l.b16 %v2576
      %v2774 = vunpack.c.l.b16 %v2577
      %v2775 = vunpack.c.h.b16 %v2577
      %v2776 = vunpack.c.l.b16 %v2578
      %v2777 = vunpack.c.l.b16 %v2579
      %v2778 = vunpack.c.h.b16 %v2579
      %v2779 = vunpack.c.l.b16 %v2580
      %v2780 = vunpack.c.l.b16 %v2581
      %v2781 = vunpack.c.h.b16 %v2581
      %v2782 = vunpack.c.l.b16 %v2582
      %v2783 = vunpack.c.l.b16 %v2583
      %v2784 = vunpack.c.h.b16 %v2583
      %v2785 = vunpack.c.l.b16 %v2584
      %v2786 = vunpack.c.l.b16 %v2585
      %v2787 = vunpack.c.h.b16 %v2585
      %v2788 = vunpack.c.l.b16 %v2586
      %v2789 = vunpack.c.l.b16 %v2587
      %v2790 = vunpack.c.h.b16 %v2587
      %v2791 = vunpack.c.l.b16 %v2588
      %v2792 = vunpack.c.l.b16 %v2589
      %v2793 = vunpack.c.h.b16 %v2589
      %v2794 = vunpack.c.l.b16 %v2590
      %v2795 = vunpack.c.l.b16 %v2591
      %v2796 = vunpack.c.h.b16 %v2591
      %v2797 = vunpack.c.l.b16 %v2592
      %v2798 = vunpack.c.l.b16 %v2593
      %v2799 = vunpack.c.h.b16 %v2593
      %v2800 = vunpack.c.l.b16 %v2594
      %v2801 = vunpack.c.l.b16 %v2595
      %v2802 = vunpack.c.h.b16 %v2595
      %v2803 = vunpack.c.l.b16 %v2596
      %v2804 = vunpack.c.l.b16 %v2597
      %v2805 = vunpack.c.h.b16 %v2597
      %v2806 = vunpack.c.l.b16 %v2598
      %v2807 = vunpack.c.l.b16 %v2599
      %v2808 = vunpack.c.h.b16 %v2599
      %v2809 = vunpack.c.l.b16 %v2600
      %v2810 = vpack.c.b16 %v2717, %v2714
      %v2811 = vpack.c.b16 %v2718, %v2715
      %v2812 = vpack.c.b16 %v2719, %v2716
      %v2813 = vpack.c.b16 %v2723, %v2720
      %v2814 = vpack.c.b16 %v2724, %v2721
      %v2815 = vpack.c.b16 %v2725, %v2722
      %v2816 = vpack.c.b16 %v2729, %v2726
      %v2817 = vpack.c.b16 %v2730, %v2727
      %v2818 = vpack.c.b16 %v2731, %v2728
      %v2819 = vpack.c.b16 %v2735, %v2732
      %v2820 = vpack.c.b16 %v2736, %v2733
      %v2821 = vpack.c.b16 %v2737, %v2734
      %v2822 = vpack.c.b16 %v2741, %v2738
      %v2823 = vpack.c.b16 %v2742, %v2739
      %v2824 = vpack.c.b16 %v2743, %v2740
      %v2825 = vpack.c.b16 %v2747, %v2744
      %v2826 = vpack.c.b16 %v2748, %v2745
      %v2827 = vpack.c.b16 %v2749, %v2746
      %v2828 = vpack.c.b16 %v2753, %v2750
      %v2829 = vpack.c.b16 %v2754, %v2751
      %v2830 = vpack.c.b16 %v2755, %v2752
      %v2831 = vpack.c.b16 %v2759, %v2756
      %v2832 = vpack.c.b16 %v2760, %v2757
      %v2833 = vpack.c.b16 %v2761, %v2758
      %v2834 = vpack.c.b16 %v2765, %v2762
      %v2835 = vpack.c.b16 %v2766, %v2763
      %v2836 = vpack.c.b16 %v2767, %v2764
      %v2837 = vpack.c.b16 %v2771, %v2768
      %v2838 = vpack.c.b16 %v2772, %v2769
      %v2839 = vpack.c.b16 %v2773, %v2770
      %v2840 = vpack.c.b16 %v2777, %v2774
      %v2841 = vpack.c.b16 %v2778, %v2775
      %v2842 = vpack.c.b16 %v2779, %v2776
      %v2843 = vpack.c.b16 %v2783, %v2780
      %v2844 = vpack.c.b16 %v2784, %v2781
      %v2845 = vpack.c.b16 %v2785, %v2782
      %v2846 = vpack.c.b16 %v2789, %v2786
      %v2847 = vpack.c.b16 %v2790, %v2787
      %v2848 = vpack.c.b16 %v2791, %v2788
      %v2849 = vpack.c.b16 %v2795, %v2792
      %v2850 = vpack.c.b16 %v2796, %v2793
      %v2851 = vpack.c.b16 %v2797, %v2794
      %v2852 = vpack.c.b16 %v2801, %v2798
      %v2853 = vpack.c.b16 %v2802, %v2799
      %v2854 = vpack.c.b16 %v2803, %v2800
      %v2855 = vpack.c.b16 %v2807, %v2804
      %v2856 = vpack.c.b16 %v2808, %v2805
      %v2857 = vpack.c.b16 %v2809, %v2806
      %v2954 = vunpack.c.l.b16 %v2602
      %v2955 = vunpack.c.l.b16 %v2603
      %v2956 = vunpack.c.l.b16 %v2604
      %v2957 = vunpack.c.l.b16 %v2605
      %v2958 = vunpack.c.l.b16 %v2606
      %v2959 = vunpack.c.l.b16 %v2607
      %v2960 = vunpack.c.l.b16 %v2608
      %v2961 = vunpack.c.l.b16 %v2609
      %v2962 = vunpack.c.l.b16 %v2610
      %v2963 = vunpack.c.l.b16 %v2611
      %v2964 = vunpack.c.l.b16 %v2612
      %v2965 = vunpack.c.l.b16 %v2613
      %v2966 = vunpack.c.l.b16 %v2614
      %v2967 = vunpack.c.l.b16 %v2615
      %v2968 = vunpack.c.l.b16 %v2616
      %v2969 = vunpack.c.l.b16 %v2617
      %v2970 = vunpack.c.l.b16 %v2618
      %v2971 = vunpack.c.l.b16 %v2619
      %v2972 = vunpack.c.l.b16 %v2620
      %v2973 = vunpack.c.l.b16 %v2621
      %v2974 = vunpack.c.l.b16 %v2622
      %v2975 = vunpack.c.l.b16 %v2623
      %v2976 = vunpack.c.l.b16 %v2624
      %v2977 = vunpack.c.l.b16 %v2625
      %v2978 = vunpack.c.l.b16 %v2626
      %v2979 = vunpack.c.l.b16 %v2627
      %v2980 = vunpack.c.l.b16 %v2628
      %v2981 = vunpack.c.l.b16 %v2629
      %v2982 = vunpack.c.l.b16 %v2630
      %v2983 = vunpack.c.l.b16 %v2631
      %v2984 = vunpack.c.l.b16 %v2632
      %v2985 = vunpack.c.l.b16 %v2633
      %v2986 = vunpack.c.l.b16 %v2634
      %v2987 = vunpack.c.l.b16 %v2635
      %v2988 = vunpack.c.l.b16 %v2636
      %v2989 = vunpack.c.l.b16 %v2637
      %v2990 = vunpack.c.l.b16 %v2638
      %v2991 = vunpack.c.l.b16 %v2639
      %v2992 = vunpack.c.l.b16 %v2640
      %v2993 = vunpack.c.l.b16 %v2641
      %v2994 = vunpack.c.l.b16 %v2642
      %v2995 = vunpack.c.l.b16 %v2643
      %v2996 = vunpack.c.l.b16 %v2644
      %v2997 = vunpack.c.l.b16 %v2645
      %v2998 = vunpack.c.l.b16 %v2646
      %v2999 = vunpack.c.l.b16 %v2647
      %v3000 = vunpack.c.l.b16 %v2648
      %v3001 = vunpack.c.l.b16 %v2649
      %v3002 = vpack.c.b16 %v2955, %v2954
      %v3003 = vpack.c.b16 %v2957, %v2956
      %v3004 = vpack.c.b16 %v2959, %v2958
      %v3005 = vpack.c.b16 %v2961, %v2960
      %v3006 = vpack.c.b16 %v2963, %v2962
      %v3007 = vpack.c.b16 %v2965, %v2964
      %v3008 = vpack.c.b16 %v2967, %v2966
      %v3009 = vpack.c.b16 %v2969, %v2968
      %v3010 = vpack.c.b16 %v2971, %v2970
      %v3011 = vpack.c.b16 %v2973, %v2972
      %v3012 = vpack.c.b16 %v2975, %v2974
      %v3013 = vpack.c.b16 %v2977, %v2976
      %v3014 = vpack.c.b16 %v2979, %v2978
      %v3015 = vpack.c.b16 %v2981, %v2980
      %v3016 = vpack.c.b16 %v2983, %v2982
      %v3017 = vpack.c.b16 %v2985, %v2984
      %v3018 = vpack.c.b16 %v2987, %v2986
      %v3019 = vpack.c.b16 %v2989, %v2988
      %v3020 = vpack.c.b16 %v2991, %v2990
      %v3021 = vpack.c.b16 %v2993, %v2992
      %v3022 = vpack.c.b16 %v2995, %v2994
      %v3023 = vpack.c.b16 %v2997, %v2996
      %v3024 = vpack.c.b16 %v2999, %v2998
      %v3025 = vpack.c.b16 %v3001, %v3000
      %3050 = vmatpush.bf16.msra.mxu0 %v3009
      %3051 = vmatpush.bf16.msra.mxu0 %v3008
      %3052 = vmatpush.bf16.msra.mxu0 %v3007
      %3053 = vmatpush.bf16.msra.mxu0 %v3006
      %3054 = vmatpush.bf16.msra.mxu0 %v3005
      %3055 = vmatpush.bf16.msra.mxu0 %v3004
      %3056 = vmatpush.bf16.msra.mxu0 %v3003
      %3057 = vmatpush.bf16.msra.mxu0 %v3002
      %3058 = vmatmul.bf16.gmra.mxu0 %v2810
      %v3059 = vpop.f32.mrf.mxu0
      %v3060 = vadd.f32 0.0, %v3059
      %v3061 = vpop.f32.mrf.mxu0
      %v3062 = vadd.f32 0.0, %v3061
      %3063 = vmatmul.bf16.gmra.mxu0 %v2813
      %v3064 = vpop.f32.mrf.mxu0
      %v3065 = vadd.f32 0.0, %v3064
      %v3066 = vpop.f32.mrf.mxu0
      %v3067 = vadd.f32 0.0, %v3066
      %3068 = vmatmul.bf16.gmra.mxu0 %v2816
      %v3069 = vpop.f32.mrf.mxu0
      %v3070 = vadd.f32 0.0, %v3069
      %v3071 = vpop.f32.mrf.mxu0
      %v3072 = vadd.f32 0.0, %v3071
      %3073 = vmatmul.bf16.gmra.mxu0 %v2819
      %v3074 = vpop.f32.mrf.mxu0
      %v3075 = vadd.f32 0.0, %v3074
      %v3076 = vpop.f32.mrf.mxu0
      %v3077 = vadd.f32 0.0, %v3076
      %3078 = vmatmul.bf16.gmra.mxu0 %v2822
      %v3079 = vpop.f32.mrf.mxu0
      %v3080 = vadd.f32 0.0, %v3079
      %v3081 = vpop.f32.mrf.mxu0
      %v3082 = vadd.f32 0.0, %v3081
      %3083 = vmatmul.bf16.gmra.mxu0 %v2825
      %v3084 = vpop.f32.mrf.mxu0
      %v3085 = vadd.f32 0.0, %v3084
      %v3086 = vpop.f32.mrf.mxu0
      %v3087 = vadd.f32 0.0, %v3086
      %3088 = vmatmul.bf16.gmra.mxu0 %v2828
      %v3089 = vpop.f32.mrf.mxu0
      %v3090 = vadd.f32 0.0, %v3089
      %v3091 = vpop.f32.mrf.mxu0
      %v3092 = vadd.f32 0.0, %v3091
      %3093 = vmatmul.bf16.gmra.mxu0 %v2831
      %v3094 = vpop.f32.mrf.mxu0
      %v3095 = vadd.f32 0.0, %v3094
      %v3096 = vpop.f32.mrf.mxu0
      %v3097 = vadd.f32 0.0, %v3096
      %3098 = vmatmul.bf16.gmra.mxu0 %v2834
      %v3099 = vpop.f32.mrf.mxu0
      %v3100 = vadd.f32 0.0, %v3099
      %v3101 = vpop.f32.mrf.mxu0
      %v3102 = vadd.f32 0.0, %v3101
      %3103 = vmatmul.bf16.gmra.mxu0 %v2837
      %v3104 = vpop.f32.mrf.mxu0
      %v3105 = vadd.f32 0.0, %v3104
      %v3106 = vpop.f32.mrf.mxu0
      %v3107 = vadd.f32 0.0, %v3106
      %3108 = vmatmul.bf16.gmra.mxu0 %v2840
      %v3109 = vpop.f32.mrf.mxu0
      %v3110 = vadd.f32 0.0, %v3109
      %v3111 = vpop.f32.mrf.mxu0
      %v3112 = vadd.f32 0.0, %v3111
      %3113 = vmatmul.bf16.gmra.mxu0 %v2843
      %v3114 = vpop.f32.mrf.mxu0
      %v3115 = vadd.f32 0.0, %v3114
      %v3116 = vpop.f32.mrf.mxu0
      %v3117 = vadd.f32 0.0, %v3116
      %3118 = vmatmul.bf16.gmra.mxu0 %v2846
      %v3119 = vpop.f32.mrf.mxu0
      %v3120 = vadd.f32 0.0, %v3119
      %v3121 = vpop.f32.mrf.mxu0
      %v3122 = vadd.f32 0.0, %v3121
      %3123 = vmatmul.bf16.gmra.mxu0 %v2849
      %v3124 = vpop.f32.mrf.mxu0
      %v3125 = vadd.f32 0.0, %v3124
      %v3126 = vpop.f32.mrf.mxu0
      %v3127 = vadd.f32 0.0, %v3126
      %3128 = vmatmul.bf16.gmra.mxu0 %v2852
      %v3129 = vpop.f32.mrf.mxu0
      %v3130 = vadd.f32 0.0, %v3129
      %v3131 = vpop.f32.mrf.mxu0
      %v3132 = vadd.f32 0.0, %v3131
      %3133 = vmatmul.bf16.gmra.mxu0 %v2855
      %v3134 = vpop.f32.mrf.mxu0
      %v3135 = vadd.f32 0.0, %v3134
      %v3136 = vpop.f32.mrf.mxu0
      %v3137 = vadd.f32 0.0, %v3136
      %3138 = vdwg.mxu0
      %3139 = vmatpush.bf16.msra.mxu0 %v3017
      %3140 = vmatpush.bf16.msra.mxu0 %v3016
      %3141 = vmatpush.bf16.msra.mxu0 %v3015
      %3142 = vmatpush.bf16.msra.mxu0 %v3014
      %3143 = vmatpush.bf16.msra.mxu0 %v3013
      %3144 = vmatpush.bf16.msra.mxu0 %v3012
      %3145 = vmatpush.bf16.msra.mxu0 %v3011
      %3146 = vmatpush.bf16.msra.mxu0 %v3010
      %3147 = vmatmul.bf16.gmra.mxu0 %v2811
      %v3148 = vpop.f32.mrf.mxu0
      %v3149 = vadd.f32 %v3060, %v3148
      %v3150 = vpop.f32.mrf.mxu0
      %v3151 = vadd.f32 %v3062, %v3150
      %3152 = vmatmul.bf16.gmra.mxu0 %v2814
      %v3153 = vpop.f32.mrf.mxu0
      %v3154 = vadd.f32 %v3065, %v3153
      %v3155 = vpop.f32.mrf.mxu0
      %v3156 = vadd.f32 %v3067, %v3155
      %3157 = vmatmul.bf16.gmra.mxu0 %v2817
      %v3158 = vpop.f32.mrf.mxu0
      %v3159 = vadd.f32 %v3070, %v3158
      %v3160 = vpop.f32.mrf.mxu0
      %v3161 = vadd.f32 %v3072, %v3160
      %3162 = vmatmul.bf16.gmra.mxu0 %v2820
      %v3163 = vpop.f32.mrf.mxu0
      %v3164 = vadd.f32 %v3075, %v3163
      %v3165 = vpop.f32.mrf.mxu0
      %v3166 = vadd.f32 %v3077, %v3165
      %3167 = vmatmul.bf16.gmra.mxu0 %v2823
      %v3168 = vpop.f32.mrf.mxu0
      %v3169 = vadd.f32 %v3080, %v3168
      %v3170 = vpop.f32.mrf.mxu0
      %v3171 = vadd.f32 %v3082, %v3170
      %3172 = vmatmul.bf16.gmra.mxu0 %v2826
      %v3173 = vpop.f32.mrf.mxu0
      %v3174 = vadd.f32 %v3085, %v3173
      %v3175 = vpop.f32.mrf.mxu0
      %v3176 = vadd.f32 %v3087, %v3175
      %3177 = vmatmul.bf16.gmra.mxu0 %v2829
      %v3178 = vpop.f32.mrf.mxu0
      %v3179 = vadd.f32 %v3090, %v3178
      %v3180 = vpop.f32.mrf.mxu0
      %v3181 = vadd.f32 %v3092, %v3180
      %3182 = vmatmul.bf16.gmra.mxu0 %v2832
      %v3183 = vpop.f32.mrf.mxu0
      %v3184 = vadd.f32 %v3095, %v3183
      %v3185 = vpop.f32.mrf.mxu0
      %v3186 = vadd.f32 %v3097, %v3185
      %3187 = vmatmul.bf16.gmra.mxu0 %v2835
      %v3188 = vpop.f32.mrf.mxu0
      %v3189 = vadd.f32 %v3100, %v3188
      %v3190 = vpop.f32.mrf.mxu0
      %v3191 = vadd.f32 %v3102, %v3190
      %3192 = vmatmul.bf16.gmra.mxu0 %v2838
      %v3193 = vpop.f32.mrf.mxu0
      %v3194 = vadd.f32 %v3105, %v3193
      %v3195 = vpop.f32.mrf.mxu0
      %v3196 = vadd.f32 %v3107, %v3195
      %3197 = vmatmul.bf16.gmra.mxu0 %v2841
      %v3198 = vpop.f32.mrf.mxu0
      %v3199 = vadd.f32 %v3110, %v3198
      %v3200 = vpop.f32.mrf.mxu0
      %v3201 = vadd.f32 %v3112, %v3200
      %3202 = vmatmul.bf16.gmra.mxu0 %v2844
      %v3203 = vpop.f32.mrf.mxu0
      %v3204 = vadd.f32 %v3115, %v3203
      %v3205 = vpop.f32.mrf.mxu0
      %v3206 = vadd.f32 %v3117, %v3205
      %3207 = vmatmul.bf16.gmra.mxu0 %v2847
      %v3208 = vpop.f32.mrf.mxu0
      %v3209 = vadd.f32 %v3120, %v3208
      %v3210 = vpop.f32.mrf.mxu0
      %v3211 = vadd.f32 %v3122, %v3210
      %3212 = vmatmul.bf16.gmra.mxu0 %v2850
      %v3213 = vpop.f32.mrf.mxu0
      %v3214 = vadd.f32 %v3125, %v3213
      %v3215 = vpop.f32.mrf.mxu0
      %v3216 = vadd.f32 %v3127, %v3215
      %3217 = vmatmul.bf16.gmra.mxu0 %v2853
      %v3218 = vpop.f32.mrf.mxu0
      %v3219 = vadd.f32 %v3130, %v3218
      %v3220 = vpop.f32.mrf.mxu0
      %v3221 = vadd.f32 %v3132, %v3220
      %3222 = vmatmul.bf16.gmra.mxu0 %v2856
      %v3223 = vpop.f32.mrf.mxu0
      %v3224 = vadd.f32 %v3135, %v3223
      %v3225 = vpop.f32.mrf.mxu0
      %v3226 = vadd.f32 %v3137, %v3225
      %3227 = vdwg.mxu0
      %3228 = vmatpush.bf16.msra.mxu0 %v3025
      %3229 = vmatpush.bf16.msra.mxu0 %v3024
      %3230 = vmatpush.bf16.msra.mxu0 %v3023
      %3231 = vmatpush.bf16.msra.mxu0 %v3022
      %3232 = vmatpush.bf16.msra.mxu0 %v3021
      %3233 = vmatpush.bf16.msra.mxu0 %v3020
      %3234 = vmatpush.bf16.msra.mxu0 %v3019
      %3235 = vmatpush.bf16.msra.mxu0 %v3018
      %3236 = vmatmul.bf16.gmra.mxu0 %v2812
      %v3237 = vpop.f32.mrf.mxu0
      %v3238 = vadd.f32 %v3149, %v3237
      %v3239 = vpop.f32.mrf.mxu0
      %v3240 = vadd.f32 %v3151, %v3239
      %3241 = vmatmul.bf16.gmra.mxu0 %v2815
      %v3242 = vpop.f32.mrf.mxu0
      %v3243 = vadd.f32 %v3154, %v3242
      %v3244 = vpop.f32.mrf.mxu0
      %v3245 = vadd.f32 %v3156, %v3244
      %3246 = vmatmul.bf16.gmra.mxu0 %v2818
      %v3247 = vpop.f32.mrf.mxu0
      %v3248 = vadd.f32 %v3159, %v3247
      %v3249 = vpop.f32.mrf.mxu0
      %v3250 = vadd.f32 %v3161, %v3249
      %3251 = vmatmul.bf16.gmra.mxu0 %v2821
      %v3252 = vpop.f32.mrf.mxu0
      %v3253 = vadd.f32 %v3164, %v3252
      %v3254 = vpop.f32.mrf.mxu0
      %v3255 = vadd.f32 %v3166, %v3254
      %3256 = vmatmul.bf16.gmra.mxu0 %v2824
      %v3257 = vpop.f32.mrf.mxu0
      %v3258 = vadd.f32 %v3169, %v3257
      %v3259 = vpop.f32.mrf.mxu0
      %v3260 = vadd.f32 %v3171, %v3259
      %3261 = vmatmul.bf16.gmra.mxu0 %v2827
      %v3262 = vpop.f32.mrf.mxu0
      %v3263 = vadd.f32 %v3174, %v3262
      %v3264 = vpop.f32.mrf.mxu0
      %v3265 = vadd.f32 %v3176, %v3264
      %3266 = vmatmul.bf16.gmra.mxu0 %v2830
      %v3267 = vpop.f32.mrf.mxu0
      %v3268 = vadd.f32 %v3179, %v3267
      %v3269 = vpop.f32.mrf.mxu0
      %v3270 = vadd.f32 %v3181, %v3269
      %3271 = vmatmul.bf16.gmra.mxu0 %v2833
      %v3272 = vpop.f32.mrf.mxu0
      %v3273 = vadd.f32 %v3184, %v3272
      %v3274 = vpop.f32.mrf.mxu0
      %v3275 = vadd.f32 %v3186, %v3274
      %3276 = vmatmul.bf16.gmra.mxu0 %v2836
      %v3277 = vpop.f32.mrf.mxu0
      %v3278 = vadd.f32 %v3189, %v3277
      %v3279 = vpop.f32.mrf.mxu0
      %v3280 = vadd.f32 %v3191, %v3279
      %3281 = vmatmul.bf16.gmra.mxu0 %v2839
      %v3282 = vpop.f32.mrf.mxu0
      %v3283 = vadd.f32 %v3194, %v3282
      %v3284 = vpop.f32.mrf.mxu0
      %v3285 = vadd.f32 %v3196, %v3284
      %3286 = vmatmul.bf16.gmra.mxu0 %v2842
      %v3287 = vpop.f32.mrf.mxu0
      %v3288 = vadd.f32 %v3199, %v3287
      %v3289 = vpop.f32.mrf.mxu0
      %v3290 = vadd.f32 %v3201, %v3289
      %3291 = vmatmul.bf16.gmra.mxu0 %v2845
      %v3292 = vpop.f32.mrf.mxu0
      %v3293 = vadd.f32 %v3204, %v3292
      %v3294 = vpop.f32.mrf.mxu0
      %v3295 = vadd.f32 %v3206, %v3294
      %3296 = vmatmul.bf16.gmra.mxu0 %v2848
      %v3297 = vpop.f32.mrf.mxu0
      %v3298 = vadd.f32 %v3209, %v3297
      %v3299 = vpop.f32.mrf.mxu0
      %v3300 = vadd.f32 %v3211, %v3299
      %3301 = vmatmul.bf16.gmra.mxu0 %v2851
      %v3302 = vpop.f32.mrf.mxu0
      %v3303 = vadd.f32 %v3214, %v3302
      %v3304 = vpop.f32.mrf.mxu0
      %v3305 = vadd.f32 %v3216, %v3304
      %3306 = vmatmul.bf16.gmra.mxu0 %v2854
      %v3307 = vpop.f32.mrf.mxu0
      %v3308 = vadd.f32 %v3219, %v3307
      %v3309 = vpop.f32.mrf.mxu0
      %v3310 = vadd.f32 %v3221, %v3309
      %3311 = vmatmul.bf16.gmra.mxu0 %v2857
      %v3312 = vpop.f32.mrf.mxu0
      %v3313 = vadd.f32 %v3224, %v3312
      %v3314 = vpop.f32.mrf.mxu0
      %v3315 = vadd.f32 %v3226, %v3314
      %3316 = vdwg.mxu0
      %v3317 = vadd.f32 %v2504, %v3238
      %v3318 = vadd.f32 %v2505, %v3240
      %v3319 = vadd.f32 %v2506, %v3243
      %v3320 = vadd.f32 %v2507, %v3245
      %v3321 = vadd.f32 %v2508, %v3248
      %v3322 = vadd.f32 %v2509, %v3250
      %v3323 = vadd.f32 %v2510, %v3253
      %v3324 = vadd.f32 %v2511, %v3255
      %v3325 = vadd.f32 %v2512, %v3258
      %v3326 = vadd.f32 %v2513, %v3260
      %v3327 = vadd.f32 %v2514, %v3263
      %v3328 = vadd.f32 %v2515, %v3265
      %v3329 = vadd.f32 %v2516, %v3268
      %v3330 = vadd.f32 %v2517, %v3270
      %v3331 = vadd.f32 %v2518, %v3273
      %v3332 = vadd.f32 %v2519, %v3275
      %v3333 = vadd.f32 %v2520, %v3278
      %v3334 = vadd.f32 %v2521, %v3280
      %v3335 = vadd.f32 %v2522, %v3283
      %v3336 = vadd.f32 %v2523, %v3285
      %v3337 = vadd.f32 %v2524, %v3288
      %v3338 = vadd.f32 %v2525, %v3290
      %v3339 = vadd.f32 %v2526, %v3293
      %v3340 = vadd.f32 %v2527, %v3295
      %v3341 = vadd.f32 %v2528, %v3298
      %v3342 = vadd.f32 %v2529, %v3300
      %v3343 = vadd.f32 %v2530, %v3303
      %v3344 = vadd.f32 %v2531, %v3305
      %v3345 = vadd.f32 %v2532, %v3308
      %v3346 = vadd.f32 %v2533, %v3310
      %v3347 = vadd.f32 %v2534, %v3313
      %v3348 = vadd.f32 %v2535, %v3315
      %3349 = vst [vmem:[#allocation3] sm:$0xff] %v3317
      %3350 = vst [vmem:[#allocation3 + $0x8] sm:$0xff] %v3318
      %3351 = vst [vmem:[#allocation3 + $0x10] sm:$0xff] %v3319
      %3352 = vst [vmem:[#allocation3 + $0x18] sm:$0xff] %v3320
      %3353 = vst [vmem:[#allocation3 + $0x20] sm:$0xff] %v3321
      %3354 = vst [vmem:[#allocation3 + $0x28] sm:$0xff] %v3322
      %3355 = vst [vmem:[#allocation3 + $0x30] sm:$0xff] %v3323
      %3356 = vst [vmem:[#allocation3 + $0x38] sm:$0xff] %v3324
      %3357 = vst [vmem:[#allocation3 + $0x40] sm:$0xff] %v3325
      %3358 = vst [vmem:[#allocation3 + $0x48] sm:$0xff] %v3326
      %3359 = vst [vmem:[#allocation3 + $0x50] sm:$0xff] %v3327
      %3360 = vst [vmem:[#allocation3 + $0x58] sm:$0xff] %v3328
      %3361 = vst [vmem:[#allocation3 + $0x60] sm:$0xff] %v3329
      %3362 = vst [vmem:[#allocation3 + $0x68] sm:$0xff] %v3330
      %3363 = vst [vmem:[#allocation3 + $0x70] sm:$0xff] %v3331
      %3364 = vst [vmem:[#allocation3 + $0x78] sm:$0xff] %v3332
      %3365 = vst [vmem:[#allocation3 + $0x80] sm:$0xff] %v3333
      %3366 = vst [vmem:[#allocation3 + $0x88] sm:$0xff] %v3334
      %3367 = vst [vmem:[#allocation3 + $0x90] sm:$0xff] %v3335
      %3368 = vst [vmem:[#allocation3 + $0x98] sm:$0xff] %v3336
      %3369 = vst [vmem:[#allocation3 + $0xa0] sm:$0xff] %v3337
      %3370 = vst [vmem:[#allocation3 + $0xa8] sm:$0xff] %v3338
      %3371 = vst [vmem:[#allocation3 + $0xb0] sm:$0xff] %v3339
      %3372 = vst [vmem:[#allocation3 + $0xb8] sm:$0xff] %v3340
      %3373 = vst [vmem:[#allocation3 + $0xc0] sm:$0xff] %v3341
      %3374 = vst [vmem:[#allocation3 + $0xc8] sm:$0xff] %v3342
      %3375 = vst [vmem:[#allocation3 + $0xd0] sm:$0xff] %v3343
      %3376 = vst [vmem:[#allocation3 + $0xd8] sm:$0xff] %v3344
      %3377 = vst [vmem:[#allocation3 + $0xe0] sm:$0xff] %v3345
      %3378 = vst [vmem:[#allocation3 + $0xe8] sm:$0xff] %v3346
      %3379 = vst [vmem:[#allocation3 + $0xf0] sm:$0xff] %v3347
      %3380 = vst [vmem:[#allocation3 + $0xf8] sm:$0xff] %v3348
      %v3381 = vld [vmem:[#allocation3] sm:$0xff]
      %v3382 = vld [vmem:[#allocation3 + $0x8] sm:$0xff]
      %v3383 = vld [vmem:[#allocation3 + $0x10] sm:$0xff]
      %v3384 = vld [vmem:[#allocation3 + $0x18] sm:$0xff]
      %v3385 = vld [vmem:[#allocation3 + $0x20] sm:$0xff]
      %v3386 = vld [vmem:[#allocation3 + $0x28] sm:$0xff]
      %v3387 = vld [vmem:[#allocation3 + $0x30] sm:$0xff]
      %v3388 = vld [vmem:[#allocation3 + $0x38] sm:$0xff]
      %v3389 = vld [vmem:[#allocation3 + $0x40] sm:$0xff]
      %v3390 = vld [vmem:[#allocation3 + $0x48] sm:$0xff]
      %v3391 = vld [vmem:[#allocation3 + $0x50] sm:$0xff]
      %v3392 = vld [vmem:[#allocation3 + $0x58] sm:$0xff]
      %v3393 = vld [vmem:[#allocation3 + $0x60] sm:$0xff]
      %v3394 = vld [vmem:[#allocation3 + $0x68] sm:$0xff]
      %v3395 = vld [vmem:[#allocation3 + $0x70] sm:$0xff]
      %v3396 = vld [vmem:[#allocation3 + $0x78] sm:$0xff]
      %v3397 = vld [vmem:[#allocation3 + $0x80] sm:$0xff]
      %v3398 = vld [vmem:[#allocation3 + $0x88] sm:$0xff]
      %v3399 = vld [vmem:[#allocation3 + $0x90] sm:$0xff]
      %v3400 = vld [vmem:[#allocation3 + $0x98] sm:$0xff]
      %v3401 = vld [vmem:[#allocation3 + $0xa0] sm:$0xff]
      %v3402 = vld [vmem:[#allocation3 + $0xa8] sm:$0xff]
      %v3403 = vld [vmem:[#allocation3 + $0xb0] sm:$0xff]
      %v3404 = vld [vmem:[#allocation3 + $0xb8] sm:$0xff]
      %v3405 = vld [vmem:[#allocation3 + $0xc0] sm:$0xff]
      %v3406 = vld [vmem:[#allocation3 + $0xc8] sm:$0xff]
      %v3407 = vld [vmem:[#allocation3 + $0xd0] sm:$0xff]
      %v3408 = vld [vmem:[#allocation3 + $0xd8] sm:$0xff]
      %v3409 = vld [vmem:[#allocation3 + $0xe0] sm:$0xff]
      %v3410 = vld [vmem:[#allocation3 + $0xe8] sm:$0xff]
      %v3411 = vld [vmem:[#allocation3 + $0xf0] sm:$0xff]
      %v3412 = vld [vmem:[#allocation3 + $0xf8] sm:$0xff]
      %3413 = vst [vmem:[%s262] sm:$0xff] %v3381
      %3414 = vst [vmem:[%s262 + $0x8] sm:$0xff] %v3382
      %3415 = vst [vmem:[%s262 + $0x10] sm:$0xff] %v3383
      %3416 = vst [vmem:[%s262 + $0x18] sm:$0xff] %v3384
      %3417 = vst [vmem:[%s262 + $0x20] sm:$0xff] %v3385
      %3418 = vst [vmem:[%s262 + $0x28] sm:$0xff] %v3386
      %3419 = vst [vmem:[%s262 + $0x30] sm:$0xff] %v3387
      %3420 = vst [vmem:[%s262 + $0x38] sm:$0xff] %v3388
      %3421 = vst [vmem:[%s262 + $0x40] sm:$0xff] %v3389
      %3422 = vst [vmem:[%s262 + $0x48] sm:$0xff] %v3390
      %3423 = vst [vmem:[%s262 + $0x50] sm:$0xff] %v3391
      %3424 = vst [vmem:[%s262 + $0x58] sm:$0xff] %v3392
      %3425 = vst [vmem:[%s262 + $0x60] sm:$0xff] %v3393
      %3426 = vst [vmem:[%s262 + $0x68] sm:$0xff] %v3394
      %3427 = vst [vmem:[%s262 + $0x70] sm:$0xff] %v3395
      %3428 = vst [vmem:[%s262 + $0x78] sm:$0xff] %v3396
      %3429 = vst [vmem:[%s262 + $0x80] sm:$0xff] %v3397
      %3430 = vst [vmem:[%s262 + $0x88] sm:$0xff] %v3398
      %3431 = vst [vmem:[%s262 + $0x90] sm:$0xff] %v3399
      %3432 = vst [vmem:[%s262 + $0x98] sm:$0xff] %v3400
      %3433 = vst [vmem:[%s262 + $0xa0] sm:$0xff] %v3401
      %3434 = vst [vmem:[%s262 + $0xa8] sm:$0xff] %v3402
      %3435 = vst [vmem:[%s262 + $0xb0] sm:$0xff] %v3403
      %3436 = vst [vmem:[%s262 + $0xb8] sm:$0xff] %v3404
      %3437 = vst [vmem:[%s262 + $0xc0] sm:$0xff] %v3405
      %3438 = vst [vmem:[%s262 + $0xc8] sm:$0xff] %v3406
      %3439 = vst [vmem:[%s262 + $0xd0] sm:$0xff] %v3407
      %3440 = vst [vmem:[%s262 + $0xd8] sm:$0xff] %v3408
      %3441 = vst [vmem:[%s262 + $0xe0] sm:$0xff] %v3409
      %3442 = vst [vmem:[%s262 + $0xe8] sm:$0xff] %v3410
      %3443 = vst [vmem:[%s262 + $0xf0] sm:$0xff] %v3411
      %3444 = vst [vmem:[%s262 + $0xf8] sm:$0xff] %v3412
      %v3445 = vadd.f32 %v3381, %v3382
      %v3446 = vadd.f32 %v3445, %v3383
      %v3447 = vadd.f32 %v3446, %v3384
      %v3448 = vadd.f32 %v3447, %v3385
      %v3449 = vadd.f32 %v3448, %v3386
      %v3450 = vadd.f32 %v3449, %v3387
      %v3451 = vadd.f32 %v3450, %v3388
      %v3452 = vadd.f32 %v3451, %v3389
      %v3453 = vadd.f32 %v3452, %v3390
      %v3454 = vadd.f32 %v3453, %v3391
      %v3455 = vadd.f32 %v3454, %v3392
      %v3456 = vadd.f32 %v3455, %v3393
      %v3457 = vadd.f32 %v3456, %v3394
      %v3458 = vadd.f32 %v3457, %v3395
      %v3459 = vadd.f32 %v3458, %v3396
      %v3460 = vadd.f32 %v3459, %v3397
      %v3461 = vadd.f32 %v3460, %v3398
      %v3462 = vadd.f32 %v3461, %v3399
      %v3463 = vadd.f32 %v3462, %v3400
      %v3464 = vadd.f32 %v3463, %v3401
      %v3465 = vadd.f32 %v3464, %v3402
      %v3466 = vadd.f32 %v3465, %v3403
      %v3467 = vadd.f32 %v3466, %v3404
      %v3468 = vadd.f32 %v3467, %v3405
      %v3469 = vadd.f32 %v3468, %v3406
      %v3470 = vadd.f32 %v3469, %v3407
      %v3471 = vadd.f32 %v3470, %v3408
      %v3472 = vadd.f32 %v3471, %v3409
      %v3473 = vadd.f32 %v3472, %v3410
      %v3474 = vadd.f32 %v3473, %v3411
      %v3475 = vadd.f32 %v3474, %v3412
      %v3476 = vrot.slane %v3475, 4
      %v3477 = vadd.f32 %v3475, %v3476
      %v3478 = vrot.slane %v3477, 2
      %v3479 = vadd.f32 %v3477, %v3478
      %v3480 = vrot.slane %v3479, 1
      %v3481 = vadd.f32 %v3479, %v3480
      %3482 = vst [vmem:[%s265] sm:$0x1] %v3481
      %v3483 = vmul.f32 %v3381, %v3381
      %v3484 = vmul.f32 %v3382, %v3382
      %v3485 = vmul.f32 %v3383, %v3383
      %v3486 = vmul.f32 %v3384, %v3384
      %v3487 = vmul.f32 %v3385, %v3385
      %v3488 = vmul.f32 %v3386, %v3386
      %v3489 = vmul.f32 %v3387, %v3387
      %v3490 = vmul.f32 %v3388, %v3388
      %v3491 = vmul.f32 %v3389, %v3389
      %v3492 = vmul.f32 %v3390, %v3390
      %v3493 = vmul.f32 %v3391, %v3391
      %v3494 = vmul.f32 %v3392, %v3392
      %v3495 = vmul.f32 %v3393, %v3393
      %v3496 = vmul.f32 %v3394, %v3394
      %v3497 = vmul.f32 %v3395, %v3395
      %v3498 = vmul.f32 %v3396, %v3396
      %v3499 = vmul.f32 %v3397, %v3397
      %v3500 = vmul.f32 %v3398, %v3398
      %v3501 = vmul.f32 %v3399, %v3399
      %v3502 = vmul.f32 %v3400, %v3400
      %v3503 = vmul.f32 %v3401, %v3401
      %v3504 = vmul.f32 %v3402, %v3402
      %v3505 = vmul.f32 %v3403, %v3403
      %v3506 = vmul.f32 %v3404, %v3404
      %v3507 = vmul.f32 %v3405, %v3405
      %v3508 = vmul.f32 %v3406, %v3406
      %v3509 = vmul.f32 %v3407, %v3407
      %v3510 = vmul.f32 %v3408, %v3408
      %v3511 = vmul.f32 %v3409, %v3409
      %v3512 = vmul.f32 %v3410, %v3410
      %v3513 = vmul.f32 %v3411, %v3411
      %v3514 = vmul.f32 %v3412, %v3412
      %v3515 = vadd.f32 %v3483, %v3484
      %v3516 = vadd.f32 %v3515, %v3485
      %v3517 = vadd.f32 %v3516, %v3486
      %v3518 = vadd.f32 %v3517, %v3487
      %v3519 = vadd.f32 %v3518, %v3488
      %v3520 = vadd.f32 %v3519, %v3489
      %v3521 = vadd.f32 %v3520, %v3490
      %v3522 = vadd.f32 %v3521, %v3491
      %v3523 = vadd.f32 %v3522, %v3492
      %v3524 = vadd.f32 %v3523, %v3493
      %v3525 = vadd.f32 %v3524, %v3494
      %v3526 = vadd.f32 %v3525, %v3495
      %v3527 = vadd.f32 %v3526, %v3496
      %v3528 = vadd.f32 %v3527, %v3497
      %v3529 = vadd.f32 %v3528, %v3498
      %v3530 = vadd.f32 %v3529, %v3499
      %v3531 = vadd.f32 %v3530, %v3500
      %v3532 = vadd.f32 %v3531, %v3501
      %v3533 = vadd.f32 %v3532, %v3502
      %v3534 = vadd.f32 %v3533, %v3503
      %v3535 = vadd.f32 %v3534, %v3504
      %v3536 = vadd.f32 %v3535, %v3505
      %v3537 = vadd.f32 %v3536, %v3506
      %v3538 = vadd.f32 %v3537, %v3507
      %v3539 = vadd.f32 %v3538, %v3508
      %v3540 = vadd.f32 %v3539, %v3509
      %v3541 = vadd.f32 %v3540, %v3510
      %v3542 = vadd.f32 %v3541, %v3511
      %v3543 = vadd.f32 %v3542, %v3512
      %v3544 = vadd.f32 %v3543, %v3513
      %v3545 = vadd.f32 %v3544, %v3514
      %v3546 = vrot.slane %v3545, 4
      %v3547 = vadd.f32 %v3545, %v3546
      %v3548 = vrot.slane %v3547, 2
      %v3549 = vadd.f32 %v3547, %v3548
      %v3550 = vrot.slane %v3549, 1
      %v3551 = vadd.f32 %v3549, %v3550
      %3552 = vst [vmem:[%s268] sm:$0x1] %v3551
      %p3553 = scmp.lt.s32.totalorder %s18, 1
      %s3554 = scalar_select %p3553, %s18, 1
      %s3555 = smul.addr %s3554, 32
      %s3556 = smul.addr %s3555, 8
      %s3557 = scalar_lea.vmem %s4, %s3556
      %p3558 = scmp.lt.s32.totalorder %s18, 1
      %s3559 = scalar_select %p3558, %s18, 1
      %s3560 = scalar_lea.vmem %s5, %s3559
      %p3561 = scmp.lt.s32.totalorder %s18, 1
      %s3562 = scalar_select %p3561, %s18, 1
      %s3563 = scalar_lea.vmem %s6, %s3562
      // Predicated region
      $region37: #{double_conv_forward.4} parent=35 // pred_check
        %p3564 = pneg %p125
      $region38: #{double_conv_forward.4} parent=35 // pred_check_branch
        %3566 = sbr.rel (%p3564) target = $region40
      $region39: #{double_conv_forward.4} parent=35 // pred_region
        _
      $region40: #{double_conv_forward.4} parent=35 // pred_fallthru
        _
      // Predicated region
      $region41: #{double_conv_forward.4} parent=35 // pred_check
        %p3567 = pneg %p151
      $region42: #{double_conv_forward.4} parent=35 // pred_check_branch
        %3569 = sbr.rel (%p3567) target = $region44
      $region43: #{double_conv_forward.4} parent=35 // pred_region
        _
      $region44: #{double_conv_forward.4} parent=35 // pred_fallthru
        _
      // Predicated region
      $region45: #{double_conv_forward.4} parent=35 // pred_check
        %p3570 = pneg %p177
      $region46: #{double_conv_forward.4} parent=35 // pred_check_branch
        %3572 = sbr.rel (%p3570) target = $region48
      $region47: #{double_conv_forward.4} parent=35 // pred_region
        _
      $region48: #{double_conv_forward.4} parent=35 // pred_fallthru
        _
    $region36: #{double_conv_forward.4} parent=5 // pred_fallthru
      _
    %p3573 = scmp.le.s32.totalorder 2, %s13
    // Predicated region
    $region49: #{double_conv_forward.4} parent=5 // pred_check
      %p3574 = pneg %p3573
    $region50: #{double_conv_forward.4} parent=5 // pred_check_branch
      %3576 = sbr.rel (%p3574) target = $region52
    $region51: #{double_conv_forward.4} parent=5 // pred_region
      %s3577 = ssub.s32 %s13, 2
      // Predicated region
      $region53: #{double_conv_forward.4} parent=51 // pred_check
        %p3578 = pneg %p131
      $region54: #{double_conv_forward.4} parent=51 // pred_check_branch
        %3580 = sbr.rel (%p3578) target = $region56
      $region55: #{double_conv_forward.4} parent=51 // pred_region
        %p3581 = scmp.lt.s32.totalorder %s19, 1
        %s3582 = scalar_select %p3581, %s19, 1
        %s3583 = smul.addr %s3582, 32
        %s3584 = smul.addr %s3583, 8
        %s3585 = scalar_lea.vmem %s4, %s3584
      $region56: #{double_conv_forward.4} parent=51 // pred_fallthru
        _
      // Predicated region
      $region57: #{double_conv_forward.4} parent=51 // pred_check
        %p3586 = pneg %p157
      $region58: #{double_conv_forward.4} parent=51 // pred_check_branch
        %3588 = sbr.rel (%p3586) target = $region60
      $region59: #{double_conv_forward.4} parent=51 // pred_region
        %p3589 = scmp.lt.s32.totalorder %s19, 1
        %s3590 = scalar_select %p3589, %s19, 1
        %s3591 = scalar_lea.vmem %s5, %s3590
      $region60: #{double_conv_forward.4} parent=51 // pred_fallthru
        _
      // Predicated region
      $region61: #{double_conv_forward.4} parent=51 // pred_check
        %p3592 = pneg %p183
      $region62: #{double_conv_forward.4} parent=51 // pred_check_branch
        %3594 = sbr.rel (%p3592) target = $region64
      $region63: #{double_conv_forward.4} parent=51 // pred_region
        %p3595 = scmp.lt.s32.totalorder %s19, 1
        %s3596 = scalar_select %p3595, %s19, 1
        %s3597 = scalar_lea.vmem %s6, %s3596
      $region64: #{double_conv_forward.4} parent=51 // pred_fallthru
        _
    $region52: #{double_conv_forward.4} parent=5 // pred_fallthru
      _
  $region6: #{double_conv_forward.4} parent=0 // loop_footer
    %s17 = sadd.s32 1, %s13
  $region7: #{double_conv_forward.4} parent=0 // loop_footer_branch
    %12 = sbr.rel target = $region3
  $region8: #{double_conv_forward.4} parent=0 // loop_exit
    _

</llo_original>
